<compile_context>
chip_gen: v6e
topology: v6e:2x2x1
jax: 0.10.0
libtpu: 0.0.40
codegen_flags: <defaults>
</compile_context>

<pallas_src>
import functools

import jax
import jax.numpy as jnp
from jax.experimental import pallas as pl
from jax.experimental.pallas import tpu as pltpu

EPS = 1e-3  # BatchNorm eps for both layers


def _fused_kernel(x_ref, w1_ref, g1_ref, b1_ref, w2_ref, g2_ref, b2_ref,
                  o_ref, *, p_true):
    # x_ref : (P_pad, C_in)    bf16, resident (constant index_map, single-buffered)
    # w1_ref: (C_in, C_mid)    bf16, resident (constant index_map, single-buffered)
    # g1/b1 : (1, C_mid)       f32
    # w2_ref: (C_mid, TILE_N)  bf16, column tile (changes per grid step)
    # g2/b2 : (1, TILE_N)      f32 tiles
    # o_ref : (P_pad, TILE_N)  bf16 column tile
    inv_p = jnp.float32(1.0 / p_true)

    # ---- conv1 (MXU) + BN1, recomputed per column tile -------------------
    # Recompute removes the cross-step scratch dependence, so the grid axis can
    # be "parallel" (v7x: the C_out tiles shard across both TensorCores).
    y1 = jnp.dot(x_ref[...], w1_ref[...], preferred_element_type=jnp.float32)
    row1 = jax.lax.broadcasted_iota(jnp.int32, y1.shape, 0)
    valid1 = row1 < p_true
    m1 = jnp.sum(y1, axis=0, keepdims=True) * inv_p        # padded rows of x are 0
    d1 = jnp.where(valid1, y1 - m1, 0.0)                    # two-pass variance
    v1 = jnp.sum(d1 * d1, axis=0, keepdims=True) * inv_p
    yn = d1 * jax.lax.rsqrt(v1 + EPS) * g1_ref[...] + b1_ref[...]
    # Re-zero padded rows so they do not pollute conv2 / BN2 statistics.
    yn = jnp.where(valid1, yn, 0.0).astype(jnp.bfloat16)

    # ---- conv2 on this C_out column tile + BN2 ----------------------------
    y2 = jnp.dot(yn, w2_ref[...], preferred_element_type=jnp.float32)
    row2 = jax.lax.broadcasted_iota(jnp.int32, y2.shape, 0)
    valid2 = row2 < p_true
    m2 = jnp.sum(y2, axis=0, keepdims=True) * inv_p          # padded rows of yn are 0
    d2 = jnp.where(valid2, y2 - m2, 0.0)
    v2 = jnp.sum(d2 * d2, axis=0, keepdims=True) * inv_p
    out = d2 * jax.lax.rsqrt(v2 + EPS) * g2_ref[...] + b2_ref[...]
    # Rows >= p_true hold beta2 (junk); the caller strips them.
    o_ref[...] = out.astype(o_ref.dtype)


def fused_conv_bn_conv_bn_2d(x2d, w1, g1, b1, w2, g2, b2, *, p_true, tile_n=1536):
    """Core fused kernel on a lane-dense (P_pad, C_in) activation slab.

    x2d : (P_pad, C_in) bf16 with rows >= p_true zero-padded (P_pad % 16 == 0).
    w1  : (C_in, C_mid) bf16  (pre-cast once at init -- not per call).
    w2  : (C_mid, C_out) bf16 (pre-cast once at init -- not per call).
    g/b : per-channel BatchNorm affine parameters.
    Returns (P_pad, C_out) bf16; rows >= p_true contain junk (BN2 of zero rows).

    tile_n sweep guidance: 1536 (default) on v6e/v7x, 1024/768 on v5e; must be
    a multiple of 128 so output stores stay unmasked.
    """
    p_pad, c_in = x2d.shape
    c_mid = w1.shape[1]
    c_out = w2.shape[1]

    if c_out % tile_n != 0:
        tile_n = c_out  # fall back to a single column tile

    # These are no-ops when the caller already passes bf16 / f32 (recommended).
    x2d = x2d.astype(jnp.bfloat16)
    w1 = w1.astype(jnp.bfloat16)
    w2 = w2.astype(jnp.bfloat16)
    g1r = g1.reshape(1, c_mid).astype(jnp.float32)
    b1r = b1.reshape(1, c_mid).astype(jnp.float32)
    g2r = g2.reshape(1, c_out).astype(jnp.float32)
    b2r = b2.reshape(1, c_out).astype(jnp.float32)

    grid = (c_out // tile_n,)

    return pl.pallas_call(
        functools.partial(_fused_kernel, p_true=p_true),
        out_shape=jax.ShapeDtypeStruct((p_pad, c_out), jnp.bfloat16),
        grid_spec=pltpu.PrefetchScalarGridSpec(
            num_scalar_prefetch=0,
            grid=grid,
            in_specs=[
                # x and w1 are read by every grid step at the same block index:
                # DMA'd once, single buffer (no double-buffer pair needed).
                pl.BlockSpec((p_pad, c_in), lambda j: (0, 0),
                             pipeline_mode=pl.Buffered(1)),
                pl.BlockSpec((c_in, c_mid), lambda j: (0, 0),
                             pipeline_mode=pl.Buffered(1)),
                pl.BlockSpec((1, c_mid), lambda j: (0, 0)),       # g1
                pl.BlockSpec((1, c_mid), lambda j: (0, 0)),       # b1
                pl.BlockSpec((c_mid, tile_n), lambda j: (0, j)),  # w2 column tile
                pl.BlockSpec((1, tile_n), lambda j: (0, j)),      # g2 tile
                pl.BlockSpec((1, tile_n), lambda j: (0, j)),      # b2 tile
            ],
            out_specs=pl.BlockSpec((p_pad, tile_n), lambda j: (0, j)),
        ),
        compiler_params=pltpu.CompilerParams(
            # Column tiles are independent (conv1+BN1 recomputed per tile), so
            # the grid may shard across TensorCores (v7x megacore); sequential
            # and harmless on single-TC v5e / v6e.
            dimension_semantics=("parallel",),
            vmem_limit_bytes=16 << 20,
        ),
    )(x2d, w1, g1r, b1r, w2, g2r, b2r)


def fused_conv_bn_conv_bn_nchw(x_nchw, w1, g1, b1, w2, g2, b2, *, tile_n=1536):
    """NCHW convenience wrapper (parity with the PyTorch module). Prefer feeding
    fused_conv_bn_conv_bn_2d with (P, C) / NHWC activations directly to avoid
    the layout round-trips. Returns bf16 NCHW."""
    n, c_in, h, w = x_nchw.shape
    c_out = w2.shape[1]
    p = n * h * w
    p_pad = -(-p // 16) * 16  # bf16 sublane packing: pad pixel axis to mult of 16

    x2d = jnp.transpose(x_nchw, (0, 2, 3, 1)).reshape(p, c_in)
    x2d = jnp.pad(x2d, ((0, p_pad - p), (0, 0))).astype(jnp.bfloat16)

    out2d = fused_conv_bn_conv_bn_2d(x2d, w1, g1, b1, w2, g2, b2,
                                     p_true=p, tile_n=tile_n)
    out2d = out2d[:p]  # strip padded rows (they hold BN2-of-zero junk)
    return jnp.transpose(out2d.reshape(n, h, w, c_out), (0, 3, 1, 2))


def _reference_f32(x_nchw, w1, g1, b1, w2, g2, b2):
    """Full-f32 reference matching the PyTorch module (training-mode BN)."""
    n, c_in, h, w = x_nchw.shape
    x2d = jnp.transpose(x_nchw, (0, 2, 3, 1)).reshape(n * h * w, c_in)
    y1 = x2d @ w1
    m1 = jnp.mean(y1, axis=0, keepdims=True)
    v1 = jnp.mean((y1 - m1) ** 2, axis=0, keepdims=True)
    y1 = (y1 - m1) / jnp.sqrt(v1 + EPS) * g1[None, :] + b1[None, :]
    y2 = y1 @ w2
    m2 = jnp.mean(y2, axis=0, keepdims=True)
    v2 = jnp.mean((y2 - m2) ** 2, axis=0, keepdims=True)
    y2 = (y2 - m2) / jnp.sqrt(v2 + EPS) * g2[None, :] + b2[None, :]
    return jnp.transpose(y2.reshape(n, h, w, w2.shape[1]), (0, 3, 1, 2))


def _reference_bf16(x_nchw, w1, g1, b1, w2, g2, b2):
    """Reference with the kernel's precision path (bf16 matmul inputs, f32
    accumulation, f32 two-pass BN, bf16 intermediate); output kept in f32."""
    n, c_in, h, w = x_nchw.shape
    p = n * h * w
    x2d = jnp.transpose(x_nchw, (0, 2, 3, 1)).reshape(p, c_in).astype(jnp.bfloat16)
    y1 = jnp.dot(x2d, w1.astype(jnp.bfloat16), preferred_element_type=jnp.float32)
    m1 = jnp.sum(y1, axis=0, keepdims=True) / p
    d1 = y1 - m1
    v1 = jnp.sum(d1 * d1, axis=0, keepdims=True) / p
    y1n = (d1 * jax.lax.rsqrt(v1 + EPS) * g1[None, :] + b1[None, :]).astype(jnp.bfloat16)
    y2 = jnp.dot(y1n, w2.astype(jnp.bfloat16), preferred_element_type=jnp.float32)
    m2 = jnp.sum(y2, axis=0, keepdims=True) / p
    d2 = y2 - m2
    v2 = jnp.sum(d2 * d2, axis=0, keepdims=True) / p
    y2 = d2 * jax.lax.rsqrt(v2 + EPS) * g2[None, :] + b2[None, :]
    return jnp.transpose(y2.reshape(n, h, w, w2.shape[1]), (0, 3, 1, 2))


if __name__ == "__main__":
    # Shapes implied by the module: input (1, 1824, 7, 7), channels 1824 -> 512 -> 3072.
    N, C_IN, H, W = 1, 1824, 7, 7
    C_MID, C_OUT = 512, 3072

    key = jax.random.PRNGKey(0)
    kx, kw1, kw2 = jax.random.split(key, 3)

    x = jax.random.normal(kx, (N, C_IN, H, W), dtype=jnp.float32)

    # Conv weights: PyTorch (C_out, C_in, 1, 1) stored directly as the
    # (C_in, C_out) matmul operand.
    w1 = jax.random.normal(kw1, (C_IN, C_MID), dtype=jnp.float32) * 0.02
    w2 = jax.random.normal(kw2, (C_MID, C_OUT), dtype=jnp.float32) * 0.02

    # BatchNorm affine params: PyTorch default init (gamma=1, beta=0).
    g1 = jnp.ones((C_MID,), jnp.float32)
    b1 = jnp.zeros((C_MID,), jnp.float32)
    g2 = jnp.ones((C_OUT,), jnp.float32)
    b2 = jnp.zeros((C_OUT,), jnp.float32)

    # Init-time (one-off) f32->bf16 weight casts, hoisted out of the per-call
    # path per the performance review.
    w1b = jax.block_until_ready(w1.astype(jnp.bfloat16))
    w2b = jax.block_until_ready(w2.astype(jnp.bfloat16))

    out = fused_conv_bn_conv_bn_nchw(x, w1b, g1, b1, w2b, g2, b2)
    out = jax.block_until_ready(out)
    assert out.shape == (N, C_OUT, H, W), out.shape
    assert out.dtype == jnp.bfloat16, out.dtype
    out_f32 = out.astype(jnp.float32)

    # 1) Exact-logic check against a reference with the same bf16/f32 precision
    #    path (the remaining delta is the final bf16 output rounding).
    ref_bf16 = jax.block_until_ready(_reference_bf16(x, w1, g1, b1, w2, g2, b2))
    err1 = float(jnp.max(jnp.abs(out_f32 - ref_bf16)))
    assert jnp.allclose(out_f32, ref_bf16, atol=3e-2, rtol=2e-2), err1

    # 2) Semantic check against the full-f32 PyTorch-equivalent reference with a
    #    bf16-appropriate tolerance (BN-normalized outputs are O(1)).
    ref_f32 = jax.block_until_ready(_reference_f32(x, w1, g1, b1, w2, g2, b2))
    err2 = float(jnp.max(jnp.abs(out_f32 - ref_f32)))
    assert jnp.allclose(out_f32, ref_f32, atol=1.5e-1, rtol=5e-2), err2

    print("KERNEL_OK")
</pallas_src>

<mosaic_0001>
module attributes {stable_mosaic.version = 11 : i64} {
  func.func @_fused_kernel(%arg0: i32, %arg1: memref<64x1824xbf16, #tpu.memory_space<vmem>>, %arg2: memref<1824x512xbf16, #tpu.memory_space<vmem>>, %arg3: memref<1x512xf32, #tpu.memory_space<vmem>>, %arg4: memref<1x512xf32, #tpu.memory_space<vmem>>, %arg5: memref<512x1536xbf16, #tpu.memory_space<vmem>>, %arg6: memref<1x1536xf32, #tpu.memory_space<vmem>>, %arg7: memref<1x1536xf32, #tpu.memory_space<vmem>>, %arg8: memref<64x1536xbf16, #tpu.memory_space<vmem>>) attributes {dimension_semantics = [#tpu.dimension_semantics<parallel>], iteration_bounds = array<i64: 2>, scalar_prefetch = 0 : i64, scratch_operands = 0 : i64, tpu.core_type = #tpu.core_type<tc>, window_params = [{pipeline_mode = #tpu.pipeline_mode<synchronous>, transform_indices = @transform_0, window_bounds = array<i64: 64, 1824>}, {pipeline_mode = #tpu.pipeline_mode<synchronous>, transform_indices = @transform_1, window_bounds = array<i64: 1824, 512>}, {pipeline_mode = #tpu.pipeline_mode<synchronous>, transform_indices = @transform_2, window_bounds = array<i64: 1, 512>}, {pipeline_mode = #tpu.pipeline_mode<synchronous>, transform_indices = @transform_3, window_bounds = array<i64: 1, 512>}, {transform_indices = @transform_4, window_bounds = array<i64: 512, 1536>}, {transform_indices = @transform_5, window_bounds = array<i64: 1, 1536>}, {transform_indices = @transform_6, window_bounds = array<i64: 1, 1536>}, {transform_indices = @transform_7, window_bounds = array<i64: 64, 1536>}]} {
    %c0 = arith.constant 0 : index
    %c0_0 = arith.constant 0 : index
    %0 = vector.load %arg1[%c0, %c0_0] : memref<64x1824xbf16, #tpu.memory_space<vmem>>, vector<64x1824xbf16>
    %c0_1 = arith.constant 0 : index
    %c0_2 = arith.constant 0 : index
    %1 = vector.load %arg2[%c0_1, %c0_2] : memref<1824x512xbf16, #tpu.memory_space<vmem>>, vector<1824x512xbf16>
    %cst = arith.constant dense<0.000000e+00> : vector<64x512xf32>
    %2 = tpu.matmul %0, %1, %cst {dimension_numbers = #tpu.dot_dimension_numbers<[1], [0], [0], [1], [0, 0, 1, 1], [], []>} : vector<64x1824xbf16>, vector<1824x512xbf16>, vector<64x512xf32> -> vector<64x512xf32>
    %3 = tpu.iota {dimensions = array<i32: 0>} : vector<64x512xi32>
    %c49_i32 = arith.constant 49 : i32
    %4 = vector.broadcast %c49_i32 : i32 to vector<64x512xi32>
    %5 = arith.cmpi slt, %3, %4 : vector<64x512xi32>
    %cst_3 = arith.constant dense<0.000000e+00> : vector<512xf32>
    %6 = vector.multi_reduction <add>, %2, %cst_3 [0] : vector<64x512xf32> to vector<512xf32>
    %7 = vector.shape_cast %6 : vector<512xf32> to vector<1x512xf32>
    %cst_4 = arith.constant 0.0204081628 : f32
    %8 = vector.broadcast %cst_4 : f32 to vector<1x512xf32>
    %9 = arith.mulf %7, %8 : vector<1x512xf32>
    %10 = vector.broadcast %9 : vector<1x512xf32> to vector<64x512xf32>
    %11 = arith.subf %2, %10 : vector<64x512xf32>
    %cst_5 = arith.constant 0.000000e+00 : f32
    %12 = vector.broadcast %cst_5 : f32 to vector<64x512xf32>
    %13 = arith.select %5, %11, %12 : vector<64x512xi1>, vector<64x512xf32>
    %14 = arith.mulf %13, %13 : vector<64x512xf32>
    %cst_6 = arith.constant dense<0.000000e+00> : vector<512xf32>
    %15 = vector.multi_reduction <add>, %14, %cst_6 [0] : vector<64x512xf32> to vector<512xf32>
    %16 = vector.shape_cast %15 : vector<512xf32> to vector<1x512xf32>
    %cst_7 = arith.constant 0.0204081628 : f32
    %17 = vector.broadcast %cst_7 : f32 to vector<1x512xf32>
    %18 = arith.mulf %16, %17 : vector<1x512xf32>
    %cst_8 = arith.constant 1.000000e-03 : f32
    %19 = vector.broadcast %cst_8 : f32 to vector<1x512xf32>
    %20 = arith.addf %18, %19 : vector<1x512xf32>
    %21 = math.rsqrt %20 : vector<1x512xf32>
    %22 = vector.broadcast %21 : vector<1x512xf32> to vector<64x512xf32>
    %23 = arith.mulf %13, %22 : vector<64x512xf32>
    %c0_9 = arith.constant 0 : index
    %c0_10 = arith.constant 0 : index
    %24 = vector.load %arg3[%c0_9, %c0_10] : memref<1x512xf32, #tpu.memory_space<vmem>>, vector<1x512xf32>
    %25 = vector.broadcast %24 : vector<1x512xf32> to vector<64x512xf32>
    %26 = arith.mulf %23, %25 : vector<64x512xf32>
    %c0_11 = arith.constant 0 : index
    %c0_12 = arith.constant 0 : index
    %27 = vector.load %arg4[%c0_11, %c0_12] : memref<1x512xf32, #tpu.memory_space<vmem>>, vector<1x512xf32>
    %28 = vector.broadcast %27 : vector<1x512xf32> to vector<64x512xf32>
    %29 = arith.addf %26, %28 : vector<64x512xf32>
    %cst_13 = arith.constant 0.000000e+00 : f32
    %30 = vector.broadcast %cst_13 : f32 to vector<64x512xf32>
    %31 = arith.select %5, %29, %30 : vector<64x512xi1>, vector<64x512xf32>
    %32 = arith.truncf %31 : vector<64x512xf32> to vector<64x512xbf16>
    %c0_14 = arith.constant 0 : index
    %c0_15 = arith.constant 0 : index
    %33 = vector.load %arg5[%c0_14, %c0_15] : memref<512x1536xbf16, #tpu.memory_space<vmem>>, vector<512x1536xbf16>
    %cst_16 = arith.constant dense<0.000000e+00> : vector<64x1536xf32>
    %34 = tpu.matmul %32, %33, %cst_16 {dimension_numbers = #tpu.dot_dimension_numbers<[1], [0], [0], [1], [0, 0, 1, 1], [], []>} : vector<64x512xbf16>, vector<512x1536xbf16>, vector<64x1536xf32> -> vector<64x1536xf32>
    %35 = tpu.iota {dimensions = array<i32: 0>} : vector<64x1536xi32>
    %c49_i32_17 = arith.constant 49 : i32
    %36 = vector.broadcast %c49_i32_17 : i32 to vector<64x1536xi32>
    %37 = arith.cmpi slt, %35, %36 : vector<64x1536xi32>
    %cst_18 = arith.constant dense<0.000000e+00> : vector<1536xf32>
    %38 = vector.multi_reduction <add>, %34, %cst_18 [0] : vector<64x1536xf32> to vector<1536xf32>
    %39 = vector.shape_cast %38 : vector<1536xf32> to vector<1x1536xf32>
    %cst_19 = arith.constant 0.0204081628 : f32
    %40 = vector.broadcast %cst_19 : f32 to vector<1x1536xf32>
    %41 = arith.mulf %39, %40 : vector<1x1536xf32>
    %42 = vector.broadcast %41 : vector<1x1536xf32> to vector<64x1536xf32>
    %43 = arith.subf %34, %42 : vector<64x1536xf32>
    %cst_20 = arith.constant 0.000000e+00 : f32
    %44 = vector.broadcast %cst_20 : f32 to vector<64x1536xf32>
    %45 = arith.select %37, %43, %44 : vector<64x1536xi1>, vector<64x1536xf32>
    %46 = arith.mulf %45, %45 : vector<64x1536xf32>
    %cst_21 = arith.constant dense<0.000000e+00> : vector<1536xf32>
    %47 = vector.multi_reduction <add>, %46, %cst_21 [0] : vector<64x1536xf32> to vector<1536xf32>
    %48 = vector.shape_cast %47 : vector<1536xf32> to vector<1x1536xf32>
    %cst_22 = arith.constant 0.0204081628 : f32
    %49 = vector.broadcast %cst_22 : f32 to vector<1x1536xf32>
    %50 = arith.mulf %48, %49 : vector<1x1536xf32>
    %cst_23 = arith.constant 1.000000e-03 : f32
    %51 = vector.broadcast %cst_23 : f32 to vector<1x1536xf32>
    %52 = arith.addf %50, %51 : vector<1x1536xf32>
    %53 = math.rsqrt %52 : vector<1x1536xf32>
    %54 = vector.broadcast %53 : vector<1x1536xf32> to vector<64x1536xf32>
    %55 = arith.mulf %45, %54 : vector<64x1536xf32>
    %c0_24 = arith.constant 0 : index
    %c0_25 = arith.constant 0 : index
    %56 = vector.load %arg6[%c0_24, %c0_25] : memref<1x1536xf32, #tpu.memory_space<vmem>>, vector<1x1536xf32>
    %57 = vector.broadcast %56 : vector<1x1536xf32> to vector<64x1536xf32>
    %58 = arith.mulf %55, %57 : vector<64x1536xf32>
    %c0_26 = arith.constant 0 : index
    %c0_27 = arith.constant 0 : index
    %59 = vector.load %arg7[%c0_26, %c0_27] : memref<1x1536xf32, #tpu.memory_space<vmem>>, vector<1x1536xf32>
    %60 = vector.broadcast %59 : vector<1x1536xf32> to vector<64x1536xf32>
    %61 = arith.addf %58, %60 : vector<64x1536xf32>
    %62 = arith.truncf %61 : vector<64x1536xf32> to vector<64x1536xbf16>
    %c0_28 = arith.constant 0 : index
    %c0_29 = arith.constant 0 : index
    %63 = vector.load %arg8[%c0_28, %c0_29] : memref<64x1536xbf16, #tpu.memory_space<vmem>>, vector<64x1536xbf16>
    tpu.vector_store %arg8[%c0_28, %c0_29], %62 {strides = array<i32>} : memref<64x1536xbf16, #tpu.memory_space<vmem>>, vector<64x1536xbf16>,
    return
  }
  func.func @transform_0(%arg0: i32) -> (i32, i32) {
    %c0_i32 = arith.constant 0 : i32
    %c0_i32_0 = arith.constant 0 : i32
    %c0_i32_1 = arith.constant 0 : i32
    return %c0_i32, %c0_i32_0 : i32, i32
  }
  func.func @transform_1(%arg0: i32) -> (i32, i32) {
    %c0_i32 = arith.constant 0 : i32
    %c0_i32_0 = arith.constant 0 : i32
    %c0_i32_1 = arith.constant 0 : i32
    return %c0_i32, %c0_i32_0 : i32, i32
  }
  func.func @transform_2(%arg0: i32) -> (i32, i32) {
    %c0_i32 = arith.constant 0 : i32
    %c0_i32_0 = arith.constant 0 : i32
    %c0_i32_1 = arith.constant 0 : i32
    return %c0_i32, %c0_i32_0 : i32, i32
  }
  func.func @transform_3(%arg0: i32) -> (i32, i32) {
    %c0_i32 = arith.constant 0 : i32
    %c0_i32_0 = arith.constant 0 : i32
    %c0_i32_1 = arith.constant 0 : i32
    return %c0_i32, %c0_i32_0 : i32, i32
  }
  func.func @transform_4(%arg0: i32) -> (i32, i32) {
    %c0_i32 = arith.constant 0 : i32
    %c0_i32_0 = arith.constant 0 : i32
    return %c0_i32, %arg0 : i32, i32
  }
  func.func @transform_5(%arg0: i32) -> (i32, i32) {
    %c0_i32 = arith.constant 0 : i32
    %c0_i32_0 = arith.constant 0 : i32
    return %c0_i32, %arg0 : i32, i32
  }
  func.func @transform_6(%arg0: i32) -> (i32, i32) {
    %c0_i32 = arith.constant 0 : i32
    %c0_i32_0 = arith.constant 0 : i32
    return %c0_i32, %arg0 : i32, i32
  }
  func.func @transform_7(%arg0: i32) -> (i32, i32) {
    %c0_i32 = arith.constant 0 : i32
    %c0_i32_0 = arith.constant 0 : i32
    return %c0_i32, %arg0 : i32, i32
  }
}

</mosaic_0001>

<llo_original>
// kernel: tpu_custom_call.1
$region0: #{tpu_custom_call.1}
  #allocation0 [shape = 'u32[]', space=smem, size = 0x4, offset = 0x4, fixed_abs, tag = 'smem constant byte address 0x4 - core index']
  #allocation1 [shape = 'u32[144,128]{1,0:T(1,128)}', space=vmem, size = 0x12000, scoped, tag = 'internal scratch']
  %s0 = inlined_call_operand.hbm [shape: bf16[64,1824], index: 0, kind: input, shape index: {}]
  %s1 = inlined_call_operand.hbm [shape: bf16[1824,512], index: 1, kind: input, shape index: {}]
  %s2 = inlined_call_operand.hbm [shape: f32[1,512], index: 2, kind: input, shape index: {}]
  %s3 = inlined_call_operand.hbm [shape: f32[1,512], index: 3, kind: input, shape index: {}]
  %s4 = inlined_call_operand.hbm [shape: bf16[512,3072], index: 4, kind: input, shape index: {}]
  %s5 = inlined_call_operand.hbm [shape: f32[1,3072], index: 5, kind: input, shape index: {}]
  %s6 = inlined_call_operand.hbm [shape: f32[1,3072], index: 6, kind: input, shape index: {}]
  %s7 = inlined_call_operand.hbm [shape: bf16[64,3072], index: 7, kind: output, shape index: {}]
  %s8 = sld [smem:[#allocation0]]
  $region89: #{tpu_custom_call.1} parent=0
    _
  %s10 = ssub.s32 1, %s8
  %s11 = scalar_select 0, %s10, %s8
  $region1: #{tpu_custom_call.1} parent=0
    #allocation2 [shape = 'u8[245760]{0}', space=vmem, size = 0x3c000, scoped, tag = 'input window, operand 0, single buffered']
    #allocation3 [shape = 's32[2]{0}', space=sflag, size = 0x8, scoped, tag = 'scoped memory for tpu_custom_call.1']
    #allocation4 [shape = 's32[2]{0}', space=sflag, size = 0x8, scoped, tag = 'scoped memory for tpu_custom_call.1']
    #allocation5 [shape = 'u8[1867776]{0}', space=vmem, size = 0x1c8000, scoped, tag = 'input window, operand 1, single buffered']
    #allocation6 [shape = 's32[1]{0}', space=sflag, size = 0x4, scoped, tag = 'scoped memory for tpu_custom_call.1']
    #allocation7 [shape = 'u8[2048]{0}', space=vmem, size = 0x800, scoped, tag = 'input window, operand 2, single buffered']
    #allocation8 [shape = 'u8[2048]{0}', space=vmem, size = 0x800, scoped, tag = 'input window, operand 3, single buffered']
    #allocation9 [shape = 's32[1]{0}', space=sflag, size = 0x4, scoped, tag = 'scoped memory for tpu_custom_call.1']
    #allocation10 [shape = 'u8[3145728]{0}', space=vmem, size = 0x300000, scoped, tag = 'input window, operand 4']
    #allocation11 [shape = 'u8[12288]{0}', space=vmem, size = 0x3000, scoped, tag = 'input window, operand 5']
    #allocation12 [shape = 'u8[12288]{0}', space=vmem, size = 0x3000, scoped, tag = 'input window, operand 6']
    #allocation13 [shape = 'u8[393216]{0}', space=vmem, size = 0x60000, scoped, tag = 'output window, operand 0']
    %12 = vsyncpa [#allocation3], 0
    %13 = vsyncpa [#allocation6], 0
    %14 = vsyncpa [#allocation9], 0
    %15 = vsyncpa [#allocation4], 0
    %s16 = scalar_lea.sflag [#allocation4], 1
    %17 = vsyncpa %s16, 0
    loop: start=0, step=1, limit=4
    $region2: #{tpu_custom_call.1} parent=1 // loop_pre_header
      _
    $region3: #{tpu_custom_call.1} parent=1 // loop_header
      %s19 = sphi 0, %s23
      %p20 = scmp.ge.s32.totalorder %s19, 4
      %s27 = sphi 0, %s27
      %s29 = sphi 0, %s27
      %s30 = sphi 0, %s29
      %s44 = sphi 0, %s30
      %s48 = sphi 0, %s48
      %s50 = sphi 0, %s48
      %s51 = sphi 0, %s50
      %s65 = sphi 0, %s51
      %s69 = sphi 0, %s69
      %s71 = sphi 0, %s69
      %s72 = sphi 0, %s71
      %s86 = sphi 0, %s72
      %s90 = sphi 0, %s90
      %s92 = sphi 0, %s90
      %s93 = sphi 0, %s92
      %s107 = sphi 0, %s93
      %s113 = sphi 0, %s115
      %s116 = sphi 0, %s113
      %s117 = sphi 0, %s116
      %s133 = sphi 0, %s117
      %s139 = sphi 0, %s141
      %s142 = sphi 0, %s139
      %s143 = sphi 0, %s142
      %s159 = sphi 0, %s143
      %s165 = sphi 0, %s167
      %s168 = sphi 0, %s165
      %s169 = sphi 0, %s168
      %s185 = sphi 0, %s169
      %s191 = sphi 0, %s193
      %s194 = sphi 0, %s191
      %s195 = sphi 0, %s194
      %s211 = sphi 0, %s195
    $region4: #{tpu_custom_call.1} parent=1 // loop_header_branch
      %22 = sbr.rel (%p20) target = $region8
    $region5: #{tpu_custom_call.1} parent=1 // loop_body
      %s24 = ssub.s32 %s19, 1
      %s25 = ssub.s32 %s19, 2
      %s26 = sadd.s32 %s19, 1
      %s28 = sadd.s32 %s27, 1
      %p31 = scmp.eq.s32.totalorder %s19, 1
      %p32 = scmp.ne.s32.totalorder %s27, %s29
      %p33 = scmp.eq.s32.totalorder %s19, 0
      %p34 = por %p32, %p33
      %p35 = scmp.ne.s32.totalorder %s27, %s29
      %p36 = scmp.eq.s32.totalorder %s24, 1
      %p37 = por %p35, %p36
      %p38 = scmp.ne.s32.totalorder %s29, %s30
      %p39 = scmp.eq.s32.totalorder %s24, 0
      %p40 = por %p38, %p39
      %p41 = scmp.ne.s32.totalorder %s29, %s30
      %p42 = scmp.eq.s32.totalorder %s25, 1
      %p43 = por %p41, %p42
      %p45 = scmp.ne.s32.totalorder %s30, %s44
      %p46 = scmp.eq.s32.totalorder %s25, 0
      %p47 = por %p45, %p46
      %s49 = sadd.s32 %s48, 1
      %p52 = scmp.eq.s32.totalorder %s19, 1
      %p53 = scmp.ne.s32.totalorder %s48, %s50
      %p54 = scmp.eq.s32.totalorder %s19, 0
      %p55 = por %p53, %p54
      %p56 = scmp.ne.s32.totalorder %s48, %s50
      %p57 = scmp.eq.s32.totalorder %s24, 1
      %p58 = por %p56, %p57
      %p59 = scmp.ne.s32.totalorder %s50, %s51
      %p60 = scmp.eq.s32.totalorder %s24, 0
      %p61 = por %p59, %p60
      %p62 = scmp.ne.s32.totalorder %s50, %s51
      %p63 = scmp.eq.s32.totalorder %s25, 1
      %p64 = por %p62, %p63
      %p66 = scmp.ne.s32.totalorder %s51, %s65
      %p67 = scmp.eq.s32.totalorder %s25, 0
      %p68 = por %p66, %p67
      %s70 = sadd.s32 %s69, 1
      %p73 = scmp.eq.s32.totalorder %s19, 1
      %p74 = scmp.ne.s32.totalorder %s69, %s71
      %p75 = scmp.eq.s32.totalorder %s19, 0
      %p76 = por %p74, %p75
      %p77 = scmp.ne.s32.totalorder %s69, %s71
      %p78 = scmp.eq.s32.totalorder %s24, 1
      %p79 = por %p77, %p78
      %p80 = scmp.ne.s32.totalorder %s71, %s72
      %p81 = scmp.eq.s32.totalorder %s24, 0
      %p82 = por %p80, %p81
      %p83 = scmp.ne.s32.totalorder %s71, %s72
      %p84 = scmp.eq.s32.totalorder %s25, 1
      %p85 = por %p83, %p84
      %p87 = scmp.ne.s32.totalorder %s72, %s86
      %p88 = scmp.eq.s32.totalorder %s25, 0
      %p89 = por %p87, %p88
      %s91 = sadd.s32 %s90, 1
      %p94 = scmp.eq.s32.totalorder %s19, 1
      %p95 = scmp.ne.s32.totalorder %s90, %s92
      %p96 = scmp.eq.s32.totalorder %s19, 0
      %p97 = por %p95, %p96
      %p98 = scmp.ne.s32.totalorder %s90, %s92
      %p99 = scmp.eq.s32.totalorder %s24, 1
      %p100 = por %p98, %p99
      %p101 = scmp.ne.s32.totalorder %s92, %s93
      %p102 = scmp.eq.s32.totalorder %s24, 0
      %p103 = por %p101, %p102
      %p104 = scmp.ne.s32.totalorder %s92, %s93
      %p105 = scmp.eq.s32.totalorder %s25, 1
      %p106 = por %p104, %p105
      %p108 = scmp.ne.s32.totalorder %s93, %s107
      %p109 = scmp.eq.s32.totalorder %s25, 0
      %p110 = por %p108, %p109
      %s111 = ssub.s32 %s19, %s26
      %p112 = scmp.eq.s32.totalorder %s111, 0
      %s114 = sadd.s32 %s113, 1
      %s115 = scalar_select %p112, %s113, %s114
      %p118 = pneg %p112
      %p119 = scmp.eq.s32.totalorder %s19, 1
      %p120 = por %p118, %p119
      %p121 = scmp.ne.s32.totalorder %s113, %s116
      %p122 = scmp.eq.s32.totalorder %s19, 0
      %p123 = por %p121, %p122
      %p124 = scmp.ne.s32.totalorder %s113, %s116
      %p125 = scmp.eq.s32.totalorder %s24, 1
      %p126 = por %p124, %p125
      %p127 = scmp.ne.s32.totalorder %s116, %s117
      %p128 = scmp.eq.s32.totalorder %s24, 0
      %p129 = por %p127, %p128
      %p130 = scmp.ne.s32.totalorder %s116, %s117
      %p131 = scmp.eq.s32.totalorder %s25, 1
      %p132 = por %p130, %p131
      %p134 = scmp.ne.s32.totalorder %s117, %s133
      %p135 = scmp.eq.s32.totalorder %s25, 0
      %p136 = por %p134, %p135
      %s137 = ssub.s32 %s19, %s26
      %p138 = scmp.eq.s32.totalorder %s137, 0
      %s140 = sadd.s32 %s139, 1
      %s141 = scalar_select %p138, %s139, %s140
      %p144 = pneg %p138
      %p145 = scmp.eq.s32.totalorder %s19, 1
      %p146 = por %p144, %p145
      %p147 = scmp.ne.s32.totalorder %s139, %s142
      %p148 = scmp.eq.s32.totalorder %s19, 0
      %p149 = por %p147, %p148
      %p150 = scmp.ne.s32.totalorder %s139, %s142
      %p151 = scmp.eq.s32.totalorder %s24, 1
      %p152 = por %p150, %p151
      %p153 = scmp.ne.s32.totalorder %s142, %s143
      %p154 = scmp.eq.s32.totalorder %s24, 0
      %p155 = por %p153, %p154
      %p156 = scmp.ne.s32.totalorder %s142, %s143
      %p157 = scmp.eq.s32.totalorder %s25, 1
      %p158 = por %p156, %p157
      %p160 = scmp.ne.s32.totalorder %s143, %s159
      %p161 = scmp.eq.s32.totalorder %s25, 0
      %p162 = por %p160, %p161
      %s163 = ssub.s32 %s19, %s26
      %p164 = scmp.eq.s32.totalorder %s163, 0
      %s166 = sadd.s32 %s165, 1
      %s167 = scalar_select %p164, %s165, %s166
      %p170 = pneg %p164
      %p171 = scmp.eq.s32.totalorder %s19, 1
      %p172 = por %p170, %p171
      %p173 = scmp.ne.s32.totalorder %s165, %s168
      %p174 = scmp.eq.s32.totalorder %s19, 0
      %p175 = por %p173, %p174
      %p176 = scmp.ne.s32.totalorder %s165, %s168
      %p177 = scmp.eq.s32.totalorder %s24, 1
      %p178 = por %p176, %p177
      %p179 = scmp.ne.s32.totalorder %s168, %s169
      %p180 = scmp.eq.s32.totalorder %s24, 0
      %p181 = por %p179, %p180
      %p182 = scmp.ne.s32.totalorder %s168, %s169
      %p183 = scmp.eq.s32.totalorder %s25, 1
      %p184 = por %p182, %p183
      %p186 = scmp.ne.s32.totalorder %s169, %s185
      %p187 = scmp.eq.s32.totalorder %s25, 0
      %p188 = por %p186, %p187
      %s189 = ssub.s32 %s19, %s26
      %p190 = scmp.eq.s32.totalorder %s189, 0
      %s192 = sadd.s32 %s191, 1
      %s193 = scalar_select %p190, %s191, %s192
      %p196 = pneg %p190
      %p197 = scmp.eq.s32.totalorder %s19, 1
      %p198 = por %p196, %p197
      %p199 = scmp.ne.s32.totalorder %s191, %s194
      %p200 = scmp.eq.s32.totalorder %s19, 0
      %p201 = por %p199, %p200
      %p202 = scmp.ne.s32.totalorder %s191, %s194
      %p203 = scmp.eq.s32.totalorder %s24, 1
      %p204 = por %p202, %p203
      %p205 = scmp.ne.s32.totalorder %s194, %s195
      %p206 = scmp.eq.s32.totalorder %s24, 0
      %p207 = por %p205, %p206
      %p208 = scmp.ne.s32.totalorder %s194, %s195
      %p209 = scmp.eq.s32.totalorder %s25, 1
      %p210 = por %p208, %p209
      %p212 = scmp.ne.s32.totalorder %s195, %s211
      %p213 = scmp.eq.s32.totalorder %s25, 0
      %p214 = por %p212, %p213
      %p215 = scmp.le.s32.totalorder 1, %s19
      %p216 = scmp.lt.s32.totalorder %s19, 3
      %p217 = pnand %p215, %p216
      %p218 = pneg %p217
      // Predicated region
      $region9: #{tpu_custom_call.1} parent=5 // pred_check
        _
      $region10: #{tpu_custom_call.1} parent=5 // pred_check_branch
        %220 = sbr.rel (%p217) target = $region12
      $region11: #{tpu_custom_call.1} parent=5 // pred_region
        %s221 = ssub.s32 %s19, 1
        // Predicated region
        $region13: #{tpu_custom_call.1} parent=11 // pred_check
          %p222 = pneg %p40
        $region14: #{tpu_custom_call.1} parent=11 // pred_check_branch
          %224 = sbr.rel (%p222) target = $region16
        $region15: #{tpu_custom_call.1} parent=11 // pred_region
          %s226 = ssub.s32 7680, 7680
          %227 = vsyncadd [#allocation3], %s226
          %s228 = sshll.u32 [#allocation2], 4
          %s229 = int_to_ptr.vmem [resolvable:$true] %s228
          %234 = dma.hbm_to_vmem [thread:$0]  %s0, 7680, %s229, [#allocation3], 960, 960, 60
        $region16: #{tpu_custom_call.1} parent=11 // pred_fallthru
          _
        // Predicated region
        $region17: #{tpu_custom_call.1} parent=11 // pred_check
          %p235 = pneg %p61
        $region18: #{tpu_custom_call.1} parent=11 // pred_check_branch
          %237 = sbr.rel (%p235) target = $region20
        $region19: #{tpu_custom_call.1} parent=11 // pred_region
          %s239 = ssub.s32 58368, 58368
          %240 = vsyncadd [#allocation6], %s239
          %s241 = sshll.u32 [#allocation5], 4
          %s242 = int_to_ptr.vmem [resolvable:$true] %s241
          %247 = dma.hbm_to_vmem [thread:$0]  %s1, 58368, %s242, [#allocation6], 256, 256, 16
        $region20: #{tpu_custom_call.1} parent=11 // pred_fallthru
          _
        // Predicated region
        $region21: #{tpu_custom_call.1} parent=11 // pred_check
          %p248 = pneg %p82
        $region22: #{tpu_custom_call.1} parent=11 // pred_check_branch
          %250 = sbr.rel (%p248) target = $region24
        $region23: #{tpu_custom_call.1} parent=11 // pred_region
          %s252 = ssub.s32 64, 64
          %253 = vsyncadd [#allocation6], %s252
          %s255 = sshll.u32 [#allocation7], 4
          %s256 = int_to_ptr.vmem [resolvable:$true] %s255
          %258 = dma.hbm_to_vmem [thread:$0]  %s2, 64, %s256, [#allocation6]
        $region24: #{tpu_custom_call.1} parent=11 // pred_fallthru
          _
        // Predicated region
        $region25: #{tpu_custom_call.1} parent=11 // pred_check
          %p259 = pneg %p103
        $region26: #{tpu_custom_call.1} parent=11 // pred_check_branch
          %261 = sbr.rel (%p259) target = $region28
        $region27: #{tpu_custom_call.1} parent=11 // pred_region
          %s263 = ssub.s32 64, 64
          %264 = vsyncadd [#allocation9], %s263
          %s266 = sshll.u32 [#allocation8], 4
          %s267 = int_to_ptr.vmem [resolvable:$true] %s266
          %269 = dma.hbm_to_vmem [thread:$0]  %s3, 64, %s267, [#allocation9]
        $region28: #{tpu_custom_call.1} parent=11 // pred_fallthru
          _
      $region12: #{tpu_custom_call.1} parent=5 // pred_fallthru
        _
      %p270 = scmp.lt.s32.totalorder %s19, 2
      // Predicated region
      $region29: #{tpu_custom_call.1} parent=5 // pred_check
        %p271 = pneg %p270
      $region30: #{tpu_custom_call.1} parent=5 // pred_check_branch
        %273 = sbr.rel (%p271) target = $region32
      $region31: #{tpu_custom_call.1} parent=5 // pred_region
        // Predicated region
        $region33: #{tpu_custom_call.1} parent=31 // pred_check
          %p274 = pneg %p123
        $region34: #{tpu_custom_call.1} parent=31 // pred_check_branch
          %276 = sbr.rel (%p274) target = $region36
        $region35: #{tpu_custom_call.1} parent=31 // pred_region
          %s277 = sand.u32 %s19, 1
          %s278 = scalar_lea.sflag [#allocation3], %s277
          %s279 = sand.u32 %s113, 1
          %s280 = smul.addr %s279, 3072
          %s281 = scalar_lea.vmem [#allocation10], %s280
          %s282 = smul.u32 12, %s19
          %s284 = ssub.s32 49152, 49152
          %285 = vsyncadd %s278, %s284
          %s286 = smul.addr %s282, 64
          %s287 = scalar_lea.hbm %s4, %s286
          %s288 = sshll.u32 %s281, 4
          %s289 = int_to_ptr.vmem [resolvable:$true] %s288
          %294 = dma.hbm_to_vmem [thread:$0]  %s287, 49152, %s289, %s278, 1536, 768, 48
        $region36: #{tpu_custom_call.1} parent=31 // pred_fallthru
          _
        // Predicated region
        $region37: #{tpu_custom_call.1} parent=31 // pred_check
          %p295 = pneg %p149
        $region38: #{tpu_custom_call.1} parent=31 // pred_check_branch
          %297 = sbr.rel (%p295) target = $region40
        $region39: #{tpu_custom_call.1} parent=31 // pred_region
          %s298 = sand.u32 %s19, 1
          %s299 = scalar_lea.sflag [#allocation3], %s298
          %s300 = sand.u32 %s139, 1
          %s301 = smul.addr %s300, 12
          %s302 = scalar_lea.vmem [#allocation11], %s301
          %s303 = smul.u32 12, %s19
          %s305 = ssub.s32 192, 192
          %306 = vsyncadd %s299, %s305
          %s307 = smul.addr %s303, 16
          %s308 = scalar_lea.hbm %s5, %s307
          %s310 = sshll.u32 %s302, 4
          %s311 = int_to_ptr.vmem [resolvable:$true] %s310
          %313 = dma.hbm_to_vmem [thread:$0]  %s308, 192, %s311, %s299
        $region40: #{tpu_custom_call.1} parent=31 // pred_fallthru
          _
        // Predicated region
        $region41: #{tpu_custom_call.1} parent=31 // pred_check
          %p314 = pneg %p175
        $region42: #{tpu_custom_call.1} parent=31 // pred_check_branch
          %316 = sbr.rel (%p314) target = $region44
        $region43: #{tpu_custom_call.1} parent=31 // pred_region
          %s317 = sand.u32 %s19, 1
          %s318 = scalar_lea.sflag [#allocation3], %s317
          %s319 = sand.u32 %s165, 1
          %s320 = smul.addr %s319, 12
          %s321 = scalar_lea.vmem [#allocation12], %s320
          %s322 = smul.u32 12, %s19
          %s324 = ssub.s32 192, 192
          %325 = vsyncadd %s318, %s324
          %s326 = smul.addr %s322, 16
          %s327 = scalar_lea.hbm %s6, %s326
          %s329 = sshll.u32 %s321, 4
          %s330 = int_to_ptr.vmem [resolvable:$true] %s329
          %332 = dma.hbm_to_vmem [thread:$0]  %s327, 192, %s330, %s318
        $region44: #{tpu_custom_call.1} parent=31 // pred_fallthru
          _
      $region32: #{tpu_custom_call.1} parent=5 // pred_fallthru
        _
      %p333 = scmp.le.s32.totalorder 1, %s19
      %p334 = scmp.lt.s32.totalorder %s19, 3
      %p335 = pnand %p333, %p334
      %p336 = pneg %p335
      // Predicated region
      $region45: #{tpu_custom_call.1} parent=5 // pred_check
        _
      $region46: #{tpu_custom_call.1} parent=5 // pred_check_branch
        %338 = sbr.rel (%p335) target = $region48
      $region47: #{tpu_custom_call.1} parent=5 // pred_region
        %s339 = ssub.s32 %s19, 1
        // Predicated region
        $region49: #{tpu_custom_call.1} parent=47 // pred_check
          %p340 = pneg %p40
        $region50: #{tpu_custom_call.1} parent=47 // pred_check_branch
          %342 = sbr.rel (%p340) target = $region52
        $region51: #{tpu_custom_call.1} parent=47 // pred_region
          %343 = dma.done [#allocation3], 7680
        $region52: #{tpu_custom_call.1} parent=47 // pred_fallthru
          _
        // Predicated region
        $region53: #{tpu_custom_call.1} parent=47 // pred_check
          %p344 = pneg %p61
        $region54: #{tpu_custom_call.1} parent=47 // pred_check_branch
          %346 = sbr.rel (%p344) target = $region56
        $region55: #{tpu_custom_call.1} parent=47 // pred_region
          %347 = dma.done [#allocation6], 58368
        $region56: #{tpu_custom_call.1} parent=47 // pred_fallthru
          _
        // Predicated region
        $region57: #{tpu_custom_call.1} parent=47 // pred_check
          %p348 = pneg %p82
        $region58: #{tpu_custom_call.1} parent=47 // pred_check_branch
          %350 = sbr.rel (%p348) target = $region60
        $region59: #{tpu_custom_call.1} parent=47 // pred_region
          %351 = dma.done [#allocation6], 64
        $region60: #{tpu_custom_call.1} parent=47 // pred_fallthru
          _
        // Predicated region
        $region61: #{tpu_custom_call.1} parent=47 // pred_check
          %p352 = pneg %p103
        $region62: #{tpu_custom_call.1} parent=47 // pred_check_branch
          %354 = sbr.rel (%p352) target = $region64
        $region63: #{tpu_custom_call.1} parent=47 // pred_region
          %355 = dma.done [#allocation9], 64
        $region64: #{tpu_custom_call.1} parent=47 // pred_fallthru
          _
        %s356 = sand.u32 %s24, 1
        %s357 = scalar_lea.sflag [#allocation3], %s356
        %s358 = sand.u32 %s116, 1
        %s359 = smul.addr %s358, 3072
        %s360 = scalar_lea.vmem [#allocation10], %s359
        // Predicated region
        $region65: #{tpu_custom_call.1} parent=47 // pred_check
          %p361 = pneg %p129
        $region66: #{tpu_custom_call.1} parent=47 // pred_check_branch
          %363 = sbr.rel (%p361) target = $region68
        $region67: #{tpu_custom_call.1} parent=47 // pred_region
          %364 = dma.done %s357, 49152
        $region68: #{tpu_custom_call.1} parent=47 // pred_fallthru
          _
        %s365 = sand.u32 %s24, 1
        %s366 = scalar_lea.sflag [#allocation3], %s365
        %s367 = sand.u32 %s142, 1
        %s368 = smul.addr %s367, 12
        %s369 = scalar_lea.vmem [#allocation11], %s368
        // Predicated region
        $region69: #{tpu_custom_call.1} parent=47 // pred_check
          %p370 = pneg %p155
        $region70: #{tpu_custom_call.1} parent=47 // pred_check_branch
          %372 = sbr.rel (%p370) target = $region72
        $region71: #{tpu_custom_call.1} parent=47 // pred_region
          %373 = dma.done %s366, 192
        $region72: #{tpu_custom_call.1} parent=47 // pred_fallthru
          _
        %s374 = sand.u32 %s24, 1
        %s375 = scalar_lea.sflag [#allocation3], %s374
        %s376 = sand.u32 %s168, 1
        %s377 = smul.addr %s376, 12
        %s378 = scalar_lea.vmem [#allocation12], %s377
        // Predicated region
        $region73: #{tpu_custom_call.1} parent=47 // pred_check
          %p379 = pneg %p181
        $region74: #{tpu_custom_call.1} parent=47 // pred_check_branch
          %381 = sbr.rel (%p379) target = $region76
        $region75: #{tpu_custom_call.1} parent=47 // pred_region
          %382 = dma.done %s375, 192
        $region76: #{tpu_custom_call.1} parent=47 // pred_fallthru
          _
        %p383 = pneg %p40
        %p384 = pneg %p37
        %p385 = pneg %p61
        %p386 = pneg %p58
        %p387 = pneg %p82
        %p388 = pneg %p79
        %p389 = pneg %p103
        %p390 = pneg %p100
        %s391 = sand.u32 %s24, 1
        %s392 = scalar_lea.sflag [#allocation3], %s391
        %s393 = sand.u32 %s116, 1
        %s394 = smul.addr %s393, 3072
        %s395 = scalar_lea.vmem [#allocation10], %s394
        %p396 = pneg %p129
        %p397 = pneg %p126
        %s398 = sand.u32 %s24, 1
        %s399 = scalar_lea.sflag [#allocation3], %s398
        %s400 = sand.u32 %s142, 1
        %s401 = smul.addr %s400, 12
        %s402 = scalar_lea.vmem [#allocation11], %s401
        %p403 = pneg %p155
        %p404 = pneg %p152
        %s405 = sand.u32 %s24, 1
        %s406 = scalar_lea.sflag [#allocation3], %s405
        %s407 = sand.u32 %s168, 1
        %s408 = smul.addr %s407, 12
        %s409 = scalar_lea.vmem [#allocation12], %s408
        %p410 = pneg %p181
        %p411 = pneg %p178
        %p412 = pneg %p207
        %p413 = pneg %p204
        %s414 = sand.u32 %s194, 1
        %s415 = scalar_lea.sflag [#allocation4], %s414
        %s416 = sand.u32 %s194, 1
        %s417 = smul.addr %s416, 384
        %s418 = scalar_lea.vmem [#allocation13], %s417
        %s419 = smul.u32 12, %s24
        %s420 = smul.u32 12, %s24
        %s421 = smul.u32 12, %s24
        %s422 = smul.u32 12, %s24
        %v424 = vld [vmem:[#allocation2] sm:$0xff]
        %v425 = vld [vmem:[#allocation2 + $0x8] sm:$0xff]
        %v426 = vld [vmem:[#allocation2 + $0x10] sm:$0xff]
        %v427 = vld [vmem:[#allocation2 + $0x18] sm:$0xff]
        %v428 = vld [vmem:[#allocation2 + $0x20] sm:$0xff]
        %v429 = vld [vmem:[#allocation2 + $0x28] sm:$0xff]
        %v430 = vld [vmem:[#allocation2 + $0x30] sm:$0xff]
        %v431 = vld [vmem:[#allocation2 + $0x38] sm:$0xf]
        %v432 = vld [vmem:[#allocation2 + $0x3c] sm:$0xff]
        %v433 = vld [vmem:[#allocation2 + $0x44] sm:$0xff]
        %v434 = vld [vmem:[#allocation2 + $0x4c] sm:$0xff]
        %v435 = vld [vmem:[#allocation2 + $0x54] sm:$0xff]
        %v436 = vld [vmem:[#allocation2 + $0x5c] sm:$0xff]
        %v437 = vld [vmem:[#allocation2 + $0x64] sm:$0xff]
        %v438 = vld [vmem:[#allocation2 + $0x6c] sm:$0xff]
        %v439 = vld [vmem:[#allocation2 + $0x74] sm:$0xf]
        %v440 = vld [vmem:[#allocation2 + $0x78] sm:$0xff]
        %v441 = vld [vmem:[#allocation2 + $0x80] sm:$0xff]
        %v442 = vld [vmem:[#allocation2 + $0x88] sm:$0xff]
        %v443 = vld [vmem:[#allocation2 + $0x90] sm:$0xff]
        %v444 = vld [vmem:[#allocation2 + $0x98] sm:$0xff]
        %v445 = vld [vmem:[#allocation2 + $0xa0] sm:$0xff]
        %v446 = vld [vmem:[#allocation2 + $0xa8] sm:$0xff]
        %v447 = vld [vmem:[#allocation2 + $0xb0] sm:$0xf]
        %v448 = vld [vmem:[#allocation2 + $0xb4] sm:$0xff]
        %v449 = vld [vmem:[#allocation2 + $0xbc] sm:$0xff]
        %v450 = vld [vmem:[#allocation2 + $0xc4] sm:$0xff]
        %v451 = vld [vmem:[#allocation2 + $0xcc] sm:$0xff]
        %v452 = vld [vmem:[#allocation2 + $0xd4] sm:$0xff]
        %v453 = vld [vmem:[#allocation2 + $0xdc] sm:$0xff]
        %v454 = vld [vmem:[#allocation2 + $0xe4] sm:$0xff]
        %v455 = vld [vmem:[#allocation2 + $0xec] sm:$0xf]
        %v456 = vld [vmem:[#allocation2 + $0xf0] sm:$0xff]
        %v457 = vld [vmem:[#allocation2 + $0xf8] sm:$0xff]
        %v458 = vld [vmem:[#allocation2 + $0x100] sm:$0xff]
        %v459 = vld [vmem:[#allocation2 + $0x108] sm:$0xff]
        %v460 = vld [vmem:[#allocation2 + $0x110] sm:$0xff]
        %v461 = vld [vmem:[#allocation2 + $0x118] sm:$0xff]
        %v462 = vld [vmem:[#allocation2 + $0x120] sm:$0xff]
        %v463 = vld [vmem:[#allocation2 + $0x128] sm:$0xf]
        %v464 = vld [vmem:[#allocation2 + $0x12c] sm:$0xff]
        %v465 = vld [vmem:[#allocation2 + $0x134] sm:$0xff]
        %v466 = vld [vmem:[#allocation2 + $0x13c] sm:$0xff]
        %v467 = vld [vmem:[#allocation2 + $0x144] sm:$0xff]
        %v468 = vld [vmem:[#allocation2 + $0x14c] sm:$0xff]
        %v469 = vld [vmem:[#allocation2 + $0x154] sm:$0xff]
        %v470 = vld [vmem:[#allocation2 + $0x15c] sm:$0xff]
        %v471 = vld [vmem:[#allocation2 + $0x164] sm:$0xf]
        %v472 = vld [vmem:[#allocation2 + $0x168] sm:$0xff]
        %v473 = vld [vmem:[#allocation2 + $0x170] sm:$0xff]
        %v474 = vld [vmem:[#allocation2 + $0x178] sm:$0xff]
        %v475 = vld [vmem:[#allocation2 + $0x180] sm:$0xff]
        %v476 = vld [vmem:[#allocation2 + $0x188] sm:$0xff]
        %v477 = vld [vmem:[#allocation2 + $0x190] sm:$0xff]
        %v478 = vld [vmem:[#allocation2 + $0x198] sm:$0xff]
        %v479 = vld [vmem:[#allocation2 + $0x1a0] sm:$0xf]
        %v480 = vld [vmem:[#allocation2 + $0x1a4] sm:$0xff]
        %v481 = vld [vmem:[#allocation2 + $0x1ac] sm:$0xff]
        %v482 = vld [vmem:[#allocation2 + $0x1b4] sm:$0xff]
        %v483 = vld [vmem:[#allocation2 + $0x1bc] sm:$0xff]
        %v484 = vld [vmem:[#allocation2 + $0x1c4] sm:$0xff]
        %v485 = vld [vmem:[#allocation2 + $0x1cc] sm:$0xff]
        %v486 = vld [vmem:[#allocation2 + $0x1d4] sm:$0xff]
        %v487 = vld [vmem:[#allocation2 + $0x1dc] sm:$0xf]
        %v488 = vld [vmem:[#allocation5] sm:$0xff]
        %v489 = vld [vmem:[#allocation5 + $0x8] sm:$0xff]
        %v490 = vld [vmem:[#allocation5 + $0x10] sm:$0xff]
        %v491 = vld [vmem:[#allocation5 + $0x18] sm:$0xff]
        %v492 = vld [vmem:[#allocation5 + $0x20] sm:$0xff]
        %v493 = vld [vmem:[#allocation5 + $0x28] sm:$0xff]
        %v494 = vld [vmem:[#allocation5 + $0x30] sm:$0xff]
        %v495 = vld [vmem:[#allocation5 + $0x38] sm:$0xff]
        %v496 = vld [vmem:[#allocation5 + $0x40] sm:$0xff]
        %v497 = vld [vmem:[#allocation5 + $0x48] sm:$0xff]
        %v498 = vld [vmem:[#allocation5 + $0x50] sm:$0xff]
        %v499 = vld [vmem:[#allocation5 + $0x58] sm:$0xff]
        %v500 = vld [vmem:[#allocation5 + $0x60] sm:$0xff]
        %v501 = vld [vmem:[#allocation5 + $0x68] sm:$0xff]
        %v502 = vld [vmem:[#allocation5 + $0x70] sm:$0xff]
        %v503 = vld [vmem:[#allocation5 + $0x78] sm:$0xff]
        %v504 = vld [vmem:[#allocation5 + $0x80] sm:$0xff]
        %v505 = vld [vmem:[#allocation5 + $0x88] sm:$0xff]
        %v506 = vld [vmem:[#allocation5 + $0x90] sm:$0xff]
        %v507 = vld [vmem:[#allocation5 + $0x98] sm:$0xff]
        %v508 = vld [vmem:[#allocation5 + $0xa0] sm:$0xff]
        %v509 = vld [vmem:[#allocation5 + $0xa8] sm:$0xff]
        %v510 = vld [vmem:[#allocation5 + $0xb0] sm:$0xff]
        %v511 = vld [vmem:[#allocation5 + $0xb8] sm:$0xff]
        %v512 = vld [vmem:[#allocation5 + $0xc0] sm:$0xff]
        %v513 = vld [vmem:[#allocation5 + $0xc8] sm:$0xff]
        %v514 = vld [vmem:[#allocation5 + $0xd0] sm:$0xff]
        %v515 = vld [vmem:[#allocation5 + $0xd8] sm:$0xff]
        %v516 = vld [vmem:[#allocation5 + $0xe0] sm:$0xff]
        %v517 = vld [vmem:[#allocation5 + $0xe8] sm:$0xff]
        %v518 = vld [vmem:[#allocation5 + $0xf0] sm:$0xff]
        %v519 = vld [vmem:[#allocation5 + $0xf8] sm:$0xff]
        %v520 = vld [vmem:[#allocation5 + $0x100] sm:$0xff]
        %v521 = vld [vmem:[#allocation5 + $0x108] sm:$0xff]
        %v522 = vld [vmem:[#allocation5 + $0x110] sm:$0xff]
        %v523 = vld [vmem:[#allocation5 + $0x118] sm:$0xff]
        %v524 = vld [vmem:[#allocation5 + $0x120] sm:$0xff]
        %v525 = vld [vmem:[#allocation5 + $0x128] sm:$0xff]
        %v526 = vld [vmem:[#allocation5 + $0x130] sm:$0xff]
        %v527 = vld [vmem:[#allocation5 + $0x138] sm:$0xff]
        %v528 = vld [vmem:[#allocation5 + $0x140] sm:$0xff]
        %v529 = vld [vmem:[#allocation5 + $0x148] sm:$0xff]
        %v530 = vld [vmem:[#allocation5 + $0x150] sm:$0xff]
        %v531 = vld [vmem:[#allocation5 + $0x158] sm:$0xff]
        %v532 = vld [vmem:[#allocation5 + $0x160] sm:$0xff]
        %v533 = vld [vmem:[#allocation5 + $0x168] sm:$0xff]
        %v534 = vld [vmem:[#allocation5 + $0x170] sm:$0xff]
        %v535 = vld [vmem:[#allocation5 + $0x178] sm:$0xff]
        %v536 = vld [vmem:[#allocation5 + $0x180] sm:$0xff]
        %v537 = vld [vmem:[#allocation5 + $0x188] sm:$0xff]
        %v538 = vld [vmem:[#allocation5 + $0x190] sm:$0xff]
        %v539 = vld [vmem:[#allocation5 + $0x198] sm:$0xff]
        %v540 = vld [vmem:[#allocation5 + $0x1a0] sm:$0xff]
        %v541 = vld [vmem:[#allocation5 + $0x1a8] sm:$0xff]
        %v542 = vld [vmem:[#allocation5 + $0x1b0] sm:$0xff]
        %v543 = vld [vmem:[#allocation5 + $0x1b8] sm:$0xff]
        %v544 = vld [vmem:[#allocation5 + $0x1c0] sm:$0xff]
        %v545 = vld [vmem:[#allocation5 + $0x1c8] sm:$0xff]
        %v546 = vld [vmem:[#allocation5 + $0x1d0] sm:$0xff]
        %v547 = vld [vmem:[#allocation5 + $0x1d8] sm:$0xff]
        %v548 = vld [vmem:[#allocation5 + $0x1e0] sm:$0xff]
        %v549 = vld [vmem:[#allocation5 + $0x1e8] sm:$0xff]
        %v550 = vld [vmem:[#allocation5 + $0x1f0] sm:$0xff]
        %v551 = vld [vmem:[#allocation5 + $0x1f8] sm:$0xff]
        %v552 = vld [vmem:[#allocation5 + $0x200] sm:$0xff]
        %v553 = vld [vmem:[#allocation5 + $0x208] sm:$0xff]
        %v554 = vld [vmem:[#allocation5 + $0x210] sm:$0xff]
        %v555 = vld [vmem:[#allocation5 + $0x218] sm:$0xff]
        %v556 = vld [vmem:[#allocation5 + $0x220] sm:$0xff]
        %v557 = vld [vmem:[#allocation5 + $0x228] sm:$0xff]
        %v558 = vld [vmem:[#allocation5 + $0x230] sm:$0xff]
        %v559 = vld [vmem:[#allocation5 + $0x238] sm:$0xff]
        %v560 = vld [vmem:[#allocation5 + $0x240] sm:$0xff]
        %v561 = vld [vmem:[#allocation5 + $0x248] sm:$0xff]
        %v562 = vld [vmem:[#allocation5 + $0x250] sm:$0xff]
        %v563 = vld [vmem:[#allocation5 + $0x258] sm:$0xff]
        %v564 = vld [vmem:[#allocation5 + $0x260] sm:$0xff]
        %v565 = vld [vmem:[#allocation5 + $0x268] sm:$0xff]
        %v566 = vld [vmem:[#allocation5 + $0x270] sm:$0xff]
        %v567 = vld [vmem:[#allocation5 + $0x278] sm:$0xff]
        %v568 = vld [vmem:[#allocation5 + $0x280] sm:$0xff]
        %v569 = vld [vmem:[#allocation5 + $0x288] sm:$0xff]
        %v570 = vld [vmem:[#allocation5 + $0x290] sm:$0xff]
        %v571 = vld [vmem:[#allocation5 + $0x298] sm:$0xff]
        %v572 = vld [vmem:[#allocation5 + $0x2a0] sm:$0xff]
        %v573 = vld [vmem:[#allocation5 + $0x2a8] sm:$0xff]
        %v574 = vld [vmem:[#allocation5 + $0x2b0] sm:$0xff]
        %v575 = vld [vmem:[#allocation5 + $0x2b8] sm:$0xff]
        %v576 = vld [vmem:[#allocation5 + $0x2c0] sm:$0xff]
        %v577 = vld [vmem:[#allocation5 + $0x2c8] sm:$0xff]
        %v578 = vld [vmem:[#allocation5 + $0x2d0] sm:$0xff]
        %v579 = vld [vmem:[#allocation5 + $0x2d8] sm:$0xff]
        %v580 = vld [vmem:[#allocation5 + $0x2e0] sm:$0xff]
        %v581 = vld [vmem:[#allocation5 + $0x2e8] sm:$0xff]
        %v582 = vld [vmem:[#allocation5 + $0x2f0] sm:$0xff]
        %v583 = vld [vmem:[#allocation5 + $0x2f8] sm:$0xff]
        %v584 = vld [vmem:[#allocation5 + $0x300] sm:$0xff]
        %v585 = vld [vmem:[#allocation5 + $0x308] sm:$0xff]
        %v586 = vld [vmem:[#allocation5 + $0x310] sm:$0xff]
        %v587 = vld [vmem:[#allocation5 + $0x318] sm:$0xff]
        %v588 = vld [vmem:[#allocation5 + $0x320] sm:$0xff]
        %v589 = vld [vmem:[#allocation5 + $0x328] sm:$0xff]
        %v590 = vld [vmem:[#allocation5 + $0x330] sm:$0xff]
        %v591 = vld [vmem:[#allocation5 + $0x338] sm:$0xff]
        %v592 = vld [vmem:[#allocation5 + $0x340] sm:$0xff]
        %v593 = vld [vmem:[#allocation5 + $0x348] sm:$0xff]
        %v594 = vld [vmem:[#allocation5 + $0x350] sm:$0xff]
        %v595 = vld [vmem:[#allocation5 + $0x358] sm:$0xff]
        %v596 = vld [vmem:[#allocation5 + $0x360] sm:$0xff]
        %v597 = vld [vmem:[#allocation5 + $0x368] sm:$0xff]
        %v598 = vld [vmem:[#allocation5 + $0x370] sm:$0xff]
        %v599 = vld [vmem:[#allocation5 + $0x378] sm:$0xff]
        %v600 = vld [vmem:[#allocation5 + $0x380] sm:$0xff]
        %v601 = vld [vmem:[#allocation5 + $0x388] sm:$0xff]
        %v602 = vld [vmem:[#allocation5 + $0x390] sm:$0xff]
        %v603 = vld [vmem:[#allocation5 + $0x398] sm:$0xff]
        %v604 = vld [vmem:[#allocation5 + $0x3a0] sm:$0xff]
        %v605 = vld [vmem:[#allocation5 + $0x3a8] sm:$0xff]
        %v606 = vld [vmem:[#allocation5 + $0x3b0] sm:$0xff]
        %v607 = vld [vmem:[#allocation5 + $0x3b8] sm:$0xff]
        %v608 = vld [vmem:[#allocation5 + $0x3c0] sm:$0xff]
        %v609 = vld [vmem:[#allocation5 + $0x3c8] sm:$0xff]
        %v610 = vld [vmem:[#allocation5 + $0x3d0] sm:$0xff]
        %v611 = vld [vmem:[#allocation5 + $0x3d8] sm:$0xff]
        %v612 = vld [vmem:[#allocation5 + $0x3e0] sm:$0xff]
        %v613 = vld [vmem:[#allocation5 + $0x3e8] sm:$0xff]
        %v614 = vld [vmem:[#allocation5 + $0x3f0] sm:$0xff]
        %v615 = vld [vmem:[#allocation5 + $0x3f8] sm:$0xff]
        %v616 = vld [vmem:[#allocation5 + $0x400] sm:$0xff]
        %v617 = vld [vmem:[#allocation5 + $0x408] sm:$0xff]
        %v618 = vld [vmem:[#allocation5 + $0x410] sm:$0xff]
        %v619 = vld [vmem:[#allocation5 + $0x418] sm:$0xff]
        %v620 = vld [vmem:[#allocation5 + $0x420] sm:$0xff]
        %v621 = vld [vmem:[#allocation5 + $0x428] sm:$0xff]
        %v622 = vld [vmem:[#allocation5 + $0x430] sm:$0xff]
        %v623 = vld [vmem:[#allocation5 + $0x438] sm:$0xff]
        %v624 = vld [vmem:[#allocation5 + $0x440] sm:$0xff]
        %v625 = vld [vmem:[#allocation5 + $0x448] sm:$0xff]
        %v626 = vld [vmem:[#allocation5 + $0x450] sm:$0xff]
        %v627 = vld [vmem:[#allocation5 + $0x458] sm:$0xff]
        %v628 = vld [vmem:[#allocation5 + $0x460] sm:$0xff]
        %v629 = vld [vmem:[#allocation5 + $0x468] sm:$0xff]
        %v630 = vld [vmem:[#allocation5 + $0x470] sm:$0xff]
        %v631 = vld [vmem:[#allocation5 + $0x478] sm:$0xff]
        %v632 = vld [vmem:[#allocation5 + $0x480] sm:$0xff]
        %v633 = vld [vmem:[#allocation5 + $0x488] sm:$0xff]
        %v634 = vld [vmem:[#allocation5 + $0x490] sm:$0xff]
        %v635 = vld [vmem:[#allocation5 + $0x498] sm:$0xff]
        %v636 = vld [vmem:[#allocation5 + $0x4a0] sm:$0xff]
        %v637 = vld [vmem:[#allocation5 + $0x4a8] sm:$0xff]
        %v638 = vld [vmem:[#allocation5 + $0x4b0] sm:$0xff]
        %v639 = vld [vmem:[#allocation5 + $0x4b8] sm:$0xff]
        %v640 = vld [vmem:[#allocation5 + $0x4c0] sm:$0xff]
        %v641 = vld [vmem:[#allocation5 + $0x4c8] sm:$0xff]
        %v642 = vld [vmem:[#allocation5 + $0x4d0] sm:$0xff]
        %v643 = vld [vmem:[#allocation5 + $0x4d8] sm:$0xff]
        %v644 = vld [vmem:[#allocation5 + $0x4e0] sm:$0xff]
        %v645 = vld [vmem:[#allocation5 + $0x4e8] sm:$0xff]
        %v646 = vld [vmem:[#allocation5 + $0x4f0] sm:$0xff]
        %v647 = vld [vmem:[#allocation5 + $0x4f8] sm:$0xff]
        %v648 = vld [vmem:[#allocation5 + $0x500] sm:$0xff]
        %v649 = vld [vmem:[#allocation5 + $0x508] sm:$0xff]
        %v650 = vld [vmem:[#allocation5 + $0x510] sm:$0xff]
        %v651 = vld [vmem:[#allocation5 + $0x518] sm:$0xff]
        %v652 = vld [vmem:[#allocation5 + $0x520] sm:$0xff]
        %v653 = vld [vmem:[#allocation5 + $0x528] sm:$0xff]
        %v654 = vld [vmem:[#allocation5 + $0x530] sm:$0xff]
        %v655 = vld [vmem:[#allocation5 + $0x538] sm:$0xff]
        %v656 = vld [vmem:[#allocation5 + $0x540] sm:$0xff]
        %v657 = vld [vmem:[#allocation5 + $0x548] sm:$0xff]
        %v658 = vld [vmem:[#allocation5 + $0x550] sm:$0xff]
        %v659 = vld [vmem:[#allocation5 + $0x558] sm:$0xff]
        %v660 = vld [vmem:[#allocation5 + $0x560] sm:$0xff]
        %v661 = vld [vmem:[#allocation5 + $0x568] sm:$0xff]
        %v662 = vld [vmem:[#allocation5 + $0x570] sm:$0xff]
        %v663 = vld [vmem:[#allocation5 + $0x578] sm:$0xff]
        %v664 = vld [vmem:[#allocation5 + $0x580] sm:$0xff]
        %v665 = vld [vmem:[#allocation5 + $0x588] sm:$0xff]
        %v666 = vld [vmem:[#allocation5 + $0x590] sm:$0xff]
        %v667 = vld [vmem:[#allocation5 + $0x598] sm:$0xff]
        %v668 = vld [vmem:[#allocation5 + $0x5a0] sm:$0xff]
        %v669 = vld [vmem:[#allocation5 + $0x5a8] sm:$0xff]
        %v670 = vld [vmem:[#allocation5 + $0x5b0] sm:$0xff]
        %v671 = vld [vmem:[#allocation5 + $0x5b8] sm:$0xff]
        %v672 = vld [vmem:[#allocation5 + $0x5c0] sm:$0xff]
        %v673 = vld [vmem:[#allocation5 + $0x5c8] sm:$0xff]
        %v674 = vld [vmem:[#allocation5 + $0x5d0] sm:$0xff]
        %v675 = vld [vmem:[#allocation5 + $0x5d8] sm:$0xff]
        %v676 = vld [vmem:[#allocation5 + $0x5e0] sm:$0xff]
        %v677 = vld [vmem:[#allocation5 + $0x5e8] sm:$0xff]
        %v678 = vld [vmem:[#allocation5 + $0x5f0] sm:$0xff]
        %v679 = vld [vmem:[#allocation5 + $0x5f8] sm:$0xff]
        %v680 = vld [vmem:[#allocation5 + $0x600] sm:$0xff]
        %v681 = vld [vmem:[#allocation5 + $0x608] sm:$0xff]
        %v682 = vld [vmem:[#allocation5 + $0x610] sm:$0xff]
        %v683 = vld [vmem:[#allocation5 + $0x618] sm:$0xff]
        %v684 = vld [vmem:[#allocation5 + $0x620] sm:$0xff]
        %v685 = vld [vmem:[#allocation5 + $0x628] sm:$0xff]
        %v686 = vld [vmem:[#allocation5 + $0x630] sm:$0xff]
        %v687 = vld [vmem:[#allocation5 + $0x638] sm:$0xff]
        %v688 = vld [vmem:[#allocation5 + $0x640] sm:$0xff]
        %v689 = vld [vmem:[#allocation5 + $0x648] sm:$0xff]
        %v690 = vld [vmem:[#allocation5 + $0x650] sm:$0xff]
        %v691 = vld [vmem:[#allocation5 + $0x658] sm:$0xff]
        %v692 = vld [vmem:[#allocation5 + $0x660] sm:$0xff]
        %v693 = vld [vmem:[#allocation5 + $0x668] sm:$0xff]
        %v694 = vld [vmem:[#allocation5 + $0x670] sm:$0xff]
        %v695 = vld [vmem:[#allocation5 + $0x678] sm:$0xff]
        %v696 = vld [vmem:[#allocation5 + $0x680] sm:$0xff]
        %v697 = vld [vmem:[#allocation5 + $0x688] sm:$0xff]
        %v698 = vld [vmem:[#allocation5 + $0x690] sm:$0xff]
        %v699 = vld [vmem:[#allocation5 + $0x698] sm:$0xff]
        %v700 = vld [vmem:[#allocation5 + $0x6a0] sm:$0xff]
        %v701 = vld [vmem:[#allocation5 + $0x6a8] sm:$0xff]
        %v702 = vld [vmem:[#allocation5 + $0x6b0] sm:$0xff]
        %v703 = vld [vmem:[#allocation5 + $0x6b8] sm:$0xff]
        %v704 = vld [vmem:[#allocation5 + $0x6c0] sm:$0xff]
        %v705 = vld [vmem:[#allocation5 + $0x6c8] sm:$0xff]
        %v706 = vld [vmem:[#allocation5 + $0x6d0] sm:$0xff]
        %v707 = vld [vmem:[#allocation5 + $0x6d8] sm:$0xff]
        %v708 = vld [vmem:[#allocation5 + $0x6e0] sm:$0xff]
        %v709 = vld [vmem:[#allocation5 + $0x6e8] sm:$0xff]
        %v710 = vld [vmem:[#allocation5 + $0x6f0] sm:$0xff]
        %v711 = vld [vmem:[#allocation5 + $0x6f8] sm:$0xff]
        %v712 = vld [vmem:[#allocation5 + $0x700] sm:$0xff]
        %v713 = vld [vmem:[#allocation5 + $0x708] sm:$0xff]
        %v714 = vld [vmem:[#allocation5 + $0x710] sm:$0xff]
        %v715 = vld [vmem:[#allocation5 + $0x718] sm:$0xff]
        %v716 = vld [vmem:[#allocation5 + $0x720] sm:$0xff]
        %v717 = vld [vmem:[#allocation5 + $0x728] sm:$0xff]
        %v718 = vld [vmem:[#allocation5 + $0x730] sm:$0xff]
        %v719 = vld [vmem:[#allocation5 + $0x738] sm:$0xff]
        %v720 = vld [vmem:[#allocation5 + $0x740] sm:$0xff]
        %v721 = vld [vmem:[#allocation5 + $0x748] sm:$0xff]
        %v722 = vld [vmem:[#allocation5 + $0x750] sm:$0xff]
        %v723 = vld [vmem:[#allocation5 + $0x758] sm:$0xff]
        %v724 = vld [vmem:[#allocation5 + $0x760] sm:$0xff]
        %v725 = vld [vmem:[#allocation5 + $0x768] sm:$0xff]
        %v726 = vld [vmem:[#allocation5 + $0x770] sm:$0xff]
        %v727 = vld [vmem:[#allocation5 + $0x778] sm:$0xff]
        %v728 = vld [vmem:[#allocation5 + $0x780] sm:$0xff]
        %v729 = vld [vmem:[#allocation5 + $0x788] sm:$0xff]
        %v730 = vld [vmem:[#allocation5 + $0x790] sm:$0xff]
        %v731 = vld [vmem:[#allocation5 + $0x798] sm:$0xff]
        %v732 = vld [vmem:[#allocation5 + $0x7a0] sm:$0xff]
        %v733 = vld [vmem:[#allocation5 + $0x7a8] sm:$0xff]
        %v734 = vld [vmem:[#allocation5 + $0x7b0] sm:$0xff]
        %v735 = vld [vmem:[#allocation5 + $0x7b8] sm:$0xff]
        %v736 = vld [vmem:[#allocation5 + $0x7c0] sm:$0xff]
        %v737 = vld [vmem:[#allocation5 + $0x7c8] sm:$0xff]
        %v738 = vld [vmem:[#allocation5 + $0x7d0] sm:$0xff]
        %v739 = vld [vmem:[#allocation5 + $0x7d8] sm:$0xff]
        %v740 = vld [vmem:[#allocation5 + $0x7e0] sm:$0xff]
        %v741 = vld [vmem:[#allocation5 + $0x7e8] sm:$0xff]
        %v742 = vld [vmem:[#allocation5 + $0x7f0] sm:$0xff]
        %v743 = vld [vmem:[#allocation5 + $0x7f8] sm:$0xff]
        %v744 = vld [vmem:[#allocation5 + $0x800] sm:$0xff]
        %v745 = vld [vmem:[#allocation5 + $0x808] sm:$0xff]
        %v746 = vld [vmem:[#allocation5 + $0x810] sm:$0xff]
        %v747 = vld [vmem:[#allocation5 + $0x818] sm:$0xff]
        %v748 = vld [vmem:[#allocation5 + $0x820] sm:$0xff]
        %v749 = vld [vmem:[#allocation5 + $0x828] sm:$0xff]
        %v750 = vld [vmem:[#allocation5 + $0x830] sm:$0xff]
        %v751 = vld [vmem:[#allocation5 + $0x838] sm:$0xff]
        %v752 = vld [vmem:[#allocation5 + $0x840] sm:$0xff]
        %v753 = vld [vmem:[#allocation5 + $0x848] sm:$0xff]
        %v754 = vld [vmem:[#allocation5 + $0x850] sm:$0xff]
        %v755 = vld [vmem:[#allocation5 + $0x858] sm:$0xff]
        %v756 = vld [vmem:[#allocation5 + $0x860] sm:$0xff]
        %v757 = vld [vmem:[#allocation5 + $0x868] sm:$0xff]
        %v758 = vld [vmem:[#allocation5 + $0x870] sm:$0xff]
        %v759 = vld [vmem:[#allocation5 + $0x878] sm:$0xff]
        %v760 = vld [vmem:[#allocation5 + $0x880] sm:$0xff]
        %v761 = vld [vmem:[#allocation5 + $0x888] sm:$0xff]
        %v762 = vld [vmem:[#allocation5 + $0x890] sm:$0xff]
        %v763 = vld [vmem:[#allocation5 + $0x898] sm:$0xff]
        %v764 = vld [vmem:[#allocation5 + $0x8a0] sm:$0xff]
        %v765 = vld [vmem:[#allocation5 + $0x8a8] sm:$0xff]
        %v766 = vld [vmem:[#allocation5 + $0x8b0] sm:$0xff]
        %v767 = vld [vmem:[#allocation5 + $0x8b8] sm:$0xff]
        %v768 = vld [vmem:[#allocation5 + $0x8c0] sm:$0xff]
        %v769 = vld [vmem:[#allocation5 + $0x8c8] sm:$0xff]
        %v770 = vld [vmem:[#allocation5 + $0x8d0] sm:$0xff]
        %v771 = vld [vmem:[#allocation5 + $0x8d8] sm:$0xff]
        %v772 = vld [vmem:[#allocation5 + $0x8e0] sm:$0xff]
        %v773 = vld [vmem:[#allocation5 + $0x8e8] sm:$0xff]
        %v774 = vld [vmem:[#allocation5 + $0x8f0] sm:$0xff]
        %v775 = vld [vmem:[#allocation5 + $0x8f8] sm:$0xff]
        %v776 = vld [vmem:[#allocation5 + $0x900] sm:$0xff]
        %v777 = vld [vmem:[#allocation5 + $0x908] sm:$0xff]
        %v778 = vld [vmem:[#allocation5 + $0x910] sm:$0xff]
        %v779 = vld [vmem:[#allocation5 + $0x918] sm:$0xff]
        %v780 = vld [vmem:[#allocation5 + $0x920] sm:$0xff]
        %v781 = vld [vmem:[#allocation5 + $0x928] sm:$0xff]
        %v782 = vld [vmem:[#allocation5 + $0x930] sm:$0xff]
        %v783 = vld [vmem:[#allocation5 + $0x938] sm:$0xff]
        %v784 = vld [vmem:[#allocation5 + $0x940] sm:$0xff]
        %v785 = vld [vmem:[#allocation5 + $0x948] sm:$0xff]
        %v786 = vld [vmem:[#allocation5 + $0x950] sm:$0xff]
        %v787 = vld [vmem:[#allocation5 + $0x958] sm:$0xff]
        %v788 = vld [vmem:[#allocation5 + $0x960] sm:$0xff]
        %v789 = vld [vmem:[#allocation5 + $0x968] sm:$0xff]
        %v790 = vld [vmem:[#allocation5 + $0x970] sm:$0xff]
        %v791 = vld [vmem:[#allocation5 + $0x978] sm:$0xff]
        %v792 = vld [vmem:[#allocation5 + $0x980] sm:$0xff]
        %v793 = vld [vmem:[#allocation5 + $0x988] sm:$0xff]
        %v794 = vld [vmem:[#allocation5 + $0x990] sm:$0xff]
        %v795 = vld [vmem:[#allocation5 + $0x998] sm:$0xff]
        %v796 = vld [vmem:[#allocation5 + $0x9a0] sm:$0xff]
        %v797 = vld [vmem:[#allocation5 + $0x9a8] sm:$0xff]
        %v798 = vld [vmem:[#allocation5 + $0x9b0] sm:$0xff]
        %v799 = vld [vmem:[#allocation5 + $0x9b8] sm:$0xff]
        %v800 = vld [vmem:[#allocation5 + $0x9c0] sm:$0xff]
        %v801 = vld [vmem:[#allocation5 + $0x9c8] sm:$0xff]
        %v802 = vld [vmem:[#allocation5 + $0x9d0] sm:$0xff]
        %v803 = vld [vmem:[#allocation5 + $0x9d8] sm:$0xff]
        %v804 = vld [vmem:[#allocation5 + $0x9e0] sm:$0xff]
        %v805 = vld [vmem:[#allocation5 + $0x9e8] sm:$0xff]
        %v806 = vld [vmem:[#allocation5 + $0x9f0] sm:$0xff]
        %v807 = vld [vmem:[#allocation5 + $0x9f8] sm:$0xff]
        %v808 = vld [vmem:[#allocation5 + $0xa00] sm:$0xff]
        %v809 = vld [vmem:[#allocation5 + $0xa08] sm:$0xff]
        %v810 = vld [vmem:[#allocation5 + $0xa10] sm:$0xff]
        %v811 = vld [vmem:[#allocation5 + $0xa18] sm:$0xff]
        %v812 = vld [vmem:[#allocation5 + $0xa20] sm:$0xff]
        %v813 = vld [vmem:[#allocation5 + $0xa28] sm:$0xff]
        %v814 = vld [vmem:[#allocation5 + $0xa30] sm:$0xff]
        %v815 = vld [vmem:[#allocation5 + $0xa38] sm:$0xff]
        %v816 = vld [vmem:[#allocation5 + $0xa40] sm:$0xff]
        %v817 = vld [vmem:[#allocation5 + $0xa48] sm:$0xff]
        %v818 = vld [vmem:[#allocation5 + $0xa50] sm:$0xff]
        %v819 = vld [vmem:[#allocation5 + $0xa58] sm:$0xff]
        %v820 = vld [vmem:[#allocation5 + $0xa60] sm:$0xff]
        %v821 = vld [vmem:[#allocation5 + $0xa68] sm:$0xff]
        %v822 = vld [vmem:[#allocation5 + $0xa70] sm:$0xff]
        %v823 = vld [vmem:[#allocation5 + $0xa78] sm:$0xff]
        %v824 = vld [vmem:[#allocation5 + $0xa80] sm:$0xff]
        %v825 = vld [vmem:[#allocation5 + $0xa88] sm:$0xff]
        %v826 = vld [vmem:[#allocation5 + $0xa90] sm:$0xff]
        %v827 = vld [vmem:[#allocation5 + $0xa98] sm:$0xff]
        %v828 = vld [vmem:[#allocation5 + $0xaa0] sm:$0xff]
        %v829 = vld [vmem:[#allocation5 + $0xaa8] sm:$0xff]
        %v830 = vld [vmem:[#allocation5 + $0xab0] sm:$0xff]
        %v831 = vld [vmem:[#allocation5 + $0xab8] sm:$0xff]
        %v832 = vld [vmem:[#allocation5 + $0xac0] sm:$0xff]
        %v833 = vld [vmem:[#allocation5 + $0xac8] sm:$0xff]
        %v834 = vld [vmem:[#allocation5 + $0xad0] sm:$0xff]
        %v835 = vld [vmem:[#allocation5 + $0xad8] sm:$0xff]
        %v836 = vld [vmem:[#allocation5 + $0xae0] sm:$0xff]
        %v837 = vld [vmem:[#allocation5 + $0xae8] sm:$0xff]
        %v838 = vld [vmem:[#allocation5 + $0xaf0] sm:$0xff]
        %v839 = vld [vmem:[#allocation5 + $0xaf8] sm:$0xff]
        %v840 = vld [vmem:[#allocation5 + $0xb00] sm:$0xff]
        %v841 = vld [vmem:[#allocation5 + $0xb08] sm:$0xff]
        %v842 = vld [vmem:[#allocation5 + $0xb10] sm:$0xff]
        %v843 = vld [vmem:[#allocation5 + $0xb18] sm:$0xff]
        %v844 = vld [vmem:[#allocation5 + $0xb20] sm:$0xff]
        %v845 = vld [vmem:[#allocation5 + $0xb28] sm:$0xff]
        %v846 = vld [vmem:[#allocation5 + $0xb30] sm:$0xff]
        %v847 = vld [vmem:[#allocation5 + $0xb38] sm:$0xff]
        %v848 = vld [vmem:[#allocation5 + $0xb40] sm:$0xff]
        %v849 = vld [vmem:[#allocation5 + $0xb48] sm:$0xff]
        %v850 = vld [vmem:[#allocation5 + $0xb50] sm:$0xff]
        %v851 = vld [vmem:[#allocation5 + $0xb58] sm:$0xff]
        %v852 = vld [vmem:[#allocation5 + $0xb60] sm:$0xff]
        %v853 = vld [vmem:[#allocation5 + $0xb68] sm:$0xff]
        %v854 = vld [vmem:[#allocation5 + $0xb70] sm:$0xff]
        %v855 = vld [vmem:[#allocation5 + $0xb78] sm:$0xff]
        %v856 = vld [vmem:[#allocation5 + $0xb80] sm:$0xff]
        %v857 = vld [vmem:[#allocation5 + $0xb88] sm:$0xff]
        %v858 = vld [vmem:[#allocation5 + $0xb90] sm:$0xff]
        %v859 = vld [vmem:[#allocation5 + $0xb98] sm:$0xff]
        %v860 = vld [vmem:[#allocation5 + $0xba0] sm:$0xff]
        %v861 = vld [vmem:[#allocation5 + $0xba8] sm:$0xff]
        %v862 = vld [vmem:[#allocation5 + $0xbb0] sm:$0xff]
        %v863 = vld [vmem:[#allocation5 + $0xbb8] sm:$0xff]
        %v864 = vld [vmem:[#allocation5 + $0xbc0] sm:$0xff]
        %v865 = vld [vmem:[#allocation5 + $0xbc8] sm:$0xff]
        %v866 = vld [vmem:[#allocation5 + $0xbd0] sm:$0xff]
        %v867 = vld [vmem:[#allocation5 + $0xbd8] sm:$0xff]
        %v868 = vld [vmem:[#allocation5 + $0xbe0] sm:$0xff]
        %v869 = vld [vmem:[#allocation5 + $0xbe8] sm:$0xff]
        %v870 = vld [vmem:[#allocation5 + $0xbf0] sm:$0xff]
        %v871 = vld [vmem:[#allocation5 + $0xbf8] sm:$0xff]
        %v872 = vld [vmem:[#allocation5 + $0xc00] sm:$0xff]
        %v873 = vld [vmem:[#allocation5 + $0xc08] sm:$0xff]
        %v874 = vld [vmem:[#allocation5 + $0xc10] sm:$0xff]
        %v875 = vld [vmem:[#allocation5 + $0xc18] sm:$0xff]
        %v876 = vld [vmem:[#allocation5 + $0xc20] sm:$0xff]
        %v877 = vld [vmem:[#allocation5 + $0xc28] sm:$0xff]
        %v878 = vld [vmem:[#allocation5 + $0xc30] sm:$0xff]
        %v879 = vld [vmem:[#allocation5 + $0xc38] sm:$0xff]
        %v880 = vld [vmem:[#allocation5 + $0xc40] sm:$0xff]
        %v881 = vld [vmem:[#allocation5 + $0xc48] sm:$0xff]
        %v882 = vld [vmem:[#allocation5 + $0xc50] sm:$0xff]
        %v883 = vld [vmem:[#allocation5 + $0xc58] sm:$0xff]
        %v884 = vld [vmem:[#allocation5 + $0xc60] sm:$0xff]
        %v885 = vld [vmem:[#allocation5 + $0xc68] sm:$0xff]
        %v886 = vld [vmem:[#allocation5 + $0xc70] sm:$0xff]
        %v887 = vld [vmem:[#allocation5 + $0xc78] sm:$0xff]
        %v888 = vld [vmem:[#allocation5 + $0xc80] sm:$0xff]
        %v889 = vld [vmem:[#allocation5 + $0xc88] sm:$0xff]
        %v890 = vld [vmem:[#allocation5 + $0xc90] sm:$0xff]
        %v891 = vld [vmem:[#allocation5 + $0xc98] sm:$0xff]
        %v892 = vld [vmem:[#allocation5 + $0xca0] sm:$0xff]
        %v893 = vld [vmem:[#allocation5 + $0xca8] sm:$0xff]
        %v894 = vld [vmem:[#allocation5 + $0xcb0] sm:$0xff]
        %v895 = vld [vmem:[#allocation5 + $0xcb8] sm:$0xff]
        %v896 = vld [vmem:[#allocation5 + $0xcc0] sm:$0xff]
        %v897 = vld [vmem:[#allocation5 + $0xcc8] sm:$0xff]
        %v898 = vld [vmem:[#allocation5 + $0xcd0] sm:$0xff]
        %v899 = vld [vmem:[#allocation5 + $0xcd8] sm:$0xff]
        %v900 = vld [vmem:[#allocation5 + $0xce0] sm:$0xff]
        %v901 = vld [vmem:[#allocation5 + $0xce8] sm:$0xff]
        %v902 = vld [vmem:[#allocation5 + $0xcf0] sm:$0xff]
        %v903 = vld [vmem:[#allocation5 + $0xcf8] sm:$0xff]
        %v904 = vld [vmem:[#allocation5 + $0xd00] sm:$0xff]
        %v905 = vld [vmem:[#allocation5 + $0xd08] sm:$0xff]
        %v906 = vld [vmem:[#allocation5 + $0xd10] sm:$0xff]
        %v907 = vld [vmem:[#allocation5 + $0xd18] sm:$0xff]
        %v908 = vld [vmem:[#allocation5 + $0xd20] sm:$0xff]
        %v909 = vld [vmem:[#allocation5 + $0xd28] sm:$0xff]
        %v910 = vld [vmem:[#allocation5 + $0xd30] sm:$0xff]
        %v911 = vld [vmem:[#allocation5 + $0xd38] sm:$0xff]
        %v912 = vld [vmem:[#allocation5 + $0xd40] sm:$0xff]
        %v913 = vld [vmem:[#allocation5 + $0xd48] sm:$0xff]
        %v914 = vld [vmem:[#allocation5 + $0xd50] sm:$0xff]
        %v915 = vld [vmem:[#allocation5 + $0xd58] sm:$0xff]
        %v916 = vld [vmem:[#allocation5 + $0xd60] sm:$0xff]
        %v917 = vld [vmem:[#allocation5 + $0xd68] sm:$0xff]
        %v918 = vld [vmem:[#allocation5 + $0xd70] sm:$0xff]
        %v919 = vld [vmem:[#allocation5 + $0xd78] sm:$0xff]
        %v920 = vld [vmem:[#allocation5 + $0xd80] sm:$0xff]
        %v921 = vld [vmem:[#allocation5 + $0xd88] sm:$0xff]
        %v922 = vld [vmem:[#allocation5 + $0xd90] sm:$0xff]
        %v923 = vld [vmem:[#allocation5 + $0xd98] sm:$0xff]
        %v924 = vld [vmem:[#allocation5 + $0xda0] sm:$0xff]
        %v925 = vld [vmem:[#allocation5 + $0xda8] sm:$0xff]
        %v926 = vld [vmem:[#allocation5 + $0xdb0] sm:$0xff]
        %v927 = vld [vmem:[#allocation5 + $0xdb8] sm:$0xff]
        %v928 = vld [vmem:[#allocation5 + $0xdc0] sm:$0xff]
        %v929 = vld [vmem:[#allocation5 + $0xdc8] sm:$0xff]
        %v930 = vld [vmem:[#allocation5 + $0xdd0] sm:$0xff]
        %v931 = vld [vmem:[#allocation5 + $0xdd8] sm:$0xff]
        %v932 = vld [vmem:[#allocation5 + $0xde0] sm:$0xff]
        %v933 = vld [vmem:[#allocation5 + $0xde8] sm:$0xff]
        %v934 = vld [vmem:[#allocation5 + $0xdf0] sm:$0xff]
        %v935 = vld [vmem:[#allocation5 + $0xdf8] sm:$0xff]
        %v936 = vld [vmem:[#allocation5 + $0xe00] sm:$0xff]
        %v937 = vld [vmem:[#allocation5 + $0xe08] sm:$0xff]
        %v938 = vld [vmem:[#allocation5 + $0xe10] sm:$0xff]
        %v939 = vld [vmem:[#allocation5 + $0xe18] sm:$0xff]
        %v940 = vld [vmem:[#allocation5 + $0xe20] sm:$0xff]
        %v941 = vld [vmem:[#allocation5 + $0xe28] sm:$0xff]
        %v942 = vld [vmem:[#allocation5 + $0xe30] sm:$0xff]
        %v943 = vld [vmem:[#allocation5 + $0xe38] sm:$0xff]
        %v1008 = vunpack.c.l.b16 %v424
        %v1009 = vunpack.c.h.b16 %v424
        %v1010 = vunpack.c.l.b16 %v425
        %v1011 = vunpack.c.h.b16 %v425
        %v1012 = vunpack.c.l.b16 %v426
        %v1013 = vunpack.c.h.b16 %v426
        %v1014 = vunpack.c.l.b16 %v427
        %v1015 = vunpack.c.h.b16 %v427
        %v1016 = vunpack.c.l.b16 %v428
        %v1017 = vunpack.c.h.b16 %v428
        %v1018 = vunpack.c.l.b16 %v429
        %v1019 = vunpack.c.h.b16 %v429
        %v1020 = vunpack.c.l.b16 %v430
        %v1021 = vunpack.c.h.b16 %v430
        %v1022 = vunpack.c.l.b16 %v431
        %v1023 = vunpack.c.l.b16 %v432
        %v1024 = vunpack.c.h.b16 %v432
        %v1025 = vunpack.c.l.b16 %v433
        %v1026 = vunpack.c.h.b16 %v433
        %v1027 = vunpack.c.l.b16 %v434
        %v1028 = vunpack.c.h.b16 %v434
        %v1029 = vunpack.c.l.b16 %v435
        %v1030 = vunpack.c.h.b16 %v435
        %v1031 = vunpack.c.l.b16 %v436
        %v1032 = vunpack.c.h.b16 %v436
        %v1033 = vunpack.c.l.b16 %v437
        %v1034 = vunpack.c.h.b16 %v437
        %v1035 = vunpack.c.l.b16 %v438
        %v1036 = vunpack.c.h.b16 %v438
        %v1037 = vunpack.c.l.b16 %v439
        %v1038 = vunpack.c.l.b16 %v440
        %v1039 = vunpack.c.h.b16 %v440
        %v1040 = vunpack.c.l.b16 %v441
        %v1041 = vunpack.c.h.b16 %v441
        %v1042 = vunpack.c.l.b16 %v442
        %v1043 = vunpack.c.h.b16 %v442
        %v1044 = vunpack.c.l.b16 %v443
        %v1045 = vunpack.c.h.b16 %v443
        %v1046 = vunpack.c.l.b16 %v444
        %v1047 = vunpack.c.h.b16 %v444
        %v1048 = vunpack.c.l.b16 %v445
        %v1049 = vunpack.c.h.b16 %v445
        %v1050 = vunpack.c.l.b16 %v446
        %v1051 = vunpack.c.h.b16 %v446
        %v1052 = vunpack.c.l.b16 %v447
        %v1053 = vunpack.c.l.b16 %v448
        %v1054 = vunpack.c.h.b16 %v448
        %v1055 = vunpack.c.l.b16 %v449
        %v1056 = vunpack.c.h.b16 %v449
        %v1057 = vunpack.c.l.b16 %v450
        %v1058 = vunpack.c.h.b16 %v450
        %v1059 = vunpack.c.l.b16 %v451
        %v1060 = vunpack.c.h.b16 %v451
        %v1061 = vunpack.c.l.b16 %v452
        %v1062 = vunpack.c.h.b16 %v452
        %v1063 = vunpack.c.l.b16 %v453
        %v1064 = vunpack.c.h.b16 %v453
        %v1065 = vunpack.c.l.b16 %v454
        %v1066 = vunpack.c.h.b16 %v454
        %v1067 = vunpack.c.l.b16 %v455
        %v1068 = vunpack.c.l.b16 %v456
        %v1069 = vunpack.c.h.b16 %v456
        %v1070 = vunpack.c.l.b16 %v457
        %v1071 = vunpack.c.h.b16 %v457
        %v1072 = vunpack.c.l.b16 %v458
        %v1073 = vunpack.c.h.b16 %v458
        %v1074 = vunpack.c.l.b16 %v459
        %v1075 = vunpack.c.h.b16 %v459
        %v1076 = vunpack.c.l.b16 %v460
        %v1077 = vunpack.c.h.b16 %v460
        %v1078 = vunpack.c.l.b16 %v461
        %v1079 = vunpack.c.h.b16 %v461
        %v1080 = vunpack.c.l.b16 %v462
        %v1081 = vunpack.c.h.b16 %v462
        %v1082 = vunpack.c.l.b16 %v463
        %v1083 = vunpack.c.l.b16 %v464
        %v1084 = vunpack.c.h.b16 %v464
        %v1085 = vunpack.c.l.b16 %v465
        %v1086 = vunpack.c.h.b16 %v465
        %v1087 = vunpack.c.l.b16 %v466
        %v1088 = vunpack.c.h.b16 %v466
        %v1089 = vunpack.c.l.b16 %v467
        %v1090 = vunpack.c.h.b16 %v467
        %v1091 = vunpack.c.l.b16 %v468
        %v1092 = vunpack.c.h.b16 %v468
        %v1093 = vunpack.c.l.b16 %v469
        %v1094 = vunpack.c.h.b16 %v469
        %v1095 = vunpack.c.l.b16 %v470
        %v1096 = vunpack.c.h.b16 %v470
        %v1097 = vunpack.c.l.b16 %v471
        %v1098 = vunpack.c.l.b16 %v472
        %v1099 = vunpack.c.h.b16 %v472
        %v1100 = vunpack.c.l.b16 %v473
        %v1101 = vunpack.c.h.b16 %v473
        %v1102 = vunpack.c.l.b16 %v474
        %v1103 = vunpack.c.h.b16 %v474
        %v1104 = vunpack.c.l.b16 %v475
        %v1105 = vunpack.c.h.b16 %v475
        %v1106 = vunpack.c.l.b16 %v476
        %v1107 = vunpack.c.h.b16 %v476
        %v1108 = vunpack.c.l.b16 %v477
        %v1109 = vunpack.c.h.b16 %v477
        %v1110 = vunpack.c.l.b16 %v478
        %v1111 = vunpack.c.h.b16 %v478
        %v1112 = vunpack.c.l.b16 %v479
        %v1113 = vunpack.c.l.b16 %v480
        %v1114 = vunpack.c.h.b16 %v480
        %v1115 = vunpack.c.l.b16 %v481
        %v1116 = vunpack.c.h.b16 %v481
        %v1117 = vunpack.c.l.b16 %v482
        %v1118 = vunpack.c.h.b16 %v482
        %v1119 = vunpack.c.l.b16 %v483
        %v1120 = vunpack.c.h.b16 %v483
        %v1121 = vunpack.c.l.b16 %v484
        %v1122 = vunpack.c.h.b16 %v484
        %v1123 = vunpack.c.l.b16 %v485
        %v1124 = vunpack.c.h.b16 %v485
        %v1125 = vunpack.c.l.b16 %v486
        %v1126 = vunpack.c.h.b16 %v486
        %v1127 = vunpack.c.l.b16 %v487
        %v1128 = vpack.c.b16 %v1023, %v1008
        %v1129 = vpack.c.b16 %v1024, %v1009
        %v1130 = vpack.c.b16 %v1025, %v1010
        %v1131 = vpack.c.b16 %v1026, %v1011
        %v1132 = vpack.c.b16 %v1027, %v1012
        %v1133 = vpack.c.b16 %v1028, %v1013
        %v1134 = vpack.c.b16 %v1029, %v1014
        %v1135 = vpack.c.b16 %v1030, %v1015
        %v1136 = vpack.c.b16 %v1031, %v1016
        %v1137 = vpack.c.b16 %v1032, %v1017
        %v1138 = vpack.c.b16 %v1033, %v1018
        %v1139 = vpack.c.b16 %v1034, %v1019
        %v1140 = vpack.c.b16 %v1035, %v1020
        %v1141 = vpack.c.b16 %v1036, %v1021
        %v1142 = vpack.c.b16 %v1037, %v1022
        %v1143 = vpack.c.b16 %v1053, %v1038
        %v1144 = vpack.c.b16 %v1054, %v1039
        %v1145 = vpack.c.b16 %v1055, %v1040
        %v1146 = vpack.c.b16 %v1056, %v1041
        %v1147 = vpack.c.b16 %v1057, %v1042
        %v1148 = vpack.c.b16 %v1058, %v1043
        %v1149 = vpack.c.b16 %v1059, %v1044
        %v1150 = vpack.c.b16 %v1060, %v1045
        %v1151 = vpack.c.b16 %v1061, %v1046
        %v1152 = vpack.c.b16 %v1062, %v1047
        %v1153 = vpack.c.b16 %v1063, %v1048
        %v1154 = vpack.c.b16 %v1064, %v1049
        %v1155 = vpack.c.b16 %v1065, %v1050
        %v1156 = vpack.c.b16 %v1066, %v1051
        %v1157 = vpack.c.b16 %v1067, %v1052
        %v1158 = vpack.c.b16 %v1083, %v1068
        %v1159 = vpack.c.b16 %v1084, %v1069
        %v1160 = vpack.c.b16 %v1085, %v1070
        %v1161 = vpack.c.b16 %v1086, %v1071
        %v1162 = vpack.c.b16 %v1087, %v1072
        %v1163 = vpack.c.b16 %v1088, %v1073
        %v1164 = vpack.c.b16 %v1089, %v1074
        %v1165 = vpack.c.b16 %v1090, %v1075
        %v1166 = vpack.c.b16 %v1091, %v1076
        %v1167 = vpack.c.b16 %v1092, %v1077
        %v1168 = vpack.c.b16 %v1093, %v1078
        %v1169 = vpack.c.b16 %v1094, %v1079
        %v1170 = vpack.c.b16 %v1095, %v1080
        %v1171 = vpack.c.b16 %v1096, %v1081
        %v1172 = vpack.c.b16 %v1097, %v1082
        %v1173 = vpack.c.b16 %v1113, %v1098
        %v1174 = vpack.c.b16 %v1114, %v1099
        %v1175 = vpack.c.b16 %v1115, %v1100
        %v1176 = vpack.c.b16 %v1116, %v1101
        %v1177 = vpack.c.b16 %v1117, %v1102
        %v1178 = vpack.c.b16 %v1118, %v1103
        %v1179 = vpack.c.b16 %v1119, %v1104
        %v1180 = vpack.c.b16 %v1120, %v1105
        %v1181 = vpack.c.b16 %v1121, %v1106
        %v1182 = vpack.c.b16 %v1122, %v1107
        %v1183 = vpack.c.b16 %v1123, %v1108
        %v1184 = vpack.c.b16 %v1124, %v1109
        %v1185 = vpack.c.b16 %v1125, %v1110
        %v1186 = vpack.c.b16 %v1126, %v1111
        %v1187 = vpack.c.b16 %v1127, %v1112
        %v1700 = vunpack.c.l.b16 %v488
        %v1701 = vunpack.c.h.b16 %v488
        %v1702 = vunpack.c.l.b16 %v489
        %v1703 = vunpack.c.h.b16 %v489
        %v1704 = vunpack.c.l.b16 %v490
        %v1705 = vunpack.c.h.b16 %v490
        %v1706 = vunpack.c.l.b16 %v491
        %v1707 = vunpack.c.h.b16 %v491
        %v1708 = vunpack.c.l.b16 %v492
        %v1709 = vunpack.c.h.b16 %v492
        %v1710 = vunpack.c.l.b16 %v493
        %v1711 = vunpack.c.h.b16 %v493
        %v1712 = vunpack.c.l.b16 %v494
        %v1713 = vunpack.c.h.b16 %v494
        %v1714 = vunpack.c.l.b16 %v495
        %v1715 = vunpack.c.h.b16 %v495
        %v1716 = vunpack.c.l.b16 %v496
        %v1717 = vunpack.c.h.b16 %v496
        %v1718 = vunpack.c.l.b16 %v497
        %v1719 = vunpack.c.h.b16 %v497
        %v1720 = vunpack.c.l.b16 %v498
        %v1721 = vunpack.c.h.b16 %v498
        %v1722 = vunpack.c.l.b16 %v499
        %v1723 = vunpack.c.h.b16 %v499
        %v1724 = vunpack.c.l.b16 %v500
        %v1725 = vunpack.c.h.b16 %v500
        %v1726 = vunpack.c.l.b16 %v501
        %v1727 = vunpack.c.h.b16 %v501
        %v1728 = vunpack.c.l.b16 %v502
        %v1729 = vunpack.c.h.b16 %v502
        %v1730 = vunpack.c.l.b16 %v503
        %v1731 = vunpack.c.h.b16 %v503
        %v1732 = vunpack.c.l.b16 %v504
        %v1733 = vunpack.c.h.b16 %v504
        %v1734 = vunpack.c.l.b16 %v505
        %v1735 = vunpack.c.h.b16 %v505
        %v1736 = vunpack.c.l.b16 %v506
        %v1737 = vunpack.c.h.b16 %v506
        %v1738 = vunpack.c.l.b16 %v507
        %v1739 = vunpack.c.h.b16 %v507
        %v1740 = vunpack.c.l.b16 %v508
        %v1741 = vunpack.c.h.b16 %v508
        %v1742 = vunpack.c.l.b16 %v509
        %v1743 = vunpack.c.h.b16 %v509
        %v1744 = vunpack.c.l.b16 %v510
        %v1745 = vunpack.c.h.b16 %v510
        %v1746 = vunpack.c.l.b16 %v511
        %v1747 = vunpack.c.h.b16 %v511
        %v1748 = vunpack.c.l.b16 %v512
        %v1749 = vunpack.c.h.b16 %v512
        %v1750 = vunpack.c.l.b16 %v513
        %v1751 = vunpack.c.h.b16 %v513
        %v1752 = vunpack.c.l.b16 %v514
        %v1753 = vunpack.c.h.b16 %v514
        %v1754 = vunpack.c.l.b16 %v515
        %v1755 = vunpack.c.h.b16 %v515
        %v1756 = vunpack.c.l.b16 %v516
        %v1757 = vunpack.c.h.b16 %v516
        %v1758 = vunpack.c.l.b16 %v517
        %v1759 = vunpack.c.h.b16 %v517
        %v1760 = vunpack.c.l.b16 %v518
        %v1761 = vunpack.c.h.b16 %v518
        %v1762 = vunpack.c.l.b16 %v519
        %v1763 = vunpack.c.h.b16 %v519
        %v1764 = vunpack.c.l.b16 %v520
        %v1765 = vunpack.c.h.b16 %v520
        %v1766 = vunpack.c.l.b16 %v521
        %v1767 = vunpack.c.h.b16 %v521
        %v1768 = vunpack.c.l.b16 %v522
        %v1769 = vunpack.c.h.b16 %v522
        %v1770 = vunpack.c.l.b16 %v523
        %v1771 = vunpack.c.h.b16 %v523
        %v1772 = vunpack.c.l.b16 %v524
        %v1773 = vunpack.c.h.b16 %v524
        %v1774 = vunpack.c.l.b16 %v525
        %v1775 = vunpack.c.h.b16 %v525
        %v1776 = vunpack.c.l.b16 %v526
        %v1777 = vunpack.c.h.b16 %v526
        %v1778 = vunpack.c.l.b16 %v527
        %v1779 = vunpack.c.h.b16 %v527
        %v1780 = vunpack.c.l.b16 %v528
        %v1781 = vunpack.c.h.b16 %v528
        %v1782 = vunpack.c.l.b16 %v529
        %v1783 = vunpack.c.h.b16 %v529
        %v1784 = vunpack.c.l.b16 %v530
        %v1785 = vunpack.c.h.b16 %v530
        %v1786 = vunpack.c.l.b16 %v531
        %v1787 = vunpack.c.h.b16 %v531
        %v1788 = vunpack.c.l.b16 %v532
        %v1789 = vunpack.c.h.b16 %v532
        %v1790 = vunpack.c.l.b16 %v533
        %v1791 = vunpack.c.h.b16 %v533
        %v1792 = vunpack.c.l.b16 %v534
        %v1793 = vunpack.c.h.b16 %v534
        %v1794 = vunpack.c.l.b16 %v535
        %v1795 = vunpack.c.h.b16 %v535
        %v1796 = vunpack.c.l.b16 %v536
        %v1797 = vunpack.c.h.b16 %v536
        %v1798 = vunpack.c.l.b16 %v537
        %v1799 = vunpack.c.h.b16 %v537
        %v1800 = vunpack.c.l.b16 %v538
        %v1801 = vunpack.c.h.b16 %v538
        %v1802 = vunpack.c.l.b16 %v539
        %v1803 = vunpack.c.h.b16 %v539
        %v1804 = vunpack.c.l.b16 %v540
        %v1805 = vunpack.c.h.b16 %v540
        %v1806 = vunpack.c.l.b16 %v541
        %v1807 = vunpack.c.h.b16 %v541
        %v1808 = vunpack.c.l.b16 %v542
        %v1809 = vunpack.c.h.b16 %v542
        %v1810 = vunpack.c.l.b16 %v543
        %v1811 = vunpack.c.h.b16 %v543
        %v1812 = vunpack.c.l.b16 %v544
        %v1813 = vunpack.c.h.b16 %v544
        %v1814 = vunpack.c.l.b16 %v545
        %v1815 = vunpack.c.h.b16 %v545
        %v1816 = vunpack.c.l.b16 %v546
        %v1817 = vunpack.c.h.b16 %v546
        %v1818 = vunpack.c.l.b16 %v547
        %v1819 = vunpack.c.h.b16 %v547
        %v1820 = vunpack.c.l.b16 %v548
        %v1821 = vunpack.c.h.b16 %v548
        %v1822 = vunpack.c.l.b16 %v549
        %v1823 = vunpack.c.h.b16 %v549
        %v1824 = vunpack.c.l.b16 %v550
        %v1825 = vunpack.c.h.b16 %v550
        %v1826 = vunpack.c.l.b16 %v551
        %v1827 = vunpack.c.h.b16 %v551
        %v1828 = vunpack.c.l.b16 %v552
        %v1829 = vunpack.c.h.b16 %v552
        %v1830 = vunpack.c.l.b16 %v553
        %v1831 = vunpack.c.h.b16 %v553
        %v1832 = vunpack.c.l.b16 %v554
        %v1833 = vunpack.c.h.b16 %v554
        %v1834 = vunpack.c.l.b16 %v555
        %v1835 = vunpack.c.h.b16 %v555
        %v1836 = vunpack.c.l.b16 %v556
        %v1837 = vunpack.c.h.b16 %v556
        %v1838 = vunpack.c.l.b16 %v557
        %v1839 = vunpack.c.h.b16 %v557
        %v1840 = vunpack.c.l.b16 %v558
        %v1841 = vunpack.c.h.b16 %v558
        %v1842 = vunpack.c.l.b16 %v559
        %v1843 = vunpack.c.h.b16 %v559
        %v1844 = vunpack.c.l.b16 %v560
        %v1845 = vunpack.c.h.b16 %v560
        %v1846 = vunpack.c.l.b16 %v561
        %v1847 = vunpack.c.h.b16 %v561
        %v1848 = vunpack.c.l.b16 %v562
        %v1849 = vunpack.c.h.b16 %v562
        %v1850 = vunpack.c.l.b16 %v563
        %v1851 = vunpack.c.h.b16 %v563
        %v1852 = vunpack.c.l.b16 %v564
        %v1853 = vunpack.c.h.b16 %v564
        %v1854 = vunpack.c.l.b16 %v565
        %v1855 = vunpack.c.h.b16 %v565
        %v1856 = vunpack.c.l.b16 %v566
        %v1857 = vunpack.c.h.b16 %v566
        %v1858 = vunpack.c.l.b16 %v567
        %v1859 = vunpack.c.h.b16 %v567
        %v1860 = vunpack.c.l.b16 %v568
        %v1861 = vunpack.c.h.b16 %v568
        %v1862 = vunpack.c.l.b16 %v569
        %v1863 = vunpack.c.h.b16 %v569
        %v1864 = vunpack.c.l.b16 %v570
        %v1865 = vunpack.c.h.b16 %v570
        %v1866 = vunpack.c.l.b16 %v571
        %v1867 = vunpack.c.h.b16 %v571
        %v1868 = vunpack.c.l.b16 %v572
        %v1869 = vunpack.c.h.b16 %v572
        %v1870 = vunpack.c.l.b16 %v573
        %v1871 = vunpack.c.h.b16 %v573
        %v1872 = vunpack.c.l.b16 %v574
        %v1873 = vunpack.c.h.b16 %v574
        %v1874 = vunpack.c.l.b16 %v575
        %v1875 = vunpack.c.h.b16 %v575
        %v1876 = vunpack.c.l.b16 %v576
        %v1877 = vunpack.c.h.b16 %v576
        %v1878 = vunpack.c.l.b16 %v577
        %v1879 = vunpack.c.h.b16 %v577
        %v1880 = vunpack.c.l.b16 %v578
        %v1881 = vunpack.c.h.b16 %v578
        %v1882 = vunpack.c.l.b16 %v579
        %v1883 = vunpack.c.h.b16 %v579
        %v1884 = vunpack.c.l.b16 %v580
        %v1885 = vunpack.c.h.b16 %v580
        %v1886 = vunpack.c.l.b16 %v581
        %v1887 = vunpack.c.h.b16 %v581
        %v1888 = vunpack.c.l.b16 %v582
        %v1889 = vunpack.c.h.b16 %v582
        %v1890 = vunpack.c.l.b16 %v583
        %v1891 = vunpack.c.h.b16 %v583
        %v1892 = vunpack.c.l.b16 %v584
        %v1893 = vunpack.c.h.b16 %v584
        %v1894 = vunpack.c.l.b16 %v585
        %v1895 = vunpack.c.h.b16 %v585
        %v1896 = vunpack.c.l.b16 %v586
        %v1897 = vunpack.c.h.b16 %v586
        %v1898 = vunpack.c.l.b16 %v587
        %v1899 = vunpack.c.h.b16 %v587
        %v1900 = vunpack.c.l.b16 %v588
        %v1901 = vunpack.c.h.b16 %v588
        %v1902 = vunpack.c.l.b16 %v589
        %v1903 = vunpack.c.h.b16 %v589
        %v1904 = vunpack.c.l.b16 %v590
        %v1905 = vunpack.c.h.b16 %v590
        %v1906 = vunpack.c.l.b16 %v591
        %v1907 = vunpack.c.h.b16 %v591
        %v1908 = vunpack.c.l.b16 %v592
        %v1909 = vunpack.c.h.b16 %v592
        %v1910 = vunpack.c.l.b16 %v593
        %v1911 = vunpack.c.h.b16 %v593
        %v1912 = vunpack.c.l.b16 %v594
        %v1913 = vunpack.c.h.b16 %v594
        %v1914 = vunpack.c.l.b16 %v595
        %v1915 = vunpack.c.h.b16 %v595
        %v1916 = vunpack.c.l.b16 %v596
        %v1917 = vunpack.c.h.b16 %v596
        %v1918 = vunpack.c.l.b16 %v597
        %v1919 = vunpack.c.h.b16 %v597
        %v1920 = vunpack.c.l.b16 %v598
        %v1921 = vunpack.c.h.b16 %v598
        %v1922 = vunpack.c.l.b16 %v599
        %v1923 = vunpack.c.h.b16 %v599
        %v1924 = vunpack.c.l.b16 %v600
        %v1925 = vunpack.c.h.b16 %v600
        %v1926 = vunpack.c.l.b16 %v601
        %v1927 = vunpack.c.h.b16 %v601
        %v1928 = vunpack.c.l.b16 %v602
        %v1929 = vunpack.c.h.b16 %v602
        %v1930 = vunpack.c.l.b16 %v603
        %v1931 = vunpack.c.h.b16 %v603
        %v1932 = vunpack.c.l.b16 %v604
        %v1933 = vunpack.c.h.b16 %v604
        %v1934 = vunpack.c.l.b16 %v605
        %v1935 = vunpack.c.h.b16 %v605
        %v1936 = vunpack.c.l.b16 %v606
        %v1937 = vunpack.c.h.b16 %v606
        %v1938 = vunpack.c.l.b16 %v607
        %v1939 = vunpack.c.h.b16 %v607
        %v1940 = vunpack.c.l.b16 %v608
        %v1941 = vunpack.c.h.b16 %v608
        %v1942 = vunpack.c.l.b16 %v609
        %v1943 = vunpack.c.h.b16 %v609
        %v1944 = vunpack.c.l.b16 %v610
        %v1945 = vunpack.c.h.b16 %v610
        %v1946 = vunpack.c.l.b16 %v611
        %v1947 = vunpack.c.h.b16 %v611
        %v1948 = vunpack.c.l.b16 %v612
        %v1949 = vunpack.c.h.b16 %v612
        %v1950 = vunpack.c.l.b16 %v613
        %v1951 = vunpack.c.h.b16 %v613
        %v1952 = vunpack.c.l.b16 %v614
        %v1953 = vunpack.c.h.b16 %v614
        %v1954 = vunpack.c.l.b16 %v615
        %v1955 = vunpack.c.h.b16 %v615
        %v1956 = vunpack.c.l.b16 %v616
        %v1957 = vunpack.c.h.b16 %v616
        %v1958 = vunpack.c.l.b16 %v617
        %v1959 = vunpack.c.h.b16 %v617
        %v1960 = vunpack.c.l.b16 %v618
        %v1961 = vunpack.c.h.b16 %v618
        %v1962 = vunpack.c.l.b16 %v619
        %v1963 = vunpack.c.h.b16 %v619
        %v1964 = vunpack.c.l.b16 %v620
        %v1965 = vunpack.c.h.b16 %v620
        %v1966 = vunpack.c.l.b16 %v621
        %v1967 = vunpack.c.h.b16 %v621
        %v1968 = vunpack.c.l.b16 %v622
        %v1969 = vunpack.c.h.b16 %v622
        %v1970 = vunpack.c.l.b16 %v623
        %v1971 = vunpack.c.h.b16 %v623
        %v1972 = vunpack.c.l.b16 %v624
        %v1973 = vunpack.c.h.b16 %v624
        %v1974 = vunpack.c.l.b16 %v625
        %v1975 = vunpack.c.h.b16 %v625
        %v1976 = vunpack.c.l.b16 %v626
        %v1977 = vunpack.c.h.b16 %v626
        %v1978 = vunpack.c.l.b16 %v627
        %v1979 = vunpack.c.h.b16 %v627
        %v1980 = vunpack.c.l.b16 %v628
        %v1981 = vunpack.c.h.b16 %v628
        %v1982 = vunpack.c.l.b16 %v629
        %v1983 = vunpack.c.h.b16 %v629
        %v1984 = vunpack.c.l.b16 %v630
        %v1985 = vunpack.c.h.b16 %v630
        %v1986 = vunpack.c.l.b16 %v631
        %v1987 = vunpack.c.h.b16 %v631
        %v1988 = vunpack.c.l.b16 %v632
        %v1989 = vunpack.c.h.b16 %v632
        %v1990 = vunpack.c.l.b16 %v633
        %v1991 = vunpack.c.h.b16 %v633
        %v1992 = vunpack.c.l.b16 %v634
        %v1993 = vunpack.c.h.b16 %v634
        %v1994 = vunpack.c.l.b16 %v635
        %v1995 = vunpack.c.h.b16 %v635
        %v1996 = vunpack.c.l.b16 %v636
        %v1997 = vunpack.c.h.b16 %v636
        %v1998 = vunpack.c.l.b16 %v637
        %v1999 = vunpack.c.h.b16 %v637
        %v2000 = vunpack.c.l.b16 %v638
        %v2001 = vunpack.c.h.b16 %v638
        %v2002 = vunpack.c.l.b16 %v639
        %v2003 = vunpack.c.h.b16 %v639
        %v2004 = vunpack.c.l.b16 %v640
        %v2005 = vunpack.c.h.b16 %v640
        %v2006 = vunpack.c.l.b16 %v641
        %v2007 = vunpack.c.h.b16 %v641
        %v2008 = vunpack.c.l.b16 %v642
        %v2009 = vunpack.c.h.b16 %v642
        %v2010 = vunpack.c.l.b16 %v643
        %v2011 = vunpack.c.h.b16 %v643
        %v2012 = vunpack.c.l.b16 %v644
        %v2013 = vunpack.c.h.b16 %v644
        %v2014 = vunpack.c.l.b16 %v645
        %v2015 = vunpack.c.h.b16 %v645
        %v2016 = vunpack.c.l.b16 %v646
        %v2017 = vunpack.c.h.b16 %v646
        %v2018 = vunpack.c.l.b16 %v647
        %v2019 = vunpack.c.h.b16 %v647
        %v2020 = vunpack.c.l.b16 %v648
        %v2021 = vunpack.c.h.b16 %v648
        %v2022 = vunpack.c.l.b16 %v649
        %v2023 = vunpack.c.h.b16 %v649
        %v2024 = vunpack.c.l.b16 %v650
        %v2025 = vunpack.c.h.b16 %v650
        %v2026 = vunpack.c.l.b16 %v651
        %v2027 = vunpack.c.h.b16 %v651
        %v2028 = vunpack.c.l.b16 %v652
        %v2029 = vunpack.c.h.b16 %v652
        %v2030 = vunpack.c.l.b16 %v653
        %v2031 = vunpack.c.h.b16 %v653
        %v2032 = vunpack.c.l.b16 %v654
        %v2033 = vunpack.c.h.b16 %v654
        %v2034 = vunpack.c.l.b16 %v655
        %v2035 = vunpack.c.h.b16 %v655
        %v2036 = vunpack.c.l.b16 %v656
        %v2037 = vunpack.c.h.b16 %v656
        %v2038 = vunpack.c.l.b16 %v657
        %v2039 = vunpack.c.h.b16 %v657
        %v2040 = vunpack.c.l.b16 %v658
        %v2041 = vunpack.c.h.b16 %v658
        %v2042 = vunpack.c.l.b16 %v659
        %v2043 = vunpack.c.h.b16 %v659
        %v2044 = vunpack.c.l.b16 %v660
        %v2045 = vunpack.c.h.b16 %v660
        %v2046 = vunpack.c.l.b16 %v661
        %v2047 = vunpack.c.h.b16 %v661
        %v2048 = vunpack.c.l.b16 %v662
        %v2049 = vunpack.c.h.b16 %v662
        %v2050 = vunpack.c.l.b16 %v663
        %v2051 = vunpack.c.h.b16 %v663
        %v2052 = vunpack.c.l.b16 %v664
        %v2053 = vunpack.c.h.b16 %v664
        %v2054 = vunpack.c.l.b16 %v665
        %v2055 = vunpack.c.h.b16 %v665
        %v2056 = vunpack.c.l.b16 %v666
        %v2057 = vunpack.c.h.b16 %v666
        %v2058 = vunpack.c.l.b16 %v667
        %v2059 = vunpack.c.h.b16 %v667
        %v2060 = vunpack.c.l.b16 %v668
        %v2061 = vunpack.c.h.b16 %v668
        %v2062 = vunpack.c.l.b16 %v669
        %v2063 = vunpack.c.h.b16 %v669
        %v2064 = vunpack.c.l.b16 %v670
        %v2065 = vunpack.c.h.b16 %v670
        %v2066 = vunpack.c.l.b16 %v671
        %v2067 = vunpack.c.h.b16 %v671
        %v2068 = vunpack.c.l.b16 %v672
        %v2069 = vunpack.c.h.b16 %v672
        %v2070 = vunpack.c.l.b16 %v673
        %v2071 = vunpack.c.h.b16 %v673
        %v2072 = vunpack.c.l.b16 %v674
        %v2073 = vunpack.c.h.b16 %v674
        %v2074 = vunpack.c.l.b16 %v675
        %v2075 = vunpack.c.h.b16 %v675
        %v2076 = vunpack.c.l.b16 %v676
        %v2077 = vunpack.c.h.b16 %v676
        %v2078 = vunpack.c.l.b16 %v677
        %v2079 = vunpack.c.h.b16 %v677
        %v2080 = vunpack.c.l.b16 %v678
        %v2081 = vunpack.c.h.b16 %v678
        %v2082 = vunpack.c.l.b16 %v679
        %v2083 = vunpack.c.h.b16 %v679
        %v2084 = vunpack.c.l.b16 %v680
        %v2085 = vunpack.c.h.b16 %v680
        %v2086 = vunpack.c.l.b16 %v681
        %v2087 = vunpack.c.h.b16 %v681
        %v2088 = vunpack.c.l.b16 %v682
        %v2089 = vunpack.c.h.b16 %v682
        %v2090 = vunpack.c.l.b16 %v683
        %v2091 = vunpack.c.h.b16 %v683
        %v2092 = vunpack.c.l.b16 %v684
        %v2093 = vunpack.c.h.b16 %v684
        %v2094 = vunpack.c.l.b16 %v685
        %v2095 = vunpack.c.h.b16 %v685
        %v2096 = vunpack.c.l.b16 %v686
        %v2097 = vunpack.c.h.b16 %v686
        %v2098 = vunpack.c.l.b16 %v687
        %v2099 = vunpack.c.h.b16 %v687
        %v2100 = vunpack.c.l.b16 %v688
        %v2101 = vunpack.c.h.b16 %v688
        %v2102 = vunpack.c.l.b16 %v689
        %v2103 = vunpack.c.h.b16 %v689
        %v2104 = vunpack.c.l.b16 %v690
        %v2105 = vunpack.c.h.b16 %v690
        %v2106 = vunpack.c.l.b16 %v691
        %v2107 = vunpack.c.h.b16 %v691
        %v2108 = vunpack.c.l.b16 %v692
        %v2109 = vunpack.c.h.b16 %v692
        %v2110 = vunpack.c.l.b16 %v693
        %v2111 = vunpack.c.h.b16 %v693
        %v2112 = vunpack.c.l.b16 %v694
        %v2113 = vunpack.c.h.b16 %v694
        %v2114 = vunpack.c.l.b16 %v695
        %v2115 = vunpack.c.h.b16 %v695
        %v2116 = vunpack.c.l.b16 %v696
        %v2117 = vunpack.c.h.b16 %v696
        %v2118 = vunpack.c.l.b16 %v697
        %v2119 = vunpack.c.h.b16 %v697
        %v2120 = vunpack.c.l.b16 %v698
        %v2121 = vunpack.c.h.b16 %v698
        %v2122 = vunpack.c.l.b16 %v699
        %v2123 = vunpack.c.h.b16 %v699
        %v2124 = vunpack.c.l.b16 %v700
        %v2125 = vunpack.c.h.b16 %v700
        %v2126 = vunpack.c.l.b16 %v701
        %v2127 = vunpack.c.h.b16 %v701
        %v2128 = vunpack.c.l.b16 %v702
        %v2129 = vunpack.c.h.b16 %v702
        %v2130 = vunpack.c.l.b16 %v703
        %v2131 = vunpack.c.h.b16 %v703
        %v2132 = vunpack.c.l.b16 %v704
        %v2133 = vunpack.c.h.b16 %v704
        %v2134 = vunpack.c.l.b16 %v705
        %v2135 = vunpack.c.h.b16 %v705
        %v2136 = vunpack.c.l.b16 %v706
        %v2137 = vunpack.c.h.b16 %v706
        %v2138 = vunpack.c.l.b16 %v707
        %v2139 = vunpack.c.h.b16 %v707
        %v2140 = vunpack.c.l.b16 %v708
        %v2141 = vunpack.c.h.b16 %v708
        %v2142 = vunpack.c.l.b16 %v709
        %v2143 = vunpack.c.h.b16 %v709
        %v2144 = vunpack.c.l.b16 %v710
        %v2145 = vunpack.c.h.b16 %v710
        %v2146 = vunpack.c.l.b16 %v711
        %v2147 = vunpack.c.h.b16 %v711
        %v2148 = vunpack.c.l.b16 %v712
        %v2149 = vunpack.c.h.b16 %v712
        %v2150 = vunpack.c.l.b16 %v713
        %v2151 = vunpack.c.h.b16 %v713
        %v2152 = vunpack.c.l.b16 %v714
        %v2153 = vunpack.c.h.b16 %v714
        %v2154 = vunpack.c.l.b16 %v715
        %v2155 = vunpack.c.h.b16 %v715
        %v2156 = vunpack.c.l.b16 %v716
        %v2157 = vunpack.c.h.b16 %v716
        %v2158 = vunpack.c.l.b16 %v717
        %v2159 = vunpack.c.h.b16 %v717
        %v2160 = vunpack.c.l.b16 %v718
        %v2161 = vunpack.c.h.b16 %v718
        %v2162 = vunpack.c.l.b16 %v719
        %v2163 = vunpack.c.h.b16 %v719
        %v2164 = vunpack.c.l.b16 %v720
        %v2165 = vunpack.c.h.b16 %v720
        %v2166 = vunpack.c.l.b16 %v721
        %v2167 = vunpack.c.h.b16 %v721
        %v2168 = vunpack.c.l.b16 %v722
        %v2169 = vunpack.c.h.b16 %v722
        %v2170 = vunpack.c.l.b16 %v723
        %v2171 = vunpack.c.h.b16 %v723
        %v2172 = vunpack.c.l.b16 %v724
        %v2173 = vunpack.c.h.b16 %v724
        %v2174 = vunpack.c.l.b16 %v725
        %v2175 = vunpack.c.h.b16 %v725
        %v2176 = vunpack.c.l.b16 %v726
        %v2177 = vunpack.c.h.b16 %v726
        %v2178 = vunpack.c.l.b16 %v727
        %v2179 = vunpack.c.h.b16 %v727
        %v2180 = vunpack.c.l.b16 %v728
        %v2181 = vunpack.c.h.b16 %v728
        %v2182 = vunpack.c.l.b16 %v729
        %v2183 = vunpack.c.h.b16 %v729
        %v2184 = vunpack.c.l.b16 %v730
        %v2185 = vunpack.c.h.b16 %v730
        %v2186 = vunpack.c.l.b16 %v731
        %v2187 = vunpack.c.h.b16 %v731
        %v2188 = vunpack.c.l.b16 %v732
        %v2189 = vunpack.c.h.b16 %v732
        %v2190 = vunpack.c.l.b16 %v733
        %v2191 = vunpack.c.h.b16 %v733
        %v2192 = vunpack.c.l.b16 %v734
        %v2193 = vunpack.c.h.b16 %v734
        %v2194 = vunpack.c.l.b16 %v735
        %v2195 = vunpack.c.h.b16 %v735
        %v2196 = vunpack.c.l.b16 %v736
        %v2197 = vunpack.c.h.b16 %v736
        %v2198 = vunpack.c.l.b16 %v737
        %v2199 = vunpack.c.h.b16 %v737
        %v2200 = vunpack.c.l.b16 %v738
        %v2201 = vunpack.c.h.b16 %v738
        %v2202 = vunpack.c.l.b16 %v739
        %v2203 = vunpack.c.h.b16 %v739
        %v2204 = vunpack.c.l.b16 %v740
        %v2205 = vunpack.c.h.b16 %v740
        %v2206 = vunpack.c.l.b16 %v741
        %v2207 = vunpack.c.h.b16 %v741
        %v2208 = vunpack.c.l.b16 %v742
        %v2209 = vunpack.c.h.b16 %v742
        %v2210 = vunpack.c.l.b16 %v743
        %v2211 = vunpack.c.h.b16 %v743
        %v2212 = vunpack.c.l.b16 %v744
        %v2213 = vunpack.c.h.b16 %v744
        %v2214 = vunpack.c.l.b16 %v745
        %v2215 = vunpack.c.h.b16 %v745
        %v2216 = vunpack.c.l.b16 %v746
        %v2217 = vunpack.c.h.b16 %v746
        %v2218 = vunpack.c.l.b16 %v747
        %v2219 = vunpack.c.h.b16 %v747
        %v2220 = vunpack.c.l.b16 %v748
        %v2221 = vunpack.c.h.b16 %v748
        %v2222 = vunpack.c.l.b16 %v749
        %v2223 = vunpack.c.h.b16 %v749
        %v2224 = vunpack.c.l.b16 %v750
        %v2225 = vunpack.c.h.b16 %v750
        %v2226 = vunpack.c.l.b16 %v751
        %v2227 = vunpack.c.h.b16 %v751
        %v2228 = vunpack.c.l.b16 %v752
        %v2229 = vunpack.c.h.b16 %v752
        %v2230 = vunpack.c.l.b16 %v753
        %v2231 = vunpack.c.h.b16 %v753
        %v2232 = vunpack.c.l.b16 %v754
        %v2233 = vunpack.c.h.b16 %v754
        %v2234 = vunpack.c.l.b16 %v755
        %v2235 = vunpack.c.h.b16 %v755
        %v2236 = vunpack.c.l.b16 %v756
        %v2237 = vunpack.c.h.b16 %v756
        %v2238 = vunpack.c.l.b16 %v757
        %v2239 = vunpack.c.h.b16 %v757
        %v2240 = vunpack.c.l.b16 %v758
        %v2241 = vunpack.c.h.b16 %v758
        %v2242 = vunpack.c.l.b16 %v759
        %v2243 = vunpack.c.h.b16 %v759
        %v2244 = vunpack.c.l.b16 %v760
        %v2245 = vunpack.c.h.b16 %v760
        %v2246 = vunpack.c.l.b16 %v761
        %v2247 = vunpack.c.h.b16 %v761
        %v2248 = vunpack.c.l.b16 %v762
        %v2249 = vunpack.c.h.b16 %v762
        %v2250 = vunpack.c.l.b16 %v763
        %v2251 = vunpack.c.h.b16 %v763
        %v2252 = vunpack.c.l.b16 %v764
        %v2253 = vunpack.c.h.b16 %v764
        %v2254 = vunpack.c.l.b16 %v765
        %v2255 = vunpack.c.h.b16 %v765
        %v2256 = vunpack.c.l.b16 %v766
        %v2257 = vunpack.c.h.b16 %v766
        %v2258 = vunpack.c.l.b16 %v767
        %v2259 = vunpack.c.h.b16 %v767
        %v2260 = vunpack.c.l.b16 %v768
        %v2261 = vunpack.c.h.b16 %v768
        %v2262 = vunpack.c.l.b16 %v769
        %v2263 = vunpack.c.h.b16 %v769
        %v2264 = vunpack.c.l.b16 %v770
        %v2265 = vunpack.c.h.b16 %v770
        %v2266 = vunpack.c.l.b16 %v771
        %v2267 = vunpack.c.h.b16 %v771
        %v2268 = vunpack.c.l.b16 %v772
        %v2269 = vunpack.c.h.b16 %v772
        %v2270 = vunpack.c.l.b16 %v773
        %v2271 = vunpack.c.h.b16 %v773
        %v2272 = vunpack.c.l.b16 %v774
        %v2273 = vunpack.c.h.b16 %v774
        %v2274 = vunpack.c.l.b16 %v775
        %v2275 = vunpack.c.h.b16 %v775
        %v2276 = vunpack.c.l.b16 %v776
        %v2277 = vunpack.c.h.b16 %v776
        %v2278 = vunpack.c.l.b16 %v777
        %v2279 = vunpack.c.h.b16 %v777
        %v2280 = vunpack.c.l.b16 %v778
        %v2281 = vunpack.c.h.b16 %v778
        %v2282 = vunpack.c.l.b16 %v779
        %v2283 = vunpack.c.h.b16 %v779
        %v2284 = vunpack.c.l.b16 %v780
        %v2285 = vunpack.c.h.b16 %v780
        %v2286 = vunpack.c.l.b16 %v781
        %v2287 = vunpack.c.h.b16 %v781
        %v2288 = vunpack.c.l.b16 %v782
        %v2289 = vunpack.c.h.b16 %v782
        %v2290 = vunpack.c.l.b16 %v783
        %v2291 = vunpack.c.h.b16 %v783
        %v2292 = vunpack.c.l.b16 %v784
        %v2293 = vunpack.c.h.b16 %v784
        %v2294 = vunpack.c.l.b16 %v785
        %v2295 = vunpack.c.h.b16 %v785
        %v2296 = vunpack.c.l.b16 %v786
        %v2297 = vunpack.c.h.b16 %v786
        %v2298 = vunpack.c.l.b16 %v787
        %v2299 = vunpack.c.h.b16 %v787
        %v2300 = vunpack.c.l.b16 %v788
        %v2301 = vunpack.c.h.b16 %v788
        %v2302 = vunpack.c.l.b16 %v789
        %v2303 = vunpack.c.h.b16 %v789
        %v2304 = vunpack.c.l.b16 %v790
        %v2305 = vunpack.c.h.b16 %v790
        %v2306 = vunpack.c.l.b16 %v791
        %v2307 = vunpack.c.h.b16 %v791
        %v2308 = vunpack.c.l.b16 %v792
        %v2309 = vunpack.c.h.b16 %v792
        %v2310 = vunpack.c.l.b16 %v793
        %v2311 = vunpack.c.h.b16 %v793
        %v2312 = vunpack.c.l.b16 %v794
        %v2313 = vunpack.c.h.b16 %v794
        %v2314 = vunpack.c.l.b16 %v795
        %v2315 = vunpack.c.h.b16 %v795
        %v2316 = vunpack.c.l.b16 %v796
        %v2317 = vunpack.c.h.b16 %v796
        %v2318 = vunpack.c.l.b16 %v797
        %v2319 = vunpack.c.h.b16 %v797
        %v2320 = vunpack.c.l.b16 %v798
        %v2321 = vunpack.c.h.b16 %v798
        %v2322 = vunpack.c.l.b16 %v799
        %v2323 = vunpack.c.h.b16 %v799
        %v2324 = vunpack.c.l.b16 %v800
        %v2325 = vunpack.c.h.b16 %v800
        %v2326 = vunpack.c.l.b16 %v801
        %v2327 = vunpack.c.h.b16 %v801
        %v2328 = vunpack.c.l.b16 %v802
        %v2329 = vunpack.c.h.b16 %v802
        %v2330 = vunpack.c.l.b16 %v803
        %v2331 = vunpack.c.h.b16 %v803
        %v2332 = vunpack.c.l.b16 %v804
        %v2333 = vunpack.c.h.b16 %v804
        %v2334 = vunpack.c.l.b16 %v805
        %v2335 = vunpack.c.h.b16 %v805
        %v2336 = vunpack.c.l.b16 %v806
        %v2337 = vunpack.c.h.b16 %v806
        %v2338 = vunpack.c.l.b16 %v807
        %v2339 = vunpack.c.h.b16 %v807
        %v2340 = vunpack.c.l.b16 %v808
        %v2341 = vunpack.c.h.b16 %v808
        %v2342 = vunpack.c.l.b16 %v809
        %v2343 = vunpack.c.h.b16 %v809
        %v2344 = vunpack.c.l.b16 %v810
        %v2345 = vunpack.c.h.b16 %v810
        %v2346 = vunpack.c.l.b16 %v811
        %v2347 = vunpack.c.h.b16 %v811
        %v2348 = vunpack.c.l.b16 %v812
        %v2349 = vunpack.c.h.b16 %v812
        %v2350 = vunpack.c.l.b16 %v813
        %v2351 = vunpack.c.h.b16 %v813
        %v2352 = vunpack.c.l.b16 %v814
        %v2353 = vunpack.c.h.b16 %v814
        %v2354 = vunpack.c.l.b16 %v815
        %v2355 = vunpack.c.h.b16 %v815
        %v2356 = vunpack.c.l.b16 %v816
        %v2357 = vunpack.c.h.b16 %v816
        %v2358 = vunpack.c.l.b16 %v817
        %v2359 = vunpack.c.h.b16 %v817
        %v2360 = vunpack.c.l.b16 %v818
        %v2361 = vunpack.c.h.b16 %v818
        %v2362 = vunpack.c.l.b16 %v819
        %v2363 = vunpack.c.h.b16 %v819
        %v2364 = vunpack.c.l.b16 %v820
        %v2365 = vunpack.c.h.b16 %v820
        %v2366 = vunpack.c.l.b16 %v821
        %v2367 = vunpack.c.h.b16 %v821
        %v2368 = vunpack.c.l.b16 %v822
        %v2369 = vunpack.c.h.b16 %v822
        %v2370 = vunpack.c.l.b16 %v823
        %v2371 = vunpack.c.h.b16 %v823
        %v2372 = vunpack.c.l.b16 %v824
        %v2373 = vunpack.c.h.b16 %v824
        %v2374 = vunpack.c.l.b16 %v825
        %v2375 = vunpack.c.h.b16 %v825
        %v2376 = vunpack.c.l.b16 %v826
        %v2377 = vunpack.c.h.b16 %v826
        %v2378 = vunpack.c.l.b16 %v827
        %v2379 = vunpack.c.h.b16 %v827
        %v2380 = vunpack.c.l.b16 %v828
        %v2381 = vunpack.c.h.b16 %v828
        %v2382 = vunpack.c.l.b16 %v829
        %v2383 = vunpack.c.h.b16 %v829
        %v2384 = vunpack.c.l.b16 %v830
        %v2385 = vunpack.c.h.b16 %v830
        %v2386 = vunpack.c.l.b16 %v831
        %v2387 = vunpack.c.h.b16 %v831
        %v2388 = vunpack.c.l.b16 %v832
        %v2389 = vunpack.c.h.b16 %v832
        %v2390 = vunpack.c.l.b16 %v833
        %v2391 = vunpack.c.h.b16 %v833
        %v2392 = vunpack.c.l.b16 %v834
        %v2393 = vunpack.c.h.b16 %v834
        %v2394 = vunpack.c.l.b16 %v835
        %v2395 = vunpack.c.h.b16 %v835
        %v2396 = vunpack.c.l.b16 %v836
        %v2397 = vunpack.c.h.b16 %v836
        %v2398 = vunpack.c.l.b16 %v837
        %v2399 = vunpack.c.h.b16 %v837
        %v2400 = vunpack.c.l.b16 %v838
        %v2401 = vunpack.c.h.b16 %v838
        %v2402 = vunpack.c.l.b16 %v839
        %v2403 = vunpack.c.h.b16 %v839
        %v2404 = vunpack.c.l.b16 %v840
        %v2405 = vunpack.c.h.b16 %v840
        %v2406 = vunpack.c.l.b16 %v841
        %v2407 = vunpack.c.h.b16 %v841
        %v2408 = vunpack.c.l.b16 %v842
        %v2409 = vunpack.c.h.b16 %v842
        %v2410 = vunpack.c.l.b16 %v843
        %v2411 = vunpack.c.h.b16 %v843
        %v2412 = vunpack.c.l.b16 %v844
        %v2413 = vunpack.c.h.b16 %v844
        %v2414 = vunpack.c.l.b16 %v845
        %v2415 = vunpack.c.h.b16 %v845
        %v2416 = vunpack.c.l.b16 %v846
        %v2417 = vunpack.c.h.b16 %v846
        %v2418 = vunpack.c.l.b16 %v847
        %v2419 = vunpack.c.h.b16 %v847
        %v2420 = vunpack.c.l.b16 %v848
        %v2421 = vunpack.c.h.b16 %v848
        %v2422 = vunpack.c.l.b16 %v849
        %v2423 = vunpack.c.h.b16 %v849
        %v2424 = vunpack.c.l.b16 %v850
        %v2425 = vunpack.c.h.b16 %v850
        %v2426 = vunpack.c.l.b16 %v851
        %v2427 = vunpack.c.h.b16 %v851
        %v2428 = vunpack.c.l.b16 %v852
        %v2429 = vunpack.c.h.b16 %v852
        %v2430 = vunpack.c.l.b16 %v853
        %v2431 = vunpack.c.h.b16 %v853
        %v2432 = vunpack.c.l.b16 %v854
        %v2433 = vunpack.c.h.b16 %v854
        %v2434 = vunpack.c.l.b16 %v855
        %v2435 = vunpack.c.h.b16 %v855
        %v2436 = vunpack.c.l.b16 %v856
        %v2437 = vunpack.c.h.b16 %v856
        %v2438 = vunpack.c.l.b16 %v857
        %v2439 = vunpack.c.h.b16 %v857
        %v2440 = vunpack.c.l.b16 %v858
        %v2441 = vunpack.c.h.b16 %v858
        %v2442 = vunpack.c.l.b16 %v859
        %v2443 = vunpack.c.h.b16 %v859
        %v2444 = vunpack.c.l.b16 %v860
        %v2445 = vunpack.c.h.b16 %v860
        %v2446 = vunpack.c.l.b16 %v861
        %v2447 = vunpack.c.h.b16 %v861
        %v2448 = vunpack.c.l.b16 %v862
        %v2449 = vunpack.c.h.b16 %v862
        %v2450 = vunpack.c.l.b16 %v863
        %v2451 = vunpack.c.h.b16 %v863
        %v2452 = vunpack.c.l.b16 %v864
        %v2453 = vunpack.c.h.b16 %v864
        %v2454 = vunpack.c.l.b16 %v865
        %v2455 = vunpack.c.h.b16 %v865
        %v2456 = vunpack.c.l.b16 %v866
        %v2457 = vunpack.c.h.b16 %v866
        %v2458 = vunpack.c.l.b16 %v867
        %v2459 = vunpack.c.h.b16 %v867
        %v2460 = vunpack.c.l.b16 %v868
        %v2461 = vunpack.c.h.b16 %v868
        %v2462 = vunpack.c.l.b16 %v869
        %v2463 = vunpack.c.h.b16 %v869
        %v2464 = vunpack.c.l.b16 %v870
        %v2465 = vunpack.c.h.b16 %v870
        %v2466 = vunpack.c.l.b16 %v871
        %v2467 = vunpack.c.h.b16 %v871
        %v2468 = vunpack.c.l.b16 %v872
        %v2469 = vunpack.c.h.b16 %v872
        %v2470 = vunpack.c.l.b16 %v873
        %v2471 = vunpack.c.h.b16 %v873
        %v2472 = vunpack.c.l.b16 %v874
        %v2473 = vunpack.c.h.b16 %v874
        %v2474 = vunpack.c.l.b16 %v875
        %v2475 = vunpack.c.h.b16 %v875
        %v2476 = vunpack.c.l.b16 %v876
        %v2477 = vunpack.c.h.b16 %v876
        %v2478 = vunpack.c.l.b16 %v877
        %v2479 = vunpack.c.h.b16 %v877
        %v2480 = vunpack.c.l.b16 %v878
        %v2481 = vunpack.c.h.b16 %v878
        %v2482 = vunpack.c.l.b16 %v879
        %v2483 = vunpack.c.h.b16 %v879
        %v2484 = vunpack.c.l.b16 %v880
        %v2485 = vunpack.c.h.b16 %v880
        %v2486 = vunpack.c.l.b16 %v881
        %v2487 = vunpack.c.h.b16 %v881
        %v2488 = vunpack.c.l.b16 %v882
        %v2489 = vunpack.c.h.b16 %v882
        %v2490 = vunpack.c.l.b16 %v883
        %v2491 = vunpack.c.h.b16 %v883
        %v2492 = vunpack.c.l.b16 %v884
        %v2493 = vunpack.c.h.b16 %v884
        %v2494 = vunpack.c.l.b16 %v885
        %v2495 = vunpack.c.h.b16 %v885
        %v2496 = vunpack.c.l.b16 %v886
        %v2497 = vunpack.c.h.b16 %v886
        %v2498 = vunpack.c.l.b16 %v887
        %v2499 = vunpack.c.h.b16 %v887
        %v2500 = vunpack.c.l.b16 %v888
        %v2501 = vunpack.c.h.b16 %v888
        %v2502 = vunpack.c.l.b16 %v889
        %v2503 = vunpack.c.h.b16 %v889
        %v2504 = vunpack.c.l.b16 %v890
        %v2505 = vunpack.c.h.b16 %v890
        %v2506 = vunpack.c.l.b16 %v891
        %v2507 = vunpack.c.h.b16 %v891
        %v2508 = vunpack.c.l.b16 %v892
        %v2509 = vunpack.c.h.b16 %v892
        %v2510 = vunpack.c.l.b16 %v893
        %v2511 = vunpack.c.h.b16 %v893
        %v2512 = vunpack.c.l.b16 %v894
        %v2513 = vunpack.c.h.b16 %v894
        %v2514 = vunpack.c.l.b16 %v895
        %v2515 = vunpack.c.h.b16 %v895
        %v2516 = vunpack.c.l.b16 %v896
        %v2517 = vunpack.c.h.b16 %v896
        %v2518 = vunpack.c.l.b16 %v897
        %v2519 = vunpack.c.h.b16 %v897
        %v2520 = vunpack.c.l.b16 %v898
        %v2521 = vunpack.c.h.b16 %v898
        %v2522 = vunpack.c.l.b16 %v899
        %v2523 = vunpack.c.h.b16 %v899
        %v2524 = vunpack.c.l.b16 %v900
        %v2525 = vunpack.c.h.b16 %v900
        %v2526 = vunpack.c.l.b16 %v901
        %v2527 = vunpack.c.h.b16 %v901
        %v2528 = vunpack.c.l.b16 %v902
        %v2529 = vunpack.c.h.b16 %v902
        %v2530 = vunpack.c.l.b16 %v903
        %v2531 = vunpack.c.h.b16 %v903
        %v2532 = vunpack.c.l.b16 %v904
        %v2533 = vunpack.c.h.b16 %v904
        %v2534 = vunpack.c.l.b16 %v905
        %v2535 = vunpack.c.h.b16 %v905
        %v2536 = vunpack.c.l.b16 %v906
        %v2537 = vunpack.c.h.b16 %v906
        %v2538 = vunpack.c.l.b16 %v907
        %v2539 = vunpack.c.h.b16 %v907
        %v2540 = vunpack.c.l.b16 %v908
        %v2541 = vunpack.c.h.b16 %v908
        %v2542 = vunpack.c.l.b16 %v909
        %v2543 = vunpack.c.h.b16 %v909
        %v2544 = vunpack.c.l.b16 %v910
        %v2545 = vunpack.c.h.b16 %v910
        %v2546 = vunpack.c.l.b16 %v911
        %v2547 = vunpack.c.h.b16 %v911
        %v2548 = vunpack.c.l.b16 %v912
        %v2549 = vunpack.c.h.b16 %v912
        %v2550 = vunpack.c.l.b16 %v913
        %v2551 = vunpack.c.h.b16 %v913
        %v2552 = vunpack.c.l.b16 %v914
        %v2553 = vunpack.c.h.b16 %v914
        %v2554 = vunpack.c.l.b16 %v915
        %v2555 = vunpack.c.h.b16 %v915
        %v2556 = vunpack.c.l.b16 %v916
        %v2557 = vunpack.c.h.b16 %v916
        %v2558 = vunpack.c.l.b16 %v917
        %v2559 = vunpack.c.h.b16 %v917
        %v2560 = vunpack.c.l.b16 %v918
        %v2561 = vunpack.c.h.b16 %v918
        %v2562 = vunpack.c.l.b16 %v919
        %v2563 = vunpack.c.h.b16 %v919
        %v2564 = vunpack.c.l.b16 %v920
        %v2565 = vunpack.c.h.b16 %v920
        %v2566 = vunpack.c.l.b16 %v921
        %v2567 = vunpack.c.h.b16 %v921
        %v2568 = vunpack.c.l.b16 %v922
        %v2569 = vunpack.c.h.b16 %v922
        %v2570 = vunpack.c.l.b16 %v923
        %v2571 = vunpack.c.h.b16 %v923
        %v2572 = vunpack.c.l.b16 %v924
        %v2573 = vunpack.c.h.b16 %v924
        %v2574 = vunpack.c.l.b16 %v925
        %v2575 = vunpack.c.h.b16 %v925
        %v2576 = vunpack.c.l.b16 %v926
        %v2577 = vunpack.c.h.b16 %v926
        %v2578 = vunpack.c.l.b16 %v927
        %v2579 = vunpack.c.h.b16 %v927
        %v2580 = vunpack.c.l.b16 %v928
        %v2581 = vunpack.c.h.b16 %v928
        %v2582 = vunpack.c.l.b16 %v929
        %v2583 = vunpack.c.h.b16 %v929
        %v2584 = vunpack.c.l.b16 %v930
        %v2585 = vunpack.c.h.b16 %v930
        %v2586 = vunpack.c.l.b16 %v931
        %v2587 = vunpack.c.h.b16 %v931
        %v2588 = vunpack.c.l.b16 %v932
        %v2589 = vunpack.c.h.b16 %v932
        %v2590 = vunpack.c.l.b16 %v933
        %v2591 = vunpack.c.h.b16 %v933
        %v2592 = vunpack.c.l.b16 %v934
        %v2593 = vunpack.c.h.b16 %v934
        %v2594 = vunpack.c.l.b16 %v935
        %v2595 = vunpack.c.h.b16 %v935
        %v2596 = vunpack.c.l.b16 %v936
        %v2597 = vunpack.c.h.b16 %v936
        %v2598 = vunpack.c.l.b16 %v937
        %v2599 = vunpack.c.h.b16 %v937
        %v2600 = vunpack.c.l.b16 %v938
        %v2601 = vunpack.c.h.b16 %v938
        %v2602 = vunpack.c.l.b16 %v939
        %v2603 = vunpack.c.h.b16 %v939
        %v2604 = vunpack.c.l.b16 %v940
        %v2605 = vunpack.c.h.b16 %v940
        %v2606 = vunpack.c.l.b16 %v941
        %v2607 = vunpack.c.h.b16 %v941
        %v2608 = vunpack.c.l.b16 %v942
        %v2609 = vunpack.c.h.b16 %v942
        %v2610 = vunpack.c.l.b16 %v943
        %v2611 = vunpack.c.h.b16 %v943
        %v2612 = vpack.c.b16 %v1704, %v1700
        %v2613 = vpack.c.b16 %v1705, %v1701
        %v2614 = vpack.c.b16 %v1706, %v1702
        %v2615 = vpack.c.b16 %v1707, %v1703
        %v2616 = vpack.c.b16 %v1712, %v1708
        %v2617 = vpack.c.b16 %v1713, %v1709
        %v2618 = vpack.c.b16 %v1714, %v1710
        %v2619 = vpack.c.b16 %v1715, %v1711
        %v2620 = vpack.c.b16 %v1720, %v1716
        %v2621 = vpack.c.b16 %v1721, %v1717
        %v2622 = vpack.c.b16 %v1722, %v1718
        %v2623 = vpack.c.b16 %v1723, %v1719
        %v2624 = vpack.c.b16 %v1728, %v1724
        %v2625 = vpack.c.b16 %v1729, %v1725
        %v2626 = vpack.c.b16 %v1730, %v1726
        %v2627 = vpack.c.b16 %v1731, %v1727
        %v2628 = vpack.c.b16 %v1736, %v1732
        %v2629 = vpack.c.b16 %v1737, %v1733
        %v2630 = vpack.c.b16 %v1738, %v1734
        %v2631 = vpack.c.b16 %v1739, %v1735
        %v2632 = vpack.c.b16 %v1744, %v1740
        %v2633 = vpack.c.b16 %v1745, %v1741
        %v2634 = vpack.c.b16 %v1746, %v1742
        %v2635 = vpack.c.b16 %v1747, %v1743
        %v2636 = vpack.c.b16 %v1752, %v1748
        %v2637 = vpack.c.b16 %v1753, %v1749
        %v2638 = vpack.c.b16 %v1754, %v1750
        %v2639 = vpack.c.b16 %v1755, %v1751
        %v2640 = vpack.c.b16 %v1760, %v1756
        %v2641 = vpack.c.b16 %v1761, %v1757
        %v2642 = vpack.c.b16 %v1762, %v1758
        %v2643 = vpack.c.b16 %v1763, %v1759
        %v2644 = vpack.c.b16 %v1768, %v1764
        %v2645 = vpack.c.b16 %v1769, %v1765
        %v2646 = vpack.c.b16 %v1770, %v1766
        %v2647 = vpack.c.b16 %v1771, %v1767
        %v2648 = vpack.c.b16 %v1776, %v1772
        %v2649 = vpack.c.b16 %v1777, %v1773
        %v2650 = vpack.c.b16 %v1778, %v1774
        %v2651 = vpack.c.b16 %v1779, %v1775
        %v2652 = vpack.c.b16 %v1784, %v1780
        %v2653 = vpack.c.b16 %v1785, %v1781
        %v2654 = vpack.c.b16 %v1786, %v1782
        %v2655 = vpack.c.b16 %v1787, %v1783
        %v2656 = vpack.c.b16 %v1792, %v1788
        %v2657 = vpack.c.b16 %v1793, %v1789
        %v2658 = vpack.c.b16 %v1794, %v1790
        %v2659 = vpack.c.b16 %v1795, %v1791
        %v2660 = vpack.c.b16 %v1800, %v1796
        %v2661 = vpack.c.b16 %v1801, %v1797
        %v2662 = vpack.c.b16 %v1802, %v1798
        %v2663 = vpack.c.b16 %v1803, %v1799
        %v2664 = vpack.c.b16 %v1808, %v1804
        %v2665 = vpack.c.b16 %v1809, %v1805
        %v2666 = vpack.c.b16 %v1810, %v1806
        %v2667 = vpack.c.b16 %v1811, %v1807
        %v2668 = vpack.c.b16 %v1816, %v1812
        %v2669 = vpack.c.b16 %v1817, %v1813
        %v2670 = vpack.c.b16 %v1818, %v1814
        %v2671 = vpack.c.b16 %v1819, %v1815
        %v2672 = vpack.c.b16 %v1824, %v1820
        %v2673 = vpack.c.b16 %v1825, %v1821
        %v2674 = vpack.c.b16 %v1826, %v1822
        %v2675 = vpack.c.b16 %v1827, %v1823
        %v2676 = vpack.c.b16 %v1832, %v1828
        %v2677 = vpack.c.b16 %v1833, %v1829
        %v2678 = vpack.c.b16 %v1834, %v1830
        %v2679 = vpack.c.b16 %v1835, %v1831
        %v2680 = vpack.c.b16 %v1840, %v1836
        %v2681 = vpack.c.b16 %v1841, %v1837
        %v2682 = vpack.c.b16 %v1842, %v1838
        %v2683 = vpack.c.b16 %v1843, %v1839
        %v2684 = vpack.c.b16 %v1848, %v1844
        %v2685 = vpack.c.b16 %v1849, %v1845
        %v2686 = vpack.c.b16 %v1850, %v1846
        %v2687 = vpack.c.b16 %v1851, %v1847
        %v2688 = vpack.c.b16 %v1856, %v1852
        %v2689 = vpack.c.b16 %v1857, %v1853
        %v2690 = vpack.c.b16 %v1858, %v1854
        %v2691 = vpack.c.b16 %v1859, %v1855
        %v2692 = vpack.c.b16 %v1864, %v1860
        %v2693 = vpack.c.b16 %v1865, %v1861
        %v2694 = vpack.c.b16 %v1866, %v1862
        %v2695 = vpack.c.b16 %v1867, %v1863
        %v2696 = vpack.c.b16 %v1872, %v1868
        %v2697 = vpack.c.b16 %v1873, %v1869
        %v2698 = vpack.c.b16 %v1874, %v1870
        %v2699 = vpack.c.b16 %v1875, %v1871
        %v2700 = vpack.c.b16 %v1880, %v1876
        %v2701 = vpack.c.b16 %v1881, %v1877
        %v2702 = vpack.c.b16 %v1882, %v1878
        %v2703 = vpack.c.b16 %v1883, %v1879
        %v2704 = vpack.c.b16 %v1888, %v1884
        %v2705 = vpack.c.b16 %v1889, %v1885
        %v2706 = vpack.c.b16 %v1890, %v1886
        %v2707 = vpack.c.b16 %v1891, %v1887
        %v2708 = vpack.c.b16 %v1896, %v1892
        %v2709 = vpack.c.b16 %v1897, %v1893
        %v2710 = vpack.c.b16 %v1898, %v1894
        %v2711 = vpack.c.b16 %v1899, %v1895
        %v2712 = vpack.c.b16 %v1904, %v1900
        %v2713 = vpack.c.b16 %v1905, %v1901
        %v2714 = vpack.c.b16 %v1906, %v1902
        %v2715 = vpack.c.b16 %v1907, %v1903
        %v2716 = vpack.c.b16 %v1912, %v1908
        %v2717 = vpack.c.b16 %v1913, %v1909
        %v2718 = vpack.c.b16 %v1914, %v1910
        %v2719 = vpack.c.b16 %v1915, %v1911
        %v2720 = vpack.c.b16 %v1920, %v1916
        %v2721 = vpack.c.b16 %v1921, %v1917
        %v2722 = vpack.c.b16 %v1922, %v1918
        %v2723 = vpack.c.b16 %v1923, %v1919
        %v2724 = vpack.c.b16 %v1928, %v1924
        %v2725 = vpack.c.b16 %v1929, %v1925
        %v2726 = vpack.c.b16 %v1930, %v1926
        %v2727 = vpack.c.b16 %v1931, %v1927
        %v2728 = vpack.c.b16 %v1936, %v1932
        %v2729 = vpack.c.b16 %v1937, %v1933
        %v2730 = vpack.c.b16 %v1938, %v1934
        %v2731 = vpack.c.b16 %v1939, %v1935
        %v2732 = vpack.c.b16 %v1944, %v1940
        %v2733 = vpack.c.b16 %v1945, %v1941
        %v2734 = vpack.c.b16 %v1946, %v1942
        %v2735 = vpack.c.b16 %v1947, %v1943
        %v2736 = vpack.c.b16 %v1952, %v1948
        %v2737 = vpack.c.b16 %v1953, %v1949
        %v2738 = vpack.c.b16 %v1954, %v1950
        %v2739 = vpack.c.b16 %v1955, %v1951
        %v2740 = vpack.c.b16 %v1960, %v1956
        %v2741 = vpack.c.b16 %v1961, %v1957
        %v2742 = vpack.c.b16 %v1962, %v1958
        %v2743 = vpack.c.b16 %v1963, %v1959
        %v2744 = vpack.c.b16 %v1968, %v1964
        %v2745 = vpack.c.b16 %v1969, %v1965
        %v2746 = vpack.c.b16 %v1970, %v1966
        %v2747 = vpack.c.b16 %v1971, %v1967
        %v2748 = vpack.c.b16 %v1976, %v1972
        %v2749 = vpack.c.b16 %v1977, %v1973
        %v2750 = vpack.c.b16 %v1978, %v1974
        %v2751 = vpack.c.b16 %v1979, %v1975
        %v2752 = vpack.c.b16 %v1984, %v1980
        %v2753 = vpack.c.b16 %v1985, %v1981
        %v2754 = vpack.c.b16 %v1986, %v1982
        %v2755 = vpack.c.b16 %v1987, %v1983
        %v2756 = vpack.c.b16 %v1992, %v1988
        %v2757 = vpack.c.b16 %v1993, %v1989
        %v2758 = vpack.c.b16 %v1994, %v1990
        %v2759 = vpack.c.b16 %v1995, %v1991
        %v2760 = vpack.c.b16 %v2000, %v1996
        %v2761 = vpack.c.b16 %v2001, %v1997
        %v2762 = vpack.c.b16 %v2002, %v1998
        %v2763 = vpack.c.b16 %v2003, %v1999
        %v2764 = vpack.c.b16 %v2008, %v2004
        %v2765 = vpack.c.b16 %v2009, %v2005
        %v2766 = vpack.c.b16 %v2010, %v2006
        %v2767 = vpack.c.b16 %v2011, %v2007
        %v2768 = vpack.c.b16 %v2016, %v2012
        %v2769 = vpack.c.b16 %v2017, %v2013
        %v2770 = vpack.c.b16 %v2018, %v2014
        %v2771 = vpack.c.b16 %v2019, %v2015
        %v2772 = vpack.c.b16 %v2024, %v2020
        %v2773 = vpack.c.b16 %v2025, %v2021
        %v2774 = vpack.c.b16 %v2026, %v2022
        %v2775 = vpack.c.b16 %v2027, %v2023
        %v2776 = vpack.c.b16 %v2032, %v2028
        %v2777 = vpack.c.b16 %v2033, %v2029
        %v2778 = vpack.c.b16 %v2034, %v2030
        %v2779 = vpack.c.b16 %v2035, %v2031
        %v2780 = vpack.c.b16 %v2040, %v2036
        %v2781 = vpack.c.b16 %v2041, %v2037
        %v2782 = vpack.c.b16 %v2042, %v2038
        %v2783 = vpack.c.b16 %v2043, %v2039
        %v2784 = vpack.c.b16 %v2048, %v2044
        %v2785 = vpack.c.b16 %v2049, %v2045
        %v2786 = vpack.c.b16 %v2050, %v2046
        %v2787 = vpack.c.b16 %v2051, %v2047
        %v2788 = vpack.c.b16 %v2056, %v2052
        %v2789 = vpack.c.b16 %v2057, %v2053
        %v2790 = vpack.c.b16 %v2058, %v2054
        %v2791 = vpack.c.b16 %v2059, %v2055
        %v2792 = vpack.c.b16 %v2064, %v2060
        %v2793 = vpack.c.b16 %v2065, %v2061
        %v2794 = vpack.c.b16 %v2066, %v2062
        %v2795 = vpack.c.b16 %v2067, %v2063
        %v2796 = vpack.c.b16 %v2072, %v2068
        %v2797 = vpack.c.b16 %v2073, %v2069
        %v2798 = vpack.c.b16 %v2074, %v2070
        %v2799 = vpack.c.b16 %v2075, %v2071
        %v2800 = vpack.c.b16 %v2080, %v2076
        %v2801 = vpack.c.b16 %v2081, %v2077
        %v2802 = vpack.c.b16 %v2082, %v2078
        %v2803 = vpack.c.b16 %v2083, %v2079
        %v2804 = vpack.c.b16 %v2088, %v2084
        %v2805 = vpack.c.b16 %v2089, %v2085
        %v2806 = vpack.c.b16 %v2090, %v2086
        %v2807 = vpack.c.b16 %v2091, %v2087
        %v2808 = vpack.c.b16 %v2096, %v2092
        %v2809 = vpack.c.b16 %v2097, %v2093
        %v2810 = vpack.c.b16 %v2098, %v2094
        %v2811 = vpack.c.b16 %v2099, %v2095
        %v2812 = vpack.c.b16 %v2104, %v2100
        %v2813 = vpack.c.b16 %v2105, %v2101
        %v2814 = vpack.c.b16 %v2106, %v2102
        %v2815 = vpack.c.b16 %v2107, %v2103
        %v2816 = vpack.c.b16 %v2112, %v2108
        %v2817 = vpack.c.b16 %v2113, %v2109
        %v2818 = vpack.c.b16 %v2114, %v2110
        %v2819 = vpack.c.b16 %v2115, %v2111
        %v2820 = vpack.c.b16 %v2120, %v2116
        %v2821 = vpack.c.b16 %v2121, %v2117
        %v2822 = vpack.c.b16 %v2122, %v2118
        %v2823 = vpack.c.b16 %v2123, %v2119
        %v2824 = vpack.c.b16 %v2128, %v2124
        %v2825 = vpack.c.b16 %v2129, %v2125
        %v2826 = vpack.c.b16 %v2130, %v2126
        %v2827 = vpack.c.b16 %v2131, %v2127
        %v2828 = vpack.c.b16 %v2136, %v2132
        %v2829 = vpack.c.b16 %v2137, %v2133
        %v2830 = vpack.c.b16 %v2138, %v2134
        %v2831 = vpack.c.b16 %v2139, %v2135
        %v2832 = vpack.c.b16 %v2144, %v2140
        %v2833 = vpack.c.b16 %v2145, %v2141
        %v2834 = vpack.c.b16 %v2146, %v2142
        %v2835 = vpack.c.b16 %v2147, %v2143
        %v2836 = vpack.c.b16 %v2152, %v2148
        %v2837 = vpack.c.b16 %v2153, %v2149
        %v2838 = vpack.c.b16 %v2154, %v2150
        %v2839 = vpack.c.b16 %v2155, %v2151
        %v2840 = vpack.c.b16 %v2160, %v2156
        %v2841 = vpack.c.b16 %v2161, %v2157
        %v2842 = vpack.c.b16 %v2162, %v2158
        %v2843 = vpack.c.b16 %v2163, %v2159
        %v2844 = vpack.c.b16 %v2168, %v2164
        %v2845 = vpack.c.b16 %v2169, %v2165
        %v2846 = vpack.c.b16 %v2170, %v2166
        %v2847 = vpack.c.b16 %v2171, %v2167
        %v2848 = vpack.c.b16 %v2176, %v2172
        %v2849 = vpack.c.b16 %v2177, %v2173
        %v2850 = vpack.c.b16 %v2178, %v2174
        %v2851 = vpack.c.b16 %v2179, %v2175
        %v2852 = vpack.c.b16 %v2184, %v2180
        %v2853 = vpack.c.b16 %v2185, %v2181
        %v2854 = vpack.c.b16 %v2186, %v2182
        %v2855 = vpack.c.b16 %v2187, %v2183
        %v2856 = vpack.c.b16 %v2192, %v2188
        %v2857 = vpack.c.b16 %v2193, %v2189
        %v2858 = vpack.c.b16 %v2194, %v2190
        %v2859 = vpack.c.b16 %v2195, %v2191
        %v2860 = vpack.c.b16 %v2200, %v2196
        %v2861 = vpack.c.b16 %v2201, %v2197
        %v2862 = vpack.c.b16 %v2202, %v2198
        %v2863 = vpack.c.b16 %v2203, %v2199
        %v2864 = vpack.c.b16 %v2208, %v2204
        %v2865 = vpack.c.b16 %v2209, %v2205
        %v2866 = vpack.c.b16 %v2210, %v2206
        %v2867 = vpack.c.b16 %v2211, %v2207
        %v2868 = vpack.c.b16 %v2216, %v2212
        %v2869 = vpack.c.b16 %v2217, %v2213
        %v2870 = vpack.c.b16 %v2218, %v2214
        %v2871 = vpack.c.b16 %v2219, %v2215
        %v2872 = vpack.c.b16 %v2224, %v2220
        %v2873 = vpack.c.b16 %v2225, %v2221
        %v2874 = vpack.c.b16 %v2226, %v2222
        %v2875 = vpack.c.b16 %v2227, %v2223
        %v2876 = vpack.c.b16 %v2232, %v2228
        %v2877 = vpack.c.b16 %v2233, %v2229
        %v2878 = vpack.c.b16 %v2234, %v2230
        %v2879 = vpack.c.b16 %v2235, %v2231
        %v2880 = vpack.c.b16 %v2240, %v2236
        %v2881 = vpack.c.b16 %v2241, %v2237
        %v2882 = vpack.c.b16 %v2242, %v2238
        %v2883 = vpack.c.b16 %v2243, %v2239
        %v2884 = vpack.c.b16 %v2248, %v2244
        %v2885 = vpack.c.b16 %v2249, %v2245
        %v2886 = vpack.c.b16 %v2250, %v2246
        %v2887 = vpack.c.b16 %v2251, %v2247
        %v2888 = vpack.c.b16 %v2256, %v2252
        %v2889 = vpack.c.b16 %v2257, %v2253
        %v2890 = vpack.c.b16 %v2258, %v2254
        %v2891 = vpack.c.b16 %v2259, %v2255
        %v2892 = vpack.c.b16 %v2264, %v2260
        %v2893 = vpack.c.b16 %v2265, %v2261
        %v2894 = vpack.c.b16 %v2266, %v2262
        %v2895 = vpack.c.b16 %v2267, %v2263
        %v2896 = vpack.c.b16 %v2272, %v2268
        %v2897 = vpack.c.b16 %v2273, %v2269
        %v2898 = vpack.c.b16 %v2274, %v2270
        %v2899 = vpack.c.b16 %v2275, %v2271
        %v2900 = vpack.c.b16 %v2280, %v2276
        %v2901 = vpack.c.b16 %v2281, %v2277
        %v2902 = vpack.c.b16 %v2282, %v2278
        %v2903 = vpack.c.b16 %v2283, %v2279
        %v2904 = vpack.c.b16 %v2288, %v2284
        %v2905 = vpack.c.b16 %v2289, %v2285
        %v2906 = vpack.c.b16 %v2290, %v2286
        %v2907 = vpack.c.b16 %v2291, %v2287
        %v2908 = vpack.c.b16 %v2296, %v2292
        %v2909 = vpack.c.b16 %v2297, %v2293
        %v2910 = vpack.c.b16 %v2298, %v2294
        %v2911 = vpack.c.b16 %v2299, %v2295
        %v2912 = vpack.c.b16 %v2304, %v2300
        %v2913 = vpack.c.b16 %v2305, %v2301
        %v2914 = vpack.c.b16 %v2306, %v2302
        %v2915 = vpack.c.b16 %v2307, %v2303
        %v2916 = vpack.c.b16 %v2312, %v2308
        %v2917 = vpack.c.b16 %v2313, %v2309
        %v2918 = vpack.c.b16 %v2314, %v2310
        %v2919 = vpack.c.b16 %v2315, %v2311
        %v2920 = vpack.c.b16 %v2320, %v2316
        %v2921 = vpack.c.b16 %v2321, %v2317
        %v2922 = vpack.c.b16 %v2322, %v2318
        %v2923 = vpack.c.b16 %v2323, %v2319
        %v2924 = vpack.c.b16 %v2328, %v2324
        %v2925 = vpack.c.b16 %v2329, %v2325
        %v2926 = vpack.c.b16 %v2330, %v2326
        %v2927 = vpack.c.b16 %v2331, %v2327
        %v2928 = vpack.c.b16 %v2336, %v2332
        %v2929 = vpack.c.b16 %v2337, %v2333
        %v2930 = vpack.c.b16 %v2338, %v2334
        %v2931 = vpack.c.b16 %v2339, %v2335
        %v2932 = vpack.c.b16 %v2344, %v2340
        %v2933 = vpack.c.b16 %v2345, %v2341
        %v2934 = vpack.c.b16 %v2346, %v2342
        %v2935 = vpack.c.b16 %v2347, %v2343
        %v2936 = vpack.c.b16 %v2352, %v2348
        %v2937 = vpack.c.b16 %v2353, %v2349
        %v2938 = vpack.c.b16 %v2354, %v2350
        %v2939 = vpack.c.b16 %v2355, %v2351
        %v2940 = vpack.c.b16 %v2360, %v2356
        %v2941 = vpack.c.b16 %v2361, %v2357
        %v2942 = vpack.c.b16 %v2362, %v2358
        %v2943 = vpack.c.b16 %v2363, %v2359
        %v2944 = vpack.c.b16 %v2368, %v2364
        %v2945 = vpack.c.b16 %v2369, %v2365
        %v2946 = vpack.c.b16 %v2370, %v2366
        %v2947 = vpack.c.b16 %v2371, %v2367
        %v2948 = vpack.c.b16 %v2376, %v2372
        %v2949 = vpack.c.b16 %v2377, %v2373
        %v2950 = vpack.c.b16 %v2378, %v2374
        %v2951 = vpack.c.b16 %v2379, %v2375
        %v2952 = vpack.c.b16 %v2384, %v2380
        %v2953 = vpack.c.b16 %v2385, %v2381
        %v2954 = vpack.c.b16 %v2386, %v2382
        %v2955 = vpack.c.b16 %v2387, %v2383
        %v2956 = vpack.c.b16 %v2392, %v2388
        %v2957 = vpack.c.b16 %v2393, %v2389
        %v2958 = vpack.c.b16 %v2394, %v2390
        %v2959 = vpack.c.b16 %v2395, %v2391
        %v2960 = vpack.c.b16 %v2400, %v2396
        %v2961 = vpack.c.b16 %v2401, %v2397
        %v2962 = vpack.c.b16 %v2402, %v2398
        %v2963 = vpack.c.b16 %v2403, %v2399
        %v2964 = vpack.c.b16 %v2408, %v2404
        %v2965 = vpack.c.b16 %v2409, %v2405
        %v2966 = vpack.c.b16 %v2410, %v2406
        %v2967 = vpack.c.b16 %v2411, %v2407
        %v2968 = vpack.c.b16 %v2416, %v2412
        %v2969 = vpack.c.b16 %v2417, %v2413
        %v2970 = vpack.c.b16 %v2418, %v2414
        %v2971 = vpack.c.b16 %v2419, %v2415
        %v2972 = vpack.c.b16 %v2424, %v2420
        %v2973 = vpack.c.b16 %v2425, %v2421
        %v2974 = vpack.c.b16 %v2426, %v2422
        %v2975 = vpack.c.b16 %v2427, %v2423
        %v2976 = vpack.c.b16 %v2432, %v2428
        %v2977 = vpack.c.b16 %v2433, %v2429
        %v2978 = vpack.c.b16 %v2434, %v2430
        %v2979 = vpack.c.b16 %v2435, %v2431
        %v2980 = vpack.c.b16 %v2440, %v2436
        %v2981 = vpack.c.b16 %v2441, %v2437
        %v2982 = vpack.c.b16 %v2442, %v2438
        %v2983 = vpack.c.b16 %v2443, %v2439
        %v2984 = vpack.c.b16 %v2448, %v2444
        %v2985 = vpack.c.b16 %v2449, %v2445
        %v2986 = vpack.c.b16 %v2450, %v2446
        %v2987 = vpack.c.b16 %v2451, %v2447
        %v2988 = vpack.c.b16 %v2456, %v2452
        %v2989 = vpack.c.b16 %v2457, %v2453
        %v2990 = vpack.c.b16 %v2458, %v2454
        %v2991 = vpack.c.b16 %v2459, %v2455
        %v2992 = vpack.c.b16 %v2464, %v2460
        %v2993 = vpack.c.b16 %v2465, %v2461
        %v2994 = vpack.c.b16 %v2466, %v2462
        %v2995 = vpack.c.b16 %v2467, %v2463
        %v2996 = vpack.c.b16 %v2472, %v2468
        %v2997 = vpack.c.b16 %v2473, %v2469
        %v2998 = vpack.c.b16 %v2474, %v2470
        %v2999 = vpack.c.b16 %v2475, %v2471
        %v3000 = vpack.c.b16 %v2480, %v2476
        %v3001 = vpack.c.b16 %v2481, %v2477
        %v3002 = vpack.c.b16 %v2482, %v2478
        %v3003 = vpack.c.b16 %v2483, %v2479
        %v3004 = vpack.c.b16 %v2488, %v2484
        %v3005 = vpack.c.b16 %v2489, %v2485
        %v3006 = vpack.c.b16 %v2490, %v2486
        %v3007 = vpack.c.b16 %v2491, %v2487
        %v3008 = vpack.c.b16 %v2496, %v2492
        %v3009 = vpack.c.b16 %v2497, %v2493
        %v3010 = vpack.c.b16 %v2498, %v2494
        %v3011 = vpack.c.b16 %v2499, %v2495
        %v3012 = vpack.c.b16 %v2504, %v2500
        %v3013 = vpack.c.b16 %v2505, %v2501
        %v3014 = vpack.c.b16 %v2506, %v2502
        %v3015 = vpack.c.b16 %v2507, %v2503
        %v3016 = vpack.c.b16 %v2512, %v2508
        %v3017 = vpack.c.b16 %v2513, %v2509
        %v3018 = vpack.c.b16 %v2514, %v2510
        %v3019 = vpack.c.b16 %v2515, %v2511
        %v3020 = vpack.c.b16 %v2520, %v2516
        %v3021 = vpack.c.b16 %v2521, %v2517
        %v3022 = vpack.c.b16 %v2522, %v2518
        %v3023 = vpack.c.b16 %v2523, %v2519
        %v3024 = vpack.c.b16 %v2528, %v2524
        %v3025 = vpack.c.b16 %v2529, %v2525
        %v3026 = vpack.c.b16 %v2530, %v2526
        %v3027 = vpack.c.b16 %v2531, %v2527
        %v3028 = vpack.c.b16 %v2536, %v2532
        %v3029 = vpack.c.b16 %v2537, %v2533
        %v3030 = vpack.c.b16 %v2538, %v2534
        %v3031 = vpack.c.b16 %v2539, %v2535
        %v3032 = vpack.c.b16 %v2544, %v2540
        %v3033 = vpack.c.b16 %v2545, %v2541
        %v3034 = vpack.c.b16 %v2546, %v2542
        %v3035 = vpack.c.b16 %v2547, %v2543
        %v3036 = vpack.c.b16 %v2552, %v2548
        %v3037 = vpack.c.b16 %v2553, %v2549
        %v3038 = vpack.c.b16 %v2554, %v2550
        %v3039 = vpack.c.b16 %v2555, %v2551
        %v3040 = vpack.c.b16 %v2560, %v2556
        %v3041 = vpack.c.b16 %v2561, %v2557
        %v3042 = vpack.c.b16 %v2562, %v2558
        %v3043 = vpack.c.b16 %v2563, %v2559
        %v3044 = vpack.c.b16 %v2568, %v2564
        %v3045 = vpack.c.b16 %v2569, %v2565
        %v3046 = vpack.c.b16 %v2570, %v2566
        %v3047 = vpack.c.b16 %v2571, %v2567
        %v3048 = vpack.c.b16 %v2576, %v2572
        %v3049 = vpack.c.b16 %v2577, %v2573
        %v3050 = vpack.c.b16 %v2578, %v2574
        %v3051 = vpack.c.b16 %v2579, %v2575
        %v3052 = vpack.c.b16 %v2584, %v2580
        %v3053 = vpack.c.b16 %v2585, %v2581
        %v3054 = vpack.c.b16 %v2586, %v2582
        %v3055 = vpack.c.b16 %v2587, %v2583
        %v3056 = vpack.c.b16 %v2592, %v2588
        %v3057 = vpack.c.b16 %v2593, %v2589
        %v3058 = vpack.c.b16 %v2594, %v2590
        %v3059 = vpack.c.b16 %v2595, %v2591
        %v3060 = vpack.c.b16 %v2600, %v2596
        %v3061 = vpack.c.b16 %v2601, %v2597
        %v3062 = vpack.c.b16 %v2602, %v2598
        %v3063 = vpack.c.b16 %v2603, %v2599
        %v3064 = vpack.c.b16 %v2608, %v2604
        %v3065 = vpack.c.b16 %v2609, %v2605
        %v3066 = vpack.c.b16 %v2610, %v2606
        %v3067 = vpack.c.b16 %v2611, %v2607
        %vm3524 = vcmask 261120
        %v3526 = vsel %vm3524, %v1142, 0
        %v3529 = vsel %vm3524, %v1157, 0
        %v3532 = vsel %vm3524, %v1172, 0
        %v3535 = vsel %vm3524, %v1187, 0
        %3537 = vmatprep.subr.bf16.mxu0 %v2641
        %3538 = vmatpush1.bf16.msra.mxu0 %v2640
        %3539 = vmatprep.subr.bf16.mxu0 %v2637
        %3540 = vmatpush1.bf16.msra.mxu0 %v2636
        %3541 = vmatprep.subr.bf16.mxu0 %v2633
        %3542 = vmatpush1.bf16.msra.mxu0 %v2632
        %3543 = vmatprep.subr.bf16.mxu0 %v2629
        %3544 = vmatpush1.bf16.msra.mxu0 %v2628
        %3545 = vmatprep.subr.bf16.mxu0 %v2625
        %3546 = vmatpush1.bf16.msra.mxu0 %v2624
        %3547 = vmatprep.subr.bf16.mxu0 %v2621
        %3548 = vmatpush1.bf16.msra.mxu0 %v2620
        %3549 = vmatprep.subr.bf16.mxu0 %v2617
        %3550 = vmatpush1.bf16.msra.mxu0 %v2616
        %3551 = vmatprep.subr.bf16.mxu0 %v2613
        %3552 = vmatpush1.bf16.msra.mxu0 %v2612
        %3553 = vmatprep.subr.bf16.mxu0 %v2673
        %3554 = vmatpush2.bf16.msra.mxu0 %v2672
        %3555 = vmatprep.subr.bf16.mxu0 %v2669
        %3556 = vmatpush2.bf16.msra.mxu0 %v2668
        %3557 = vmatprep.subr.bf16.mxu0 %v2665
        %3558 = vmatpush2.bf16.msra.mxu0 %v2664
        %3559 = vmatprep.subr.bf16.mxu0 %v2661
        %3560 = vmatpush2.bf16.msra.mxu0 %v2660
        %3561 = vmatprep.subr.bf16.mxu0 %v2657
        %3562 = vmatpush2.bf16.msra.mxu0 %v2656
        %3563 = vmatprep.subr.bf16.mxu0 %v2653
        %3564 = vmatpush2.bf16.msra.mxu0 %v2652
        %3565 = vmatprep.subr.bf16.mxu0 %v2649
        %3566 = vmatpush2.bf16.msra.mxu0 %v2648
        %3567 = vmatprep.subr.bf16.mxu0 %v2645
        %3568 = vmatpush2.bf16.msra.mxu0 %v2644
        %3569 = vmatprep.mubr.bf16.mxu0 %v1129
        %3570 = vmatmul.mubr.bf16.gmra.mxu0 %v1128
        %v3571 = vpop.f32.mrf.mxu0
        %v3572 = vadd.f32 0.0, %v3571
        %v3573 = vpop.f32.mrf.mxu0
        %v3574 = vadd.f32 0.0, %v3573
        %v3575 = vpop.f32.mrf.mxu0
        %v3576 = vadd.f32 0.0, %v3575
        %v3577 = vpop.f32.mrf.mxu0
        %v3578 = vadd.f32 0.0, %v3577
        %3579 = vmatprep.mubr.bf16.mxu0 %v1144
        %3580 = vmatmul.mubr.bf16.gmra.mxu0 %v1143
        %v3581 = vpop.f32.mrf.mxu0
        %v3582 = vadd.f32 0.0, %v3581
        %v3583 = vpop.f32.mrf.mxu0
        %v3584 = vadd.f32 0.0, %v3583
        %v3585 = vpop.f32.mrf.mxu0
        %v3586 = vadd.f32 0.0, %v3585
        %v3587 = vpop.f32.mrf.mxu0
        %v3588 = vadd.f32 0.0, %v3587
        %3589 = vmatprep.mubr.bf16.mxu0 %v1159
        %3590 = vmatmul.mubr.bf16.gmra.mxu0 %v1158
        %v3591 = vpop.f32.mrf.mxu0
        %v3592 = vadd.f32 0.0, %v3591
        %v3593 = vpop.f32.mrf.mxu0
        %v3594 = vadd.f32 0.0, %v3593
        %v3595 = vpop.f32.mrf.mxu0
        %v3596 = vadd.f32 0.0, %v3595
        %v3597 = vpop.f32.mrf.mxu0
        %v3598 = vadd.f32 0.0, %v3597
        %3599 = vmatprep.mubr.bf16.mxu0 %v1174
        %3600 = vmatmul.mubr.bf16.gmra.mxu0 %v1173
        %v3601 = vpop.f32.mrf.mxu0
        %v3602 = vadd.f32 0.0, %v3601
        %v3603 = vpop.f32.mrf.mxu0
        %v3604 = vadd.f32 0.0, %v3603
        %v3605 = vpop.f32.mrf.mxu0
        %v3606 = vadd.f32 0.0, %v3605
        %v3607 = vpop.f32.mrf.mxu0
        %v3608 = vadd.f32 0.0, %v3607
        %3609 = vdwg.mxu0
        %3610 = vmatprep.subr.bf16.mxu0 %v2705
        %3611 = vmatpush1.bf16.msra.mxu0 %v2704
        %3612 = vmatprep.subr.bf16.mxu0 %v2701
        %3613 = vmatpush1.bf16.msra.mxu0 %v2700
        %3614 = vmatprep.subr.bf16.mxu0 %v2697
        %3615 = vmatpush1.bf16.msra.mxu0 %v2696
        %3616 = vmatprep.subr.bf16.mxu0 %v2693
        %3617 = vmatpush1.bf16.msra.mxu0 %v2692
        %3618 = vmatprep.subr.bf16.mxu0 %v2689
        %3619 = vmatpush1.bf16.msra.mxu0 %v2688
        %3620 = vmatprep.subr.bf16.mxu0 %v2685
        %3621 = vmatpush1.bf16.msra.mxu0 %v2684
        %3622 = vmatprep.subr.bf16.mxu0 %v2681
        %3623 = vmatpush1.bf16.msra.mxu0 %v2680
        %3624 = vmatprep.subr.bf16.mxu0 %v2677
        %3625 = vmatpush1.bf16.msra.mxu0 %v2676
        %3626 = vmatprep.subr.bf16.mxu0 %v2737
        %3627 = vmatpush2.bf16.msra.mxu0 %v2736
        %3628 = vmatprep.subr.bf16.mxu0 %v2733
        %3629 = vmatpush2.bf16.msra.mxu0 %v2732
        %3630 = vmatprep.subr.bf16.mxu0 %v2729
        %3631 = vmatpush2.bf16.msra.mxu0 %v2728
        %3632 = vmatprep.subr.bf16.mxu0 %v2725
        %3633 = vmatpush2.bf16.msra.mxu0 %v2724
        %3634 = vmatprep.subr.bf16.mxu0 %v2721
        %3635 = vmatpush2.bf16.msra.mxu0 %v2720
        %3636 = vmatprep.subr.bf16.mxu0 %v2717
        %3637 = vmatpush2.bf16.msra.mxu0 %v2716
        %3638 = vmatprep.subr.bf16.mxu0 %v2713
        %3639 = vmatpush2.bf16.msra.mxu0 %v2712
        %3640 = vmatprep.subr.bf16.mxu0 %v2709
        %3641 = vmatpush2.bf16.msra.mxu0 %v2708
        %3642 = vmatprep.mubr.bf16.mxu0 %v1131
        %3643 = vmatmul.mubr.bf16.gmra.mxu0 %v1130
        %v3644 = vpop.f32.mrf.mxu0
        %v3645 = vadd.f32 %v3572, %v3644
        %v3646 = vpop.f32.mrf.mxu0
        %v3647 = vadd.f32 %v3574, %v3646
        %v3648 = vpop.f32.mrf.mxu0
        %v3649 = vadd.f32 %v3576, %v3648
        %v3650 = vpop.f32.mrf.mxu0
        %v3651 = vadd.f32 %v3578, %v3650
        %3652 = vmatprep.mubr.bf16.mxu0 %v1146
        %3653 = vmatmul.mubr.bf16.gmra.mxu0 %v1145
        %v3654 = vpop.f32.mrf.mxu0
        %v3655 = vadd.f32 %v3582, %v3654
        %v3656 = vpop.f32.mrf.mxu0
        %v3657 = vadd.f32 %v3584, %v3656
        %v3658 = vpop.f32.mrf.mxu0
        %v3659 = vadd.f32 %v3586, %v3658
        %v3660 = vpop.f32.mrf.mxu0
        %v3661 = vadd.f32 %v3588, %v3660
        %3662 = vmatprep.mubr.bf16.mxu0 %v1161
        %3663 = vmatmul.mubr.bf16.gmra.mxu0 %v1160
        %v3664 = vpop.f32.mrf.mxu0
        %v3665 = vadd.f32 %v3592, %v3664
        %v3666 = vpop.f32.mrf.mxu0
        %v3667 = vadd.f32 %v3594, %v3666
        %v3668 = vpop.f32.mrf.mxu0
        %v3669 = vadd.f32 %v3596, %v3668
        %v3670 = vpop.f32.mrf.mxu0
        %v3671 = vadd.f32 %v3598, %v3670
        %3672 = vmatprep.mubr.bf16.mxu0 %v1176
        %3673 = vmatmul.mubr.bf16.gmra.mxu0 %v1175
        %v3674 = vpop.f32.mrf.mxu0
        %v3675 = vadd.f32 %v3602, %v3674
        %v3676 = vpop.f32.mrf.mxu0
        %v3677 = vadd.f32 %v3604, %v3676
        %v3678 = vpop.f32.mrf.mxu0
        %v3679 = vadd.f32 %v3606, %v3678
        %v3680 = vpop.f32.mrf.mxu0
        %v3681 = vadd.f32 %v3608, %v3680
        %3682 = vdwg.mxu0
        %3683 = vmatprep.subr.bf16.mxu0 %v2769
        %3684 = vmatpush1.bf16.msra.mxu0 %v2768
        %3685 = vmatprep.subr.bf16.mxu0 %v2765
        %3686 = vmatpush1.bf16.msra.mxu0 %v2764
        %3687 = vmatprep.subr.bf16.mxu0 %v2761
        %3688 = vmatpush1.bf16.msra.mxu0 %v2760
        %3689 = vmatprep.subr.bf16.mxu0 %v2757
        %3690 = vmatpush1.bf16.msra.mxu0 %v2756
        %3691 = vmatprep.subr.bf16.mxu0 %v2753
        %3692 = vmatpush1.bf16.msra.mxu0 %v2752
        %3693 = vmatprep.subr.bf16.mxu0 %v2749
        %3694 = vmatpush1.bf16.msra.mxu0 %v2748
        %3695 = vmatprep.subr.bf16.mxu0 %v2745
        %3696 = vmatpush1.bf16.msra.mxu0 %v2744
        %3697 = vmatprep.subr.bf16.mxu0 %v2741
        %3698 = vmatpush1.bf16.msra.mxu0 %v2740
        %3699 = vmatprep.subr.bf16.mxu0 %v2801
        %3700 = vmatpush2.bf16.msra.mxu0 %v2800
        %3701 = vmatprep.subr.bf16.mxu0 %v2797
        %3702 = vmatpush2.bf16.msra.mxu0 %v2796
        %3703 = vmatprep.subr.bf16.mxu0 %v2793
        %3704 = vmatpush2.bf16.msra.mxu0 %v2792
        %3705 = vmatprep.subr.bf16.mxu0 %v2789
        %3706 = vmatpush2.bf16.msra.mxu0 %v2788
        %3707 = vmatprep.subr.bf16.mxu0 %v2785
        %3708 = vmatpush2.bf16.msra.mxu0 %v2784
        %3709 = vmatprep.subr.bf16.mxu0 %v2781
        %3710 = vmatpush2.bf16.msra.mxu0 %v2780
        %3711 = vmatprep.subr.bf16.mxu0 %v2777
        %3712 = vmatpush2.bf16.msra.mxu0 %v2776
        %3713 = vmatprep.subr.bf16.mxu0 %v2773
        %3714 = vmatpush2.bf16.msra.mxu0 %v2772
        %3715 = vmatprep.mubr.bf16.mxu0 %v1133
        %3716 = vmatmul.mubr.bf16.gmra.mxu0 %v1132
        %v3717 = vpop.f32.mrf.mxu0
        %v3718 = vadd.f32 %v3645, %v3717
        %v3719 = vpop.f32.mrf.mxu0
        %v3720 = vadd.f32 %v3647, %v3719
        %v3721 = vpop.f32.mrf.mxu0
        %v3722 = vadd.f32 %v3649, %v3721
        %v3723 = vpop.f32.mrf.mxu0
        %v3724 = vadd.f32 %v3651, %v3723
        %3725 = vmatprep.mubr.bf16.mxu0 %v1148
        %3726 = vmatmul.mubr.bf16.gmra.mxu0 %v1147
        %v3727 = vpop.f32.mrf.mxu0
        %v3728 = vadd.f32 %v3655, %v3727
        %v3729 = vpop.f32.mrf.mxu0
        %v3730 = vadd.f32 %v3657, %v3729
        %v3731 = vpop.f32.mrf.mxu0
        %v3732 = vadd.f32 %v3659, %v3731
        %v3733 = vpop.f32.mrf.mxu0
        %v3734 = vadd.f32 %v3661, %v3733
        %3735 = vmatprep.mubr.bf16.mxu0 %v1163
        %3736 = vmatmul.mubr.bf16.gmra.mxu0 %v1162
        %v3737 = vpop.f32.mrf.mxu0
        %v3738 = vadd.f32 %v3665, %v3737
        %v3739 = vpop.f32.mrf.mxu0
        %v3740 = vadd.f32 %v3667, %v3739
        %v3741 = vpop.f32.mrf.mxu0
        %v3742 = vadd.f32 %v3669, %v3741
        %v3743 = vpop.f32.mrf.mxu0
        %v3744 = vadd.f32 %v3671, %v3743
        %3745 = vmatprep.mubr.bf16.mxu0 %v1178
        %3746 = vmatmul.mubr.bf16.gmra.mxu0 %v1177
        %v3747 = vpop.f32.mrf.mxu0
        %v3748 = vadd.f32 %v3675, %v3747
        %v3749 = vpop.f32.mrf.mxu0
        %v3750 = vadd.f32 %v3677, %v3749
        %v3751 = vpop.f32.mrf.mxu0
        %v3752 = vadd.f32 %v3679, %v3751
        %v3753 = vpop.f32.mrf.mxu0
        %v3754 = vadd.f32 %v3681, %v3753
        %3755 = vdwg.mxu0
        %3756 = vmatprep.subr.bf16.mxu0 %v2833
        %3757 = vmatpush1.bf16.msra.mxu0 %v2832
        %3758 = vmatprep.subr.bf16.mxu0 %v2829
        %3759 = vmatpush1.bf16.msra.mxu0 %v2828
        %3760 = vmatprep.subr.bf16.mxu0 %v2825
        %3761 = vmatpush1.bf16.msra.mxu0 %v2824
        %3762 = vmatprep.subr.bf16.mxu0 %v2821
        %3763 = vmatpush1.bf16.msra.mxu0 %v2820
        %3764 = vmatprep.subr.bf16.mxu0 %v2817
        %3765 = vmatpush1.bf16.msra.mxu0 %v2816
        %3766 = vmatprep.subr.bf16.mxu0 %v2813
        %3767 = vmatpush1.bf16.msra.mxu0 %v2812
        %3768 = vmatprep.subr.bf16.mxu0 %v2809
        %3769 = vmatpush1.bf16.msra.mxu0 %v2808
        %3770 = vmatprep.subr.bf16.mxu0 %v2805
        %3771 = vmatpush1.bf16.msra.mxu0 %v2804
        %3772 = vmatprep.subr.bf16.mxu0 %v2865
        %3773 = vmatpush2.bf16.msra.mxu0 %v2864
        %3774 = vmatprep.subr.bf16.mxu0 %v2861
        %3775 = vmatpush2.bf16.msra.mxu0 %v2860
        %3776 = vmatprep.subr.bf16.mxu0 %v2857
        %3777 = vmatpush2.bf16.msra.mxu0 %v2856
        %3778 = vmatprep.subr.bf16.mxu0 %v2853
        %3779 = vmatpush2.bf16.msra.mxu0 %v2852
        %3780 = vmatprep.subr.bf16.mxu0 %v2849
        %3781 = vmatpush2.bf16.msra.mxu0 %v2848
        %3782 = vmatprep.subr.bf16.mxu0 %v2845
        %3783 = vmatpush2.bf16.msra.mxu0 %v2844
        %3784 = vmatprep.subr.bf16.mxu0 %v2841
        %3785 = vmatpush2.bf16.msra.mxu0 %v2840
        %3786 = vmatprep.subr.bf16.mxu0 %v2837
        %3787 = vmatpush2.bf16.msra.mxu0 %v2836
        %3788 = vmatprep.mubr.bf16.mxu0 %v1135
        %3789 = vmatmul.mubr.bf16.gmra.mxu0 %v1134
        %v3790 = vpop.f32.mrf.mxu0
        %v3791 = vadd.f32 %v3718, %v3790
        %v3792 = vpop.f32.mrf.mxu0
        %v3793 = vadd.f32 %v3720, %v3792
        %v3794 = vpop.f32.mrf.mxu0
        %v3795 = vadd.f32 %v3722, %v3794
        %v3796 = vpop.f32.mrf.mxu0
        %v3797 = vadd.f32 %v3724, %v3796
        %3798 = vmatprep.mubr.bf16.mxu0 %v1150
        %3799 = vmatmul.mubr.bf16.gmra.mxu0 %v1149
        %v3800 = vpop.f32.mrf.mxu0
        %v3801 = vadd.f32 %v3728, %v3800
        %v3802 = vpop.f32.mrf.mxu0
        %v3803 = vadd.f32 %v3730, %v3802
        %v3804 = vpop.f32.mrf.mxu0
        %v3805 = vadd.f32 %v3732, %v3804
        %v3806 = vpop.f32.mrf.mxu0
        %v3807 = vadd.f32 %v3734, %v3806
        %3808 = vmatprep.mubr.bf16.mxu0 %v1165
        %3809 = vmatmul.mubr.bf16.gmra.mxu0 %v1164
        %v3810 = vpop.f32.mrf.mxu0
        %v3811 = vadd.f32 %v3738, %v3810
        %v3812 = vpop.f32.mrf.mxu0
        %v3813 = vadd.f32 %v3740, %v3812
        %v3814 = vpop.f32.mrf.mxu0
        %v3815 = vadd.f32 %v3742, %v3814
        %v3816 = vpop.f32.mrf.mxu0
        %v3817 = vadd.f32 %v3744, %v3816
        %3818 = vmatprep.mubr.bf16.mxu0 %v1180
        %3819 = vmatmul.mubr.bf16.gmra.mxu0 %v1179
        %v3820 = vpop.f32.mrf.mxu0
        %v3821 = vadd.f32 %v3748, %v3820
        %v3822 = vpop.f32.mrf.mxu0
        %v3823 = vadd.f32 %v3750, %v3822
        %v3824 = vpop.f32.mrf.mxu0
        %v3825 = vadd.f32 %v3752, %v3824
        %v3826 = vpop.f32.mrf.mxu0
        %v3827 = vadd.f32 %v3754, %v3826
        %3828 = vdwg.mxu0
        %3829 = vmatprep.subr.bf16.mxu0 %v2897
        %3830 = vmatpush1.bf16.msra.mxu0 %v2896
        %3831 = vmatprep.subr.bf16.mxu0 %v2893
        %3832 = vmatpush1.bf16.msra.mxu0 %v2892
        %3833 = vmatprep.subr.bf16.mxu0 %v2889
        %3834 = vmatpush1.bf16.msra.mxu0 %v2888
        %3835 = vmatprep.subr.bf16.mxu0 %v2885
        %3836 = vmatpush1.bf16.msra.mxu0 %v2884
        %3837 = vmatprep.subr.bf16.mxu0 %v2881
        %3838 = vmatpush1.bf16.msra.mxu0 %v2880
        %3839 = vmatprep.subr.bf16.mxu0 %v2877
        %3840 = vmatpush1.bf16.msra.mxu0 %v2876
        %3841 = vmatprep.subr.bf16.mxu0 %v2873
        %3842 = vmatpush1.bf16.msra.mxu0 %v2872
        %3843 = vmatprep.subr.bf16.mxu0 %v2869
        %3844 = vmatpush1.bf16.msra.mxu0 %v2868
        %3845 = vmatprep.subr.bf16.mxu0 %v2929
        %3846 = vmatpush2.bf16.msra.mxu0 %v2928
        %3847 = vmatprep.subr.bf16.mxu0 %v2925
        %3848 = vmatpush2.bf16.msra.mxu0 %v2924
        %3849 = vmatprep.subr.bf16.mxu0 %v2921
        %3850 = vmatpush2.bf16.msra.mxu0 %v2920
        %3851 = vmatprep.subr.bf16.mxu0 %v2917
        %3852 = vmatpush2.bf16.msra.mxu0 %v2916
        %3853 = vmatprep.subr.bf16.mxu0 %v2913
        %3854 = vmatpush2.bf16.msra.mxu0 %v2912
        %3855 = vmatprep.subr.bf16.mxu0 %v2909
        %3856 = vmatpush2.bf16.msra.mxu0 %v2908
        %3857 = vmatprep.subr.bf16.mxu0 %v2905
        %3858 = vmatpush2.bf16.msra.mxu0 %v2904
        %3859 = vmatprep.subr.bf16.mxu0 %v2901
        %3860 = vmatpush2.bf16.msra.mxu0 %v2900
        %3861 = vmatprep.mubr.bf16.mxu0 %v1137
        %3862 = vmatmul.mubr.bf16.gmra.mxu0 %v1136
        %v3863 = vpop.f32.mrf.mxu0
        %v3864 = vadd.f32 %v3791, %v3863
        %v3865 = vpop.f32.mrf.mxu0
        %v3866 = vadd.f32 %v3793, %v3865
        %v3867 = vpop.f32.mrf.mxu0
        %v3868 = vadd.f32 %v3795, %v3867
        %v3869 = vpop.f32.mrf.mxu0
        %v3870 = vadd.f32 %v3797, %v3869
        %3871 = vmatprep.mubr.bf16.mxu0 %v1152
        %3872 = vmatmul.mubr.bf16.gmra.mxu0 %v1151
        %v3873 = vpop.f32.mrf.mxu0
        %v3874 = vadd.f32 %v3801, %v3873
        %v3875 = vpop.f32.mrf.mxu0
        %v3876 = vadd.f32 %v3803, %v3875
        %v3877 = vpop.f32.mrf.mxu0
        %v3878 = vadd.f32 %v3805, %v3877
        %v3879 = vpop.f32.mrf.mxu0
        %v3880 = vadd.f32 %v3807, %v3879
        %3881 = vmatprep.mubr.bf16.mxu0 %v1167
        %3882 = vmatmul.mubr.bf16.gmra.mxu0 %v1166
        %v3883 = vpop.f32.mrf.mxu0
        %v3884 = vadd.f32 %v3811, %v3883
        %v3885 = vpop.f32.mrf.mxu0
        %v3886 = vadd.f32 %v3813, %v3885
        %v3887 = vpop.f32.mrf.mxu0
        %v3888 = vadd.f32 %v3815, %v3887
        %v3889 = vpop.f32.mrf.mxu0
        %v3890 = vadd.f32 %v3817, %v3889
        %3891 = vmatprep.mubr.bf16.mxu0 %v1182
        %3892 = vmatmul.mubr.bf16.gmra.mxu0 %v1181
        %v3893 = vpop.f32.mrf.mxu0
        %v3894 = vadd.f32 %v3821, %v3893
        %v3895 = vpop.f32.mrf.mxu0
        %v3896 = vadd.f32 %v3823, %v3895
        %v3897 = vpop.f32.mrf.mxu0
        %v3898 = vadd.f32 %v3825, %v3897
        %v3899 = vpop.f32.mrf.mxu0
        %v3900 = vadd.f32 %v3827, %v3899
        %3901 = vdwg.mxu0
        %3902 = vmatprep.subr.bf16.mxu0 %v2961
        %3903 = vmatpush1.bf16.msra.mxu0 %v2960
        %3904 = vmatprep.subr.bf16.mxu0 %v2957
        %3905 = vmatpush1.bf16.msra.mxu0 %v2956
        %3906 = vmatprep.subr.bf16.mxu0 %v2953
        %3907 = vmatpush1.bf16.msra.mxu0 %v2952
        %3908 = vmatprep.subr.bf16.mxu0 %v2949
        %3909 = vmatpush1.bf16.msra.mxu0 %v2948
        %3910 = vmatprep.subr.bf16.mxu0 %v2945
        %3911 = vmatpush1.bf16.msra.mxu0 %v2944
        %3912 = vmatprep.subr.bf16.mxu0 %v2941
        %3913 = vmatpush1.bf16.msra.mxu0 %v2940
        %3914 = vmatprep.subr.bf16.mxu0 %v2937
        %3915 = vmatpush1.bf16.msra.mxu0 %v2936
        %3916 = vmatprep.subr.bf16.mxu0 %v2933
        %3917 = vmatpush1.bf16.msra.mxu0 %v2932
        %3918 = vmatprep.subr.bf16.mxu0 %v2993
        %3919 = vmatpush2.bf16.msra.mxu0 %v2992
        %3920 = vmatprep.subr.bf16.mxu0 %v2989
        %3921 = vmatpush2.bf16.msra.mxu0 %v2988
        %3922 = vmatprep.subr.bf16.mxu0 %v2985
        %3923 = vmatpush2.bf16.msra.mxu0 %v2984
        %3924 = vmatprep.subr.bf16.mxu0 %v2981
        %3925 = vmatpush2.bf16.msra.mxu0 %v2980
        %3926 = vmatprep.subr.bf16.mxu0 %v2977
        %3927 = vmatpush2.bf16.msra.mxu0 %v2976
        %3928 = vmatprep.subr.bf16.mxu0 %v2973
        %3929 = vmatpush2.bf16.msra.mxu0 %v2972
        %3930 = vmatprep.subr.bf16.mxu0 %v2969
        %3931 = vmatpush2.bf16.msra.mxu0 %v2968
        %3932 = vmatprep.subr.bf16.mxu0 %v2965
        %3933 = vmatpush2.bf16.msra.mxu0 %v2964
        %3934 = vmatprep.mubr.bf16.mxu0 %v1139
        %3935 = vmatmul.mubr.bf16.gmra.mxu0 %v1138
        %v3936 = vpop.f32.mrf.mxu0
        %v3937 = vadd.f32 %v3864, %v3936
        %v3938 = vpop.f32.mrf.mxu0
        %v3939 = vadd.f32 %v3866, %v3938
        %v3940 = vpop.f32.mrf.mxu0
        %v3941 = vadd.f32 %v3868, %v3940
        %v3942 = vpop.f32.mrf.mxu0
        %v3943 = vadd.f32 %v3870, %v3942
        %3944 = vmatprep.mubr.bf16.mxu0 %v1154
        %3945 = vmatmul.mubr.bf16.gmra.mxu0 %v1153
        %v3946 = vpop.f32.mrf.mxu0
        %v3947 = vadd.f32 %v3874, %v3946
        %v3948 = vpop.f32.mrf.mxu0
        %v3949 = vadd.f32 %v3876, %v3948
        %v3950 = vpop.f32.mrf.mxu0
        %v3951 = vadd.f32 %v3878, %v3950
        %v3952 = vpop.f32.mrf.mxu0
        %v3953 = vadd.f32 %v3880, %v3952
        %3954 = vmatprep.mubr.bf16.mxu0 %v1169
        %3955 = vmatmul.mubr.bf16.gmra.mxu0 %v1168
        %v3956 = vpop.f32.mrf.mxu0
        %v3957 = vadd.f32 %v3884, %v3956
        %v3958 = vpop.f32.mrf.mxu0
        %v3959 = vadd.f32 %v3886, %v3958
        %v3960 = vpop.f32.mrf.mxu0
        %v3961 = vadd.f32 %v3888, %v3960
        %v3962 = vpop.f32.mrf.mxu0
        %v3963 = vadd.f32 %v3890, %v3962
        %3964 = vmatprep.mubr.bf16.mxu0 %v1184
        %3965 = vmatmul.mubr.bf16.gmra.mxu0 %v1183
        %v3966 = vpop.f32.mrf.mxu0
        %v3967 = vadd.f32 %v3894, %v3966
        %v3968 = vpop.f32.mrf.mxu0
        %v3969 = vadd.f32 %v3896, %v3968
        %v3970 = vpop.f32.mrf.mxu0
        %v3971 = vadd.f32 %v3898, %v3970
        %v3972 = vpop.f32.mrf.mxu0
        %v3973 = vadd.f32 %v3900, %v3972
        %3974 = vdwg.mxu0
        %3975 = vmatprep.subr.bf16.mxu0 %v3025
        %3976 = vmatpush1.bf16.msra.mxu0 %v3024
        %3977 = vmatprep.subr.bf16.mxu0 %v3021
        %3978 = vmatpush1.bf16.msra.mxu0 %v3020
        %3979 = vmatprep.subr.bf16.mxu0 %v3017
        %3980 = vmatpush1.bf16.msra.mxu0 %v3016
        %3981 = vmatprep.subr.bf16.mxu0 %v3013
        %3982 = vmatpush1.bf16.msra.mxu0 %v3012
        %3983 = vmatprep.subr.bf16.mxu0 %v3009
        %3984 = vmatpush1.bf16.msra.mxu0 %v3008
        %3985 = vmatprep.subr.bf16.mxu0 %v3005
        %3986 = vmatpush1.bf16.msra.mxu0 %v3004
        %3987 = vmatprep.subr.bf16.mxu0 %v3001
        %3988 = vmatpush1.bf16.msra.mxu0 %v3000
        %3989 = vmatprep.subr.bf16.mxu0 %v2997
        %3990 = vmatpush1.bf16.msra.mxu0 %v2996
        %3991 = vmatprep.subr.bf16.mxu0 %v3057
        %3992 = vmatpush2.bf16.msra.mxu0 %v3056
        %3993 = vmatprep.subr.bf16.mxu0 %v3053
        %3994 = vmatpush2.bf16.msra.mxu0 %v3052
        %3995 = vmatprep.subr.bf16.mxu0 %v3049
        %3996 = vmatpush2.bf16.msra.mxu0 %v3048
        %3997 = vmatprep.subr.bf16.mxu0 %v3045
        %3998 = vmatpush2.bf16.msra.mxu0 %v3044
        %3999 = vmatprep.subr.bf16.mxu0 %v3041
        %4000 = vmatpush2.bf16.msra.mxu0 %v3040
        %4001 = vmatprep.subr.bf16.mxu0 %v3037
        %4002 = vmatpush2.bf16.msra.mxu0 %v3036
        %4003 = vmatprep.subr.bf16.mxu0 %v3033
        %4004 = vmatpush2.bf16.msra.mxu0 %v3032
        %4005 = vmatprep.subr.bf16.mxu0 %v3029
        %4006 = vmatpush2.bf16.msra.mxu0 %v3028
        %4007 = vmatprep.mubr.bf16.mxu0 %v1141
        %4008 = vmatmul.mubr.bf16.gmra.mxu0 %v1140
        %v4009 = vpop.f32.mrf.mxu0
        %v4010 = vadd.f32 %v3937, %v4009
        %v4011 = vpop.f32.mrf.mxu0
        %v4012 = vadd.f32 %v3939, %v4011
        %v4013 = vpop.f32.mrf.mxu0
        %v4014 = vadd.f32 %v3941, %v4013
        %v4015 = vpop.f32.mrf.mxu0
        %v4016 = vadd.f32 %v3943, %v4015
        %4017 = vmatprep.mubr.bf16.mxu0 %v1156
        %4018 = vmatmul.mubr.bf16.gmra.mxu0 %v1155
        %v4019 = vpop.f32.mrf.mxu0
        %v4020 = vadd.f32 %v3947, %v4019
        %v4021 = vpop.f32.mrf.mxu0
        %v4022 = vadd.f32 %v3949, %v4021
        %v4023 = vpop.f32.mrf.mxu0
        %v4024 = vadd.f32 %v3951, %v4023
        %v4025 = vpop.f32.mrf.mxu0
        %v4026 = vadd.f32 %v3953, %v4025
        %4027 = vmatprep.mubr.bf16.mxu0 %v1171
        %4028 = vmatmul.mubr.bf16.gmra.mxu0 %v1170
        %v4029 = vpop.f32.mrf.mxu0
        %v4030 = vadd.f32 %v3957, %v4029
        %v4031 = vpop.f32.mrf.mxu0
        %v4032 = vadd.f32 %v3959, %v4031
        %v4033 = vpop.f32.mrf.mxu0
        %v4034 = vadd.f32 %v3961, %v4033
        %v4035 = vpop.f32.mrf.mxu0
        %v4036 = vadd.f32 %v3963, %v4035
        %4037 = vmatprep.mubr.bf16.mxu0 %v1186
        %4038 = vmatmul.mubr.bf16.gmra.mxu0 %v1185
        %v4039 = vpop.f32.mrf.mxu0
        %v4040 = vadd.f32 %v3967, %v4039
        %v4041 = vpop.f32.mrf.mxu0
        %v4042 = vadd.f32 %v3969, %v4041
        %v4043 = vpop.f32.mrf.mxu0
        %v4044 = vadd.f32 %v3971, %v4043
        %v4045 = vpop.f32.mrf.mxu0
        %v4046 = vadd.f32 %v3973, %v4045
        %4047 = vdwg.mxu0
        %4048 = vmatprep.subr.bf16.mxu0 0
        %4049 = vmatpush1.bf16.msra.mxu0 0
        %4050 = vmatprep.subr.bf16.mxu0 0
        %4051 = vmatpush1.bf16.msra.mxu0 0
        %4052 = vmatprep.subr.bf16.mxu0 0
        %4053 = vmatpush1.bf16.msra.mxu0 0
        %4054 = vmatprep.subr.bf16.mxu0 0
        %4055 = vmatpush1.bf16.msra.mxu0 0
        %4056 = vmatprep.subr.bf16.mxu0 0
        %4057 = vmatpush1.bf16.msra.mxu0 0
        %4058 = vmatprep.subr.bf16.mxu0 0
        %4059 = vmatpush1.bf16.msra.mxu0 0
        %4060 = vmatprep.subr.bf16.mxu0 %v3065
        %4061 = vmatpush1.bf16.msra.mxu0 %v3064
        %4062 = vmatprep.subr.bf16.mxu0 %v3061
        %4063 = vmatpush1.bf16.msra.mxu0 %v3060
        %4064 = vmatprep.subr.bf16.mxu0 0
        %4065 = vmatpush2.bf16.msra.mxu0 0
        %4066 = vmatprep.subr.bf16.mxu0 0
        %4067 = vmatpush2.bf16.msra.mxu0 0
        %4068 = vmatprep.subr.bf16.mxu0 0
        %4069 = vmatpush2.bf16.msra.mxu0 0
        %4070 = vmatprep.subr.bf16.mxu0 0
        %4071 = vmatpush2.bf16.msra.mxu0 0
        %4072 = vmatprep.subr.bf16.mxu0 0
        %4073 = vmatpush2.bf16.msra.mxu0 0
        %4074 = vmatprep.subr.bf16.mxu0 0
        %4075 = vmatpush2.bf16.msra.mxu0 0
        %4076 = vmatprep.subr.bf16.mxu0 0
        %4077 = vmatpush2.bf16.msra.mxu0 0
        %4078 = vmatprep.subr.bf16.mxu0 0
        %4079 = vmatpush2.bf16.msra.mxu0 0
        %4080 = vmatprep.mubr.bf16.mxu0 0
        %4081 = vmatmul.mubr.bf16.gmra.mxu0 %v3526
        %v4082 = vpop.f32.mrf.mxu0
        %v4083 = vadd.f32 %v4010, %v4082
        %v4084 = vpop.f32.mrf.mxu0
        %v4085 = vadd.f32 %v4012, %v4084
        %v4086 = vpop.f32.mrf.mxu0
        %v4087 = vadd.f32 %v4014, %v4086
        %v4088 = vpop.f32.mrf.mxu0
        %v4089 = vadd.f32 %v4016, %v4088
        %4090 = vmatprep.mubr.bf16.mxu0 0
        %4091 = vmatmul.mubr.bf16.gmra.mxu0 %v3529
        %v4092 = vpop.f32.mrf.mxu0
        %v4093 = vadd.f32 %v4020, %v4092
        %v4094 = vpop.f32.mrf.mxu0
        %v4095 = vadd.f32 %v4022, %v4094
        %v4096 = vpop.f32.mrf.mxu0
        %v4097 = vadd.f32 %v4024, %v4096
        %v4098 = vpop.f32.mrf.mxu0
        %v4099 = vadd.f32 %v4026, %v4098
        %4100 = vmatprep.mubr.bf16.mxu0 0
        %4101 = vmatmul.mubr.bf16.gmra.mxu0 %v3532
        %v4102 = vpop.f32.mrf.mxu0
        %v4103 = vadd.f32 %v4030, %v4102
        %v4104 = vpop.f32.mrf.mxu0
        %v4105 = vadd.f32 %v4032, %v4104
        %v4106 = vpop.f32.mrf.mxu0
        %v4107 = vadd.f32 %v4034, %v4106
        %v4108 = vpop.f32.mrf.mxu0
        %v4109 = vadd.f32 %v4036, %v4108
        %4110 = vmatprep.mubr.bf16.mxu0 0
        %4111 = vmatmul.mubr.bf16.gmra.mxu0 %v3535
        %v4112 = vpop.f32.mrf.mxu0
        %v4113 = vadd.f32 %v4040, %v4112
        %v4114 = vpop.f32.mrf.mxu0
        %v4115 = vadd.f32 %v4042, %v4114
        %v4116 = vpop.f32.mrf.mxu0
        %v4117 = vadd.f32 %v4044, %v4116
        %v4118 = vpop.f32.mrf.mxu0
        %v4119 = vadd.f32 %v4046, %v4118
        %4120 = vdwg.mxu0
        %4121 = vmatprep.subr.bf16.mxu0 %v2643
        %4122 = vmatpush1.bf16.msra.mxu0 %v2642
        %4123 = vmatprep.subr.bf16.mxu0 %v2639
        %4124 = vmatpush1.bf16.msra.mxu0 %v2638
        %4125 = vmatprep.subr.bf16.mxu0 %v2635
        %4126 = vmatpush1.bf16.msra.mxu0 %v2634
        %4127 = vmatprep.subr.bf16.mxu0 %v2631
        %4128 = vmatpush1.bf16.msra.mxu0 %v2630
        %4129 = vmatprep.subr.bf16.mxu0 %v2627
        %4130 = vmatpush1.bf16.msra.mxu0 %v2626
        %4131 = vmatprep.subr.bf16.mxu0 %v2623
        %4132 = vmatpush1.bf16.msra.mxu0 %v2622
        %4133 = vmatprep.subr.bf16.mxu0 %v2619
        %4134 = vmatpush1.bf16.msra.mxu0 %v2618
        %4135 = vmatprep.subr.bf16.mxu0 %v2615
        %4136 = vmatpush1.bf16.msra.mxu0 %v2614
        %4137 = vmatprep.subr.bf16.mxu0 %v2675
        %4138 = vmatpush2.bf16.msra.mxu0 %v2674
        %4139 = vmatprep.subr.bf16.mxu0 %v2671
        %4140 = vmatpush2.bf16.msra.mxu0 %v2670
        %4141 = vmatprep.subr.bf16.mxu0 %v2667
        %4142 = vmatpush2.bf16.msra.mxu0 %v2666
        %4143 = vmatprep.subr.bf16.mxu0 %v2663
        %4144 = vmatpush2.bf16.msra.mxu0 %v2662
        %4145 = vmatprep.subr.bf16.mxu0 %v2659
        %4146 = vmatpush2.bf16.msra.mxu0 %v2658
        %4147 = vmatprep.subr.bf16.mxu0 %v2655
        %4148 = vmatpush2.bf16.msra.mxu0 %v2654
        %4149 = vmatprep.subr.bf16.mxu0 %v2651
        %4150 = vmatpush2.bf16.msra.mxu0 %v2650
        %4151 = vmatprep.subr.bf16.mxu0 %v2647
        %4152 = vmatpush2.bf16.msra.mxu0 %v2646
        %4153 = vmatprep.mubr.bf16.mxu0 %v1129
        %4154 = vmatmul.mubr.bf16.gmra.mxu0 %v1128
        %v4155 = vpop.f32.mrf.mxu0
        %v4156 = vadd.f32 0.0, %v4155
        %v4157 = vpop.f32.mrf.mxu0
        %v4158 = vadd.f32 0.0, %v4157
        %v4159 = vpop.f32.mrf.mxu0
        %v4160 = vadd.f32 0.0, %v4159
        %v4161 = vpop.f32.mrf.mxu0
        %v4162 = vadd.f32 0.0, %v4161
        %4163 = vmatprep.mubr.bf16.mxu0 %v1144
        %4164 = vmatmul.mubr.bf16.gmra.mxu0 %v1143
        %v4165 = vpop.f32.mrf.mxu0
        %v4166 = vadd.f32 0.0, %v4165
        %v4167 = vpop.f32.mrf.mxu0
        %v4168 = vadd.f32 0.0, %v4167
        %v4169 = vpop.f32.mrf.mxu0
        %v4170 = vadd.f32 0.0, %v4169
        %v4171 = vpop.f32.mrf.mxu0
        %v4172 = vadd.f32 0.0, %v4171
        %4173 = vmatprep.mubr.bf16.mxu0 %v1159
        %4174 = vmatmul.mubr.bf16.gmra.mxu0 %v1158
        %v4175 = vpop.f32.mrf.mxu0
        %v4176 = vadd.f32 0.0, %v4175
        %v4177 = vpop.f32.mrf.mxu0
        %v4178 = vadd.f32 0.0, %v4177
        %v4179 = vpop.f32.mrf.mxu0
        %v4180 = vadd.f32 0.0, %v4179
        %v4181 = vpop.f32.mrf.mxu0
        %v4182 = vadd.f32 0.0, %v4181
        %4183 = vmatprep.mubr.bf16.mxu0 %v1174
        %4184 = vmatmul.mubr.bf16.gmra.mxu0 %v1173
        %v4185 = vpop.f32.mrf.mxu0
        %v4186 = vadd.f32 0.0, %v4185
        %v4187 = vpop.f32.mrf.mxu0
        %v4188 = vadd.f32 0.0, %v4187
        %v4189 = vpop.f32.mrf.mxu0
        %v4190 = vadd.f32 0.0, %v4189
        %v4191 = vpop.f32.mrf.mxu0
        %v4192 = vadd.f32 0.0, %v4191
        %4193 = vdwg.mxu0
        %4194 = vmatprep.subr.bf16.mxu0 %v2707
        %4195 = vmatpush1.bf16.msra.mxu0 %v2706
        %4196 = vmatprep.subr.bf16.mxu0 %v2703
        %4197 = vmatpush1.bf16.msra.mxu0 %v2702
        %4198 = vmatprep.subr.bf16.mxu0 %v2699
        %4199 = vmatpush1.bf16.msra.mxu0 %v2698
        %4200 = vmatprep.subr.bf16.mxu0 %v2695
        %4201 = vmatpush1.bf16.msra.mxu0 %v2694
        %4202 = vmatprep.subr.bf16.mxu0 %v2691
        %4203 = vmatpush1.bf16.msra.mxu0 %v2690
        %4204 = vmatprep.subr.bf16.mxu0 %v2687
        %4205 = vmatpush1.bf16.msra.mxu0 %v2686
        %4206 = vmatprep.subr.bf16.mxu0 %v2683
        %4207 = vmatpush1.bf16.msra.mxu0 %v2682
        %4208 = vmatprep.subr.bf16.mxu0 %v2679
        %4209 = vmatpush1.bf16.msra.mxu0 %v2678
        %4210 = vmatprep.subr.bf16.mxu0 %v2739
        %4211 = vmatpush2.bf16.msra.mxu0 %v2738
        %4212 = vmatprep.subr.bf16.mxu0 %v2735
        %4213 = vmatpush2.bf16.msra.mxu0 %v2734
        %4214 = vmatprep.subr.bf16.mxu0 %v2731
        %4215 = vmatpush2.bf16.msra.mxu0 %v2730
        %4216 = vmatprep.subr.bf16.mxu0 %v2727
        %4217 = vmatpush2.bf16.msra.mxu0 %v2726
        %4218 = vmatprep.subr.bf16.mxu0 %v2723
        %4219 = vmatpush2.bf16.msra.mxu0 %v2722
        %4220 = vmatprep.subr.bf16.mxu0 %v2719
        %4221 = vmatpush2.bf16.msra.mxu0 %v2718
        %4222 = vmatprep.subr.bf16.mxu0 %v2715
        %4223 = vmatpush2.bf16.msra.mxu0 %v2714
        %4224 = vmatprep.subr.bf16.mxu0 %v2711
        %4225 = vmatpush2.bf16.msra.mxu0 %v2710
        %4226 = vmatprep.mubr.bf16.mxu0 %v1131
        %4227 = vmatmul.mubr.bf16.gmra.mxu0 %v1130
        %v4228 = vpop.f32.mrf.mxu0
        %v4229 = vadd.f32 %v4156, %v4228
        %v4230 = vpop.f32.mrf.mxu0
        %v4231 = vadd.f32 %v4158, %v4230
        %v4232 = vpop.f32.mrf.mxu0
        %v4233 = vadd.f32 %v4160, %v4232
        %v4234 = vpop.f32.mrf.mxu0
        %v4235 = vadd.f32 %v4162, %v4234
        %4236 = vmatprep.mubr.bf16.mxu0 %v1146
        %4237 = vmatmul.mubr.bf16.gmra.mxu0 %v1145
        %v4238 = vpop.f32.mrf.mxu0
        %v4239 = vadd.f32 %v4166, %v4238
        %v4240 = vpop.f32.mrf.mxu0
        %v4241 = vadd.f32 %v4168, %v4240
        %v4242 = vpop.f32.mrf.mxu0
        %v4243 = vadd.f32 %v4170, %v4242
        %v4244 = vpop.f32.mrf.mxu0
        %v4245 = vadd.f32 %v4172, %v4244
        %4246 = vmatprep.mubr.bf16.mxu0 %v1161
        %4247 = vmatmul.mubr.bf16.gmra.mxu0 %v1160
        %v4248 = vpop.f32.mrf.mxu0
        %v4249 = vadd.f32 %v4176, %v4248
        %v4250 = vpop.f32.mrf.mxu0
        %v4251 = vadd.f32 %v4178, %v4250
        %v4252 = vpop.f32.mrf.mxu0
        %v4253 = vadd.f32 %v4180, %v4252
        %v4254 = vpop.f32.mrf.mxu0
        %v4255 = vadd.f32 %v4182, %v4254
        %4256 = vmatprep.mubr.bf16.mxu0 %v1176
        %4257 = vmatmul.mubr.bf16.gmra.mxu0 %v1175
        %v4258 = vpop.f32.mrf.mxu0
        %v4259 = vadd.f32 %v4186, %v4258
        %v4260 = vpop.f32.mrf.mxu0
        %v4261 = vadd.f32 %v4188, %v4260
        %v4262 = vpop.f32.mrf.mxu0
        %v4263 = vadd.f32 %v4190, %v4262
        %v4264 = vpop.f32.mrf.mxu0
        %v4265 = vadd.f32 %v4192, %v4264
        %4266 = vdwg.mxu0
        %4267 = vmatprep.subr.bf16.mxu0 %v2771
        %4268 = vmatpush1.bf16.msra.mxu0 %v2770
        %4269 = vmatprep.subr.bf16.mxu0 %v2767
        %4270 = vmatpush1.bf16.msra.mxu0 %v2766
        %4271 = vmatprep.subr.bf16.mxu0 %v2763
        %4272 = vmatpush1.bf16.msra.mxu0 %v2762
        %4273 = vmatprep.subr.bf16.mxu0 %v2759
        %4274 = vmatpush1.bf16.msra.mxu0 %v2758
        %4275 = vmatprep.subr.bf16.mxu0 %v2755
        %4276 = vmatpush1.bf16.msra.mxu0 %v2754
        %4277 = vmatprep.subr.bf16.mxu0 %v2751
        %4278 = vmatpush1.bf16.msra.mxu0 %v2750
        %4279 = vmatprep.subr.bf16.mxu0 %v2747
        %4280 = vmatpush1.bf16.msra.mxu0 %v2746
        %4281 = vmatprep.subr.bf16.mxu0 %v2743
        %4282 = vmatpush1.bf16.msra.mxu0 %v2742
        %4283 = vmatprep.subr.bf16.mxu0 %v2803
        %4284 = vmatpush2.bf16.msra.mxu0 %v2802
        %4285 = vmatprep.subr.bf16.mxu0 %v2799
        %4286 = vmatpush2.bf16.msra.mxu0 %v2798
        %4287 = vmatprep.subr.bf16.mxu0 %v2795
        %4288 = vmatpush2.bf16.msra.mxu0 %v2794
        %4289 = vmatprep.subr.bf16.mxu0 %v2791
        %4290 = vmatpush2.bf16.msra.mxu0 %v2790
        %4291 = vmatprep.subr.bf16.mxu0 %v2787
        %4292 = vmatpush2.bf16.msra.mxu0 %v2786
        %4293 = vmatprep.subr.bf16.mxu0 %v2783
        %4294 = vmatpush2.bf16.msra.mxu0 %v2782
        %4295 = vmatprep.subr.bf16.mxu0 %v2779
        %4296 = vmatpush2.bf16.msra.mxu0 %v2778
        %4297 = vmatprep.subr.bf16.mxu0 %v2775
        %4298 = vmatpush2.bf16.msra.mxu0 %v2774
        %4299 = vmatprep.mubr.bf16.mxu0 %v1133
        %4300 = vmatmul.mubr.bf16.gmra.mxu0 %v1132
        %v4301 = vpop.f32.mrf.mxu0
        %v4302 = vadd.f32 %v4229, %v4301
        %v4303 = vpop.f32.mrf.mxu0
        %v4304 = vadd.f32 %v4231, %v4303
        %v4305 = vpop.f32.mrf.mxu0
        %v4306 = vadd.f32 %v4233, %v4305
        %v4307 = vpop.f32.mrf.mxu0
        %v4308 = vadd.f32 %v4235, %v4307
        %4309 = vmatprep.mubr.bf16.mxu0 %v1148
        %4310 = vmatmul.mubr.bf16.gmra.mxu0 %v1147
        %v4311 = vpop.f32.mrf.mxu0
        %v4312 = vadd.f32 %v4239, %v4311
        %v4313 = vpop.f32.mrf.mxu0
        %v4314 = vadd.f32 %v4241, %v4313
        %v4315 = vpop.f32.mrf.mxu0
        %v4316 = vadd.f32 %v4243, %v4315
        %v4317 = vpop.f32.mrf.mxu0
        %v4318 = vadd.f32 %v4245, %v4317
        %4319 = vmatprep.mubr.bf16.mxu0 %v1163
        %4320 = vmatmul.mubr.bf16.gmra.mxu0 %v1162
        %v4321 = vpop.f32.mrf.mxu0
        %v4322 = vadd.f32 %v4249, %v4321
        %v4323 = vpop.f32.mrf.mxu0
        %v4324 = vadd.f32 %v4251, %v4323
        %v4325 = vpop.f32.mrf.mxu0
        %v4326 = vadd.f32 %v4253, %v4325
        %v4327 = vpop.f32.mrf.mxu0
        %v4328 = vadd.f32 %v4255, %v4327
        %4329 = vmatprep.mubr.bf16.mxu0 %v1178
        %4330 = vmatmul.mubr.bf16.gmra.mxu0 %v1177
        %v4331 = vpop.f32.mrf.mxu0
        %v4332 = vadd.f32 %v4259, %v4331
        %v4333 = vpop.f32.mrf.mxu0
        %v4334 = vadd.f32 %v4261, %v4333
        %v4335 = vpop.f32.mrf.mxu0
        %v4336 = vadd.f32 %v4263, %v4335
        %v4337 = vpop.f32.mrf.mxu0
        %v4338 = vadd.f32 %v4265, %v4337
        %4339 = vdwg.mxu0
        %4340 = vmatprep.subr.bf16.mxu0 %v2835
        %4341 = vmatpush1.bf16.msra.mxu0 %v2834
        %4342 = vmatprep.subr.bf16.mxu0 %v2831
        %4343 = vmatpush1.bf16.msra.mxu0 %v2830
        %4344 = vmatprep.subr.bf16.mxu0 %v2827
        %4345 = vmatpush1.bf16.msra.mxu0 %v2826
        %4346 = vmatprep.subr.bf16.mxu0 %v2823
        %4347 = vmatpush1.bf16.msra.mxu0 %v2822
        %4348 = vmatprep.subr.bf16.mxu0 %v2819
        %4349 = vmatpush1.bf16.msra.mxu0 %v2818
        %4350 = vmatprep.subr.bf16.mxu0 %v2815
        %4351 = vmatpush1.bf16.msra.mxu0 %v2814
        %4352 = vmatprep.subr.bf16.mxu0 %v2811
        %4353 = vmatpush1.bf16.msra.mxu0 %v2810
        %4354 = vmatprep.subr.bf16.mxu0 %v2807
        %4355 = vmatpush1.bf16.msra.mxu0 %v2806
        %4356 = vmatprep.subr.bf16.mxu0 %v2867
        %4357 = vmatpush2.bf16.msra.mxu0 %v2866
        %4358 = vmatprep.subr.bf16.mxu0 %v2863
        %4359 = vmatpush2.bf16.msra.mxu0 %v2862
        %4360 = vmatprep.subr.bf16.mxu0 %v2859
        %4361 = vmatpush2.bf16.msra.mxu0 %v2858
        %4362 = vmatprep.subr.bf16.mxu0 %v2855
        %4363 = vmatpush2.bf16.msra.mxu0 %v2854
        %4364 = vmatprep.subr.bf16.mxu0 %v2851
        %4365 = vmatpush2.bf16.msra.mxu0 %v2850
        %4366 = vmatprep.subr.bf16.mxu0 %v2847
        %4367 = vmatpush2.bf16.msra.mxu0 %v2846
        %4368 = vmatprep.subr.bf16.mxu0 %v2843
        %4369 = vmatpush2.bf16.msra.mxu0 %v2842
        %4370 = vmatprep.subr.bf16.mxu0 %v2839
        %4371 = vmatpush2.bf16.msra.mxu0 %v2838
        %4372 = vmatprep.mubr.bf16.mxu0 %v1135
        %4373 = vmatmul.mubr.bf16.gmra.mxu0 %v1134
        %v4374 = vpop.f32.mrf.mxu0
        %v4375 = vadd.f32 %v4302, %v4374
        %v4376 = vpop.f32.mrf.mxu0
        %v4377 = vadd.f32 %v4304, %v4376
        %v4378 = vpop.f32.mrf.mxu0
        %v4379 = vadd.f32 %v4306, %v4378
        %v4380 = vpop.f32.mrf.mxu0
        %v4381 = vadd.f32 %v4308, %v4380
        %4382 = vmatprep.mubr.bf16.mxu0 %v1150
        %4383 = vmatmul.mubr.bf16.gmra.mxu0 %v1149
        %v4384 = vpop.f32.mrf.mxu0
        %v4385 = vadd.f32 %v4312, %v4384
        %v4386 = vpop.f32.mrf.mxu0
        %v4387 = vadd.f32 %v4314, %v4386
        %v4388 = vpop.f32.mrf.mxu0
        %v4389 = vadd.f32 %v4316, %v4388
        %v4390 = vpop.f32.mrf.mxu0
        %v4391 = vadd.f32 %v4318, %v4390
        %4392 = vmatprep.mubr.bf16.mxu0 %v1165
        %4393 = vmatmul.mubr.bf16.gmra.mxu0 %v1164
        %v4394 = vpop.f32.mrf.mxu0
        %v4395 = vadd.f32 %v4322, %v4394
        %v4396 = vpop.f32.mrf.mxu0
        %v4397 = vadd.f32 %v4324, %v4396
        %v4398 = vpop.f32.mrf.mxu0
        %v4399 = vadd.f32 %v4326, %v4398
        %v4400 = vpop.f32.mrf.mxu0
        %v4401 = vadd.f32 %v4328, %v4400
        %4402 = vmatprep.mubr.bf16.mxu0 %v1180
        %4403 = vmatmul.mubr.bf16.gmra.mxu0 %v1179
        %v4404 = vpop.f32.mrf.mxu0
        %v4405 = vadd.f32 %v4332, %v4404
        %v4406 = vpop.f32.mrf.mxu0
        %v4407 = vadd.f32 %v4334, %v4406
        %v4408 = vpop.f32.mrf.mxu0
        %v4409 = vadd.f32 %v4336, %v4408
        %v4410 = vpop.f32.mrf.mxu0
        %v4411 = vadd.f32 %v4338, %v4410
        %4412 = vdwg.mxu0
        %4413 = vmatprep.subr.bf16.mxu0 %v2899
        %4414 = vmatpush1.bf16.msra.mxu0 %v2898
        %4415 = vmatprep.subr.bf16.mxu0 %v2895
        %4416 = vmatpush1.bf16.msra.mxu0 %v2894
        %4417 = vmatprep.subr.bf16.mxu0 %v2891
        %4418 = vmatpush1.bf16.msra.mxu0 %v2890
        %4419 = vmatprep.subr.bf16.mxu0 %v2887
        %4420 = vmatpush1.bf16.msra.mxu0 %v2886
        %4421 = vmatprep.subr.bf16.mxu0 %v2883
        %4422 = vmatpush1.bf16.msra.mxu0 %v2882
        %4423 = vmatprep.subr.bf16.mxu0 %v2879
        %4424 = vmatpush1.bf16.msra.mxu0 %v2878
        %4425 = vmatprep.subr.bf16.mxu0 %v2875
        %4426 = vmatpush1.bf16.msra.mxu0 %v2874
        %4427 = vmatprep.subr.bf16.mxu0 %v2871
        %4428 = vmatpush1.bf16.msra.mxu0 %v2870
        %4429 = vmatprep.subr.bf16.mxu0 %v2931
        %4430 = vmatpush2.bf16.msra.mxu0 %v2930
        %4431 = vmatprep.subr.bf16.mxu0 %v2927
        %4432 = vmatpush2.bf16.msra.mxu0 %v2926
        %4433 = vmatprep.subr.bf16.mxu0 %v2923
        %4434 = vmatpush2.bf16.msra.mxu0 %v2922
        %4435 = vmatprep.subr.bf16.mxu0 %v2919
        %4436 = vmatpush2.bf16.msra.mxu0 %v2918
        %4437 = vmatprep.subr.bf16.mxu0 %v2915
        %4438 = vmatpush2.bf16.msra.mxu0 %v2914
        %4439 = vmatprep.subr.bf16.mxu0 %v2911
        %4440 = vmatpush2.bf16.msra.mxu0 %v2910
        %4441 = vmatprep.subr.bf16.mxu0 %v2907
        %4442 = vmatpush2.bf16.msra.mxu0 %v2906
        %4443 = vmatprep.subr.bf16.mxu0 %v2903
        %4444 = vmatpush2.bf16.msra.mxu0 %v2902
        %4445 = vmatprep.mubr.bf16.mxu0 %v1137
        %4446 = vmatmul.mubr.bf16.gmra.mxu0 %v1136
        %v4447 = vpop.f32.mrf.mxu0
        %v4448 = vadd.f32 %v4375, %v4447
        %v4449 = vpop.f32.mrf.mxu0
        %v4450 = vadd.f32 %v4377, %v4449
        %v4451 = vpop.f32.mrf.mxu0
        %v4452 = vadd.f32 %v4379, %v4451
        %v4453 = vpop.f32.mrf.mxu0
        %v4454 = vadd.f32 %v4381, %v4453
        %4455 = vmatprep.mubr.bf16.mxu0 %v1152
        %4456 = vmatmul.mubr.bf16.gmra.mxu0 %v1151
        %v4457 = vpop.f32.mrf.mxu0
        %v4458 = vadd.f32 %v4385, %v4457
        %v4459 = vpop.f32.mrf.mxu0
        %v4460 = vadd.f32 %v4387, %v4459
        %v4461 = vpop.f32.mrf.mxu0
        %v4462 = vadd.f32 %v4389, %v4461
        %v4463 = vpop.f32.mrf.mxu0
        %v4464 = vadd.f32 %v4391, %v4463
        %4465 = vmatprep.mubr.bf16.mxu0 %v1167
        %4466 = vmatmul.mubr.bf16.gmra.mxu0 %v1166
        %v4467 = vpop.f32.mrf.mxu0
        %v4468 = vadd.f32 %v4395, %v4467
        %v4469 = vpop.f32.mrf.mxu0
        %v4470 = vadd.f32 %v4397, %v4469
        %v4471 = vpop.f32.mrf.mxu0
        %v4472 = vadd.f32 %v4399, %v4471
        %v4473 = vpop.f32.mrf.mxu0
        %v4474 = vadd.f32 %v4401, %v4473
        %4475 = vmatprep.mubr.bf16.mxu0 %v1182
        %4476 = vmatmul.mubr.bf16.gmra.mxu0 %v1181
        %v4477 = vpop.f32.mrf.mxu0
        %v4478 = vadd.f32 %v4405, %v4477
        %v4479 = vpop.f32.mrf.mxu0
        %v4480 = vadd.f32 %v4407, %v4479
        %v4481 = vpop.f32.mrf.mxu0
        %v4482 = vadd.f32 %v4409, %v4481
        %v4483 = vpop.f32.mrf.mxu0
        %v4484 = vadd.f32 %v4411, %v4483
        %4485 = vdwg.mxu0
        %4486 = vmatprep.subr.bf16.mxu0 %v2963
        %4487 = vmatpush1.bf16.msra.mxu0 %v2962
        %4488 = vmatprep.subr.bf16.mxu0 %v2959
        %4489 = vmatpush1.bf16.msra.mxu0 %v2958
        %4490 = vmatprep.subr.bf16.mxu0 %v2955
        %4491 = vmatpush1.bf16.msra.mxu0 %v2954
        %4492 = vmatprep.subr.bf16.mxu0 %v2951
        %4493 = vmatpush1.bf16.msra.mxu0 %v2950
        %4494 = vmatprep.subr.bf16.mxu0 %v2947
        %4495 = vmatpush1.bf16.msra.mxu0 %v2946
        %4496 = vmatprep.subr.bf16.mxu0 %v2943
        %4497 = vmatpush1.bf16.msra.mxu0 %v2942
        %4498 = vmatprep.subr.bf16.mxu0 %v2939
        %4499 = vmatpush1.bf16.msra.mxu0 %v2938
        %4500 = vmatprep.subr.bf16.mxu0 %v2935
        %4501 = vmatpush1.bf16.msra.mxu0 %v2934
        %4502 = vmatprep.subr.bf16.mxu0 %v2995
        %4503 = vmatpush2.bf16.msra.mxu0 %v2994
        %4504 = vmatprep.subr.bf16.mxu0 %v2991
        %4505 = vmatpush2.bf16.msra.mxu0 %v2990
        %4506 = vmatprep.subr.bf16.mxu0 %v2987
        %4507 = vmatpush2.bf16.msra.mxu0 %v2986
        %4508 = vmatprep.subr.bf16.mxu0 %v2983
        %4509 = vmatpush2.bf16.msra.mxu0 %v2982
        %4510 = vmatprep.subr.bf16.mxu0 %v2979
        %4511 = vmatpush2.bf16.msra.mxu0 %v2978
        %4512 = vmatprep.subr.bf16.mxu0 %v2975
        %4513 = vmatpush2.bf16.msra.mxu0 %v2974
        %4514 = vmatprep.subr.bf16.mxu0 %v2971
        %4515 = vmatpush2.bf16.msra.mxu0 %v2970
        %4516 = vmatprep.subr.bf16.mxu0 %v2967
        %4517 = vmatpush2.bf16.msra.mxu0 %v2966
        %4518 = vmatprep.mubr.bf16.mxu0 %v1139
        %4519 = vmatmul.mubr.bf16.gmra.mxu0 %v1138
        %v4520 = vpop.f32.mrf.mxu0
        %v4521 = vadd.f32 %v4448, %v4520
        %v4522 = vpop.f32.mrf.mxu0
        %v4523 = vadd.f32 %v4450, %v4522
        %v4524 = vpop.f32.mrf.mxu0
        %v4525 = vadd.f32 %v4452, %v4524
        %v4526 = vpop.f32.mrf.mxu0
        %v4527 = vadd.f32 %v4454, %v4526
        %4528 = vmatprep.mubr.bf16.mxu0 %v1154
        %4529 = vmatmul.mubr.bf16.gmra.mxu0 %v1153
        %v4530 = vpop.f32.mrf.mxu0
        %v4531 = vadd.f32 %v4458, %v4530
        %v4532 = vpop.f32.mrf.mxu0
        %v4533 = vadd.f32 %v4460, %v4532
        %v4534 = vpop.f32.mrf.mxu0
        %v4535 = vadd.f32 %v4462, %v4534
        %v4536 = vpop.f32.mrf.mxu0
        %v4537 = vadd.f32 %v4464, %v4536
        %4538 = vmatprep.mubr.bf16.mxu0 %v1169
        %4539 = vmatmul.mubr.bf16.gmra.mxu0 %v1168
        %v4540 = vpop.f32.mrf.mxu0
        %v4541 = vadd.f32 %v4468, %v4540
        %v4542 = vpop.f32.mrf.mxu0
        %v4543 = vadd.f32 %v4470, %v4542
        %v4544 = vpop.f32.mrf.mxu0
        %v4545 = vadd.f32 %v4472, %v4544
        %v4546 = vpop.f32.mrf.mxu0
        %v4547 = vadd.f32 %v4474, %v4546
        %4548 = vmatprep.mubr.bf16.mxu0 %v1184
        %4549 = vmatmul.mubr.bf16.gmra.mxu0 %v1183
        %v4550 = vpop.f32.mrf.mxu0
        %v4551 = vadd.f32 %v4478, %v4550
        %v4552 = vpop.f32.mrf.mxu0
        %v4553 = vadd.f32 %v4480, %v4552
        %v4554 = vpop.f32.mrf.mxu0
        %v4555 = vadd.f32 %v4482, %v4554
        %v4556 = vpop.f32.mrf.mxu0
        %v4557 = vadd.f32 %v4484, %v4556
        %4558 = vdwg.mxu0
        %4559 = vmatprep.subr.bf16.mxu0 %v3027
        %4560 = vmatpush1.bf16.msra.mxu0 %v3026
        %4561 = vmatprep.subr.bf16.mxu0 %v3023
        %4562 = vmatpush1.bf16.msra.mxu0 %v3022
        %4563 = vmatprep.subr.bf16.mxu0 %v3019
        %4564 = vmatpush1.bf16.msra.mxu0 %v3018
        %4565 = vmatprep.subr.bf16.mxu0 %v3015
        %4566 = vmatpush1.bf16.msra.mxu0 %v3014
        %4567 = vmatprep.subr.bf16.mxu0 %v3011
        %4568 = vmatpush1.bf16.msra.mxu0 %v3010
        %4569 = vmatprep.subr.bf16.mxu0 %v3007
        %4570 = vmatpush1.bf16.msra.mxu0 %v3006
        %4571 = vmatprep.subr.bf16.mxu0 %v3003
        %4572 = vmatpush1.bf16.msra.mxu0 %v3002
        %4573 = vmatprep.subr.bf16.mxu0 %v2999
        %4574 = vmatpush1.bf16.msra.mxu0 %v2998
        %4575 = vmatprep.subr.bf16.mxu0 %v3059
        %4576 = vmatpush2.bf16.msra.mxu0 %v3058
        %4577 = vmatprep.subr.bf16.mxu0 %v3055
        %4578 = vmatpush2.bf16.msra.mxu0 %v3054
        %4579 = vmatprep.subr.bf16.mxu0 %v3051
        %4580 = vmatpush2.bf16.msra.mxu0 %v3050
        %4581 = vmatprep.subr.bf16.mxu0 %v3047
        %4582 = vmatpush2.bf16.msra.mxu0 %v3046
        %4583 = vmatprep.subr.bf16.mxu0 %v3043
        %4584 = vmatpush2.bf16.msra.mxu0 %v3042
        %4585 = vmatprep.subr.bf16.mxu0 %v3039
        %4586 = vmatpush2.bf16.msra.mxu0 %v3038
        %4587 = vmatprep.subr.bf16.mxu0 %v3035
        %4588 = vmatpush2.bf16.msra.mxu0 %v3034
        %4589 = vmatprep.subr.bf16.mxu0 %v3031
        %4590 = vmatpush2.bf16.msra.mxu0 %v3030
        %4591 = vmatprep.mubr.bf16.mxu0 %v1141
        %4592 = vmatmul.mubr.bf16.gmra.mxu0 %v1140
        %v4593 = vpop.f32.mrf.mxu0
        %v4594 = vadd.f32 %v4521, %v4593
        %v4595 = vpop.f32.mrf.mxu0
        %v4596 = vadd.f32 %v4523, %v4595
        %v4597 = vpop.f32.mrf.mxu0
        %v4598 = vadd.f32 %v4525, %v4597
        %v4599 = vpop.f32.mrf.mxu0
        %v4600 = vadd.f32 %v4527, %v4599
        %4601 = vmatprep.mubr.bf16.mxu0 %v1156
        %4602 = vmatmul.mubr.bf16.gmra.mxu0 %v1155
        %v4603 = vpop.f32.mrf.mxu0
        %v4604 = vadd.f32 %v4531, %v4603
        %v4605 = vpop.f32.mrf.mxu0
        %v4606 = vadd.f32 %v4533, %v4605
        %v4607 = vpop.f32.mrf.mxu0
        %v4608 = vadd.f32 %v4535, %v4607
        %v4609 = vpop.f32.mrf.mxu0
        %v4610 = vadd.f32 %v4537, %v4609
        %4611 = vmatprep.mubr.bf16.mxu0 %v1171
        %4612 = vmatmul.mubr.bf16.gmra.mxu0 %v1170
        %v4613 = vpop.f32.mrf.mxu0
        %v4614 = vadd.f32 %v4541, %v4613
        %v4615 = vpop.f32.mrf.mxu0
        %v4616 = vadd.f32 %v4543, %v4615
        %v4617 = vpop.f32.mrf.mxu0
        %v4618 = vadd.f32 %v4545, %v4617
        %v4619 = vpop.f32.mrf.mxu0
        %v4620 = vadd.f32 %v4547, %v4619
        %4621 = vmatprep.mubr.bf16.mxu0 %v1186
        %4622 = vmatmul.mubr.bf16.gmra.mxu0 %v1185
        %v4623 = vpop.f32.mrf.mxu0
        %v4624 = vadd.f32 %v4551, %v4623
        %v4625 = vpop.f32.mrf.mxu0
        %v4626 = vadd.f32 %v4553, %v4625
        %v4627 = vpop.f32.mrf.mxu0
        %v4628 = vadd.f32 %v4555, %v4627
        %v4629 = vpop.f32.mrf.mxu0
        %v4630 = vadd.f32 %v4557, %v4629
        %4631 = vdwg.mxu0
        %4632 = vmatprep.subr.bf16.mxu0 0
        %4633 = vmatpush1.bf16.msra.mxu0 0
        %4634 = vmatprep.subr.bf16.mxu0 0
        %4635 = vmatpush1.bf16.msra.mxu0 0
        %4636 = vmatprep.subr.bf16.mxu0 0
        %4637 = vmatpush1.bf16.msra.mxu0 0
        %4638 = vmatprep.subr.bf16.mxu0 0
        %4639 = vmatpush1.bf16.msra.mxu0 0
        %4640 = vmatprep.subr.bf16.mxu0 0
        %4641 = vmatpush1.bf16.msra.mxu0 0
        %4642 = vmatprep.subr.bf16.mxu0 0
        %4643 = vmatpush1.bf16.msra.mxu0 0
        %4644 = vmatprep.subr.bf16.mxu0 %v3067
        %4645 = vmatpush1.bf16.msra.mxu0 %v3066
        %4646 = vmatprep.subr.bf16.mxu0 %v3063
        %4647 = vmatpush1.bf16.msra.mxu0 %v3062
        %4648 = vmatprep.subr.bf16.mxu0 0
        %4649 = vmatpush2.bf16.msra.mxu0 0
        %4650 = vmatprep.subr.bf16.mxu0 0
        %4651 = vmatpush2.bf16.msra.mxu0 0
        %4652 = vmatprep.subr.bf16.mxu0 0
        %4653 = vmatpush2.bf16.msra.mxu0 0
        %4654 = vmatprep.subr.bf16.mxu0 0
        %4655 = vmatpush2.bf16.msra.mxu0 0
        %4656 = vmatprep.subr.bf16.mxu0 0
        %4657 = vmatpush2.bf16.msra.mxu0 0
        %4658 = vmatprep.subr.bf16.mxu0 0
        %4659 = vmatpush2.bf16.msra.mxu0 0
        %4660 = vmatprep.subr.bf16.mxu0 0
        %4661 = vmatpush2.bf16.msra.mxu0 0
        %4662 = vmatprep.subr.bf16.mxu0 0
        %4663 = vmatpush2.bf16.msra.mxu0 0
        %4664 = vmatprep.mubr.bf16.mxu0 0
        %4665 = vmatmul.mubr.bf16.gmra.mxu0 %v3526
        %v4666 = vpop.f32.mrf.mxu0
        %v4667 = vadd.f32 %v4594, %v4666
        %v4668 = vpop.f32.mrf.mxu0
        %v4669 = vadd.f32 %v4596, %v4668
        %v4670 = vpop.f32.mrf.mxu0
        %v4671 = vadd.f32 %v4598, %v4670
        %v4672 = vpop.f32.mrf.mxu0
        %v4673 = vadd.f32 %v4600, %v4672
        %4674 = vmatprep.mubr.bf16.mxu0 0
        %4675 = vmatmul.mubr.bf16.gmra.mxu0 %v3529
        %v4676 = vpop.f32.mrf.mxu0
        %v4677 = vadd.f32 %v4604, %v4676
        %v4678 = vpop.f32.mrf.mxu0
        %v4679 = vadd.f32 %v4606, %v4678
        %v4680 = vpop.f32.mrf.mxu0
        %v4681 = vadd.f32 %v4608, %v4680
        %v4682 = vpop.f32.mrf.mxu0
        %v4683 = vadd.f32 %v4610, %v4682
        %4684 = vmatprep.mubr.bf16.mxu0 0
        %4685 = vmatmul.mubr.bf16.gmra.mxu0 %v3532
        %v4686 = vpop.f32.mrf.mxu0
        %v4687 = vadd.f32 %v4614, %v4686
        %v4688 = vpop.f32.mrf.mxu0
        %v4689 = vadd.f32 %v4616, %v4688
        %v4690 = vpop.f32.mrf.mxu0
        %v4691 = vadd.f32 %v4618, %v4690
        %v4692 = vpop.f32.mrf.mxu0
        %v4693 = vadd.f32 %v4620, %v4692
        %4694 = vmatprep.mubr.bf16.mxu0 0
        %4695 = vmatmul.mubr.bf16.gmra.mxu0 %v3535
        %v4696 = vpop.f32.mrf.mxu0
        %v4697 = vadd.f32 %v4624, %v4696
        %v4698 = vpop.f32.mrf.mxu0
        %v4699 = vadd.f32 %v4626, %v4698
        %v4700 = vpop.f32.mrf.mxu0
        %v4701 = vadd.f32 %v4628, %v4700
        %v4702 = vpop.f32.mrf.mxu0
        %v4703 = vadd.f32 %v4630, %v4702
        %4704 = vdwg.mxu0
        %v4705 = vlaneseq
        %v4706 = vshrl.u32 %v4705, 7
        %v4707 = vadd.s32 %v4706, 8
        %v4708 = vadd.s32 %v4706, 16
        %v4709 = vadd.s32 %v4706, 24
        %v4710 = vadd.s32 %v4706, 32
        %v4711 = vadd.s32 %v4706, 40
        %v4712 = vadd.s32 %v4706, 48
        %v4713 = vadd.s32 %v4706, 56
        %vm4714 = vcmp.lt.s32.totalorder %v4706, 49
        %vm4715 = vcmp.lt.s32.totalorder %v4707, 49
        %vm4716 = vcmp.lt.s32.totalorder %v4708, 49
        %vm4717 = vcmp.lt.s32.totalorder %v4709, 49
        %vm4718 = vcmp.lt.s32.totalorder %v4710, 49
        %vm4719 = vcmp.lt.s32.totalorder %v4711, 49
        %vm4720 = vcmp.lt.s32.totalorder %v4712, 49
        %vm4721 = vcmp.lt.s32.totalorder %v4713, 49
        %v4722 = vadd.f32 %v4083, %v4087
        %v4723 = vadd.f32 %v4722, %v4093
        %v4724 = vadd.f32 %v4723, %v4097
        %v4725 = vadd.f32 %v4724, %v4103
        %v4726 = vadd.f32 %v4725, %v4107
        %v4727 = vadd.f32 %v4726, %v4113
        %v4728 = vadd.f32 %v4727, %v4117
        %v4729 = vrot.slane %v4728, 4
        %v4730 = vadd.f32 %v4728, %v4729
        %v4731 = vrot.slane %v4730, 2
        %v4732 = vadd.f32 %v4730, %v4731
        %v4733 = vrot.slane %v4732, 1
        %v4734 = vadd.f32 %v4732, %v4733
        %v4735 = vadd.f32 %v4085, %v4089
        %v4736 = vadd.f32 %v4735, %v4095
        %v4737 = vadd.f32 %v4736, %v4099
        %v4738 = vadd.f32 %v4737, %v4105
        %v4739 = vadd.f32 %v4738, %v4109
        %v4740 = vadd.f32 %v4739, %v4115
        %v4741 = vadd.f32 %v4740, %v4119
        %v4742 = vrot.slane %v4741, 4
        %v4743 = vadd.f32 %v4741, %v4742
        %v4744 = vrot.slane %v4743, 2
        %v4745 = vadd.f32 %v4743, %v4744
        %v4746 = vrot.slane %v4745, 1
        %v4747 = vadd.f32 %v4745, %v4746
        %v4748 = vadd.f32 %v4667, %v4671
        %v4749 = vadd.f32 %v4748, %v4677
        %v4750 = vadd.f32 %v4749, %v4681
        %v4751 = vadd.f32 %v4750, %v4687
        %v4752 = vadd.f32 %v4751, %v4691
        %v4753 = vadd.f32 %v4752, %v4697
        %v4754 = vadd.f32 %v4753, %v4701
        %v4755 = vrot.slane %v4754, 4
        %v4756 = vadd.f32 %v4754, %v4755
        %v4757 = vrot.slane %v4756, 2
        %v4758 = vadd.f32 %v4756, %v4757
        %v4759 = vrot.slane %v4758, 1
        %v4760 = vadd.f32 %v4758, %v4759
        %v4761 = vadd.f32 %v4669, %v4673
        %v4762 = vadd.f32 %v4761, %v4679
        %v4763 = vadd.f32 %v4762, %v4683
        %v4764 = vadd.f32 %v4763, %v4689
        %v4765 = vadd.f32 %v4764, %v4693
        %v4766 = vadd.f32 %v4765, %v4699
        %v4767 = vadd.f32 %v4766, %v4703
        %v4768 = vrot.slane %v4767, 4
        %v4769 = vadd.f32 %v4767, %v4768
        %v4770 = vrot.slane %v4769, 2
        %v4771 = vadd.f32 %v4769, %v4770
        %v4772 = vrot.slane %v4771, 1
        %v4773 = vadd.f32 %v4771, %v4772
        %v4774 = vmul.f32 %v4734, 0.020408163
        %v4775 = vmul.f32 %v4747, 0.020408163
        %v4776 = vmul.f32 %v4760, 0.020408163
        %v4777 = vmul.f32 %v4773, 0.020408163
        %v4778 = vsub.f32 %v4083, %v4774
        %v4779 = vsub.f32 %v4085, %v4775
        %v4780 = vsub.f32 %v4667, %v4776
        %v4781 = vsub.f32 %v4669, %v4777
        %v4782 = vsub.f32 %v4087, %v4774
        %v4783 = vsub.f32 %v4089, %v4775
        %v4784 = vsub.f32 %v4671, %v4776
        %v4785 = vsub.f32 %v4673, %v4777
        %v4786 = vsub.f32 %v4093, %v4774
        %v4787 = vsub.f32 %v4095, %v4775
        %v4788 = vsub.f32 %v4677, %v4776
        %v4789 = vsub.f32 %v4679, %v4777
        %v4790 = vsub.f32 %v4097, %v4774
        %v4791 = vsub.f32 %v4099, %v4775
        %v4792 = vsub.f32 %v4681, %v4776
        %v4793 = vsub.f32 %v4683, %v4777
        %v4794 = vsub.f32 %v4103, %v4774
        %v4795 = vsub.f32 %v4105, %v4775
        %v4796 = vsub.f32 %v4687, %v4776
        %v4797 = vsub.f32 %v4689, %v4777
        %v4798 = vsub.f32 %v4107, %v4774
        %v4799 = vsub.f32 %v4109, %v4775
        %v4800 = vsub.f32 %v4691, %v4776
        %v4801 = vsub.f32 %v4693, %v4777
        %v4802 = vsub.f32 %v4113, %v4774
        %v4803 = vsub.f32 %v4115, %v4775
        %v4804 = vsub.f32 %v4697, %v4776
        %v4805 = vsub.f32 %v4699, %v4777
        %v4806 = vsub.f32 %v4117, %v4774
        %v4807 = vsub.f32 %v4119, %v4775
        %v4808 = vsub.f32 %v4701, %v4776
        %v4809 = vsub.f32 %v4703, %v4777
        %v4810 = vsel %vm4714, %v4778, 0.0
        %v4811 = vsel %vm4714, %v4779, 0.0
        %v4812 = vsel %vm4714, %v4780, 0.0
        %v4813 = vsel %vm4714, %v4781, 0.0
        %v4814 = vsel %vm4715, %v4782, 0.0
        %v4815 = vsel %vm4715, %v4783, 0.0
        %v4816 = vsel %vm4715, %v4784, 0.0
        %v4817 = vsel %vm4715, %v4785, 0.0
        %v4818 = vsel %vm4716, %v4786, 0.0
        %v4819 = vsel %vm4716, %v4787, 0.0
        %v4820 = vsel %vm4716, %v4788, 0.0
        %v4821 = vsel %vm4716, %v4789, 0.0
        %v4822 = vsel %vm4717, %v4790, 0.0
        %v4823 = vsel %vm4717, %v4791, 0.0
        %v4824 = vsel %vm4717, %v4792, 0.0
        %v4825 = vsel %vm4717, %v4793, 0.0
        %v4826 = vsel %vm4718, %v4794, 0.0
        %v4827 = vsel %vm4718, %v4795, 0.0
        %v4828 = vsel %vm4718, %v4796, 0.0
        %v4829 = vsel %vm4718, %v4797, 0.0
        %v4830 = vsel %vm4719, %v4798, 0.0
        %v4831 = vsel %vm4719, %v4799, 0.0
        %v4832 = vsel %vm4719, %v4800, 0.0
        %v4833 = vsel %vm4719, %v4801, 0.0
        %v4834 = vsel %vm4720, %v4802, 0.0
        %v4835 = vsel %vm4720, %v4803, 0.0
        %v4836 = vsel %vm4720, %v4804, 0.0
        %v4837 = vsel %vm4720, %v4805, 0.0
        %v4838 = vsel %vm4721, %v4806, 0.0
        %v4839 = vsel %vm4721, %v4807, 0.0
        %v4840 = vsel %vm4721, %v4808, 0.0
        %v4841 = vsel %vm4721, %v4809, 0.0
        %v4842 = vmul.f32 %v4810, %v4810
        %v4843 = vmul.f32 %v4811, %v4811
        %v4844 = vmul.f32 %v4812, %v4812
        %v4845 = vmul.f32 %v4813, %v4813
        %v4846 = vmul.f32 %v4814, %v4814
        %v4847 = vmul.f32 %v4815, %v4815
        %v4848 = vmul.f32 %v4816, %v4816
        %v4849 = vmul.f32 %v4817, %v4817
        %v4850 = vmul.f32 %v4818, %v4818
        %v4851 = vmul.f32 %v4819, %v4819
        %v4852 = vmul.f32 %v4820, %v4820
        %v4853 = vmul.f32 %v4821, %v4821
        %v4854 = vmul.f32 %v4822, %v4822
        %v4855 = vmul.f32 %v4823, %v4823
        %v4856 = vmul.f32 %v4824, %v4824
        %v4857 = vmul.f32 %v4825, %v4825
        %v4858 = vmul.f32 %v4826, %v4826
        %v4859 = vmul.f32 %v4827, %v4827
        %v4860 = vmul.f32 %v4828, %v4828
        %v4861 = vmul.f32 %v4829, %v4829
        %v4862 = vmul.f32 %v4830, %v4830
        %v4863 = vmul.f32 %v4831, %v4831
        %v4864 = vmul.f32 %v4832, %v4832
        %v4865 = vmul.f32 %v4833, %v4833
        %v4866 = vmul.f32 %v4834, %v4834
        %v4867 = vmul.f32 %v4835, %v4835
        %v4868 = vmul.f32 %v4836, %v4836
        %v4869 = vmul.f32 %v4837, %v4837
        %v4870 = vmul.f32 %v4838, %v4838
        %v4871 = vmul.f32 %v4839, %v4839
        %v4872 = vmul.f32 %v4840, %v4840
        %v4873 = vmul.f32 %v4841, %v4841
        %v4874 = vadd.f32 %v4842, %v4846
        %v4875 = vadd.f32 %v4874, %v4850
        %v4876 = vadd.f32 %v4875, %v4854
        %v4877 = vadd.f32 %v4876, %v4858
        %v4878 = vadd.f32 %v4877, %v4862
        %v4879 = vadd.f32 %v4878, %v4866
        %v4880 = vadd.f32 %v4879, %v4870
        %v4881 = vrot.slane %v4880, 4
        %v4882 = vadd.f32 %v4880, %v4881
        %v4883 = vrot.slane %v4882, 2
        %v4884 = vadd.f32 %v4882, %v4883
        %v4885 = vrot.slane %v4884, 1
        %v4886 = vadd.f32 %v4884, %v4885
        %v4887 = vadd.f32 %v4843, %v4847
        %v4888 = vadd.f32 %v4887, %v4851
        %v4889 = vadd.f32 %v4888, %v4855
        %v4890 = vadd.f32 %v4889, %v4859
        %v4891 = vadd.f32 %v4890, %v4863
        %v4892 = vadd.f32 %v4891, %v4867
        %v4893 = vadd.f32 %v4892, %v4871
        %v4894 = vrot.slane %v4893, 4
        %v4895 = vadd.f32 %v4893, %v4894
        %v4896 = vrot.slane %v4895, 2
        %v4897 = vadd.f32 %v4895, %v4896
        %v4898 = vrot.slane %v4897, 1
        %v4899 = vadd.f32 %v4897, %v4898
        %v4900 = vadd.f32 %v4844, %v4848
        %v4901 = vadd.f32 %v4900, %v4852
        %v4902 = vadd.f32 %v4901, %v4856
        %v4903 = vadd.f32 %v4902, %v4860
        %v4904 = vadd.f32 %v4903, %v4864
        %v4905 = vadd.f32 %v4904, %v4868
        %v4906 = vadd.f32 %v4905, %v4872
        %v4907 = vrot.slane %v4906, 4
        %v4908 = vadd.f32 %v4906, %v4907
        %v4909 = vrot.slane %v4908, 2
        %v4910 = vadd.f32 %v4908, %v4909
        %v4911 = vrot.slane %v4910, 1
        %v4912 = vadd.f32 %v4910, %v4911
        %v4913 = vadd.f32 %v4845, %v4849
        %v4914 = vadd.f32 %v4913, %v4853
        %v4915 = vadd.f32 %v4914, %v4857
        %v4916 = vadd.f32 %v4915, %v4861
        %v4917 = vadd.f32 %v4916, %v4865
        %v4918 = vadd.f32 %v4917, %v4869
        %v4919 = vadd.f32 %v4918, %v4873
        %v4920 = vrot.slane %v4919, 4
        %v4921 = vadd.f32 %v4919, %v4920
        %v4922 = vrot.slane %v4921, 2
        %v4923 = vadd.f32 %v4921, %v4922
        %v4924 = vrot.slane %v4923, 1
        %v4925 = vadd.f32 %v4923, %v4924
        %v4926 = vmul.f32 %v4886, 0.020408163
        %v4927 = vmul.f32 %v4899, 0.020408163
        %v4928 = vmul.f32 %v4912, 0.020408163
        %v4929 = vmul.f32 %v4925, 0.020408163
        %v4930 = vadd.f32 %v4926, 0.001
        %v4931 = vadd.f32 %v4927, 0.001
        %v4932 = vadd.f32 %v4928, 0.001
        %v4933 = vadd.f32 %v4929, 0.001
        %v4934 = vrsqrt.pop %v4930
        %v4935 = vrsqrt.pop %v4931
        %v4936 = vrsqrt.pop %v4932
        %v4937 = vrsqrt.pop %v4933
        %v4938 = vmul.f32 %v4810, %v4934
        %v4939 = vmul.f32 %v4811, %v4935
        %v4940 = vmul.f32 %v4812, %v4936
        %v4941 = vmul.f32 %v4813, %v4937
        %v4942 = vmul.f32 %v4814, %v4934
        %v4943 = vmul.f32 %v4815, %v4935
        %v4944 = vmul.f32 %v4816, %v4936
        %v4945 = vmul.f32 %v4817, %v4937
        %v4946 = vmul.f32 %v4818, %v4934
        %v4947 = vmul.f32 %v4819, %v4935
        %v4948 = vmul.f32 %v4820, %v4936
        %v4949 = vmul.f32 %v4821, %v4937
        %v4950 = vmul.f32 %v4822, %v4934
        %v4951 = vmul.f32 %v4823, %v4935
        %v4952 = vmul.f32 %v4824, %v4936
        %v4953 = vmul.f32 %v4825, %v4937
        %v4954 = vmul.f32 %v4826, %v4934
        %v4955 = vmul.f32 %v4827, %v4935
        %v4956 = vmul.f32 %v4828, %v4936
        %v4957 = vmul.f32 %v4829, %v4937
        %v4958 = vmul.f32 %v4830, %v4934
        %v4959 = vmul.f32 %v4831, %v4935
        %v4960 = vmul.f32 %v4832, %v4936
        %v4961 = vmul.f32 %v4833, %v4937
        %v4962 = vmul.f32 %v4834, %v4934
        %v4963 = vmul.f32 %v4835, %v4935
        %v4964 = vmul.f32 %v4836, %v4936
        %v4965 = vmul.f32 %v4837, %v4937
        %v4966 = vmul.f32 %v4838, %v4934
        %v4967 = vmul.f32 %v4839, %v4935
        %v4968 = vmul.f32 %v4840, %v4936
        %v4969 = vmul.f32 %v4841, %v4937
        %v4970 = vld [vmem:[#allocation7] sm:$0xf]
        %v4972 = vlaneseq
        %v4973 = vshrl.u32 %v4972, 7
        %v4974 = vsub.s32 0, %v4973
        %v4975 = vrot.slane %v4970, %v4974
        %v4976 = vlaneseq
        %v4977 = vshrl.u32 %v4976, 7
        %v4978 = vsub.s32 1, %v4977
        %v4979 = vrot.slane %v4970, %v4978
        %v4980 = vlaneseq
        %v4981 = vshrl.u32 %v4980, 7
        %v4982 = vsub.s32 2, %v4981
        %v4983 = vrot.slane %v4970, %v4982
        %v4984 = vlaneseq
        %v4985 = vshrl.u32 %v4984, 7
        %v4986 = vsub.s32 3, %v4985
        %v4987 = vrot.slane %v4970, %v4986
        %v4992 = vmul.f32 %v4938, %v4975
        %v4993 = vmul.f32 %v4939, %v4979
        %v4994 = vmul.f32 %v4940, %v4983
        %v4995 = vmul.f32 %v4941, %v4987
        %v4996 = vmul.f32 %v4942, %v4975
        %v4997 = vmul.f32 %v4943, %v4979
        %v4998 = vmul.f32 %v4944, %v4983
        %v4999 = vmul.f32 %v4945, %v4987
        %v5000 = vmul.f32 %v4946, %v4975
        %v5001 = vmul.f32 %v4947, %v4979
        %v5002 = vmul.f32 %v4948, %v4983
        %v5003 = vmul.f32 %v4949, %v4987
        %v5004 = vmul.f32 %v4950, %v4975
        %v5005 = vmul.f32 %v4951, %v4979
        %v5006 = vmul.f32 %v4952, %v4983
        %v5007 = vmul.f32 %v4953, %v4987
        %v5008 = vmul.f32 %v4954, %v4975
        %v5009 = vmul.f32 %v4955, %v4979
        %v5010 = vmul.f32 %v4956, %v4983
        %v5011 = vmul.f32 %v4957, %v4987
        %v5012 = vmul.f32 %v4958, %v4975
        %v5013 = vmul.f32 %v4959, %v4979
        %v5014 = vmul.f32 %v4960, %v4983
        %v5015 = vmul.f32 %v4961, %v4987
        %v5016 = vmul.f32 %v4962, %v4975
        %v5017 = vmul.f32 %v4963, %v4979
        %v5018 = vmul.f32 %v4964, %v4983
        %v5019 = vmul.f32 %v4965, %v4987
        %v5020 = vmul.f32 %v4966, %v4975
        %v5021 = vmul.f32 %v4967, %v4979
        %v5022 = vmul.f32 %v4968, %v4983
        %v5023 = vmul.f32 %v4969, %v4987
        %v5024 = vld [vmem:[#allocation8] sm:$0xf]
        %v5026 = vlaneseq
        %v5027 = vshrl.u32 %v5026, 7
        %v5028 = vsub.s32 0, %v5027
        %v5029 = vrot.slane %v5024, %v5028
        %v5030 = vlaneseq
        %v5031 = vshrl.u32 %v5030, 7
        %v5032 = vsub.s32 1, %v5031
        %v5033 = vrot.slane %v5024, %v5032
        %v5034 = vlaneseq
        %v5035 = vshrl.u32 %v5034, 7
        %v5036 = vsub.s32 2, %v5035
        %v5037 = vrot.slane %v5024, %v5036
        %v5038 = vlaneseq
        %v5039 = vshrl.u32 %v5038, 7
        %v5040 = vsub.s32 3, %v5039
        %v5041 = vrot.slane %v5024, %v5040
        %v5046 = vadd.f32 %v4992, %v5029
        %v5047 = vadd.f32 %v4993, %v5033
        %v5048 = vadd.f32 %v4994, %v5037
        %v5049 = vadd.f32 %v4995, %v5041
        %v5050 = vadd.f32 %v4996, %v5029
        %v5051 = vadd.f32 %v4997, %v5033
        %v5052 = vadd.f32 %v4998, %v5037
        %v5053 = vadd.f32 %v4999, %v5041
        %v5054 = vadd.f32 %v5000, %v5029
        %v5055 = vadd.f32 %v5001, %v5033
        %v5056 = vadd.f32 %v5002, %v5037
        %v5057 = vadd.f32 %v5003, %v5041
        %v5058 = vadd.f32 %v5004, %v5029
        %v5059 = vadd.f32 %v5005, %v5033
        %v5060 = vadd.f32 %v5006, %v5037
        %v5061 = vadd.f32 %v5007, %v5041
        %v5062 = vadd.f32 %v5008, %v5029
        %v5063 = vadd.f32 %v5009, %v5033
        %v5064 = vadd.f32 %v5010, %v5037
        %v5065 = vadd.f32 %v5011, %v5041
        %v5066 = vadd.f32 %v5012, %v5029
        %v5067 = vadd.f32 %v5013, %v5033
        %v5068 = vadd.f32 %v5014, %v5037
        %v5069 = vadd.f32 %v5015, %v5041
        %v5070 = vadd.f32 %v5016, %v5029
        %v5071 = vadd.f32 %v5017, %v5033
        %v5072 = vadd.f32 %v5018, %v5037
        %v5073 = vadd.f32 %v5019, %v5041
        %v5074 = vadd.f32 %v5020, %v5029
        %v5075 = vadd.f32 %v5021, %v5033
        %v5076 = vadd.f32 %v5022, %v5037
        %v5077 = vadd.f32 %v5023, %v5041
        %v5078 = vsel %vm4714, %v5046, 0.0
        %v5079 = vsel %vm4714, %v5047, 0.0
        %v5080 = vsel %vm4714, %v5048, 0.0
        %v5081 = vsel %vm4714, %v5049, 0.0
        %v5082 = vsel %vm4715, %v5050, 0.0
        %v5083 = vsel %vm4715, %v5051, 0.0
        %v5084 = vsel %vm4715, %v5052, 0.0
        %v5085 = vsel %vm4715, %v5053, 0.0
        %v5086 = vsel %vm4716, %v5054, 0.0
        %v5087 = vsel %vm4716, %v5055, 0.0
        %v5088 = vsel %vm4716, %v5056, 0.0
        %v5089 = vsel %vm4716, %v5057, 0.0
        %v5090 = vsel %vm4717, %v5058, 0.0
        %v5091 = vsel %vm4717, %v5059, 0.0
        %v5092 = vsel %vm4717, %v5060, 0.0
        %v5093 = vsel %vm4717, %v5061, 0.0
        %v5094 = vsel %vm4718, %v5062, 0.0
        %v5095 = vsel %vm4718, %v5063, 0.0
        %v5096 = vsel %vm4718, %v5064, 0.0
        %v5097 = vsel %vm4718, %v5065, 0.0
        %v5098 = vsel %vm4719, %v5066, 0.0
        %v5099 = vsel %vm4719, %v5067, 0.0
        %v5100 = vsel %vm4719, %v5068, 0.0
        %v5101 = vsel %vm4719, %v5069, 0.0
        %v5102 = vsel %vm4720, %v5070, 0.0
        %v5103 = vsel %vm4720, %v5071, 0.0
        %v5104 = vsel %vm4720, %v5072, 0.0
        %v5105 = vsel %vm4720, %v5073, 0.0
        %v5106 = vsel %vm4721, %v5074, 0.0
        %v5107 = vsel %vm4721, %v5075, 0.0
        %v5108 = vsel %vm4721, %v5076, 0.0
        %v5109 = vsel %vm4721, %v5077, 0.0
        %v5110 = vpack.c.bf16 %v5082, %v5078
        %v5111 = vpack.c.bf16 %v5083, %v5079
        %v5112 = vpack.c.bf16 %v5084, %v5080
        %v5113 = vpack.c.bf16 %v5085, %v5081
        %v5114 = vpack.c.bf16 %v5090, %v5086
        %v5115 = vpack.c.bf16 %v5091, %v5087
        %v5116 = vpack.c.bf16 %v5092, %v5088
        %v5117 = vpack.c.bf16 %v5093, %v5089
        %v5118 = vpack.c.bf16 %v5098, %v5094
        %v5119 = vpack.c.bf16 %v5099, %v5095
        %v5120 = vpack.c.bf16 %v5100, %v5096
        %v5121 = vpack.c.bf16 %v5101, %v5097
        %v5122 = vpack.c.bf16 %v5106, %v5102
        %v5123 = vpack.c.bf16 %v5107, %v5103
        %v5124 = vpack.c.bf16 %v5108, %v5104
        %v5125 = vpack.c.bf16 %v5109, %v5105
        %v5126 = vld [vmem:[%s360] sm:$0xff]
        %v5127 = vld [vmem:[%s360 + $0x8] sm:$0xff]
        %v5128 = vld [vmem:[%s360 + $0x10] sm:$0xff]
        %v5129 = vld [vmem:[%s360 + $0x18] sm:$0xff]
        %v5130 = vld [vmem:[%s360 + $0x20] sm:$0xff]
        %v5131 = vld [vmem:[%s360 + $0x28] sm:$0xff]
        %v5132 = vld [vmem:[%s360 + $0x30] sm:$0xff]
        %v5133 = vld [vmem:[%s360 + $0x38] sm:$0xff]
        %v5134 = vld [vmem:[%s360 + $0x40] sm:$0xff]
        %v5135 = vld [vmem:[%s360 + $0x48] sm:$0xff]
        %v5136 = vld [vmem:[%s360 + $0x50] sm:$0xff]
        %v5137 = vld [vmem:[%s360 + $0x58] sm:$0xff]
        %v5138 = vld [vmem:[%s360 + $0x60] sm:$0xff]
        %v5139 = vld [vmem:[%s360 + $0x68] sm:$0xff]
        %v5140 = vld [vmem:[%s360 + $0x70] sm:$0xff]
        %v5141 = vld [vmem:[%s360 + $0x78] sm:$0xff]
        %v5142 = vld [vmem:[%s360 + $0x80] sm:$0xff]
        %v5143 = vld [vmem:[%s360 + $0x88] sm:$0xff]
        %v5144 = vld [vmem:[%s360 + $0x90] sm:$0xff]
        %v5145 = vld [vmem:[%s360 + $0x98] sm:$0xff]
        %v5146 = vld [vmem:[%s360 + $0xa0] sm:$0xff]
        %v5147 = vld [vmem:[%s360 + $0xa8] sm:$0xff]
        %v5148 = vld [vmem:[%s360 + $0xb0] sm:$0xff]
        %v5149 = vld [vmem:[%s360 + $0xb8] sm:$0xff]
        %v5150 = vld [vmem:[%s360 + $0xc0] sm:$0xff]
        %v5151 = vld [vmem:[%s360 + $0xc8] sm:$0xff]
        %v5152 = vld [vmem:[%s360 + $0xd0] sm:$0xff]
        %v5153 = vld [vmem:[%s360 + $0xd8] sm:$0xff]
        %v5154 = vld [vmem:[%s360 + $0xe0] sm:$0xff]
        %v5155 = vld [vmem:[%s360 + $0xe8] sm:$0xff]
        %v5156 = vld [vmem:[%s360 + $0xf0] sm:$0xff]
        %v5157 = vld [vmem:[%s360 + $0xf8] sm:$0xff]
        %v5158 = vld [vmem:[%s360 + $0x100] sm:$0xff]
        %v5159 = vld [vmem:[%s360 + $0x108] sm:$0xff]
        %v5160 = vld [vmem:[%s360 + $0x110] sm:$0xff]
        %v5161 = vld [vmem:[%s360 + $0x118] sm:$0xff]
        %v5162 = vld [vmem:[%s360 + $0x120] sm:$0xff]
        %v5163 = vld [vmem:[%s360 + $0x128] sm:$0xff]
        %v5164 = vld [vmem:[%s360 + $0x130] sm:$0xff]
        %v5165 = vld [vmem:[%s360 + $0x138] sm:$0xff]
        %v5166 = vld [vmem:[%s360 + $0x140] sm:$0xff]
        %v5167 = vld [vmem:[%s360 + $0x148] sm:$0xff]
        %v5168 = vld [vmem:[%s360 + $0x150] sm:$0xff]
        %v5169 = vld [vmem:[%s360 + $0x158] sm:$0xff]
        %v5170 = vld [vmem:[%s360 + $0x160] sm:$0xff]
        %v5171 = vld [vmem:[%s360 + $0x168] sm:$0xff]
        %v5172 = vld [vmem:[%s360 + $0x170] sm:$0xff]
        %v5173 = vld [vmem:[%s360 + $0x178] sm:$0xff]
        %v5174 = vld [vmem:[%s360 + $0x180] sm:$0xff]
        %v5175 = vld [vmem:[%s360 + $0x188] sm:$0xff]
        %v5176 = vld [vmem:[%s360 + $0x190] sm:$0xff]
        %v5177 = vld [vmem:[%s360 + $0x198] sm:$0xff]
        %v5178 = vld [vmem:[%s360 + $0x1a0] sm:$0xff]
        %v5179 = vld [vmem:[%s360 + $0x1a8] sm:$0xff]
        %v5180 = vld [vmem:[%s360 + $0x1b0] sm:$0xff]
        %v5181 = vld [vmem:[%s360 + $0x1b8] sm:$0xff]
        %v5182 = vld [vmem:[%s360 + $0x1c0] sm:$0xff]
        %v5183 = vld [vmem:[%s360 + $0x1c8] sm:$0xff]
        %v5184 = vld [vmem:[%s360 + $0x1d0] sm:$0xff]
        %v5185 = vld [vmem:[%s360 + $0x1d8] sm:$0xff]
        %v5186 = vld [vmem:[%s360 + $0x1e0] sm:$0xff]
        %v5187 = vld [vmem:[%s360 + $0x1e8] sm:$0xff]
        %v5188 = vld [vmem:[%s360 + $0x1f0] sm:$0xff]
        %v5189 = vld [vmem:[%s360 + $0x1f8] sm:$0xff]
        %v5190 = vld [vmem:[%s360 + $0x200] sm:$0xff]
        %v5191 = vld [vmem:[%s360 + $0x208] sm:$0xff]
        %v5192 = vld [vmem:[%s360 + $0x210] sm:$0xff]
        %v5193 = vld [vmem:[%s360 + $0x218] sm:$0xff]
        %v5194 = vld [vmem:[%s360 + $0x220] sm:$0xff]
        %v5195 = vld [vmem:[%s360 + $0x228] sm:$0xff]
        %v5196 = vld [vmem:[%s360 + $0x230] sm:$0xff]
        %v5197 = vld [vmem:[%s360 + $0x238] sm:$0xff]
        %v5198 = vld [vmem:[%s360 + $0x240] sm:$0xff]
        %v5199 = vld [vmem:[%s360 + $0x248] sm:$0xff]
        %v5200 = vld [vmem:[%s360 + $0x250] sm:$0xff]
        %v5201 = vld [vmem:[%s360 + $0x258] sm:$0xff]
        %v5202 = vld [vmem:[%s360 + $0x260] sm:$0xff]
        %v5203 = vld [vmem:[%s360 + $0x268] sm:$0xff]
        %v5204 = vld [vmem:[%s360 + $0x270] sm:$0xff]
        %v5205 = vld [vmem:[%s360 + $0x278] sm:$0xff]
        %v5206 = vld [vmem:[%s360 + $0x280] sm:$0xff]
        %v5207 = vld [vmem:[%s360 + $0x288] sm:$0xff]
        %v5208 = vld [vmem:[%s360 + $0x290] sm:$0xff]
        %v5209 = vld [vmem:[%s360 + $0x298] sm:$0xff]
        %v5210 = vld [vmem:[%s360 + $0x2a0] sm:$0xff]
        %v5211 = vld [vmem:[%s360 + $0x2a8] sm:$0xff]
        %v5212 = vld [vmem:[%s360 + $0x2b0] sm:$0xff]
        %v5213 = vld [vmem:[%s360 + $0x2b8] sm:$0xff]
        %v5214 = vld [vmem:[%s360 + $0x2c0] sm:$0xff]
        %v5215 = vld [vmem:[%s360 + $0x2c8] sm:$0xff]
        %v5216 = vld [vmem:[%s360 + $0x2d0] sm:$0xff]
        %v5217 = vld [vmem:[%s360 + $0x2d8] sm:$0xff]
        %v5218 = vld [vmem:[%s360 + $0x2e0] sm:$0xff]
        %v5219 = vld [vmem:[%s360 + $0x2e8] sm:$0xff]
        %v5220 = vld [vmem:[%s360 + $0x2f0] sm:$0xff]
        %v5221 = vld [vmem:[%s360 + $0x2f8] sm:$0xff]
        %v5222 = vld [vmem:[%s360 + $0x300] sm:$0xff]
        %v5223 = vld [vmem:[%s360 + $0x308] sm:$0xff]
        %v5224 = vld [vmem:[%s360 + $0x310] sm:$0xff]
        %v5225 = vld [vmem:[%s360 + $0x318] sm:$0xff]
        %v5226 = vld [vmem:[%s360 + $0x320] sm:$0xff]
        %v5227 = vld [vmem:[%s360 + $0x328] sm:$0xff]
        %v5228 = vld [vmem:[%s360 + $0x330] sm:$0xff]
        %v5229 = vld [vmem:[%s360 + $0x338] sm:$0xff]
        %v5230 = vld [vmem:[%s360 + $0x340] sm:$0xff]
        %v5231 = vld [vmem:[%s360 + $0x348] sm:$0xff]
        %v5232 = vld [vmem:[%s360 + $0x350] sm:$0xff]
        %v5233 = vld [vmem:[%s360 + $0x358] sm:$0xff]
        %v5234 = vld [vmem:[%s360 + $0x360] sm:$0xff]
        %v5235 = vld [vmem:[%s360 + $0x368] sm:$0xff]
        %v5236 = vld [vmem:[%s360 + $0x370] sm:$0xff]
        %v5237 = vld [vmem:[%s360 + $0x378] sm:$0xff]
        %v5238 = vld [vmem:[%s360 + $0x380] sm:$0xff]
        %v5239 = vld [vmem:[%s360 + $0x388] sm:$0xff]
        %v5240 = vld [vmem:[%s360 + $0x390] sm:$0xff]
        %v5241 = vld [vmem:[%s360 + $0x398] sm:$0xff]
        %v5242 = vld [vmem:[%s360 + $0x3a0] sm:$0xff]
        %v5243 = vld [vmem:[%s360 + $0x3a8] sm:$0xff]
        %v5244 = vld [vmem:[%s360 + $0x3b0] sm:$0xff]
        %v5245 = vld [vmem:[%s360 + $0x3b8] sm:$0xff]
        %v5246 = vld [vmem:[%s360 + $0x3c0] sm:$0xff]
        %v5247 = vld [vmem:[%s360 + $0x3c8] sm:$0xff]
        %v5248 = vld [vmem:[%s360 + $0x3d0] sm:$0xff]
        %v5249 = vld [vmem:[%s360 + $0x3d8] sm:$0xff]
        %v5250 = vld [vmem:[%s360 + $0x3e0] sm:$0xff]
        %v5251 = vld [vmem:[%s360 + $0x3e8] sm:$0xff]
        %v5252 = vld [vmem:[%s360 + $0x3f0] sm:$0xff]
        %v5253 = vld [vmem:[%s360 + $0x3f8] sm:$0xff]
        %v5254 = vld [vmem:[%s360 + $0x400] sm:$0xff]
        %v5255 = vld [vmem:[%s360 + $0x408] sm:$0xff]
        %v5256 = vld [vmem:[%s360 + $0x410] sm:$0xff]
        %v5257 = vld [vmem:[%s360 + $0x418] sm:$0xff]
        %v5258 = vld [vmem:[%s360 + $0x420] sm:$0xff]
        %v5259 = vld [vmem:[%s360 + $0x428] sm:$0xff]
        %v5260 = vld [vmem:[%s360 + $0x430] sm:$0xff]
        %v5261 = vld [vmem:[%s360 + $0x438] sm:$0xff]
        %v5262 = vld [vmem:[%s360 + $0x440] sm:$0xff]
        %v5263 = vld [vmem:[%s360 + $0x448] sm:$0xff]
        %v5264 = vld [vmem:[%s360 + $0x450] sm:$0xff]
        %v5265 = vld [vmem:[%s360 + $0x458] sm:$0xff]
        %v5266 = vld [vmem:[%s360 + $0x460] sm:$0xff]
        %v5267 = vld [vmem:[%s360 + $0x468] sm:$0xff]
        %v5268 = vld [vmem:[%s360 + $0x470] sm:$0xff]
        %v5269 = vld [vmem:[%s360 + $0x478] sm:$0xff]
        %v5270 = vld [vmem:[%s360 + $0x480] sm:$0xff]
        %v5271 = vld [vmem:[%s360 + $0x488] sm:$0xff]
        %v5272 = vld [vmem:[%s360 + $0x490] sm:$0xff]
        %v5273 = vld [vmem:[%s360 + $0x498] sm:$0xff]
        %v5274 = vld [vmem:[%s360 + $0x4a0] sm:$0xff]
        %v5275 = vld [vmem:[%s360 + $0x4a8] sm:$0xff]
        %v5276 = vld [vmem:[%s360 + $0x4b0] sm:$0xff]
        %v5277 = vld [vmem:[%s360 + $0x4b8] sm:$0xff]
        %v5278 = vld [vmem:[%s360 + $0x4c0] sm:$0xff]
        %v5279 = vld [vmem:[%s360 + $0x4c8] sm:$0xff]
        %v5280 = vld [vmem:[%s360 + $0x4d0] sm:$0xff]
        %v5281 = vld [vmem:[%s360 + $0x4d8] sm:$0xff]
        %v5282 = vld [vmem:[%s360 + $0x4e0] sm:$0xff]
        %v5283 = vld [vmem:[%s360 + $0x4e8] sm:$0xff]
        %v5284 = vld [vmem:[%s360 + $0x4f0] sm:$0xff]
        %v5285 = vld [vmem:[%s360 + $0x4f8] sm:$0xff]
        %v5286 = vld [vmem:[%s360 + $0x500] sm:$0xff]
        %v5287 = vld [vmem:[%s360 + $0x508] sm:$0xff]
        %v5288 = vld [vmem:[%s360 + $0x510] sm:$0xff]
        %v5289 = vld [vmem:[%s360 + $0x518] sm:$0xff]
        %v5290 = vld [vmem:[%s360 + $0x520] sm:$0xff]
        %v5291 = vld [vmem:[%s360 + $0x528] sm:$0xff]
        %v5292 = vld [vmem:[%s360 + $0x530] sm:$0xff]
        %v5293 = vld [vmem:[%s360 + $0x538] sm:$0xff]
        %v5294 = vld [vmem:[%s360 + $0x540] sm:$0xff]
        %v5295 = vld [vmem:[%s360 + $0x548] sm:$0xff]
        %v5296 = vld [vmem:[%s360 + $0x550] sm:$0xff]
        %v5297 = vld [vmem:[%s360 + $0x558] sm:$0xff]
        %v5298 = vld [vmem:[%s360 + $0x560] sm:$0xff]
        %v5299 = vld [vmem:[%s360 + $0x568] sm:$0xff]
        %v5300 = vld [vmem:[%s360 + $0x570] sm:$0xff]
        %v5301 = vld [vmem:[%s360 + $0x578] sm:$0xff]
        %v5302 = vld [vmem:[%s360 + $0x580] sm:$0xff]
        %v5303 = vld [vmem:[%s360 + $0x588] sm:$0xff]
        %v5304 = vld [vmem:[%s360 + $0x590] sm:$0xff]
        %v5305 = vld [vmem:[%s360 + $0x598] sm:$0xff]
        %v5306 = vld [vmem:[%s360 + $0x5a0] sm:$0xff]
        %v5307 = vld [vmem:[%s360 + $0x5a8] sm:$0xff]
        %v5308 = vld [vmem:[%s360 + $0x5b0] sm:$0xff]
        %v5309 = vld [vmem:[%s360 + $0x5b8] sm:$0xff]
        %v5310 = vld [vmem:[%s360 + $0x5c0] sm:$0xff]
        %v5311 = vld [vmem:[%s360 + $0x5c8] sm:$0xff]
        %v5312 = vld [vmem:[%s360 + $0x5d0] sm:$0xff]
        %v5313 = vld [vmem:[%s360 + $0x5d8] sm:$0xff]
        %v5314 = vld [vmem:[%s360 + $0x5e0] sm:$0xff]
        %v5315 = vld [vmem:[%s360 + $0x5e8] sm:$0xff]
        %v5316 = vld [vmem:[%s360 + $0x5f0] sm:$0xff]
        %v5317 = vld [vmem:[%s360 + $0x5f8] sm:$0xff]
        %v5318 = vld [vmem:[%s360 + $0x600] sm:$0xff]
        %v5319 = vld [vmem:[%s360 + $0x608] sm:$0xff]
        %v5320 = vld [vmem:[%s360 + $0x610] sm:$0xff]
        %v5321 = vld [vmem:[%s360 + $0x618] sm:$0xff]
        %v5322 = vld [vmem:[%s360 + $0x620] sm:$0xff]
        %v5323 = vld [vmem:[%s360 + $0x628] sm:$0xff]
        %v5324 = vld [vmem:[%s360 + $0x630] sm:$0xff]
        %v5325 = vld [vmem:[%s360 + $0x638] sm:$0xff]
        %v5326 = vld [vmem:[%s360 + $0x640] sm:$0xff]
        %v5327 = vld [vmem:[%s360 + $0x648] sm:$0xff]
        %v5328 = vld [vmem:[%s360 + $0x650] sm:$0xff]
        %v5329 = vld [vmem:[%s360 + $0x658] sm:$0xff]
        %v5330 = vld [vmem:[%s360 + $0x660] sm:$0xff]
        %v5331 = vld [vmem:[%s360 + $0x668] sm:$0xff]
        %v5332 = vld [vmem:[%s360 + $0x670] sm:$0xff]
        %v5333 = vld [vmem:[%s360 + $0x678] sm:$0xff]
        %v5334 = vld [vmem:[%s360 + $0x680] sm:$0xff]
        %v5335 = vld [vmem:[%s360 + $0x688] sm:$0xff]
        %v5336 = vld [vmem:[%s360 + $0x690] sm:$0xff]
        %v5337 = vld [vmem:[%s360 + $0x698] sm:$0xff]
        %v5338 = vld [vmem:[%s360 + $0x6a0] sm:$0xff]
        %v5339 = vld [vmem:[%s360 + $0x6a8] sm:$0xff]
        %v5340 = vld [vmem:[%s360 + $0x6b0] sm:$0xff]
        %v5341 = vld [vmem:[%s360 + $0x6b8] sm:$0xff]
        %v5342 = vld [vmem:[%s360 + $0x6c0] sm:$0xff]
        %v5343 = vld [vmem:[%s360 + $0x6c8] sm:$0xff]
        %v5344 = vld [vmem:[%s360 + $0x6d0] sm:$0xff]
        %v5345 = vld [vmem:[%s360 + $0x6d8] sm:$0xff]
        %v5346 = vld [vmem:[%s360 + $0x6e0] sm:$0xff]
        %v5347 = vld [vmem:[%s360 + $0x6e8] sm:$0xff]
        %v5348 = vld [vmem:[%s360 + $0x6f0] sm:$0xff]
        %v5349 = vld [vmem:[%s360 + $0x6f8] sm:$0xff]
        %v5350 = vld [vmem:[%s360 + $0x700] sm:$0xff]
        %v5351 = vld [vmem:[%s360 + $0x708] sm:$0xff]
        %v5352 = vld [vmem:[%s360 + $0x710] sm:$0xff]
        %v5353 = vld [vmem:[%s360 + $0x718] sm:$0xff]
        %v5354 = vld [vmem:[%s360 + $0x720] sm:$0xff]
        %v5355 = vld [vmem:[%s360 + $0x728] sm:$0xff]
        %v5356 = vld [vmem:[%s360 + $0x730] sm:$0xff]
        %v5357 = vld [vmem:[%s360 + $0x738] sm:$0xff]
        %v5358 = vld [vmem:[%s360 + $0x740] sm:$0xff]
        %v5359 = vld [vmem:[%s360 + $0x748] sm:$0xff]
        %v5360 = vld [vmem:[%s360 + $0x750] sm:$0xff]
        %v5361 = vld [vmem:[%s360 + $0x758] sm:$0xff]
        %v5362 = vld [vmem:[%s360 + $0x760] sm:$0xff]
        %v5363 = vld [vmem:[%s360 + $0x768] sm:$0xff]
        %v5364 = vld [vmem:[%s360 + $0x770] sm:$0xff]
        %v5365 = vld [vmem:[%s360 + $0x778] sm:$0xff]
        %v5366 = vld [vmem:[%s360 + $0x780] sm:$0xff]
        %v5367 = vld [vmem:[%s360 + $0x788] sm:$0xff]
        %v5368 = vld [vmem:[%s360 + $0x790] sm:$0xff]
        %v5369 = vld [vmem:[%s360 + $0x798] sm:$0xff]
        %v5370 = vld [vmem:[%s360 + $0x7a0] sm:$0xff]
        %v5371 = vld [vmem:[%s360 + $0x7a8] sm:$0xff]
        %v5372 = vld [vmem:[%s360 + $0x7b0] sm:$0xff]
        %v5373 = vld [vmem:[%s360 + $0x7b8] sm:$0xff]
        %v5374 = vld [vmem:[%s360 + $0x7c0] sm:$0xff]
        %v5375 = vld [vmem:[%s360 + $0x7c8] sm:$0xff]
        %v5376 = vld [vmem:[%s360 + $0x7d0] sm:$0xff]
        %v5377 = vld [vmem:[%s360 + $0x7d8] sm:$0xff]
        %v5378 = vld [vmem:[%s360 + $0x7e0] sm:$0xff]
        %v5379 = vld [vmem:[%s360 + $0x7e8] sm:$0xff]
        %v5380 = vld [vmem:[%s360 + $0x7f0] sm:$0xff]
        %v5381 = vld [vmem:[%s360 + $0x7f8] sm:$0xff]
        %v5382 = vld [vmem:[%s360 + $0x800] sm:$0xff]
        %v5383 = vld [vmem:[%s360 + $0x808] sm:$0xff]
        %v5384 = vld [vmem:[%s360 + $0x810] sm:$0xff]
        %v5385 = vld [vmem:[%s360 + $0x818] sm:$0xff]
        %v5386 = vld [vmem:[%s360 + $0x820] sm:$0xff]
        %v5387 = vld [vmem:[%s360 + $0x828] sm:$0xff]
        %v5388 = vld [vmem:[%s360 + $0x830] sm:$0xff]
        %v5389 = vld [vmem:[%s360 + $0x838] sm:$0xff]
        %v5390 = vld [vmem:[%s360 + $0x840] sm:$0xff]
        %v5391 = vld [vmem:[%s360 + $0x848] sm:$0xff]
        %v5392 = vld [vmem:[%s360 + $0x850] sm:$0xff]
        %v5393 = vld [vmem:[%s360 + $0x858] sm:$0xff]
        %v5394 = vld [vmem:[%s360 + $0x860] sm:$0xff]
        %v5395 = vld [vmem:[%s360 + $0x868] sm:$0xff]
        %v5396 = vld [vmem:[%s360 + $0x870] sm:$0xff]
        %v5397 = vld [vmem:[%s360 + $0x878] sm:$0xff]
        %v5398 = vld [vmem:[%s360 + $0x880] sm:$0xff]
        %v5399 = vld [vmem:[%s360 + $0x888] sm:$0xff]
        %v5400 = vld [vmem:[%s360 + $0x890] sm:$0xff]
        %v5401 = vld [vmem:[%s360 + $0x898] sm:$0xff]
        %v5402 = vld [vmem:[%s360 + $0x8a0] sm:$0xff]
        %v5403 = vld [vmem:[%s360 + $0x8a8] sm:$0xff]
        %v5404 = vld [vmem:[%s360 + $0x8b0] sm:$0xff]
        %v5405 = vld [vmem:[%s360 + $0x8b8] sm:$0xff]
        %v5406 = vld [vmem:[%s360 + $0x8c0] sm:$0xff]
        %v5407 = vld [vmem:[%s360 + $0x8c8] sm:$0xff]
        %v5408 = vld [vmem:[%s360 + $0x8d0] sm:$0xff]
        %v5409 = vld [vmem:[%s360 + $0x8d8] sm:$0xff]
        %v5410 = vld [vmem:[%s360 + $0x8e0] sm:$0xff]
        %v5411 = vld [vmem:[%s360 + $0x8e8] sm:$0xff]
        %v5412 = vld [vmem:[%s360 + $0x8f0] sm:$0xff]
        %v5413 = vld [vmem:[%s360 + $0x8f8] sm:$0xff]
        %v5414 = vld [vmem:[%s360 + $0x900] sm:$0xff]
        %v5415 = vld [vmem:[%s360 + $0x908] sm:$0xff]
        %v5416 = vld [vmem:[%s360 + $0x910] sm:$0xff]
        %v5417 = vld [vmem:[%s360 + $0x918] sm:$0xff]
        %v5418 = vld [vmem:[%s360 + $0x920] sm:$0xff]
        %v5419 = vld [vmem:[%s360 + $0x928] sm:$0xff]
        %v5420 = vld [vmem:[%s360 + $0x930] sm:$0xff]
        %v5421 = vld [vmem:[%s360 + $0x938] sm:$0xff]
        %v5422 = vld [vmem:[%s360 + $0x940] sm:$0xff]
        %v5423 = vld [vmem:[%s360 + $0x948] sm:$0xff]
        %v5424 = vld [vmem:[%s360 + $0x950] sm:$0xff]
        %v5425 = vld [vmem:[%s360 + $0x958] sm:$0xff]
        %v5426 = vld [vmem:[%s360 + $0x960] sm:$0xff]
        %v5427 = vld [vmem:[%s360 + $0x968] sm:$0xff]
        %v5428 = vld [vmem:[%s360 + $0x970] sm:$0xff]
        %v5429 = vld [vmem:[%s360 + $0x978] sm:$0xff]
        %v5430 = vld [vmem:[%s360 + $0x980] sm:$0xff]
        %v5431 = vld [vmem:[%s360 + $0x988] sm:$0xff]
        %v5432 = vld [vmem:[%s360 + $0x990] sm:$0xff]
        %v5433 = vld [vmem:[%s360 + $0x998] sm:$0xff]
        %v5434 = vld [vmem:[%s360 + $0x9a0] sm:$0xff]
        %v5435 = vld [vmem:[%s360 + $0x9a8] sm:$0xff]
        %v5436 = vld [vmem:[%s360 + $0x9b0] sm:$0xff]
        %v5437 = vld [vmem:[%s360 + $0x9b8] sm:$0xff]
        %v5438 = vld [vmem:[%s360 + $0x9c0] sm:$0xff]
        %v5439 = vld [vmem:[%s360 + $0x9c8] sm:$0xff]
        %v5440 = vld [vmem:[%s360 + $0x9d0] sm:$0xff]
        %v5441 = vld [vmem:[%s360 + $0x9d8] sm:$0xff]
        %v5442 = vld [vmem:[%s360 + $0x9e0] sm:$0xff]
        %v5443 = vld [vmem:[%s360 + $0x9e8] sm:$0xff]
        %v5444 = vld [vmem:[%s360 + $0x9f0] sm:$0xff]
        %v5445 = vld [vmem:[%s360 + $0x9f8] sm:$0xff]
        %v5446 = vld [vmem:[%s360 + $0xa00] sm:$0xff]
        %v5447 = vld [vmem:[%s360 + $0xa08] sm:$0xff]
        %v5448 = vld [vmem:[%s360 + $0xa10] sm:$0xff]
        %v5449 = vld [vmem:[%s360 + $0xa18] sm:$0xff]
        %v5450 = vld [vmem:[%s360 + $0xa20] sm:$0xff]
        %v5451 = vld [vmem:[%s360 + $0xa28] sm:$0xff]
        %v5452 = vld [vmem:[%s360 + $0xa30] sm:$0xff]
        %v5453 = vld [vmem:[%s360 + $0xa38] sm:$0xff]
        %v5454 = vld [vmem:[%s360 + $0xa40] sm:$0xff]
        %v5455 = vld [vmem:[%s360 + $0xa48] sm:$0xff]
        %v5456 = vld [vmem:[%s360 + $0xa50] sm:$0xff]
        %v5457 = vld [vmem:[%s360 + $0xa58] sm:$0xff]
        %v5458 = vld [vmem:[%s360 + $0xa60] sm:$0xff]
        %v5459 = vld [vmem:[%s360 + $0xa68] sm:$0xff]
        %v5460 = vld [vmem:[%s360 + $0xa70] sm:$0xff]
        %v5461 = vld [vmem:[%s360 + $0xa78] sm:$0xff]
        %v5462 = vld [vmem:[%s360 + $0xa80] sm:$0xff]
        %v5463 = vld [vmem:[%s360 + $0xa88] sm:$0xff]
        %v5464 = vld [vmem:[%s360 + $0xa90] sm:$0xff]
        %v5465 = vld [vmem:[%s360 + $0xa98] sm:$0xff]
        %v5466 = vld [vmem:[%s360 + $0xaa0] sm:$0xff]
        %v5467 = vld [vmem:[%s360 + $0xaa8] sm:$0xff]
        %v5468 = vld [vmem:[%s360 + $0xab0] sm:$0xff]
        %v5469 = vld [vmem:[%s360 + $0xab8] sm:$0xff]
        %v5470 = vld [vmem:[%s360 + $0xac0] sm:$0xff]
        %v5471 = vld [vmem:[%s360 + $0xac8] sm:$0xff]
        %v5472 = vld [vmem:[%s360 + $0xad0] sm:$0xff]
        %v5473 = vld [vmem:[%s360 + $0xad8] sm:$0xff]
        %v5474 = vld [vmem:[%s360 + $0xae0] sm:$0xff]
        %v5475 = vld [vmem:[%s360 + $0xae8] sm:$0xff]
        %v5476 = vld [vmem:[%s360 + $0xaf0] sm:$0xff]
        %v5477 = vld [vmem:[%s360 + $0xaf8] sm:$0xff]
        %v5478 = vld [vmem:[%s360 + $0xb00] sm:$0xff]
        %v5479 = vld [vmem:[%s360 + $0xb08] sm:$0xff]
        %v5480 = vld [vmem:[%s360 + $0xb10] sm:$0xff]
        %v5481 = vld [vmem:[%s360 + $0xb18] sm:$0xff]
        %v5482 = vld [vmem:[%s360 + $0xb20] sm:$0xff]
        %v5483 = vld [vmem:[%s360 + $0xb28] sm:$0xff]
        %v5484 = vld [vmem:[%s360 + $0xb30] sm:$0xff]
        %v5485 = vld [vmem:[%s360 + $0xb38] sm:$0xff]
        %v5486 = vld [vmem:[%s360 + $0xb40] sm:$0xff]
        %v5487 = vld [vmem:[%s360 + $0xb48] sm:$0xff]
        %v5488 = vld [vmem:[%s360 + $0xb50] sm:$0xff]
        %v5489 = vld [vmem:[%s360 + $0xb58] sm:$0xff]
        %v5490 = vld [vmem:[%s360 + $0xb60] sm:$0xff]
        %v5491 = vld [vmem:[%s360 + $0xb68] sm:$0xff]
        %v5492 = vld [vmem:[%s360 + $0xb70] sm:$0xff]
        %v5493 = vld [vmem:[%s360 + $0xb78] sm:$0xff]
        %v5494 = vld [vmem:[%s360 + $0xb80] sm:$0xff]
        %v5495 = vld [vmem:[%s360 + $0xb88] sm:$0xff]
        %v5496 = vld [vmem:[%s360 + $0xb90] sm:$0xff]
        %v5497 = vld [vmem:[%s360 + $0xb98] sm:$0xff]
        %v5498 = vld [vmem:[%s360 + $0xba0] sm:$0xff]
        %v5499 = vld [vmem:[%s360 + $0xba8] sm:$0xff]
        %v5500 = vld [vmem:[%s360 + $0xbb0] sm:$0xff]
        %v5501 = vld [vmem:[%s360 + $0xbb8] sm:$0xff]
        %v5502 = vld [vmem:[%s360 + $0xbc0] sm:$0xff]
        %v5503 = vld [vmem:[%s360 + $0xbc8] sm:$0xff]
        %v5504 = vld [vmem:[%s360 + $0xbd0] sm:$0xff]
        %v5505 = vld [vmem:[%s360 + $0xbd8] sm:$0xff]
        %v5506 = vld [vmem:[%s360 + $0xbe0] sm:$0xff]
        %v5507 = vld [vmem:[%s360 + $0xbe8] sm:$0xff]
        %v5508 = vld [vmem:[%s360 + $0xbf0] sm:$0xff]
        %v5509 = vld [vmem:[%s360 + $0xbf8] sm:$0xff]
        %v5894 = vunpack.c.l.b16 %v5126
        %v5895 = vunpack.c.h.b16 %v5126
        %v5896 = vunpack.c.l.b16 %v5127
        %v5897 = vunpack.c.h.b16 %v5127
        %v5898 = vunpack.c.l.b16 %v5128
        %v5899 = vunpack.c.h.b16 %v5128
        %v5900 = vunpack.c.l.b16 %v5129
        %v5901 = vunpack.c.h.b16 %v5129
        %v5902 = vunpack.c.l.b16 %v5130
        %v5903 = vunpack.c.h.b16 %v5130
        %v5904 = vunpack.c.l.b16 %v5131
        %v5905 = vunpack.c.h.b16 %v5131
        %v5906 = vunpack.c.l.b16 %v5132
        %v5907 = vunpack.c.h.b16 %v5132
        %v5908 = vunpack.c.l.b16 %v5133
        %v5909 = vunpack.c.h.b16 %v5133
        %v5910 = vunpack.c.l.b16 %v5134
        %v5911 = vunpack.c.h.b16 %v5134
        %v5912 = vunpack.c.l.b16 %v5135
        %v5913 = vunpack.c.h.b16 %v5135
        %v5914 = vunpack.c.l.b16 %v5136
        %v5915 = vunpack.c.h.b16 %v5136
        %v5916 = vunpack.c.l.b16 %v5137
        %v5917 = vunpack.c.h.b16 %v5137
        %v5918 = vunpack.c.l.b16 %v5138
        %v5919 = vunpack.c.h.b16 %v5138
        %v5920 = vunpack.c.l.b16 %v5139
        %v5921 = vunpack.c.h.b16 %v5139
        %v5922 = vunpack.c.l.b16 %v5140
        %v5923 = vunpack.c.h.b16 %v5140
        %v5924 = vunpack.c.l.b16 %v5141
        %v5925 = vunpack.c.h.b16 %v5141
        %v5926 = vunpack.c.l.b16 %v5142
        %v5927 = vunpack.c.h.b16 %v5142
        %v5928 = vunpack.c.l.b16 %v5143
        %v5929 = vunpack.c.h.b16 %v5143
        %v5930 = vunpack.c.l.b16 %v5144
        %v5931 = vunpack.c.h.b16 %v5144
        %v5932 = vunpack.c.l.b16 %v5145
        %v5933 = vunpack.c.h.b16 %v5145
        %v5934 = vunpack.c.l.b16 %v5146
        %v5935 = vunpack.c.h.b16 %v5146
        %v5936 = vunpack.c.l.b16 %v5147
        %v5937 = vunpack.c.h.b16 %v5147
        %v5938 = vunpack.c.l.b16 %v5148
        %v5939 = vunpack.c.h.b16 %v5148
        %v5940 = vunpack.c.l.b16 %v5149
        %v5941 = vunpack.c.h.b16 %v5149
        %v5942 = vunpack.c.l.b16 %v5150
        %v5943 = vunpack.c.h.b16 %v5150
        %v5944 = vunpack.c.l.b16 %v5151
        %v5945 = vunpack.c.h.b16 %v5151
        %v5946 = vunpack.c.l.b16 %v5152
        %v5947 = vunpack.c.h.b16 %v5152
        %v5948 = vunpack.c.l.b16 %v5153
        %v5949 = vunpack.c.h.b16 %v5153
        %v5950 = vunpack.c.l.b16 %v5154
        %v5951 = vunpack.c.h.b16 %v5154
        %v5952 = vunpack.c.l.b16 %v5155
        %v5953 = vunpack.c.h.b16 %v5155
        %v5954 = vunpack.c.l.b16 %v5156
        %v5955 = vunpack.c.h.b16 %v5156
        %v5956 = vunpack.c.l.b16 %v5157
        %v5957 = vunpack.c.h.b16 %v5157
        %v5958 = vunpack.c.l.b16 %v5158
        %v5959 = vunpack.c.h.b16 %v5158
        %v5960 = vunpack.c.l.b16 %v5159
        %v5961 = vunpack.c.h.b16 %v5159
        %v5962 = vunpack.c.l.b16 %v5160
        %v5963 = vunpack.c.h.b16 %v5160
        %v5964 = vunpack.c.l.b16 %v5161
        %v5965 = vunpack.c.h.b16 %v5161
        %v5966 = vunpack.c.l.b16 %v5162
        %v5967 = vunpack.c.h.b16 %v5162
        %v5968 = vunpack.c.l.b16 %v5163
        %v5969 = vunpack.c.h.b16 %v5163
        %v5970 = vunpack.c.l.b16 %v5164
        %v5971 = vunpack.c.h.b16 %v5164
        %v5972 = vunpack.c.l.b16 %v5165
        %v5973 = vunpack.c.h.b16 %v5165
        %v5974 = vunpack.c.l.b16 %v5166
        %v5975 = vunpack.c.h.b16 %v5166
        %v5976 = vunpack.c.l.b16 %v5167
        %v5977 = vunpack.c.h.b16 %v5167
        %v5978 = vunpack.c.l.b16 %v5168
        %v5979 = vunpack.c.h.b16 %v5168
        %v5980 = vunpack.c.l.b16 %v5169
        %v5981 = vunpack.c.h.b16 %v5169
        %v5982 = vunpack.c.l.b16 %v5170
        %v5983 = vunpack.c.h.b16 %v5170
        %v5984 = vunpack.c.l.b16 %v5171
        %v5985 = vunpack.c.h.b16 %v5171
        %v5986 = vunpack.c.l.b16 %v5172
        %v5987 = vunpack.c.h.b16 %v5172
        %v5988 = vunpack.c.l.b16 %v5173
        %v5989 = vunpack.c.h.b16 %v5173
        %v5990 = vunpack.c.l.b16 %v5174
        %v5991 = vunpack.c.h.b16 %v5174
        %v5992 = vunpack.c.l.b16 %v5175
        %v5993 = vunpack.c.h.b16 %v5175
        %v5994 = vunpack.c.l.b16 %v5176
        %v5995 = vunpack.c.h.b16 %v5176
        %v5996 = vunpack.c.l.b16 %v5177
        %v5997 = vunpack.c.h.b16 %v5177
        %v5998 = vunpack.c.l.b16 %v5178
        %v5999 = vunpack.c.h.b16 %v5178
        %v6000 = vunpack.c.l.b16 %v5179
        %v6001 = vunpack.c.h.b16 %v5179
        %v6002 = vunpack.c.l.b16 %v5180
        %v6003 = vunpack.c.h.b16 %v5180
        %v6004 = vunpack.c.l.b16 %v5181
        %v6005 = vunpack.c.h.b16 %v5181
        %v6006 = vunpack.c.l.b16 %v5182
        %v6007 = vunpack.c.h.b16 %v5182
        %v6008 = vunpack.c.l.b16 %v5183
        %v6009 = vunpack.c.h.b16 %v5183
        %v6010 = vunpack.c.l.b16 %v5184
        %v6011 = vunpack.c.h.b16 %v5184
        %v6012 = vunpack.c.l.b16 %v5185
        %v6013 = vunpack.c.h.b16 %v5185
        %v6014 = vunpack.c.l.b16 %v5186
        %v6015 = vunpack.c.h.b16 %v5186
        %v6016 = vunpack.c.l.b16 %v5187
        %v6017 = vunpack.c.h.b16 %v5187
        %v6018 = vunpack.c.l.b16 %v5188
        %v6019 = vunpack.c.h.b16 %v5188
        %v6020 = vunpack.c.l.b16 %v5189
        %v6021 = vunpack.c.h.b16 %v5189
        %v6022 = vunpack.c.l.b16 %v5190
        %v6023 = vunpack.c.h.b16 %v5190
        %v6024 = vunpack.c.l.b16 %v5191
        %v6025 = vunpack.c.h.b16 %v5191
        %v6026 = vunpack.c.l.b16 %v5192
        %v6027 = vunpack.c.h.b16 %v5192
        %v6028 = vunpack.c.l.b16 %v5193
        %v6029 = vunpack.c.h.b16 %v5193
        %v6030 = vunpack.c.l.b16 %v5194
        %v6031 = vunpack.c.h.b16 %v5194
        %v6032 = vunpack.c.l.b16 %v5195
        %v6033 = vunpack.c.h.b16 %v5195
        %v6034 = vunpack.c.l.b16 %v5196
        %v6035 = vunpack.c.h.b16 %v5196
        %v6036 = vunpack.c.l.b16 %v5197
        %v6037 = vunpack.c.h.b16 %v5197
        %v6038 = vunpack.c.l.b16 %v5198
        %v6039 = vunpack.c.h.b16 %v5198
        %v6040 = vunpack.c.l.b16 %v5199
        %v6041 = vunpack.c.h.b16 %v5199
        %v6042 = vunpack.c.l.b16 %v5200
        %v6043 = vunpack.c.h.b16 %v5200
        %v6044 = vunpack.c.l.b16 %v5201
        %v6045 = vunpack.c.h.b16 %v5201
        %v6046 = vunpack.c.l.b16 %v5202
        %v6047 = vunpack.c.h.b16 %v5202
        %v6048 = vunpack.c.l.b16 %v5203
        %v6049 = vunpack.c.h.b16 %v5203
        %v6050 = vunpack.c.l.b16 %v5204
        %v6051 = vunpack.c.h.b16 %v5204
        %v6052 = vunpack.c.l.b16 %v5205
        %v6053 = vunpack.c.h.b16 %v5205
        %v6054 = vunpack.c.l.b16 %v5206
        %v6055 = vunpack.c.h.b16 %v5206
        %v6056 = vunpack.c.l.b16 %v5207
        %v6057 = vunpack.c.h.b16 %v5207
        %v6058 = vunpack.c.l.b16 %v5208
        %v6059 = vunpack.c.h.b16 %v5208
        %v6060 = vunpack.c.l.b16 %v5209
        %v6061 = vunpack.c.h.b16 %v5209
        %v6062 = vunpack.c.l.b16 %v5210
        %v6063 = vunpack.c.h.b16 %v5210
        %v6064 = vunpack.c.l.b16 %v5211
        %v6065 = vunpack.c.h.b16 %v5211
        %v6066 = vunpack.c.l.b16 %v5212
        %v6067 = vunpack.c.h.b16 %v5212
        %v6068 = vunpack.c.l.b16 %v5213
        %v6069 = vunpack.c.h.b16 %v5213
        %v6070 = vunpack.c.l.b16 %v5214
        %v6071 = vunpack.c.h.b16 %v5214
        %v6072 = vunpack.c.l.b16 %v5215
        %v6073 = vunpack.c.h.b16 %v5215
        %v6074 = vunpack.c.l.b16 %v5216
        %v6075 = vunpack.c.h.b16 %v5216
        %v6076 = vunpack.c.l.b16 %v5217
        %v6077 = vunpack.c.h.b16 %v5217
        %v6078 = vunpack.c.l.b16 %v5218
        %v6079 = vunpack.c.h.b16 %v5218
        %v6080 = vunpack.c.l.b16 %v5219
        %v6081 = vunpack.c.h.b16 %v5219
        %v6082 = vunpack.c.l.b16 %v5220
        %v6083 = vunpack.c.h.b16 %v5220
        %v6084 = vunpack.c.l.b16 %v5221
        %v6085 = vunpack.c.h.b16 %v5221
        %v6086 = vunpack.c.l.b16 %v5222
        %v6087 = vunpack.c.h.b16 %v5222
        %v6088 = vunpack.c.l.b16 %v5223
        %v6089 = vunpack.c.h.b16 %v5223
        %v6090 = vunpack.c.l.b16 %v5224
        %v6091 = vunpack.c.h.b16 %v5224
        %v6092 = vunpack.c.l.b16 %v5225
        %v6093 = vunpack.c.h.b16 %v5225
        %v6094 = vunpack.c.l.b16 %v5226
        %v6095 = vunpack.c.h.b16 %v5226
        %v6096 = vunpack.c.l.b16 %v5227
        %v6097 = vunpack.c.h.b16 %v5227
        %v6098 = vunpack.c.l.b16 %v5228
        %v6099 = vunpack.c.h.b16 %v5228
        %v6100 = vunpack.c.l.b16 %v5229
        %v6101 = vunpack.c.h.b16 %v5229
        %v6102 = vunpack.c.l.b16 %v5230
        %v6103 = vunpack.c.h.b16 %v5230
        %v6104 = vunpack.c.l.b16 %v5231
        %v6105 = vunpack.c.h.b16 %v5231
        %v6106 = vunpack.c.l.b16 %v5232
        %v6107 = vunpack.c.h.b16 %v5232
        %v6108 = vunpack.c.l.b16 %v5233
        %v6109 = vunpack.c.h.b16 %v5233
        %v6110 = vunpack.c.l.b16 %v5234
        %v6111 = vunpack.c.h.b16 %v5234
        %v6112 = vunpack.c.l.b16 %v5235
        %v6113 = vunpack.c.h.b16 %v5235
        %v6114 = vunpack.c.l.b16 %v5236
        %v6115 = vunpack.c.h.b16 %v5236
        %v6116 = vunpack.c.l.b16 %v5237
        %v6117 = vunpack.c.h.b16 %v5237
        %v6118 = vunpack.c.l.b16 %v5238
        %v6119 = vunpack.c.h.b16 %v5238
        %v6120 = vunpack.c.l.b16 %v5239
        %v6121 = vunpack.c.h.b16 %v5239
        %v6122 = vunpack.c.l.b16 %v5240
        %v6123 = vunpack.c.h.b16 %v5240
        %v6124 = vunpack.c.l.b16 %v5241
        %v6125 = vunpack.c.h.b16 %v5241
        %v6126 = vunpack.c.l.b16 %v5242
        %v6127 = vunpack.c.h.b16 %v5242
        %v6128 = vunpack.c.l.b16 %v5243
        %v6129 = vunpack.c.h.b16 %v5243
        %v6130 = vunpack.c.l.b16 %v5244
        %v6131 = vunpack.c.h.b16 %v5244
        %v6132 = vunpack.c.l.b16 %v5245
        %v6133 = vunpack.c.h.b16 %v5245
        %v6134 = vunpack.c.l.b16 %v5246
        %v6135 = vunpack.c.h.b16 %v5246
        %v6136 = vunpack.c.l.b16 %v5247
        %v6137 = vunpack.c.h.b16 %v5247
        %v6138 = vunpack.c.l.b16 %v5248
        %v6139 = vunpack.c.h.b16 %v5248
        %v6140 = vunpack.c.l.b16 %v5249
        %v6141 = vunpack.c.h.b16 %v5249
        %v6142 = vunpack.c.l.b16 %v5250
        %v6143 = vunpack.c.h.b16 %v5250
        %v6144 = vunpack.c.l.b16 %v5251
        %v6145 = vunpack.c.h.b16 %v5251
        %v6146 = vunpack.c.l.b16 %v5252
        %v6147 = vunpack.c.h.b16 %v5252
        %v6148 = vunpack.c.l.b16 %v5253
        %v6149 = vunpack.c.h.b16 %v5253
        %v6150 = vunpack.c.l.b16 %v5254
        %v6151 = vunpack.c.h.b16 %v5254
        %v6152 = vunpack.c.l.b16 %v5255
        %v6153 = vunpack.c.h.b16 %v5255
        %v6154 = vunpack.c.l.b16 %v5256
        %v6155 = vunpack.c.h.b16 %v5256
        %v6156 = vunpack.c.l.b16 %v5257
        %v6157 = vunpack.c.h.b16 %v5257
        %v6158 = vunpack.c.l.b16 %v5258
        %v6159 = vunpack.c.h.b16 %v5258
        %v6160 = vunpack.c.l.b16 %v5259
        %v6161 = vunpack.c.h.b16 %v5259
        %v6162 = vunpack.c.l.b16 %v5260
        %v6163 = vunpack.c.h.b16 %v5260
        %v6164 = vunpack.c.l.b16 %v5261
        %v6165 = vunpack.c.h.b16 %v5261
        %v6166 = vunpack.c.l.b16 %v5262
        %v6167 = vunpack.c.h.b16 %v5262
        %v6168 = vunpack.c.l.b16 %v5263
        %v6169 = vunpack.c.h.b16 %v5263
        %v6170 = vunpack.c.l.b16 %v5264
        %v6171 = vunpack.c.h.b16 %v5264
        %v6172 = vunpack.c.l.b16 %v5265
        %v6173 = vunpack.c.h.b16 %v5265
        %v6174 = vunpack.c.l.b16 %v5266
        %v6175 = vunpack.c.h.b16 %v5266
        %v6176 = vunpack.c.l.b16 %v5267
        %v6177 = vunpack.c.h.b16 %v5267
        %v6178 = vunpack.c.l.b16 %v5268
        %v6179 = vunpack.c.h.b16 %v5268
        %v6180 = vunpack.c.l.b16 %v5269
        %v6181 = vunpack.c.h.b16 %v5269
        %v6182 = vunpack.c.l.b16 %v5270
        %v6183 = vunpack.c.h.b16 %v5270
        %v6184 = vunpack.c.l.b16 %v5271
        %v6185 = vunpack.c.h.b16 %v5271
        %v6186 = vunpack.c.l.b16 %v5272
        %v6187 = vunpack.c.h.b16 %v5272
        %v6188 = vunpack.c.l.b16 %v5273
        %v6189 = vunpack.c.h.b16 %v5273
        %v6190 = vunpack.c.l.b16 %v5274
        %v6191 = vunpack.c.h.b16 %v5274
        %v6192 = vunpack.c.l.b16 %v5275
        %v6193 = vunpack.c.h.b16 %v5275
        %v6194 = vunpack.c.l.b16 %v5276
        %v6195 = vunpack.c.h.b16 %v5276
        %v6196 = vunpack.c.l.b16 %v5277
        %v6197 = vunpack.c.h.b16 %v5277
        %v6198 = vunpack.c.l.b16 %v5278
        %v6199 = vunpack.c.h.b16 %v5278
        %v6200 = vunpack.c.l.b16 %v5279
        %v6201 = vunpack.c.h.b16 %v5279
        %v6202 = vunpack.c.l.b16 %v5280
        %v6203 = vunpack.c.h.b16 %v5280
        %v6204 = vunpack.c.l.b16 %v5281
        %v6205 = vunpack.c.h.b16 %v5281
        %v6206 = vunpack.c.l.b16 %v5282
        %v6207 = vunpack.c.h.b16 %v5282
        %v6208 = vunpack.c.l.b16 %v5283
        %v6209 = vunpack.c.h.b16 %v5283
        %v6210 = vunpack.c.l.b16 %v5284
        %v6211 = vunpack.c.h.b16 %v5284
        %v6212 = vunpack.c.l.b16 %v5285
        %v6213 = vunpack.c.h.b16 %v5285
        %v6214 = vunpack.c.l.b16 %v5286
        %v6215 = vunpack.c.h.b16 %v5286
        %v6216 = vunpack.c.l.b16 %v5287
        %v6217 = vunpack.c.h.b16 %v5287
        %v6218 = vunpack.c.l.b16 %v5288
        %v6219 = vunpack.c.h.b16 %v5288
        %v6220 = vunpack.c.l.b16 %v5289
        %v6221 = vunpack.c.h.b16 %v5289
        %v6222 = vunpack.c.l.b16 %v5290
        %v6223 = vunpack.c.h.b16 %v5290
        %v6224 = vunpack.c.l.b16 %v5291
        %v6225 = vunpack.c.h.b16 %v5291
        %v6226 = vunpack.c.l.b16 %v5292
        %v6227 = vunpack.c.h.b16 %v5292
        %v6228 = vunpack.c.l.b16 %v5293
        %v6229 = vunpack.c.h.b16 %v5293
        %v6230 = vunpack.c.l.b16 %v5294
        %v6231 = vunpack.c.h.b16 %v5294
        %v6232 = vunpack.c.l.b16 %v5295
        %v6233 = vunpack.c.h.b16 %v5295
        %v6234 = vunpack.c.l.b16 %v5296
        %v6235 = vunpack.c.h.b16 %v5296
        %v6236 = vunpack.c.l.b16 %v5297
        %v6237 = vunpack.c.h.b16 %v5297
        %v6238 = vunpack.c.l.b16 %v5298
        %v6239 = vunpack.c.h.b16 %v5298
        %v6240 = vunpack.c.l.b16 %v5299
        %v6241 = vunpack.c.h.b16 %v5299
        %v6242 = vunpack.c.l.b16 %v5300
        %v6243 = vunpack.c.h.b16 %v5300
        %v6244 = vunpack.c.l.b16 %v5301
        %v6245 = vunpack.c.h.b16 %v5301
        %v6246 = vunpack.c.l.b16 %v5302
        %v6247 = vunpack.c.h.b16 %v5302
        %v6248 = vunpack.c.l.b16 %v5303
        %v6249 = vunpack.c.h.b16 %v5303
        %v6250 = vunpack.c.l.b16 %v5304
        %v6251 = vunpack.c.h.b16 %v5304
        %v6252 = vunpack.c.l.b16 %v5305
        %v6253 = vunpack.c.h.b16 %v5305
        %v6254 = vunpack.c.l.b16 %v5306
        %v6255 = vunpack.c.h.b16 %v5306
        %v6256 = vunpack.c.l.b16 %v5307
        %v6257 = vunpack.c.h.b16 %v5307
        %v6258 = vunpack.c.l.b16 %v5308
        %v6259 = vunpack.c.h.b16 %v5308
        %v6260 = vunpack.c.l.b16 %v5309
        %v6261 = vunpack.c.h.b16 %v5309
        %v6262 = vunpack.c.l.b16 %v5310
        %v6263 = vunpack.c.h.b16 %v5310
        %v6264 = vunpack.c.l.b16 %v5311
        %v6265 = vunpack.c.h.b16 %v5311
        %v6266 = vunpack.c.l.b16 %v5312
        %v6267 = vunpack.c.h.b16 %v5312
        %v6268 = vunpack.c.l.b16 %v5313
        %v6269 = vunpack.c.h.b16 %v5313
        %v6270 = vunpack.c.l.b16 %v5314
        %v6271 = vunpack.c.h.b16 %v5314
        %v6272 = vunpack.c.l.b16 %v5315
        %v6273 = vunpack.c.h.b16 %v5315
        %v6274 = vunpack.c.l.b16 %v5316
        %v6275 = vunpack.c.h.b16 %v5316
        %v6276 = vunpack.c.l.b16 %v5317
        %v6277 = vunpack.c.h.b16 %v5317
        %v6278 = vunpack.c.l.b16 %v5318
        %v6279 = vunpack.c.h.b16 %v5318
        %v6280 = vunpack.c.l.b16 %v5319
        %v6281 = vunpack.c.h.b16 %v5319
        %v6282 = vunpack.c.l.b16 %v5320
        %v6283 = vunpack.c.h.b16 %v5320
        %v6284 = vunpack.c.l.b16 %v5321
        %v6285 = vunpack.c.h.b16 %v5321
        %v6286 = vunpack.c.l.b16 %v5322
        %v6287 = vunpack.c.h.b16 %v5322
        %v6288 = vunpack.c.l.b16 %v5323
        %v6289 = vunpack.c.h.b16 %v5323
        %v6290 = vunpack.c.l.b16 %v5324
        %v6291 = vunpack.c.h.b16 %v5324
        %v6292 = vunpack.c.l.b16 %v5325
        %v6293 = vunpack.c.h.b16 %v5325
        %v6294 = vunpack.c.l.b16 %v5326
        %v6295 = vunpack.c.h.b16 %v5326
        %v6296 = vunpack.c.l.b16 %v5327
        %v6297 = vunpack.c.h.b16 %v5327
        %v6298 = vunpack.c.l.b16 %v5328
        %v6299 = vunpack.c.h.b16 %v5328
        %v6300 = vunpack.c.l.b16 %v5329
        %v6301 = vunpack.c.h.b16 %v5329
        %v6302 = vunpack.c.l.b16 %v5330
        %v6303 = vunpack.c.h.b16 %v5330
        %v6304 = vunpack.c.l.b16 %v5331
        %v6305 = vunpack.c.h.b16 %v5331
        %v6306 = vunpack.c.l.b16 %v5332
        %v6307 = vunpack.c.h.b16 %v5332
        %v6308 = vunpack.c.l.b16 %v5333
        %v6309 = vunpack.c.h.b16 %v5333
        %v6310 = vunpack.c.l.b16 %v5334
        %v6311 = vunpack.c.h.b16 %v5334
        %v6312 = vunpack.c.l.b16 %v5335
        %v6313 = vunpack.c.h.b16 %v5335
        %v6314 = vunpack.c.l.b16 %v5336
        %v6315 = vunpack.c.h.b16 %v5336
        %v6316 = vunpack.c.l.b16 %v5337
        %v6317 = vunpack.c.h.b16 %v5337
        %v6318 = vunpack.c.l.b16 %v5338
        %v6319 = vunpack.c.h.b16 %v5338
        %v6320 = vunpack.c.l.b16 %v5339
        %v6321 = vunpack.c.h.b16 %v5339
        %v6322 = vunpack.c.l.b16 %v5340
        %v6323 = vunpack.c.h.b16 %v5340
        %v6324 = vunpack.c.l.b16 %v5341
        %v6325 = vunpack.c.h.b16 %v5341
        %v6326 = vunpack.c.l.b16 %v5342
        %v6327 = vunpack.c.h.b16 %v5342
        %v6328 = vunpack.c.l.b16 %v5343
        %v6329 = vunpack.c.h.b16 %v5343
        %v6330 = vunpack.c.l.b16 %v5344
        %v6331 = vunpack.c.h.b16 %v5344
        %v6332 = vunpack.c.l.b16 %v5345
        %v6333 = vunpack.c.h.b16 %v5345
        %v6334 = vunpack.c.l.b16 %v5346
        %v6335 = vunpack.c.h.b16 %v5346
        %v6336 = vunpack.c.l.b16 %v5347
        %v6337 = vunpack.c.h.b16 %v5347
        %v6338 = vunpack.c.l.b16 %v5348
        %v6339 = vunpack.c.h.b16 %v5348
        %v6340 = vunpack.c.l.b16 %v5349
        %v6341 = vunpack.c.h.b16 %v5349
        %v6342 = vunpack.c.l.b16 %v5350
        %v6343 = vunpack.c.h.b16 %v5350
        %v6344 = vunpack.c.l.b16 %v5351
        %v6345 = vunpack.c.h.b16 %v5351
        %v6346 = vunpack.c.l.b16 %v5352
        %v6347 = vunpack.c.h.b16 %v5352
        %v6348 = vunpack.c.l.b16 %v5353
        %v6349 = vunpack.c.h.b16 %v5353
        %v6350 = vunpack.c.l.b16 %v5354
        %v6351 = vunpack.c.h.b16 %v5354
        %v6352 = vunpack.c.l.b16 %v5355
        %v6353 = vunpack.c.h.b16 %v5355
        %v6354 = vunpack.c.l.b16 %v5356
        %v6355 = vunpack.c.h.b16 %v5356
        %v6356 = vunpack.c.l.b16 %v5357
        %v6357 = vunpack.c.h.b16 %v5357
        %v6358 = vunpack.c.l.b16 %v5358
        %v6359 = vunpack.c.h.b16 %v5358
        %v6360 = vunpack.c.l.b16 %v5359
        %v6361 = vunpack.c.h.b16 %v5359
        %v6362 = vunpack.c.l.b16 %v5360
        %v6363 = vunpack.c.h.b16 %v5360
        %v6364 = vunpack.c.l.b16 %v5361
        %v6365 = vunpack.c.h.b16 %v5361
        %v6366 = vunpack.c.l.b16 %v5362
        %v6367 = vunpack.c.h.b16 %v5362
        %v6368 = vunpack.c.l.b16 %v5363
        %v6369 = vunpack.c.h.b16 %v5363
        %v6370 = vunpack.c.l.b16 %v5364
        %v6371 = vunpack.c.h.b16 %v5364
        %v6372 = vunpack.c.l.b16 %v5365
        %v6373 = vunpack.c.h.b16 %v5365
        %v6374 = vunpack.c.l.b16 %v5366
        %v6375 = vunpack.c.h.b16 %v5366
        %v6376 = vunpack.c.l.b16 %v5367
        %v6377 = vunpack.c.h.b16 %v5367
        %v6378 = vunpack.c.l.b16 %v5368
        %v6379 = vunpack.c.h.b16 %v5368
        %v6380 = vunpack.c.l.b16 %v5369
        %v6381 = vunpack.c.h.b16 %v5369
        %v6382 = vunpack.c.l.b16 %v5370
        %v6383 = vunpack.c.h.b16 %v5370
        %v6384 = vunpack.c.l.b16 %v5371
        %v6385 = vunpack.c.h.b16 %v5371
        %v6386 = vunpack.c.l.b16 %v5372
        %v6387 = vunpack.c.h.b16 %v5372
        %v6388 = vunpack.c.l.b16 %v5373
        %v6389 = vunpack.c.h.b16 %v5373
        %v6390 = vunpack.c.l.b16 %v5374
        %v6391 = vunpack.c.h.b16 %v5374
        %v6392 = vunpack.c.l.b16 %v5375
        %v6393 = vunpack.c.h.b16 %v5375
        %v6394 = vunpack.c.l.b16 %v5376
        %v6395 = vunpack.c.h.b16 %v5376
        %v6396 = vunpack.c.l.b16 %v5377
        %v6397 = vunpack.c.h.b16 %v5377
        %v6398 = vunpack.c.l.b16 %v5378
        %v6399 = vunpack.c.h.b16 %v5378
        %v6400 = vunpack.c.l.b16 %v5379
        %v6401 = vunpack.c.h.b16 %v5379
        %v6402 = vunpack.c.l.b16 %v5380
        %v6403 = vunpack.c.h.b16 %v5380
        %v6404 = vunpack.c.l.b16 %v5381
        %v6405 = vunpack.c.h.b16 %v5381
        %v6406 = vunpack.c.l.b16 %v5382
        %v6407 = vunpack.c.h.b16 %v5382
        %v6408 = vunpack.c.l.b16 %v5383
        %v6409 = vunpack.c.h.b16 %v5383
        %v6410 = vunpack.c.l.b16 %v5384
        %v6411 = vunpack.c.h.b16 %v5384
        %v6412 = vunpack.c.l.b16 %v5385
        %v6413 = vunpack.c.h.b16 %v5385
        %v6414 = vunpack.c.l.b16 %v5386
        %v6415 = vunpack.c.h.b16 %v5386
        %v6416 = vunpack.c.l.b16 %v5387
        %v6417 = vunpack.c.h.b16 %v5387
        %v6418 = vunpack.c.l.b16 %v5388
        %v6419 = vunpack.c.h.b16 %v5388
        %v6420 = vunpack.c.l.b16 %v5389
        %v6421 = vunpack.c.h.b16 %v5389
        %v6422 = vunpack.c.l.b16 %v5390
        %v6423 = vunpack.c.h.b16 %v5390
        %v6424 = vunpack.c.l.b16 %v5391
        %v6425 = vunpack.c.h.b16 %v5391
        %v6426 = vunpack.c.l.b16 %v5392
        %v6427 = vunpack.c.h.b16 %v5392
        %v6428 = vunpack.c.l.b16 %v5393
        %v6429 = vunpack.c.h.b16 %v5393
        %v6430 = vunpack.c.l.b16 %v5394
        %v6431 = vunpack.c.h.b16 %v5394
        %v6432 = vunpack.c.l.b16 %v5395
        %v6433 = vunpack.c.h.b16 %v5395
        %v6434 = vunpack.c.l.b16 %v5396
        %v6435 = vunpack.c.h.b16 %v5396
        %v6436 = vunpack.c.l.b16 %v5397
        %v6437 = vunpack.c.h.b16 %v5397
        %v6438 = vunpack.c.l.b16 %v5398
        %v6439 = vunpack.c.h.b16 %v5398
        %v6440 = vunpack.c.l.b16 %v5399
        %v6441 = vunpack.c.h.b16 %v5399
        %v6442 = vunpack.c.l.b16 %v5400
        %v6443 = vunpack.c.h.b16 %v5400
        %v6444 = vunpack.c.l.b16 %v5401
        %v6445 = vunpack.c.h.b16 %v5401
        %v6446 = vunpack.c.l.b16 %v5402
        %v6447 = vunpack.c.h.b16 %v5402
        %v6448 = vunpack.c.l.b16 %v5403
        %v6449 = vunpack.c.h.b16 %v5403
        %v6450 = vunpack.c.l.b16 %v5404
        %v6451 = vunpack.c.h.b16 %v5404
        %v6452 = vunpack.c.l.b16 %v5405
        %v6453 = vunpack.c.h.b16 %v5405
        %v6454 = vunpack.c.l.b16 %v5406
        %v6455 = vunpack.c.h.b16 %v5406
        %v6456 = vunpack.c.l.b16 %v5407
        %v6457 = vunpack.c.h.b16 %v5407
        %v6458 = vunpack.c.l.b16 %v5408
        %v6459 = vunpack.c.h.b16 %v5408
        %v6460 = vunpack.c.l.b16 %v5409
        %v6461 = vunpack.c.h.b16 %v5409
        %v6462 = vunpack.c.l.b16 %v5410
        %v6463 = vunpack.c.h.b16 %v5410
        %v6464 = vunpack.c.l.b16 %v5411
        %v6465 = vunpack.c.h.b16 %v5411
        %v6466 = vunpack.c.l.b16 %v5412
        %v6467 = vunpack.c.h.b16 %v5412
        %v6468 = vunpack.c.l.b16 %v5413
        %v6469 = vunpack.c.h.b16 %v5413
        %v6470 = vunpack.c.l.b16 %v5414
        %v6471 = vunpack.c.h.b16 %v5414
        %v6472 = vunpack.c.l.b16 %v5415
        %v6473 = vunpack.c.h.b16 %v5415
        %v6474 = vunpack.c.l.b16 %v5416
        %v6475 = vunpack.c.h.b16 %v5416
        %v6476 = vunpack.c.l.b16 %v5417
        %v6477 = vunpack.c.h.b16 %v5417
        %v6478 = vunpack.c.l.b16 %v5418
        %v6479 = vunpack.c.h.b16 %v5418
        %v6480 = vunpack.c.l.b16 %v5419
        %v6481 = vunpack.c.h.b16 %v5419
        %v6482 = vunpack.c.l.b16 %v5420
        %v6483 = vunpack.c.h.b16 %v5420
        %v6484 = vunpack.c.l.b16 %v5421
        %v6485 = vunpack.c.h.b16 %v5421
        %v6486 = vunpack.c.l.b16 %v5422
        %v6487 = vunpack.c.h.b16 %v5422
        %v6488 = vunpack.c.l.b16 %v5423
        %v6489 = vunpack.c.h.b16 %v5423
        %v6490 = vunpack.c.l.b16 %v5424
        %v6491 = vunpack.c.h.b16 %v5424
        %v6492 = vunpack.c.l.b16 %v5425
        %v6493 = vunpack.c.h.b16 %v5425
        %v6494 = vunpack.c.l.b16 %v5426
        %v6495 = vunpack.c.h.b16 %v5426
        %v6496 = vunpack.c.l.b16 %v5427
        %v6497 = vunpack.c.h.b16 %v5427
        %v6498 = vunpack.c.l.b16 %v5428
        %v6499 = vunpack.c.h.b16 %v5428
        %v6500 = vunpack.c.l.b16 %v5429
        %v6501 = vunpack.c.h.b16 %v5429
        %v6502 = vunpack.c.l.b16 %v5430
        %v6503 = vunpack.c.h.b16 %v5430
        %v6504 = vunpack.c.l.b16 %v5431
        %v6505 = vunpack.c.h.b16 %v5431
        %v6506 = vunpack.c.l.b16 %v5432
        %v6507 = vunpack.c.h.b16 %v5432
        %v6508 = vunpack.c.l.b16 %v5433
        %v6509 = vunpack.c.h.b16 %v5433
        %v6510 = vunpack.c.l.b16 %v5434
        %v6511 = vunpack.c.h.b16 %v5434
        %v6512 = vunpack.c.l.b16 %v5435
        %v6513 = vunpack.c.h.b16 %v5435
        %v6514 = vunpack.c.l.b16 %v5436
        %v6515 = vunpack.c.h.b16 %v5436
        %v6516 = vunpack.c.l.b16 %v5437
        %v6517 = vunpack.c.h.b16 %v5437
        %v6518 = vunpack.c.l.b16 %v5438
        %v6519 = vunpack.c.h.b16 %v5438
        %v6520 = vunpack.c.l.b16 %v5439
        %v6521 = vunpack.c.h.b16 %v5439
        %v6522 = vunpack.c.l.b16 %v5440
        %v6523 = vunpack.c.h.b16 %v5440
        %v6524 = vunpack.c.l.b16 %v5441
        %v6525 = vunpack.c.h.b16 %v5441
        %v6526 = vunpack.c.l.b16 %v5442
        %v6527 = vunpack.c.h.b16 %v5442
        %v6528 = vunpack.c.l.b16 %v5443
        %v6529 = vunpack.c.h.b16 %v5443
        %v6530 = vunpack.c.l.b16 %v5444
        %v6531 = vunpack.c.h.b16 %v5444
        %v6532 = vunpack.c.l.b16 %v5445
        %v6533 = vunpack.c.h.b16 %v5445
        %v6534 = vunpack.c.l.b16 %v5446
        %v6535 = vunpack.c.h.b16 %v5446
        %v6536 = vunpack.c.l.b16 %v5447
        %v6537 = vunpack.c.h.b16 %v5447
        %v6538 = vunpack.c.l.b16 %v5448
        %v6539 = vunpack.c.h.b16 %v5448
        %v6540 = vunpack.c.l.b16 %v5449
        %v6541 = vunpack.c.h.b16 %v5449
        %v6542 = vunpack.c.l.b16 %v5450
        %v6543 = vunpack.c.h.b16 %v5450
        %v6544 = vunpack.c.l.b16 %v5451
        %v6545 = vunpack.c.h.b16 %v5451
        %v6546 = vunpack.c.l.b16 %v5452
        %v6547 = vunpack.c.h.b16 %v5452
        %v6548 = vunpack.c.l.b16 %v5453
        %v6549 = vunpack.c.h.b16 %v5453
        %v6550 = vunpack.c.l.b16 %v5454
        %v6551 = vunpack.c.h.b16 %v5454
        %v6552 = vunpack.c.l.b16 %v5455
        %v6553 = vunpack.c.h.b16 %v5455
        %v6554 = vunpack.c.l.b16 %v5456
        %v6555 = vunpack.c.h.b16 %v5456
        %v6556 = vunpack.c.l.b16 %v5457
        %v6557 = vunpack.c.h.b16 %v5457
        %v6558 = vunpack.c.l.b16 %v5458
        %v6559 = vunpack.c.h.b16 %v5458
        %v6560 = vunpack.c.l.b16 %v5459
        %v6561 = vunpack.c.h.b16 %v5459
        %v6562 = vunpack.c.l.b16 %v5460
        %v6563 = vunpack.c.h.b16 %v5460
        %v6564 = vunpack.c.l.b16 %v5461
        %v6565 = vunpack.c.h.b16 %v5461
        %v6566 = vunpack.c.l.b16 %v5462
        %v6567 = vunpack.c.h.b16 %v5462
        %v6568 = vunpack.c.l.b16 %v5463
        %v6569 = vunpack.c.h.b16 %v5463
        %v6570 = vunpack.c.l.b16 %v5464
        %v6571 = vunpack.c.h.b16 %v5464
        %v6572 = vunpack.c.l.b16 %v5465
        %v6573 = vunpack.c.h.b16 %v5465
        %v6574 = vunpack.c.l.b16 %v5466
        %v6575 = vunpack.c.h.b16 %v5466
        %v6576 = vunpack.c.l.b16 %v5467
        %v6577 = vunpack.c.h.b16 %v5467
        %v6578 = vunpack.c.l.b16 %v5468
        %v6579 = vunpack.c.h.b16 %v5468
        %v6580 = vunpack.c.l.b16 %v5469
        %v6581 = vunpack.c.h.b16 %v5469
        %v6582 = vunpack.c.l.b16 %v5470
        %v6583 = vunpack.c.h.b16 %v5470
        %v6584 = vunpack.c.l.b16 %v5471
        %v6585 = vunpack.c.h.b16 %v5471
        %v6586 = vunpack.c.l.b16 %v5472
        %v6587 = vunpack.c.h.b16 %v5472
        %v6588 = vunpack.c.l.b16 %v5473
        %v6589 = vunpack.c.h.b16 %v5473
        %v6590 = vunpack.c.l.b16 %v5474
        %v6591 = vunpack.c.h.b16 %v5474
        %v6592 = vunpack.c.l.b16 %v5475
        %v6593 = vunpack.c.h.b16 %v5475
        %v6594 = vunpack.c.l.b16 %v5476
        %v6595 = vunpack.c.h.b16 %v5476
        %v6596 = vunpack.c.l.b16 %v5477
        %v6597 = vunpack.c.h.b16 %v5477
        %v6598 = vunpack.c.l.b16 %v5478
        %v6599 = vunpack.c.h.b16 %v5478
        %v6600 = vunpack.c.l.b16 %v5479
        %v6601 = vunpack.c.h.b16 %v5479
        %v6602 = vunpack.c.l.b16 %v5480
        %v6603 = vunpack.c.h.b16 %v5480
        %v6604 = vunpack.c.l.b16 %v5481
        %v6605 = vunpack.c.h.b16 %v5481
        %v6606 = vunpack.c.l.b16 %v5482
        %v6607 = vunpack.c.h.b16 %v5482
        %v6608 = vunpack.c.l.b16 %v5483
        %v6609 = vunpack.c.h.b16 %v5483
        %v6610 = vunpack.c.l.b16 %v5484
        %v6611 = vunpack.c.h.b16 %v5484
        %v6612 = vunpack.c.l.b16 %v5485
        %v6613 = vunpack.c.h.b16 %v5485
        %v6614 = vunpack.c.l.b16 %v5486
        %v6615 = vunpack.c.h.b16 %v5486
        %v6616 = vunpack.c.l.b16 %v5487
        %v6617 = vunpack.c.h.b16 %v5487
        %v6618 = vunpack.c.l.b16 %v5488
        %v6619 = vunpack.c.h.b16 %v5488
        %v6620 = vunpack.c.l.b16 %v5489
        %v6621 = vunpack.c.h.b16 %v5489
        %v6622 = vunpack.c.l.b16 %v5490
        %v6623 = vunpack.c.h.b16 %v5490
        %v6624 = vunpack.c.l.b16 %v5491
        %v6625 = vunpack.c.h.b16 %v5491
        %v6626 = vunpack.c.l.b16 %v5492
        %v6627 = vunpack.c.h.b16 %v5492
        %v6628 = vunpack.c.l.b16 %v5493
        %v6629 = vunpack.c.h.b16 %v5493
        %v6630 = vunpack.c.l.b16 %v5494
        %v6631 = vunpack.c.h.b16 %v5494
        %v6632 = vunpack.c.l.b16 %v5495
        %v6633 = vunpack.c.h.b16 %v5495
        %v6634 = vunpack.c.l.b16 %v5496
        %v6635 = vunpack.c.h.b16 %v5496
        %v6636 = vunpack.c.l.b16 %v5497
        %v6637 = vunpack.c.h.b16 %v5497
        %v6638 = vunpack.c.l.b16 %v5498
        %v6639 = vunpack.c.h.b16 %v5498
        %v6640 = vunpack.c.l.b16 %v5499
        %v6641 = vunpack.c.h.b16 %v5499
        %v6642 = vunpack.c.l.b16 %v5500
        %v6643 = vunpack.c.h.b16 %v5500
        %v6644 = vunpack.c.l.b16 %v5501
        %v6645 = vunpack.c.h.b16 %v5501
        %v6646 = vunpack.c.l.b16 %v5502
        %v6647 = vunpack.c.h.b16 %v5502
        %v6648 = vunpack.c.l.b16 %v5503
        %v6649 = vunpack.c.h.b16 %v5503
        %v6650 = vunpack.c.l.b16 %v5504
        %v6651 = vunpack.c.h.b16 %v5504
        %v6652 = vunpack.c.l.b16 %v5505
        %v6653 = vunpack.c.h.b16 %v5505
        %v6654 = vunpack.c.l.b16 %v5506
        %v6655 = vunpack.c.h.b16 %v5506
        %v6656 = vunpack.c.l.b16 %v5507
        %v6657 = vunpack.c.h.b16 %v5507
        %v6658 = vunpack.c.l.b16 %v5508
        %v6659 = vunpack.c.h.b16 %v5508
        %v6660 = vunpack.c.l.b16 %v5509
        %v6661 = vunpack.c.h.b16 %v5509
        %v6662 = vpack.c.b16 %v5906, %v5894
        %v6663 = vpack.c.b16 %v5907, %v5895
        %v6664 = vpack.c.b16 %v5908, %v5896
        %v6665 = vpack.c.b16 %v5909, %v5897
        %v6666 = vpack.c.b16 %v5910, %v5898
        %v6667 = vpack.c.b16 %v5911, %v5899
        %v6668 = vpack.c.b16 %v5912, %v5900
        %v6669 = vpack.c.b16 %v5913, %v5901
        %v6670 = vpack.c.b16 %v5914, %v5902
        %v6671 = vpack.c.b16 %v5915, %v5903
        %v6672 = vpack.c.b16 %v5916, %v5904
        %v6673 = vpack.c.b16 %v5917, %v5905
        %v6674 = vpack.c.b16 %v5930, %v5918
        %v6675 = vpack.c.b16 %v5931, %v5919
        %v6676 = vpack.c.b16 %v5932, %v5920
        %v6677 = vpack.c.b16 %v5933, %v5921
        %v6678 = vpack.c.b16 %v5934, %v5922
        %v6679 = vpack.c.b16 %v5935, %v5923
        %v6680 = vpack.c.b16 %v5936, %v5924
        %v6681 = vpack.c.b16 %v5937, %v5925
        %v6682 = vpack.c.b16 %v5938, %v5926
        %v6683 = vpack.c.b16 %v5939, %v5927
        %v6684 = vpack.c.b16 %v5940, %v5928
        %v6685 = vpack.c.b16 %v5941, %v5929
        %v6686 = vpack.c.b16 %v5954, %v5942
        %v6687 = vpack.c.b16 %v5955, %v5943
        %v6688 = vpack.c.b16 %v5956, %v5944
        %v6689 = vpack.c.b16 %v5957, %v5945
        %v6690 = vpack.c.b16 %v5958, %v5946
        %v6691 = vpack.c.b16 %v5959, %v5947
        %v6692 = vpack.c.b16 %v5960, %v5948
        %v6693 = vpack.c.b16 %v5961, %v5949
        %v6694 = vpack.c.b16 %v5962, %v5950
        %v6695 = vpack.c.b16 %v5963, %v5951
        %v6696 = vpack.c.b16 %v5964, %v5952
        %v6697 = vpack.c.b16 %v5965, %v5953
        %v6698 = vpack.c.b16 %v5978, %v5966
        %v6699 = vpack.c.b16 %v5979, %v5967
        %v6700 = vpack.c.b16 %v5980, %v5968
        %v6701 = vpack.c.b16 %v5981, %v5969
        %v6702 = vpack.c.b16 %v5982, %v5970
        %v6703 = vpack.c.b16 %v5983, %v5971
        %v6704 = vpack.c.b16 %v5984, %v5972
        %v6705 = vpack.c.b16 %v5985, %v5973
        %v6706 = vpack.c.b16 %v5986, %v5974
        %v6707 = vpack.c.b16 %v5987, %v5975
        %v6708 = vpack.c.b16 %v5988, %v5976
        %v6709 = vpack.c.b16 %v5989, %v5977
        %v6710 = vpack.c.b16 %v6002, %v5990
        %v6711 = vpack.c.b16 %v6003, %v5991
        %v6712 = vpack.c.b16 %v6004, %v5992
        %v6713 = vpack.c.b16 %v6005, %v5993
        %v6714 = vpack.c.b16 %v6006, %v5994
        %v6715 = vpack.c.b16 %v6007, %v5995
        %v6716 = vpack.c.b16 %v6008, %v5996
        %v6717 = vpack.c.b16 %v6009, %v5997
        %v6718 = vpack.c.b16 %v6010, %v5998
        %v6719 = vpack.c.b16 %v6011, %v5999
        %v6720 = vpack.c.b16 %v6012, %v6000
        %v6721 = vpack.c.b16 %v6013, %v6001
        %v6722 = vpack.c.b16 %v6026, %v6014
        %v6723 = vpack.c.b16 %v6027, %v6015
        %v6724 = vpack.c.b16 %v6028, %v6016
        %v6725 = vpack.c.b16 %v6029, %v6017
        %v6726 = vpack.c.b16 %v6030, %v6018
        %v6727 = vpack.c.b16 %v6031, %v6019
        %v6728 = vpack.c.b16 %v6032, %v6020
        %v6729 = vpack.c.b16 %v6033, %v6021
        %v6730 = vpack.c.b16 %v6034, %v6022
        %v6731 = vpack.c.b16 %v6035, %v6023
        %v6732 = vpack.c.b16 %v6036, %v6024
        %v6733 = vpack.c.b16 %v6037, %v6025
        %v6734 = vpack.c.b16 %v6050, %v6038
        %v6735 = vpack.c.b16 %v6051, %v6039
        %v6736 = vpack.c.b16 %v6052, %v6040
        %v6737 = vpack.c.b16 %v6053, %v6041
        %v6738 = vpack.c.b16 %v6054, %v6042
        %v6739 = vpack.c.b16 %v6055, %v6043
        %v6740 = vpack.c.b16 %v6056, %v6044
        %v6741 = vpack.c.b16 %v6057, %v6045
        %v6742 = vpack.c.b16 %v6058, %v6046
        %v6743 = vpack.c.b16 %v6059, %v6047
        %v6744 = vpack.c.b16 %v6060, %v6048
        %v6745 = vpack.c.b16 %v6061, %v6049
        %v6746 = vpack.c.b16 %v6074, %v6062
        %v6747 = vpack.c.b16 %v6075, %v6063
        %v6748 = vpack.c.b16 %v6076, %v6064
        %v6749 = vpack.c.b16 %v6077, %v6065
        %v6750 = vpack.c.b16 %v6078, %v6066
        %v6751 = vpack.c.b16 %v6079, %v6067
        %v6752 = vpack.c.b16 %v6080, %v6068
        %v6753 = vpack.c.b16 %v6081, %v6069
        %v6754 = vpack.c.b16 %v6082, %v6070
        %v6755 = vpack.c.b16 %v6083, %v6071
        %v6756 = vpack.c.b16 %v6084, %v6072
        %v6757 = vpack.c.b16 %v6085, %v6073
        %v6758 = vpack.c.b16 %v6098, %v6086
        %v6759 = vpack.c.b16 %v6099, %v6087
        %v6760 = vpack.c.b16 %v6100, %v6088
        %v6761 = vpack.c.b16 %v6101, %v6089
        %v6762 = vpack.c.b16 %v6102, %v6090
        %v6763 = vpack.c.b16 %v6103, %v6091
        %v6764 = vpack.c.b16 %v6104, %v6092
        %v6765 = vpack.c.b16 %v6105, %v6093
        %v6766 = vpack.c.b16 %v6106, %v6094
        %v6767 = vpack.c.b16 %v6107, %v6095
        %v6768 = vpack.c.b16 %v6108, %v6096
        %v6769 = vpack.c.b16 %v6109, %v6097
        %v6770 = vpack.c.b16 %v6122, %v6110
        %v6771 = vpack.c.b16 %v6123, %v6111
        %v6772 = vpack.c.b16 %v6124, %v6112
        %v6773 = vpack.c.b16 %v6125, %v6113
        %v6774 = vpack.c.b16 %v6126, %v6114
        %v6775 = vpack.c.b16 %v6127, %v6115
        %v6776 = vpack.c.b16 %v6128, %v6116
        %v6777 = vpack.c.b16 %v6129, %v6117
        %v6778 = vpack.c.b16 %v6130, %v6118
        %v6779 = vpack.c.b16 %v6131, %v6119
        %v6780 = vpack.c.b16 %v6132, %v6120
        %v6781 = vpack.c.b16 %v6133, %v6121
        %v6782 = vpack.c.b16 %v6146, %v6134
        %v6783 = vpack.c.b16 %v6147, %v6135
        %v6784 = vpack.c.b16 %v6148, %v6136
        %v6785 = vpack.c.b16 %v6149, %v6137
        %v6786 = vpack.c.b16 %v6150, %v6138
        %v6787 = vpack.c.b16 %v6151, %v6139
        %v6788 = vpack.c.b16 %v6152, %v6140
        %v6789 = vpack.c.b16 %v6153, %v6141
        %v6790 = vpack.c.b16 %v6154, %v6142
        %v6791 = vpack.c.b16 %v6155, %v6143
        %v6792 = vpack.c.b16 %v6156, %v6144
        %v6793 = vpack.c.b16 %v6157, %v6145
        %v6794 = vpack.c.b16 %v6170, %v6158
        %v6795 = vpack.c.b16 %v6171, %v6159
        %v6796 = vpack.c.b16 %v6172, %v6160
        %v6797 = vpack.c.b16 %v6173, %v6161
        %v6798 = vpack.c.b16 %v6174, %v6162
        %v6799 = vpack.c.b16 %v6175, %v6163
        %v6800 = vpack.c.b16 %v6176, %v6164
        %v6801 = vpack.c.b16 %v6177, %v6165
        %v6802 = vpack.c.b16 %v6178, %v6166
        %v6803 = vpack.c.b16 %v6179, %v6167
        %v6804 = vpack.c.b16 %v6180, %v6168
        %v6805 = vpack.c.b16 %v6181, %v6169
        %v6806 = vpack.c.b16 %v6194, %v6182
        %v6807 = vpack.c.b16 %v6195, %v6183
        %v6808 = vpack.c.b16 %v6196, %v6184
        %v6809 = vpack.c.b16 %v6197, %v6185
        %v6810 = vpack.c.b16 %v6198, %v6186
        %v6811 = vpack.c.b16 %v6199, %v6187
        %v6812 = vpack.c.b16 %v6200, %v6188
        %v6813 = vpack.c.b16 %v6201, %v6189
        %v6814 = vpack.c.b16 %v6202, %v6190
        %v6815 = vpack.c.b16 %v6203, %v6191
        %v6816 = vpack.c.b16 %v6204, %v6192
        %v6817 = vpack.c.b16 %v6205, %v6193
        %v6818 = vpack.c.b16 %v6218, %v6206
        %v6819 = vpack.c.b16 %v6219, %v6207
        %v6820 = vpack.c.b16 %v6220, %v6208
        %v6821 = vpack.c.b16 %v6221, %v6209
        %v6822 = vpack.c.b16 %v6222, %v6210
        %v6823 = vpack.c.b16 %v6223, %v6211
        %v6824 = vpack.c.b16 %v6224, %v6212
        %v6825 = vpack.c.b16 %v6225, %v6213
        %v6826 = vpack.c.b16 %v6226, %v6214
        %v6827 = vpack.c.b16 %v6227, %v6215
        %v6828 = vpack.c.b16 %v6228, %v6216
        %v6829 = vpack.c.b16 %v6229, %v6217
        %v6830 = vpack.c.b16 %v6242, %v6230
        %v6831 = vpack.c.b16 %v6243, %v6231
        %v6832 = vpack.c.b16 %v6244, %v6232
        %v6833 = vpack.c.b16 %v6245, %v6233
        %v6834 = vpack.c.b16 %v6246, %v6234
        %v6835 = vpack.c.b16 %v6247, %v6235
        %v6836 = vpack.c.b16 %v6248, %v6236
        %v6837 = vpack.c.b16 %v6249, %v6237
        %v6838 = vpack.c.b16 %v6250, %v6238
        %v6839 = vpack.c.b16 %v6251, %v6239
        %v6840 = vpack.c.b16 %v6252, %v6240
        %v6841 = vpack.c.b16 %v6253, %v6241
        %v6842 = vpack.c.b16 %v6266, %v6254
        %v6843 = vpack.c.b16 %v6267, %v6255
        %v6844 = vpack.c.b16 %v6268, %v6256
        %v6845 = vpack.c.b16 %v6269, %v6257
        %v6846 = vpack.c.b16 %v6270, %v6258
        %v6847 = vpack.c.b16 %v6271, %v6259
        %v6848 = vpack.c.b16 %v6272, %v6260
        %v6849 = vpack.c.b16 %v6273, %v6261
        %v6850 = vpack.c.b16 %v6274, %v6262
        %v6851 = vpack.c.b16 %v6275, %v6263
        %v6852 = vpack.c.b16 %v6276, %v6264
        %v6853 = vpack.c.b16 %v6277, %v6265
        %v6854 = vpack.c.b16 %v6290, %v6278
        %v6855 = vpack.c.b16 %v6291, %v6279
        %v6856 = vpack.c.b16 %v6292, %v6280
        %v6857 = vpack.c.b16 %v6293, %v6281
        %v6858 = vpack.c.b16 %v6294, %v6282
        %v6859 = vpack.c.b16 %v6295, %v6283
        %v6860 = vpack.c.b16 %v6296, %v6284
        %v6861 = vpack.c.b16 %v6297, %v6285
        %v6862 = vpack.c.b16 %v6298, %v6286
        %v6863 = vpack.c.b16 %v6299, %v6287
        %v6864 = vpack.c.b16 %v6300, %v6288
        %v6865 = vpack.c.b16 %v6301, %v6289
        %v6866 = vpack.c.b16 %v6314, %v6302
        %v6867 = vpack.c.b16 %v6315, %v6303
        %v6868 = vpack.c.b16 %v6316, %v6304
        %v6869 = vpack.c.b16 %v6317, %v6305
        %v6870 = vpack.c.b16 %v6318, %v6306
        %v6871 = vpack.c.b16 %v6319, %v6307
        %v6872 = vpack.c.b16 %v6320, %v6308
        %v6873 = vpack.c.b16 %v6321, %v6309
        %v6874 = vpack.c.b16 %v6322, %v6310
        %v6875 = vpack.c.b16 %v6323, %v6311
        %v6876 = vpack.c.b16 %v6324, %v6312
        %v6877 = vpack.c.b16 %v6325, %v6313
        %v6878 = vpack.c.b16 %v6338, %v6326
        %v6879 = vpack.c.b16 %v6339, %v6327
        %v6880 = vpack.c.b16 %v6340, %v6328
        %v6881 = vpack.c.b16 %v6341, %v6329
        %v6882 = vpack.c.b16 %v6342, %v6330
        %v6883 = vpack.c.b16 %v6343, %v6331
        %v6884 = vpack.c.b16 %v6344, %v6332
        %v6885 = vpack.c.b16 %v6345, %v6333
        %v6886 = vpack.c.b16 %v6346, %v6334
        %v6887 = vpack.c.b16 %v6347, %v6335
        %v6888 = vpack.c.b16 %v6348, %v6336
        %v6889 = vpack.c.b16 %v6349, %v6337
        %v6890 = vpack.c.b16 %v6362, %v6350
        %v6891 = vpack.c.b16 %v6363, %v6351
        %v6892 = vpack.c.b16 %v6364, %v6352
        %v6893 = vpack.c.b16 %v6365, %v6353
        %v6894 = vpack.c.b16 %v6366, %v6354
        %v6895 = vpack.c.b16 %v6367, %v6355
        %v6896 = vpack.c.b16 %v6368, %v6356
        %v6897 = vpack.c.b16 %v6369, %v6357
        %v6898 = vpack.c.b16 %v6370, %v6358
        %v6899 = vpack.c.b16 %v6371, %v6359
        %v6900 = vpack.c.b16 %v6372, %v6360
        %v6901 = vpack.c.b16 %v6373, %v6361
        %v6902 = vpack.c.b16 %v6386, %v6374
        %v6903 = vpack.c.b16 %v6387, %v6375
        %v6904 = vpack.c.b16 %v6388, %v6376
        %v6905 = vpack.c.b16 %v6389, %v6377
        %v6906 = vpack.c.b16 %v6390, %v6378
        %v6907 = vpack.c.b16 %v6391, %v6379
        %v6908 = vpack.c.b16 %v6392, %v6380
        %v6909 = vpack.c.b16 %v6393, %v6381
        %v6910 = vpack.c.b16 %v6394, %v6382
        %v6911 = vpack.c.b16 %v6395, %v6383
        %v6912 = vpack.c.b16 %v6396, %v6384
        %v6913 = vpack.c.b16 %v6397, %v6385
        %v6914 = vpack.c.b16 %v6410, %v6398
        %v6915 = vpack.c.b16 %v6411, %v6399
        %v6916 = vpack.c.b16 %v6412, %v6400
        %v6917 = vpack.c.b16 %v6413, %v6401
        %v6918 = vpack.c.b16 %v6414, %v6402
        %v6919 = vpack.c.b16 %v6415, %v6403
        %v6920 = vpack.c.b16 %v6416, %v6404
        %v6921 = vpack.c.b16 %v6417, %v6405
        %v6922 = vpack.c.b16 %v6418, %v6406
        %v6923 = vpack.c.b16 %v6419, %v6407
        %v6924 = vpack.c.b16 %v6420, %v6408
        %v6925 = vpack.c.b16 %v6421, %v6409
        %v6926 = vpack.c.b16 %v6434, %v6422
        %v6927 = vpack.c.b16 %v6435, %v6423
        %v6928 = vpack.c.b16 %v6436, %v6424
        %v6929 = vpack.c.b16 %v6437, %v6425
        %v6930 = vpack.c.b16 %v6438, %v6426
        %v6931 = vpack.c.b16 %v6439, %v6427
        %v6932 = vpack.c.b16 %v6440, %v6428
        %v6933 = vpack.c.b16 %v6441, %v6429
        %v6934 = vpack.c.b16 %v6442, %v6430
        %v6935 = vpack.c.b16 %v6443, %v6431
        %v6936 = vpack.c.b16 %v6444, %v6432
        %v6937 = vpack.c.b16 %v6445, %v6433
        %v6938 = vpack.c.b16 %v6458, %v6446
        %v6939 = vpack.c.b16 %v6459, %v6447
        %v6940 = vpack.c.b16 %v6460, %v6448
        %v6941 = vpack.c.b16 %v6461, %v6449
        %v6942 = vpack.c.b16 %v6462, %v6450
        %v6943 = vpack.c.b16 %v6463, %v6451
        %v6944 = vpack.c.b16 %v6464, %v6452
        %v6945 = vpack.c.b16 %v6465, %v6453
        %v6946 = vpack.c.b16 %v6466, %v6454
        %v6947 = vpack.c.b16 %v6467, %v6455
        %v6948 = vpack.c.b16 %v6468, %v6456
        %v6949 = vpack.c.b16 %v6469, %v6457
        %v6950 = vpack.c.b16 %v6482, %v6470
        %v6951 = vpack.c.b16 %v6483, %v6471
        %v6952 = vpack.c.b16 %v6484, %v6472
        %v6953 = vpack.c.b16 %v6485, %v6473
        %v6954 = vpack.c.b16 %v6486, %v6474
        %v6955 = vpack.c.b16 %v6487, %v6475
        %v6956 = vpack.c.b16 %v6488, %v6476
        %v6957 = vpack.c.b16 %v6489, %v6477
        %v6958 = vpack.c.b16 %v6490, %v6478
        %v6959 = vpack.c.b16 %v6491, %v6479
        %v6960 = vpack.c.b16 %v6492, %v6480
        %v6961 = vpack.c.b16 %v6493, %v6481
        %v6962 = vpack.c.b16 %v6506, %v6494
        %v6963 = vpack.c.b16 %v6507, %v6495
        %v6964 = vpack.c.b16 %v6508, %v6496
        %v6965 = vpack.c.b16 %v6509, %v6497
        %v6966 = vpack.c.b16 %v6510, %v6498
        %v6967 = vpack.c.b16 %v6511, %v6499
        %v6968 = vpack.c.b16 %v6512, %v6500
        %v6969 = vpack.c.b16 %v6513, %v6501
        %v6970 = vpack.c.b16 %v6514, %v6502
        %v6971 = vpack.c.b16 %v6515, %v6503
        %v6972 = vpack.c.b16 %v6516, %v6504
        %v6973 = vpack.c.b16 %v6517, %v6505
        %v6974 = vpack.c.b16 %v6530, %v6518
        %v6975 = vpack.c.b16 %v6531, %v6519
        %v6976 = vpack.c.b16 %v6532, %v6520
        %v6977 = vpack.c.b16 %v6533, %v6521
        %v6978 = vpack.c.b16 %v6534, %v6522
        %v6979 = vpack.c.b16 %v6535, %v6523
        %v6980 = vpack.c.b16 %v6536, %v6524
        %v6981 = vpack.c.b16 %v6537, %v6525
        %v6982 = vpack.c.b16 %v6538, %v6526
        %v6983 = vpack.c.b16 %v6539, %v6527
        %v6984 = vpack.c.b16 %v6540, %v6528
        %v6985 = vpack.c.b16 %v6541, %v6529
        %v6986 = vpack.c.b16 %v6554, %v6542
        %v6987 = vpack.c.b16 %v6555, %v6543
        %v6988 = vpack.c.b16 %v6556, %v6544
        %v6989 = vpack.c.b16 %v6557, %v6545
        %v6990 = vpack.c.b16 %v6558, %v6546
        %v6991 = vpack.c.b16 %v6559, %v6547
        %v6992 = vpack.c.b16 %v6560, %v6548
        %v6993 = vpack.c.b16 %v6561, %v6549
        %v6994 = vpack.c.b16 %v6562, %v6550
        %v6995 = vpack.c.b16 %v6563, %v6551
        %v6996 = vpack.c.b16 %v6564, %v6552
        %v6997 = vpack.c.b16 %v6565, %v6553
        %v6998 = vpack.c.b16 %v6578, %v6566
        %v6999 = vpack.c.b16 %v6579, %v6567
        %v7000 = vpack.c.b16 %v6580, %v6568
        %v7001 = vpack.c.b16 %v6581, %v6569
        %v7002 = vpack.c.b16 %v6582, %v6570
        %v7003 = vpack.c.b16 %v6583, %v6571
        %v7004 = vpack.c.b16 %v6584, %v6572
        %v7005 = vpack.c.b16 %v6585, %v6573
        %v7006 = vpack.c.b16 %v6586, %v6574
        %v7007 = vpack.c.b16 %v6587, %v6575
        %v7008 = vpack.c.b16 %v6588, %v6576
        %v7009 = vpack.c.b16 %v6589, %v6577
        %v7010 = vpack.c.b16 %v6602, %v6590
        %v7011 = vpack.c.b16 %v6603, %v6591
        %v7012 = vpack.c.b16 %v6604, %v6592
        %v7013 = vpack.c.b16 %v6605, %v6593
        %v7014 = vpack.c.b16 %v6606, %v6594
        %v7015 = vpack.c.b16 %v6607, %v6595
        %v7016 = vpack.c.b16 %v6608, %v6596
        %v7017 = vpack.c.b16 %v6609, %v6597
        %v7018 = vpack.c.b16 %v6610, %v6598
        %v7019 = vpack.c.b16 %v6611, %v6599
        %v7020 = vpack.c.b16 %v6612, %v6600
        %v7021 = vpack.c.b16 %v6613, %v6601
        %v7022 = vpack.c.b16 %v6626, %v6614
        %v7023 = vpack.c.b16 %v6627, %v6615
        %v7024 = vpack.c.b16 %v6628, %v6616
        %v7025 = vpack.c.b16 %v6629, %v6617
        %v7026 = vpack.c.b16 %v6630, %v6618
        %v7027 = vpack.c.b16 %v6631, %v6619
        %v7028 = vpack.c.b16 %v6632, %v6620
        %v7029 = vpack.c.b16 %v6633, %v6621
        %v7030 = vpack.c.b16 %v6634, %v6622
        %v7031 = vpack.c.b16 %v6635, %v6623
        %v7032 = vpack.c.b16 %v6636, %v6624
        %v7033 = vpack.c.b16 %v6637, %v6625
        %v7034 = vpack.c.b16 %v6650, %v6638
        %v7035 = vpack.c.b16 %v6651, %v6639
        %v7036 = vpack.c.b16 %v6652, %v6640
        %v7037 = vpack.c.b16 %v6653, %v6641
        %v7038 = vpack.c.b16 %v6654, %v6642
        %v7039 = vpack.c.b16 %v6655, %v6643
        %v7040 = vpack.c.b16 %v6656, %v6644
        %v7041 = vpack.c.b16 %v6657, %v6645
        %v7042 = vpack.c.b16 %v6658, %v6646
        %v7043 = vpack.c.b16 %v6659, %v6647
        %v7044 = vpack.c.b16 %v6660, %v6648
        %v7045 = vpack.c.b16 %v6661, %v6649
        %7430 = vmatprep.subr.bf16.mxu0 %v6747
        %7431 = vmatpush1.bf16.msra.mxu0 %v6746
        %7432 = vmatprep.subr.bf16.mxu0 %v6735
        %7433 = vmatpush1.bf16.msra.mxu0 %v6734
        %7434 = vmatprep.subr.bf16.mxu0 %v6723
        %7435 = vmatpush1.bf16.msra.mxu0 %v6722
        %7436 = vmatprep.subr.bf16.mxu0 %v6711
        %7437 = vmatpush1.bf16.msra.mxu0 %v6710
        %7438 = vmatprep.subr.bf16.mxu0 %v6699
        %7439 = vmatpush1.bf16.msra.mxu0 %v6698
        %7440 = vmatprep.subr.bf16.mxu0 %v6687
        %7441 = vmatpush1.bf16.msra.mxu0 %v6686
        %7442 = vmatprep.subr.bf16.mxu0 %v6675
        %7443 = vmatpush1.bf16.msra.mxu0 %v6674
        %7444 = vmatprep.subr.bf16.mxu0 %v6663
        %7445 = vmatpush1.bf16.msra.mxu0 %v6662
        %7446 = vmatprep.subr.bf16.mxu0 %v6843
        %7447 = vmatpush2.bf16.msra.mxu0 %v6842
        %7448 = vmatprep.subr.bf16.mxu0 %v6831
        %7449 = vmatpush2.bf16.msra.mxu0 %v6830
        %7450 = vmatprep.subr.bf16.mxu0 %v6819
        %7451 = vmatpush2.bf16.msra.mxu0 %v6818
        %7452 = vmatprep.subr.bf16.mxu0 %v6807
        %7453 = vmatpush2.bf16.msra.mxu0 %v6806
        %7454 = vmatprep.subr.bf16.mxu0 %v6795
        %7455 = vmatpush2.bf16.msra.mxu0 %v6794
        %7456 = vmatprep.subr.bf16.mxu0 %v6783
        %7457 = vmatpush2.bf16.msra.mxu0 %v6782
        %7458 = vmatprep.subr.bf16.mxu0 %v6771
        %7459 = vmatpush2.bf16.msra.mxu0 %v6770
        %7460 = vmatprep.subr.bf16.mxu0 %v6759
        %7461 = vmatpush2.bf16.msra.mxu0 %v6758
        %7462 = vmatprep.mubr.bf16.mxu0 %v5111
        %7463 = vmatmul.mubr.bf16.gmra.mxu0 %v5110
        %v7464 = vpop.f32.mrf.mxu0
        %v7465 = vadd.f32 0.0, %v7464
        %v7466 = vpop.f32.mrf.mxu0
        %v7467 = vadd.f32 0.0, %v7466
        %v7468 = vpop.f32.mrf.mxu0
        %v7469 = vadd.f32 0.0, %v7468
        %v7470 = vpop.f32.mrf.mxu0
        %v7471 = vadd.f32 0.0, %v7470
        %7472 = vmatprep.mubr.bf16.mxu0 %v5115
        %7473 = vmatmul.mubr.bf16.gmra.mxu0 %v5114
        %v7474 = vpop.f32.mrf.mxu0
        %v7475 = vadd.f32 0.0, %v7474
        %v7476 = vpop.f32.mrf.mxu0
        %v7477 = vadd.f32 0.0, %v7476
        %v7478 = vpop.f32.mrf.mxu0
        %v7479 = vadd.f32 0.0, %v7478
        %v7480 = vpop.f32.mrf.mxu0
        %v7481 = vadd.f32 0.0, %v7480
        %7482 = vmatprep.mubr.bf16.mxu0 %v5119
        %7483 = vmatmul.mubr.bf16.gmra.mxu0 %v5118
        %v7484 = vpop.f32.mrf.mxu0
        %v7485 = vadd.f32 0.0, %v7484
        %v7486 = vpop.f32.mrf.mxu0
        %v7487 = vadd.f32 0.0, %v7486
        %v7488 = vpop.f32.mrf.mxu0
        %v7489 = vadd.f32 0.0, %v7488
        %v7490 = vpop.f32.mrf.mxu0
        %v7491 = vadd.f32 0.0, %v7490
        %7492 = vmatprep.mubr.bf16.mxu0 %v5123
        %7493 = vmatmul.mubr.bf16.gmra.mxu0 %v5122
        %v7494 = vpop.f32.mrf.mxu0
        %v7495 = vadd.f32 0.0, %v7494
        %v7496 = vpop.f32.mrf.mxu0
        %v7497 = vadd.f32 0.0, %v7496
        %v7498 = vpop.f32.mrf.mxu0
        %v7499 = vadd.f32 0.0, %v7498
        %v7500 = vpop.f32.mrf.mxu0
        %v7501 = vadd.f32 0.0, %v7500
        %7502 = vdwg.mxu0
        %7503 = vmatprep.subr.bf16.mxu0 %v6939
        %7504 = vmatpush1.bf16.msra.mxu0 %v6938
        %7505 = vmatprep.subr.bf16.mxu0 %v6927
        %7506 = vmatpush1.bf16.msra.mxu0 %v6926
        %7507 = vmatprep.subr.bf16.mxu0 %v6915
        %7508 = vmatpush1.bf16.msra.mxu0 %v6914
        %7509 = vmatprep.subr.bf16.mxu0 %v6903
        %7510 = vmatpush1.bf16.msra.mxu0 %v6902
        %7511 = vmatprep.subr.bf16.mxu0 %v6891
        %7512 = vmatpush1.bf16.msra.mxu0 %v6890
        %7513 = vmatprep.subr.bf16.mxu0 %v6879
        %7514 = vmatpush1.bf16.msra.mxu0 %v6878
        %7515 = vmatprep.subr.bf16.mxu0 %v6867
        %7516 = vmatpush1.bf16.msra.mxu0 %v6866
        %7517 = vmatprep.subr.bf16.mxu0 %v6855
        %7518 = vmatpush1.bf16.msra.mxu0 %v6854
        %7519 = vmatprep.subr.bf16.mxu0 %v7035
        %7520 = vmatpush2.bf16.msra.mxu0 %v7034
        %7521 = vmatprep.subr.bf16.mxu0 %v7023
        %7522 = vmatpush2.bf16.msra.mxu0 %v7022
        %7523 = vmatprep.subr.bf16.mxu0 %v7011
        %7524 = vmatpush2.bf16.msra.mxu0 %v7010
        %7525 = vmatprep.subr.bf16.mxu0 %v6999
        %7526 = vmatpush2.bf16.msra.mxu0 %v6998
        %7527 = vmatprep.subr.bf16.mxu0 %v6987
        %7528 = vmatpush2.bf16.msra.mxu0 %v6986
        %7529 = vmatprep.subr.bf16.mxu0 %v6975
        %7530 = vmatpush2.bf16.msra.mxu0 %v6974
        %7531 = vmatprep.subr.bf16.mxu0 %v6963
        %7532 = vmatpush2.bf16.msra.mxu0 %v6962
        %7533 = vmatprep.subr.bf16.mxu0 %v6951
        %7534 = vmatpush2.bf16.msra.mxu0 %v6950
        %7535 = vmatprep.mubr.bf16.mxu0 %v5113
        %7536 = vmatmul.mubr.bf16.gmra.mxu0 %v5112
        %v7537 = vpop.f32.mrf.mxu0
        %v7538 = vadd.f32 %v7465, %v7537
        %v7539 = vpop.f32.mrf.mxu0
        %v7540 = vadd.f32 %v7467, %v7539
        %v7541 = vpop.f32.mrf.mxu0
        %v7542 = vadd.f32 %v7469, %v7541
        %v7543 = vpop.f32.mrf.mxu0
        %v7544 = vadd.f32 %v7471, %v7543
        %7545 = vmatprep.mubr.bf16.mxu0 %v5117
        %7546 = vmatmul.mubr.bf16.gmra.mxu0 %v5116
        %v7547 = vpop.f32.mrf.mxu0
        %v7548 = vadd.f32 %v7475, %v7547
        %v7549 = vpop.f32.mrf.mxu0
        %v7550 = vadd.f32 %v7477, %v7549
        %v7551 = vpop.f32.mrf.mxu0
        %v7552 = vadd.f32 %v7479, %v7551
        %v7553 = vpop.f32.mrf.mxu0
        %v7554 = vadd.f32 %v7481, %v7553
        %7555 = vmatprep.mubr.bf16.mxu0 %v5121
        %7556 = vmatmul.mubr.bf16.gmra.mxu0 %v5120
        %v7557 = vpop.f32.mrf.mxu0
        %v7558 = vadd.f32 %v7485, %v7557
        %v7559 = vpop.f32.mrf.mxu0
        %v7560 = vadd.f32 %v7487, %v7559
        %v7561 = vpop.f32.mrf.mxu0
        %v7562 = vadd.f32 %v7489, %v7561
        %v7563 = vpop.f32.mrf.mxu0
        %v7564 = vadd.f32 %v7491, %v7563
        %7565 = vmatprep.mubr.bf16.mxu0 %v5125
        %7566 = vmatmul.mubr.bf16.gmra.mxu0 %v5124
        %v7567 = vpop.f32.mrf.mxu0
        %v7568 = vadd.f32 %v7495, %v7567
        %v7569 = vpop.f32.mrf.mxu0
        %v7570 = vadd.f32 %v7497, %v7569
        %v7571 = vpop.f32.mrf.mxu0
        %v7572 = vadd.f32 %v7499, %v7571
        %v7573 = vpop.f32.mrf.mxu0
        %v7574 = vadd.f32 %v7501, %v7573
        %7575 = vdwg.mxu0
        %7576 = vmatprep.subr.bf16.mxu0 %v6749
        %7577 = vmatpush1.bf16.msra.mxu0 %v6748
        %7578 = vmatprep.subr.bf16.mxu0 %v6737
        %7579 = vmatpush1.bf16.msra.mxu0 %v6736
        %7580 = vmatprep.subr.bf16.mxu0 %v6725
        %7581 = vmatpush1.bf16.msra.mxu0 %v6724
        %7582 = vmatprep.subr.bf16.mxu0 %v6713
        %7583 = vmatpush1.bf16.msra.mxu0 %v6712
        %7584 = vmatprep.subr.bf16.mxu0 %v6701
        %7585 = vmatpush1.bf16.msra.mxu0 %v6700
        %7586 = vmatprep.subr.bf16.mxu0 %v6689
        %7587 = vmatpush1.bf16.msra.mxu0 %v6688
        %7588 = vmatprep.subr.bf16.mxu0 %v6677
        %7589 = vmatpush1.bf16.msra.mxu0 %v6676
        %7590 = vmatprep.subr.bf16.mxu0 %v6665
        %7591 = vmatpush1.bf16.msra.mxu0 %v6664
        %7592 = vmatprep.subr.bf16.mxu0 %v6845
        %7593 = vmatpush2.bf16.msra.mxu0 %v6844
        %7594 = vmatprep.subr.bf16.mxu0 %v6833
        %7595 = vmatpush2.bf16.msra.mxu0 %v6832
        %7596 = vmatprep.subr.bf16.mxu0 %v6821
        %7597 = vmatpush2.bf16.msra.mxu0 %v6820
        %7598 = vmatprep.subr.bf16.mxu0 %v6809
        %7599 = vmatpush2.bf16.msra.mxu0 %v6808
        %7600 = vmatprep.subr.bf16.mxu0 %v6797
        %7601 = vmatpush2.bf16.msra.mxu0 %v6796
        %7602 = vmatprep.subr.bf16.mxu0 %v6785
        %7603 = vmatpush2.bf16.msra.mxu0 %v6784
        %7604 = vmatprep.subr.bf16.mxu0 %v6773
        %7605 = vmatpush2.bf16.msra.mxu0 %v6772
        %7606 = vmatprep.subr.bf16.mxu0 %v6761
        %7607 = vmatpush2.bf16.msra.mxu0 %v6760
        %7608 = vmatprep.mubr.bf16.mxu0 %v5111
        %7609 = vmatmul.mubr.bf16.gmra.mxu0 %v5110
        %v7610 = vpop.f32.mrf.mxu0
        %v7611 = vadd.f32 0.0, %v7610
        %v7612 = vpop.f32.mrf.mxu0
        %v7613 = vadd.f32 0.0, %v7612
        %v7614 = vpop.f32.mrf.mxu0
        %v7615 = vadd.f32 0.0, %v7614
        %v7616 = vpop.f32.mrf.mxu0
        %v7617 = vadd.f32 0.0, %v7616
        %7618 = vmatprep.mubr.bf16.mxu0 %v5115
        %7619 = vmatmul.mubr.bf16.gmra.mxu0 %v5114
        %v7620 = vpop.f32.mrf.mxu0
        %v7621 = vadd.f32 0.0, %v7620
        %v7622 = vpop.f32.mrf.mxu0
        %v7623 = vadd.f32 0.0, %v7622
        %v7624 = vpop.f32.mrf.mxu0
        %v7625 = vadd.f32 0.0, %v7624
        %v7626 = vpop.f32.mrf.mxu0
        %v7627 = vadd.f32 0.0, %v7626
        %7628 = vmatprep.mubr.bf16.mxu0 %v5119
        %7629 = vmatmul.mubr.bf16.gmra.mxu0 %v5118
        %v7630 = vpop.f32.mrf.mxu0
        %v7631 = vadd.f32 0.0, %v7630
        %v7632 = vpop.f32.mrf.mxu0
        %v7633 = vadd.f32 0.0, %v7632
        %v7634 = vpop.f32.mrf.mxu0
        %v7635 = vadd.f32 0.0, %v7634
        %v7636 = vpop.f32.mrf.mxu0
        %v7637 = vadd.f32 0.0, %v7636
        %7638 = vmatprep.mubr.bf16.mxu0 %v5123
        %7639 = vmatmul.mubr.bf16.gmra.mxu0 %v5122
        %v7640 = vpop.f32.mrf.mxu0
        %v7641 = vadd.f32 0.0, %v7640
        %v7642 = vpop.f32.mrf.mxu0
        %v7643 = vadd.f32 0.0, %v7642
        %v7644 = vpop.f32.mrf.mxu0
        %v7645 = vadd.f32 0.0, %v7644
        %v7646 = vpop.f32.mrf.mxu0
        %v7647 = vadd.f32 0.0, %v7646
        %7648 = vdwg.mxu0
        %7649 = vmatprep.subr.bf16.mxu0 %v6941
        %7650 = vmatpush1.bf16.msra.mxu0 %v6940
        %7651 = vmatprep.subr.bf16.mxu0 %v6929
        %7652 = vmatpush1.bf16.msra.mxu0 %v6928
        %7653 = vmatprep.subr.bf16.mxu0 %v6917
        %7654 = vmatpush1.bf16.msra.mxu0 %v6916
        %7655 = vmatprep.subr.bf16.mxu0 %v6905
        %7656 = vmatpush1.bf16.msra.mxu0 %v6904
        %7657 = vmatprep.subr.bf16.mxu0 %v6893
        %7658 = vmatpush1.bf16.msra.mxu0 %v6892
        %7659 = vmatprep.subr.bf16.mxu0 %v6881
        %7660 = vmatpush1.bf16.msra.mxu0 %v6880
        %7661 = vmatprep.subr.bf16.mxu0 %v6869
        %7662 = vmatpush1.bf16.msra.mxu0 %v6868
        %7663 = vmatprep.subr.bf16.mxu0 %v6857
        %7664 = vmatpush1.bf16.msra.mxu0 %v6856
        %7665 = vmatprep.subr.bf16.mxu0 %v7037
        %7666 = vmatpush2.bf16.msra.mxu0 %v7036
        %7667 = vmatprep.subr.bf16.mxu0 %v7025
        %7668 = vmatpush2.bf16.msra.mxu0 %v7024
        %7669 = vmatprep.subr.bf16.mxu0 %v7013
        %7670 = vmatpush2.bf16.msra.mxu0 %v7012
        %7671 = vmatprep.subr.bf16.mxu0 %v7001
        %7672 = vmatpush2.bf16.msra.mxu0 %v7000
        %7673 = vmatprep.subr.bf16.mxu0 %v6989
        %7674 = vmatpush2.bf16.msra.mxu0 %v6988
        %7675 = vmatprep.subr.bf16.mxu0 %v6977
        %7676 = vmatpush2.bf16.msra.mxu0 %v6976
        %7677 = vmatprep.subr.bf16.mxu0 %v6965
        %7678 = vmatpush2.bf16.msra.mxu0 %v6964
        %7679 = vmatprep.subr.bf16.mxu0 %v6953
        %7680 = vmatpush2.bf16.msra.mxu0 %v6952
        %7681 = vmatprep.mubr.bf16.mxu0 %v5113
        %7682 = vmatmul.mubr.bf16.gmra.mxu0 %v5112
        %v7683 = vpop.f32.mrf.mxu0
        %v7684 = vadd.f32 %v7611, %v7683
        %v7685 = vpop.f32.mrf.mxu0
        %v7686 = vadd.f32 %v7613, %v7685
        %v7687 = vpop.f32.mrf.mxu0
        %v7688 = vadd.f32 %v7615, %v7687
        %v7689 = vpop.f32.mrf.mxu0
        %v7690 = vadd.f32 %v7617, %v7689
        %7691 = vmatprep.mubr.bf16.mxu0 %v5117
        %7692 = vmatmul.mubr.bf16.gmra.mxu0 %v5116
        %v7693 = vpop.f32.mrf.mxu0
        %v7694 = vadd.f32 %v7621, %v7693
        %v7695 = vpop.f32.mrf.mxu0
        %v7696 = vadd.f32 %v7623, %v7695
        %v7697 = vpop.f32.mrf.mxu0
        %v7698 = vadd.f32 %v7625, %v7697
        %v7699 = vpop.f32.mrf.mxu0
        %v7700 = vadd.f32 %v7627, %v7699
        %7701 = vmatprep.mubr.bf16.mxu0 %v5121
        %7702 = vmatmul.mubr.bf16.gmra.mxu0 %v5120
        %v7703 = vpop.f32.mrf.mxu0
        %v7704 = vadd.f32 %v7631, %v7703
        %v7705 = vpop.f32.mrf.mxu0
        %v7706 = vadd.f32 %v7633, %v7705
        %v7707 = vpop.f32.mrf.mxu0
        %v7708 = vadd.f32 %v7635, %v7707
        %v7709 = vpop.f32.mrf.mxu0
        %v7710 = vadd.f32 %v7637, %v7709
        %7711 = vmatprep.mubr.bf16.mxu0 %v5125
        %7712 = vmatmul.mubr.bf16.gmra.mxu0 %v5124
        %v7713 = vpop.f32.mrf.mxu0
        %v7714 = vadd.f32 %v7641, %v7713
        %v7715 = vpop.f32.mrf.mxu0
        %v7716 = vadd.f32 %v7643, %v7715
        %v7717 = vpop.f32.mrf.mxu0
        %v7718 = vadd.f32 %v7645, %v7717
        %v7719 = vpop.f32.mrf.mxu0
        %v7720 = vadd.f32 %v7647, %v7719
        %7721 = vdwg.mxu0
        %7722 = vmatprep.subr.bf16.mxu0 %v6751
        %7723 = vmatpush1.bf16.msra.mxu0 %v6750
        %7724 = vmatprep.subr.bf16.mxu0 %v6739
        %7725 = vmatpush1.bf16.msra.mxu0 %v6738
        %7726 = vmatprep.subr.bf16.mxu0 %v6727
        %7727 = vmatpush1.bf16.msra.mxu0 %v6726
        %7728 = vmatprep.subr.bf16.mxu0 %v6715
        %7729 = vmatpush1.bf16.msra.mxu0 %v6714
        %7730 = vmatprep.subr.bf16.mxu0 %v6703
        %7731 = vmatpush1.bf16.msra.mxu0 %v6702
        %7732 = vmatprep.subr.bf16.mxu0 %v6691
        %7733 = vmatpush1.bf16.msra.mxu0 %v6690
        %7734 = vmatprep.subr.bf16.mxu0 %v6679
        %7735 = vmatpush1.bf16.msra.mxu0 %v6678
        %7736 = vmatprep.subr.bf16.mxu0 %v6667
        %7737 = vmatpush1.bf16.msra.mxu0 %v6666
        %7738 = vmatprep.subr.bf16.mxu0 %v6847
        %7739 = vmatpush2.bf16.msra.mxu0 %v6846
        %7740 = vmatprep.subr.bf16.mxu0 %v6835
        %7741 = vmatpush2.bf16.msra.mxu0 %v6834
        %7742 = vmatprep.subr.bf16.mxu0 %v6823
        %7743 = vmatpush2.bf16.msra.mxu0 %v6822
        %7744 = vmatprep.subr.bf16.mxu0 %v6811
        %7745 = vmatpush2.bf16.msra.mxu0 %v6810
        %7746 = vmatprep.subr.bf16.mxu0 %v6799
        %7747 = vmatpush2.bf16.msra.mxu0 %v6798
        %7748 = vmatprep.subr.bf16.mxu0 %v6787
        %7749 = vmatpush2.bf16.msra.mxu0 %v6786
        %7750 = vmatprep.subr.bf16.mxu0 %v6775
        %7751 = vmatpush2.bf16.msra.mxu0 %v6774
        %7752 = vmatprep.subr.bf16.mxu0 %v6763
        %7753 = vmatpush2.bf16.msra.mxu0 %v6762
        %7754 = vmatprep.mubr.bf16.mxu0 %v5111
        %7755 = vmatmul.mubr.bf16.gmra.mxu0 %v5110
        %v7756 = vpop.f32.mrf.mxu0
        %v7757 = vadd.f32 0.0, %v7756
        %v7758 = vpop.f32.mrf.mxu0
        %v7759 = vadd.f32 0.0, %v7758
        %v7760 = vpop.f32.mrf.mxu0
        %v7761 = vadd.f32 0.0, %v7760
        %v7762 = vpop.f32.mrf.mxu0
        %v7763 = vadd.f32 0.0, %v7762
        %7764 = vmatprep.mubr.bf16.mxu0 %v5115
        %7765 = vmatmul.mubr.bf16.gmra.mxu0 %v5114
        %v7766 = vpop.f32.mrf.mxu0
        %v7767 = vadd.f32 0.0, %v7766
        %v7768 = vpop.f32.mrf.mxu0
        %v7769 = vadd.f32 0.0, %v7768
        %v7770 = vpop.f32.mrf.mxu0
        %v7771 = vadd.f32 0.0, %v7770
        %v7772 = vpop.f32.mrf.mxu0
        %v7773 = vadd.f32 0.0, %v7772
        %7774 = vmatprep.mubr.bf16.mxu0 %v5119
        %7775 = vmatmul.mubr.bf16.gmra.mxu0 %v5118
        %v7776 = vpop.f32.mrf.mxu0
        %v7777 = vadd.f32 0.0, %v7776
        %v7778 = vpop.f32.mrf.mxu0
        %v7779 = vadd.f32 0.0, %v7778
        %v7780 = vpop.f32.mrf.mxu0
        %v7781 = vadd.f32 0.0, %v7780
        %v7782 = vpop.f32.mrf.mxu0
        %v7783 = vadd.f32 0.0, %v7782
        %7784 = vmatprep.mubr.bf16.mxu0 %v5123
        %7785 = vmatmul.mubr.bf16.gmra.mxu0 %v5122
        %v7786 = vpop.f32.mrf.mxu0
        %v7787 = vadd.f32 0.0, %v7786
        %v7788 = vpop.f32.mrf.mxu0
        %v7789 = vadd.f32 0.0, %v7788
        %v7790 = vpop.f32.mrf.mxu0
        %v7791 = vadd.f32 0.0, %v7790
        %v7792 = vpop.f32.mrf.mxu0
        %v7793 = vadd.f32 0.0, %v7792
        %7794 = vdwg.mxu0
        %7795 = vmatprep.subr.bf16.mxu0 %v6943
        %7796 = vmatpush1.bf16.msra.mxu0 %v6942
        %7797 = vmatprep.subr.bf16.mxu0 %v6931
        %7798 = vmatpush1.bf16.msra.mxu0 %v6930
        %7799 = vmatprep.subr.bf16.mxu0 %v6919
        %7800 = vmatpush1.bf16.msra.mxu0 %v6918
        %7801 = vmatprep.subr.bf16.mxu0 %v6907
        %7802 = vmatpush1.bf16.msra.mxu0 %v6906
        %7803 = vmatprep.subr.bf16.mxu0 %v6895
        %7804 = vmatpush1.bf16.msra.mxu0 %v6894
        %7805 = vmatprep.subr.bf16.mxu0 %v6883
        %7806 = vmatpush1.bf16.msra.mxu0 %v6882
        %7807 = vmatprep.subr.bf16.mxu0 %v6871
        %7808 = vmatpush1.bf16.msra.mxu0 %v6870
        %7809 = vmatprep.subr.bf16.mxu0 %v6859
        %7810 = vmatpush1.bf16.msra.mxu0 %v6858
        %7811 = vmatprep.subr.bf16.mxu0 %v7039
        %7812 = vmatpush2.bf16.msra.mxu0 %v7038
        %7813 = vmatprep.subr.bf16.mxu0 %v7027
        %7814 = vmatpush2.bf16.msra.mxu0 %v7026
        %7815 = vmatprep.subr.bf16.mxu0 %v7015
        %7816 = vmatpush2.bf16.msra.mxu0 %v7014
        %7817 = vmatprep.subr.bf16.mxu0 %v7003
        %7818 = vmatpush2.bf16.msra.mxu0 %v7002
        %7819 = vmatprep.subr.bf16.mxu0 %v6991
        %7820 = vmatpush2.bf16.msra.mxu0 %v6990
        %7821 = vmatprep.subr.bf16.mxu0 %v6979
        %7822 = vmatpush2.bf16.msra.mxu0 %v6978
        %7823 = vmatprep.subr.bf16.mxu0 %v6967
        %7824 = vmatpush2.bf16.msra.mxu0 %v6966
        %7825 = vmatprep.subr.bf16.mxu0 %v6955
        %7826 = vmatpush2.bf16.msra.mxu0 %v6954
        %7827 = vmatprep.mubr.bf16.mxu0 %v5113
        %7828 = vmatmul.mubr.bf16.gmra.mxu0 %v5112
        %v7829 = vpop.f32.mrf.mxu0
        %v7830 = vadd.f32 %v7757, %v7829
        %v7831 = vpop.f32.mrf.mxu0
        %v7832 = vadd.f32 %v7759, %v7831
        %v7833 = vpop.f32.mrf.mxu0
        %v7834 = vadd.f32 %v7761, %v7833
        %v7835 = vpop.f32.mrf.mxu0
        %v7836 = vadd.f32 %v7763, %v7835
        %7837 = vmatprep.mubr.bf16.mxu0 %v5117
        %7838 = vmatmul.mubr.bf16.gmra.mxu0 %v5116
        %v7839 = vpop.f32.mrf.mxu0
        %v7840 = vadd.f32 %v7767, %v7839
        %v7841 = vpop.f32.mrf.mxu0
        %v7842 = vadd.f32 %v7769, %v7841
        %v7843 = vpop.f32.mrf.mxu0
        %v7844 = vadd.f32 %v7771, %v7843
        %v7845 = vpop.f32.mrf.mxu0
        %v7846 = vadd.f32 %v7773, %v7845
        %7847 = vmatprep.mubr.bf16.mxu0 %v5121
        %7848 = vmatmul.mubr.bf16.gmra.mxu0 %v5120
        %v7849 = vpop.f32.mrf.mxu0
        %v7850 = vadd.f32 %v7777, %v7849
        %v7851 = vpop.f32.mrf.mxu0
        %v7852 = vadd.f32 %v7779, %v7851
        %v7853 = vpop.f32.mrf.mxu0
        %v7854 = vadd.f32 %v7781, %v7853
        %v7855 = vpop.f32.mrf.mxu0
        %v7856 = vadd.f32 %v7783, %v7855
        %7857 = vmatprep.mubr.bf16.mxu0 %v5125
        %7858 = vmatmul.mubr.bf16.gmra.mxu0 %v5124
        %v7859 = vpop.f32.mrf.mxu0
        %v7860 = vadd.f32 %v7787, %v7859
        %v7861 = vpop.f32.mrf.mxu0
        %v7862 = vadd.f32 %v7789, %v7861
        %v7863 = vpop.f32.mrf.mxu0
        %v7864 = vadd.f32 %v7791, %v7863
        %v7865 = vpop.f32.mrf.mxu0
        %v7866 = vadd.f32 %v7793, %v7865
        %7867 = vdwg.mxu0
        %7868 = vmatprep.subr.bf16.mxu0 %v6753
        %7869 = vmatpush1.bf16.msra.mxu0 %v6752
        %7870 = vmatprep.subr.bf16.mxu0 %v6741
        %7871 = vmatpush1.bf16.msra.mxu0 %v6740
        %7872 = vmatprep.subr.bf16.mxu0 %v6729
        %7873 = vmatpush1.bf16.msra.mxu0 %v6728
        %7874 = vmatprep.subr.bf16.mxu0 %v6717
        %7875 = vmatpush1.bf16.msra.mxu0 %v6716
        %7876 = vmatprep.subr.bf16.mxu0 %v6705
        %7877 = vmatpush1.bf16.msra.mxu0 %v6704
        %7878 = vmatprep.subr.bf16.mxu0 %v6693
        %7879 = vmatpush1.bf16.msra.mxu0 %v6692
        %7880 = vmatprep.subr.bf16.mxu0 %v6681
        %7881 = vmatpush1.bf16.msra.mxu0 %v6680
        %7882 = vmatprep.subr.bf16.mxu0 %v6669
        %7883 = vmatpush1.bf16.msra.mxu0 %v6668
        %7884 = vmatprep.subr.bf16.mxu0 %v6849
        %7885 = vmatpush2.bf16.msra.mxu0 %v6848
        %7886 = vmatprep.subr.bf16.mxu0 %v6837
        %7887 = vmatpush2.bf16.msra.mxu0 %v6836
        %7888 = vmatprep.subr.bf16.mxu0 %v6825
        %7889 = vmatpush2.bf16.msra.mxu0 %v6824
        %7890 = vmatprep.subr.bf16.mxu0 %v6813
        %7891 = vmatpush2.bf16.msra.mxu0 %v6812
        %7892 = vmatprep.subr.bf16.mxu0 %v6801
        %7893 = vmatpush2.bf16.msra.mxu0 %v6800
        %7894 = vmatprep.subr.bf16.mxu0 %v6789
        %7895 = vmatpush2.bf16.msra.mxu0 %v6788
        %7896 = vmatprep.subr.bf16.mxu0 %v6777
        %7897 = vmatpush2.bf16.msra.mxu0 %v6776
        %7898 = vmatprep.subr.bf16.mxu0 %v6765
        %7899 = vmatpush2.bf16.msra.mxu0 %v6764
        %7900 = vmatprep.mubr.bf16.mxu0 %v5111
        %7901 = vmatmul.mubr.bf16.gmra.mxu0 %v5110
        %v7902 = vpop.f32.mrf.mxu0
        %v7903 = vadd.f32 0.0, %v7902
        %v7904 = vpop.f32.mrf.mxu0
        %v7905 = vadd.f32 0.0, %v7904
        %v7906 = vpop.f32.mrf.mxu0
        %v7907 = vadd.f32 0.0, %v7906
        %v7908 = vpop.f32.mrf.mxu0
        %v7909 = vadd.f32 0.0, %v7908
        %7910 = vmatprep.mubr.bf16.mxu0 %v5115
        %7911 = vmatmul.mubr.bf16.gmra.mxu0 %v5114
        %v7912 = vpop.f32.mrf.mxu0
        %v7913 = vadd.f32 0.0, %v7912
        %v7914 = vpop.f32.mrf.mxu0
        %v7915 = vadd.f32 0.0, %v7914
        %v7916 = vpop.f32.mrf.mxu0
        %v7917 = vadd.f32 0.0, %v7916
        %v7918 = vpop.f32.mrf.mxu0
        %v7919 = vadd.f32 0.0, %v7918
        %7920 = vmatprep.mubr.bf16.mxu0 %v5119
        %7921 = vmatmul.mubr.bf16.gmra.mxu0 %v5118
        %v7922 = vpop.f32.mrf.mxu0
        %v7923 = vadd.f32 0.0, %v7922
        %v7924 = vpop.f32.mrf.mxu0
        %v7925 = vadd.f32 0.0, %v7924
        %v7926 = vpop.f32.mrf.mxu0
        %v7927 = vadd.f32 0.0, %v7926
        %v7928 = vpop.f32.mrf.mxu0
        %v7929 = vadd.f32 0.0, %v7928
        %7930 = vmatprep.mubr.bf16.mxu0 %v5123
        %7931 = vmatmul.mubr.bf16.gmra.mxu0 %v5122
        %v7932 = vpop.f32.mrf.mxu0
        %v7933 = vadd.f32 0.0, %v7932
        %v7934 = vpop.f32.mrf.mxu0
        %v7935 = vadd.f32 0.0, %v7934
        %v7936 = vpop.f32.mrf.mxu0
        %v7937 = vadd.f32 0.0, %v7936
        %v7938 = vpop.f32.mrf.mxu0
        %v7939 = vadd.f32 0.0, %v7938
        %7940 = vdwg.mxu0
        %7941 = vmatprep.subr.bf16.mxu0 %v6945
        %7942 = vmatpush1.bf16.msra.mxu0 %v6944
        %7943 = vmatprep.subr.bf16.mxu0 %v6933
        %7944 = vmatpush1.bf16.msra.mxu0 %v6932
        %7945 = vmatprep.subr.bf16.mxu0 %v6921
        %7946 = vmatpush1.bf16.msra.mxu0 %v6920
        %7947 = vmatprep.subr.bf16.mxu0 %v6909
        %7948 = vmatpush1.bf16.msra.mxu0 %v6908
        %7949 = vmatprep.subr.bf16.mxu0 %v6897
        %7950 = vmatpush1.bf16.msra.mxu0 %v6896
        %7951 = vmatprep.subr.bf16.mxu0 %v6885
        %7952 = vmatpush1.bf16.msra.mxu0 %v6884
        %7953 = vmatprep.subr.bf16.mxu0 %v6873
        %7954 = vmatpush1.bf16.msra.mxu0 %v6872
        %7955 = vmatprep.subr.bf16.mxu0 %v6861
        %7956 = vmatpush1.bf16.msra.mxu0 %v6860
        %7957 = vmatprep.subr.bf16.mxu0 %v7041
        %7958 = vmatpush2.bf16.msra.mxu0 %v7040
        %7959 = vmatprep.subr.bf16.mxu0 %v7029
        %7960 = vmatpush2.bf16.msra.mxu0 %v7028
        %7961 = vmatprep.subr.bf16.mxu0 %v7017
        %7962 = vmatpush2.bf16.msra.mxu0 %v7016
        %7963 = vmatprep.subr.bf16.mxu0 %v7005
        %7964 = vmatpush2.bf16.msra.mxu0 %v7004
        %7965 = vmatprep.subr.bf16.mxu0 %v6993
        %7966 = vmatpush2.bf16.msra.mxu0 %v6992
        %7967 = vmatprep.subr.bf16.mxu0 %v6981
        %7968 = vmatpush2.bf16.msra.mxu0 %v6980
        %7969 = vmatprep.subr.bf16.mxu0 %v6969
        %7970 = vmatpush2.bf16.msra.mxu0 %v6968
        %7971 = vmatprep.subr.bf16.mxu0 %v6957
        %7972 = vmatpush2.bf16.msra.mxu0 %v6956
        %7973 = vmatprep.mubr.bf16.mxu0 %v5113
        %7974 = vmatmul.mubr.bf16.gmra.mxu0 %v5112
        %v7975 = vpop.f32.mrf.mxu0
        %v7976 = vadd.f32 %v7903, %v7975
        %v7977 = vpop.f32.mrf.mxu0
        %v7978 = vadd.f32 %v7905, %v7977
        %v7979 = vpop.f32.mrf.mxu0
        %v7980 = vadd.f32 %v7907, %v7979
        %v7981 = vpop.f32.mrf.mxu0
        %v7982 = vadd.f32 %v7909, %v7981
        %7983 = vmatprep.mubr.bf16.mxu0 %v5117
        %7984 = vmatmul.mubr.bf16.gmra.mxu0 %v5116
        %v7985 = vpop.f32.mrf.mxu0
        %v7986 = vadd.f32 %v7913, %v7985
        %v7987 = vpop.f32.mrf.mxu0
        %v7988 = vadd.f32 %v7915, %v7987
        %v7989 = vpop.f32.mrf.mxu0
        %v7990 = vadd.f32 %v7917, %v7989
        %v7991 = vpop.f32.mrf.mxu0
        %v7992 = vadd.f32 %v7919, %v7991
        %7993 = vmatprep.mubr.bf16.mxu0 %v5121
        %7994 = vmatmul.mubr.bf16.gmra.mxu0 %v5120
        %v7995 = vpop.f32.mrf.mxu0
        %v7996 = vadd.f32 %v7923, %v7995
        %v7997 = vpop.f32.mrf.mxu0
        %v7998 = vadd.f32 %v7925, %v7997
        %v7999 = vpop.f32.mrf.mxu0
        %v8000 = vadd.f32 %v7927, %v7999
        %v8001 = vpop.f32.mrf.mxu0
        %v8002 = vadd.f32 %v7929, %v8001
        %8003 = vmatprep.mubr.bf16.mxu0 %v5125
        %8004 = vmatmul.mubr.bf16.gmra.mxu0 %v5124
        %v8005 = vpop.f32.mrf.mxu0
        %v8006 = vadd.f32 %v7933, %v8005
        %v8007 = vpop.f32.mrf.mxu0
        %v8008 = vadd.f32 %v7935, %v8007
        %v8009 = vpop.f32.mrf.mxu0
        %v8010 = vadd.f32 %v7937, %v8009
        %v8011 = vpop.f32.mrf.mxu0
        %v8012 = vadd.f32 %v7939, %v8011
        %8013 = vdwg.mxu0
        %8014 = vmatprep.subr.bf16.mxu0 %v6755
        %8015 = vmatpush1.bf16.msra.mxu0 %v6754
        %8016 = vmatprep.subr.bf16.mxu0 %v6743
        %8017 = vmatpush1.bf16.msra.mxu0 %v6742
        %8018 = vmatprep.subr.bf16.mxu0 %v6731
        %8019 = vmatpush1.bf16.msra.mxu0 %v6730
        %8020 = vmatprep.subr.bf16.mxu0 %v6719
        %8021 = vmatpush1.bf16.msra.mxu0 %v6718
        %8022 = vmatprep.subr.bf16.mxu0 %v6707
        %8023 = vmatpush1.bf16.msra.mxu0 %v6706
        %8024 = vmatprep.subr.bf16.mxu0 %v6695
        %8025 = vmatpush1.bf16.msra.mxu0 %v6694
        %8026 = vmatprep.subr.bf16.mxu0 %v6683
        %8027 = vmatpush1.bf16.msra.mxu0 %v6682
        %8028 = vmatprep.subr.bf16.mxu0 %v6671
        %8029 = vmatpush1.bf16.msra.mxu0 %v6670
        %8030 = vmatprep.subr.bf16.mxu0 %v6851
        %8031 = vmatpush2.bf16.msra.mxu0 %v6850
        %8032 = vmatprep.subr.bf16.mxu0 %v6839
        %8033 = vmatpush2.bf16.msra.mxu0 %v6838
        %8034 = vmatprep.subr.bf16.mxu0 %v6827
        %8035 = vmatpush2.bf16.msra.mxu0 %v6826
        %8036 = vmatprep.subr.bf16.mxu0 %v6815
        %8037 = vmatpush2.bf16.msra.mxu0 %v6814
        %8038 = vmatprep.subr.bf16.mxu0 %v6803
        %8039 = vmatpush2.bf16.msra.mxu0 %v6802
        %8040 = vmatprep.subr.bf16.mxu0 %v6791
        %8041 = vmatpush2.bf16.msra.mxu0 %v6790
        %8042 = vmatprep.subr.bf16.mxu0 %v6779
        %8043 = vmatpush2.bf16.msra.mxu0 %v6778
        %8044 = vmatprep.subr.bf16.mxu0 %v6767
        %8045 = vmatpush2.bf16.msra.mxu0 %v6766
        %8046 = vmatprep.mubr.bf16.mxu0 %v5111
        %8047 = vmatmul.mubr.bf16.gmra.mxu0 %v5110
        %v8048 = vpop.f32.mrf.mxu0
        %v8049 = vadd.f32 0.0, %v8048
        %v8050 = vpop.f32.mrf.mxu0
        %v8051 = vadd.f32 0.0, %v8050
        %v8052 = vpop.f32.mrf.mxu0
        %v8053 = vadd.f32 0.0, %v8052
        %v8054 = vpop.f32.mrf.mxu0
        %v8055 = vadd.f32 0.0, %v8054
        %8056 = vmatprep.mubr.bf16.mxu0 %v5115
        %8057 = vmatmul.mubr.bf16.gmra.mxu0 %v5114
        %v8058 = vpop.f32.mrf.mxu0
        %v8059 = vadd.f32 0.0, %v8058
        %v8060 = vpop.f32.mrf.mxu0
        %v8061 = vadd.f32 0.0, %v8060
        %v8062 = vpop.f32.mrf.mxu0
        %v8063 = vadd.f32 0.0, %v8062
        %v8064 = vpop.f32.mrf.mxu0
        %v8065 = vadd.f32 0.0, %v8064
        %8066 = vmatprep.mubr.bf16.mxu0 %v5119
        %8067 = vmatmul.mubr.bf16.gmra.mxu0 %v5118
        %v8068 = vpop.f32.mrf.mxu0
        %v8069 = vadd.f32 0.0, %v8068
        %v8070 = vpop.f32.mrf.mxu0
        %v8071 = vadd.f32 0.0, %v8070
        %v8072 = vpop.f32.mrf.mxu0
        %v8073 = vadd.f32 0.0, %v8072
        %v8074 = vpop.f32.mrf.mxu0
        %v8075 = vadd.f32 0.0, %v8074
        %8076 = vmatprep.mubr.bf16.mxu0 %v5123
        %8077 = vmatmul.mubr.bf16.gmra.mxu0 %v5122
        %v8078 = vpop.f32.mrf.mxu0
        %v8079 = vadd.f32 0.0, %v8078
        %v8080 = vpop.f32.mrf.mxu0
        %v8081 = vadd.f32 0.0, %v8080
        %v8082 = vpop.f32.mrf.mxu0
        %v8083 = vadd.f32 0.0, %v8082
        %v8084 = vpop.f32.mrf.mxu0
        %v8085 = vadd.f32 0.0, %v8084
        %8086 = vdwg.mxu0
        %8087 = vmatprep.subr.bf16.mxu0 %v6947
        %8088 = vmatpush1.bf16.msra.mxu0 %v6946
        %8089 = vmatprep.subr.bf16.mxu0 %v6935
        %8090 = vmatpush1.bf16.msra.mxu0 %v6934
        %8091 = vmatprep.subr.bf16.mxu0 %v6923
        %8092 = vmatpush1.bf16.msra.mxu0 %v6922
        %8093 = vmatprep.subr.bf16.mxu0 %v6911
        %8094 = vmatpush1.bf16.msra.mxu0 %v6910
        %8095 = vmatprep.subr.bf16.mxu0 %v6899
        %8096 = vmatpush1.bf16.msra.mxu0 %v6898
        %8097 = vmatprep.subr.bf16.mxu0 %v6887
        %8098 = vmatpush1.bf16.msra.mxu0 %v6886
        %8099 = vmatprep.subr.bf16.mxu0 %v6875
        %8100 = vmatpush1.bf16.msra.mxu0 %v6874
        %8101 = vmatprep.subr.bf16.mxu0 %v6863
        %8102 = vmatpush1.bf16.msra.mxu0 %v6862
        %8103 = vmatprep.subr.bf16.mxu0 %v7043
        %8104 = vmatpush2.bf16.msra.mxu0 %v7042
        %8105 = vmatprep.subr.bf16.mxu0 %v7031
        %8106 = vmatpush2.bf16.msra.mxu0 %v7030
        %8107 = vmatprep.subr.bf16.mxu0 %v7019
        %8108 = vmatpush2.bf16.msra.mxu0 %v7018
        %8109 = vmatprep.subr.bf16.mxu0 %v7007
        %8110 = vmatpush2.bf16.msra.mxu0 %v7006
        %8111 = vmatprep.subr.bf16.mxu0 %v6995
        %8112 = vmatpush2.bf16.msra.mxu0 %v6994
        %8113 = vmatprep.subr.bf16.mxu0 %v6983
        %8114 = vmatpush2.bf16.msra.mxu0 %v6982
        %8115 = vmatprep.subr.bf16.mxu0 %v6971
        %8116 = vmatpush2.bf16.msra.mxu0 %v6970
        %8117 = vmatprep.subr.bf16.mxu0 %v6959
        %8118 = vmatpush2.bf16.msra.mxu0 %v6958
        %8119 = vmatprep.mubr.bf16.mxu0 %v5113
        %8120 = vmatmul.mubr.bf16.gmra.mxu0 %v5112
        %v8121 = vpop.f32.mrf.mxu0
        %v8122 = vadd.f32 %v8049, %v8121
        %v8123 = vpop.f32.mrf.mxu0
        %v8124 = vadd.f32 %v8051, %v8123
        %v8125 = vpop.f32.mrf.mxu0
        %v8126 = vadd.f32 %v8053, %v8125
        %v8127 = vpop.f32.mrf.mxu0
        %v8128 = vadd.f32 %v8055, %v8127
        %8129 = vmatprep.mubr.bf16.mxu0 %v5117
        %8130 = vmatmul.mubr.bf16.gmra.mxu0 %v5116
        %v8131 = vpop.f32.mrf.mxu0
        %v8132 = vadd.f32 %v8059, %v8131
        %v8133 = vpop.f32.mrf.mxu0
        %v8134 = vadd.f32 %v8061, %v8133
        %v8135 = vpop.f32.mrf.mxu0
        %v8136 = vadd.f32 %v8063, %v8135
        %v8137 = vpop.f32.mrf.mxu0
        %v8138 = vadd.f32 %v8065, %v8137
        %8139 = vmatprep.mubr.bf16.mxu0 %v5121
        %8140 = vmatmul.mubr.bf16.gmra.mxu0 %v5120
        %v8141 = vpop.f32.mrf.mxu0
        %v8142 = vadd.f32 %v8069, %v8141
        %v8143 = vpop.f32.mrf.mxu0
        %v8144 = vadd.f32 %v8071, %v8143
        %v8145 = vpop.f32.mrf.mxu0
        %v8146 = vadd.f32 %v8073, %v8145
        %v8147 = vpop.f32.mrf.mxu0
        %v8148 = vadd.f32 %v8075, %v8147
        %8149 = vmatprep.mubr.bf16.mxu0 %v5125
        %8150 = vmatmul.mubr.bf16.gmra.mxu0 %v5124
        %v8151 = vpop.f32.mrf.mxu0
        %v8152 = vadd.f32 %v8079, %v8151
        %v8153 = vpop.f32.mrf.mxu0
        %v8154 = vadd.f32 %v8081, %v8153
        %v8155 = vpop.f32.mrf.mxu0
        %v8156 = vadd.f32 %v8083, %v8155
        %v8157 = vpop.f32.mrf.mxu0
        %v8158 = vadd.f32 %v8085, %v8157
        %8159 = vdwg.mxu0
        %8160 = vmatprep.subr.bf16.mxu0 %v6757
        %8161 = vmatpush1.bf16.msra.mxu0 %v6756
        %8162 = vmatprep.subr.bf16.mxu0 %v6745
        %8163 = vmatpush1.bf16.msra.mxu0 %v6744
        %8164 = vmatprep.subr.bf16.mxu0 %v6733
        %8165 = vmatpush1.bf16.msra.mxu0 %v6732
        %8166 = vmatprep.subr.bf16.mxu0 %v6721
        %8167 = vmatpush1.bf16.msra.mxu0 %v6720
        %8168 = vmatprep.subr.bf16.mxu0 %v6709
        %8169 = vmatpush1.bf16.msra.mxu0 %v6708
        %8170 = vmatprep.subr.bf16.mxu0 %v6697
        %8171 = vmatpush1.bf16.msra.mxu0 %v6696
        %8172 = vmatprep.subr.bf16.mxu0 %v6685
        %8173 = vmatpush1.bf16.msra.mxu0 %v6684
        %8174 = vmatprep.subr.bf16.mxu0 %v6673
        %8175 = vmatpush1.bf16.msra.mxu0 %v6672
        %8176 = vmatprep.subr.bf16.mxu0 %v6853
        %8177 = vmatpush2.bf16.msra.mxu0 %v6852
        %8178 = vmatprep.subr.bf16.mxu0 %v6841
        %8179 = vmatpush2.bf16.msra.mxu0 %v6840
        %8180 = vmatprep.subr.bf16.mxu0 %v6829
        %8181 = vmatpush2.bf16.msra.mxu0 %v6828
        %8182 = vmatprep.subr.bf16.mxu0 %v6817
        %8183 = vmatpush2.bf16.msra.mxu0 %v6816
        %8184 = vmatprep.subr.bf16.mxu0 %v6805
        %8185 = vmatpush2.bf16.msra.mxu0 %v6804
        %8186 = vmatprep.subr.bf16.mxu0 %v6793
        %8187 = vmatpush2.bf16.msra.mxu0 %v6792
        %8188 = vmatprep.subr.bf16.mxu0 %v6781
        %8189 = vmatpush2.bf16.msra.mxu0 %v6780
        %8190 = vmatprep.subr.bf16.mxu0 %v6769
        %8191 = vmatpush2.bf16.msra.mxu0 %v6768
        %8192 = vmatprep.mubr.bf16.mxu0 %v5111
        %8193 = vmatmul.mubr.bf16.gmra.mxu0 %v5110
        %v8194 = vpop.f32.mrf.mxu0
        %v8195 = vadd.f32 0.0, %v8194
        %v8196 = vpop.f32.mrf.mxu0
        %v8197 = vadd.f32 0.0, %v8196
        %v8198 = vpop.f32.mrf.mxu0
        %v8199 = vadd.f32 0.0, %v8198
        %v8200 = vpop.f32.mrf.mxu0
        %v8201 = vadd.f32 0.0, %v8200
        %8202 = vmatprep.mubr.bf16.mxu0 %v5115
        %8203 = vmatmul.mubr.bf16.gmra.mxu0 %v5114
        %v8204 = vpop.f32.mrf.mxu0
        %v8205 = vadd.f32 0.0, %v8204
        %v8206 = vpop.f32.mrf.mxu0
        %v8207 = vadd.f32 0.0, %v8206
        %v8208 = vpop.f32.mrf.mxu0
        %v8209 = vadd.f32 0.0, %v8208
        %v8210 = vpop.f32.mrf.mxu0
        %v8211 = vadd.f32 0.0, %v8210
        %8212 = vmatprep.mubr.bf16.mxu0 %v5119
        %8213 = vmatmul.mubr.bf16.gmra.mxu0 %v5118
        %v8214 = vpop.f32.mrf.mxu0
        %v8215 = vadd.f32 0.0, %v8214
        %v8216 = vpop.f32.mrf.mxu0
        %v8217 = vadd.f32 0.0, %v8216
        %v8218 = vpop.f32.mrf.mxu0
        %v8219 = vadd.f32 0.0, %v8218
        %v8220 = vpop.f32.mrf.mxu0
        %v8221 = vadd.f32 0.0, %v8220
        %8222 = vmatprep.mubr.bf16.mxu0 %v5123
        %8223 = vmatmul.mubr.bf16.gmra.mxu0 %v5122
        %v8224 = vpop.f32.mrf.mxu0
        %v8225 = vadd.f32 0.0, %v8224
        %v8226 = vpop.f32.mrf.mxu0
        %v8227 = vadd.f32 0.0, %v8226
        %v8228 = vpop.f32.mrf.mxu0
        %v8229 = vadd.f32 0.0, %v8228
        %v8230 = vpop.f32.mrf.mxu0
        %v8231 = vadd.f32 0.0, %v8230
        %8232 = vdwg.mxu0
        %8233 = vmatprep.subr.bf16.mxu0 %v6949
        %8234 = vmatpush1.bf16.msra.mxu0 %v6948
        %8235 = vmatprep.subr.bf16.mxu0 %v6937
        %8236 = vmatpush1.bf16.msra.mxu0 %v6936
        %8237 = vmatprep.subr.bf16.mxu0 %v6925
        %8238 = vmatpush1.bf16.msra.mxu0 %v6924
        %8239 = vmatprep.subr.bf16.mxu0 %v6913
        %8240 = vmatpush1.bf16.msra.mxu0 %v6912
        %8241 = vmatprep.subr.bf16.mxu0 %v6901
        %8242 = vmatpush1.bf16.msra.mxu0 %v6900
        %8243 = vmatprep.subr.bf16.mxu0 %v6889
        %8244 = vmatpush1.bf16.msra.mxu0 %v6888
        %8245 = vmatprep.subr.bf16.mxu0 %v6877
        %8246 = vmatpush1.bf16.msra.mxu0 %v6876
        %8247 = vmatprep.subr.bf16.mxu0 %v6865
        %8248 = vmatpush1.bf16.msra.mxu0 %v6864
        %8249 = vmatprep.subr.bf16.mxu0 %v7045
        %8250 = vmatpush2.bf16.msra.mxu0 %v7044
        %8251 = vmatprep.subr.bf16.mxu0 %v7033
        %8252 = vmatpush2.bf16.msra.mxu0 %v7032
        %8253 = vmatprep.subr.bf16.mxu0 %v7021
        %8254 = vmatpush2.bf16.msra.mxu0 %v7020
        %8255 = vmatprep.subr.bf16.mxu0 %v7009
        %8256 = vmatpush2.bf16.msra.mxu0 %v7008
        %8257 = vmatprep.subr.bf16.mxu0 %v6997
        %8258 = vmatpush2.bf16.msra.mxu0 %v6996
        %8259 = vmatprep.subr.bf16.mxu0 %v6985
        %8260 = vmatpush2.bf16.msra.mxu0 %v6984
        %8261 = vmatprep.subr.bf16.mxu0 %v6973
        %8262 = vmatpush2.bf16.msra.mxu0 %v6972
        %8263 = vmatprep.subr.bf16.mxu0 %v6961
        %8264 = vmatpush2.bf16.msra.mxu0 %v6960
        %8265 = vmatprep.mubr.bf16.mxu0 %v5113
        %8266 = vmatmul.mubr.bf16.gmra.mxu0 %v5112
        %v8267 = vpop.f32.mrf.mxu0
        %v8268 = vadd.f32 %v8195, %v8267
        %v8269 = vpop.f32.mrf.mxu0
        %v8270 = vadd.f32 %v8197, %v8269
        %v8271 = vpop.f32.mrf.mxu0
        %v8272 = vadd.f32 %v8199, %v8271
        %v8273 = vpop.f32.mrf.mxu0
        %v8274 = vadd.f32 %v8201, %v8273
        %8275 = vmatprep.mubr.bf16.mxu0 %v5117
        %8276 = vmatmul.mubr.bf16.gmra.mxu0 %v5116
        %v8277 = vpop.f32.mrf.mxu0
        %v8278 = vadd.f32 %v8205, %v8277
        %v8279 = vpop.f32.mrf.mxu0
        %v8280 = vadd.f32 %v8207, %v8279
        %v8281 = vpop.f32.mrf.mxu0
        %v8282 = vadd.f32 %v8209, %v8281
        %v8283 = vpop.f32.mrf.mxu0
        %v8284 = vadd.f32 %v8211, %v8283
        %8285 = vmatprep.mubr.bf16.mxu0 %v5121
        %8286 = vmatmul.mubr.bf16.gmra.mxu0 %v5120
        %v8287 = vpop.f32.mrf.mxu0
        %v8288 = vadd.f32 %v8215, %v8287
        %v8289 = vpop.f32.mrf.mxu0
        %v8290 = vadd.f32 %v8217, %v8289
        %v8291 = vpop.f32.mrf.mxu0
        %v8292 = vadd.f32 %v8219, %v8291
        %v8293 = vpop.f32.mrf.mxu0
        %v8294 = vadd.f32 %v8221, %v8293
        %8295 = vmatprep.mubr.bf16.mxu0 %v5125
        %8296 = vmatmul.mubr.bf16.gmra.mxu0 %v5124
        %v8297 = vpop.f32.mrf.mxu0
        %v8298 = vadd.f32 %v8225, %v8297
        %v8299 = vpop.f32.mrf.mxu0
        %v8300 = vadd.f32 %v8227, %v8299
        %v8301 = vpop.f32.mrf.mxu0
        %v8302 = vadd.f32 %v8229, %v8301
        %v8303 = vpop.f32.mrf.mxu0
        %v8304 = vadd.f32 %v8231, %v8303
        %8305 = vdwg.mxu0
        %v8306 = vadd.f32 %v7538, %v7542
        %v8307 = vadd.f32 %v8306, %v7548
        %v8308 = vadd.f32 %v8307, %v7552
        %v8309 = vadd.f32 %v8308, %v7558
        %v8310 = vadd.f32 %v8309, %v7562
        %v8311 = vadd.f32 %v8310, %v7568
        %v8312 = vadd.f32 %v8311, %v7572
        %v8313 = vrot.slane %v8312, 4
        %v8314 = vadd.f32 %v8312, %v8313
        %v8315 = vrot.slane %v8314, 2
        %v8316 = vadd.f32 %v8314, %v8315
        %v8317 = vrot.slane %v8316, 1
        %v8318 = vadd.f32 %v8316, %v8317
        %v8319 = vadd.f32 %v7540, %v7544
        %v8320 = vadd.f32 %v8319, %v7550
        %v8321 = vadd.f32 %v8320, %v7554
        %v8322 = vadd.f32 %v8321, %v7560
        %v8323 = vadd.f32 %v8322, %v7564
        %v8324 = vadd.f32 %v8323, %v7570
        %v8325 = vadd.f32 %v8324, %v7574
        %v8326 = vrot.slane %v8325, 4
        %v8327 = vadd.f32 %v8325, %v8326
        %v8328 = vrot.slane %v8327, 2
        %v8329 = vadd.f32 %v8327, %v8328
        %v8330 = vrot.slane %v8329, 1
        %v8331 = vadd.f32 %v8329, %v8330
        %v8332 = vadd.f32 %v7684, %v7688
        %v8333 = vadd.f32 %v8332, %v7694
        %v8334 = vadd.f32 %v8333, %v7698
        %v8335 = vadd.f32 %v8334, %v7704
        %v8336 = vadd.f32 %v8335, %v7708
        %v8337 = vadd.f32 %v8336, %v7714
        %v8338 = vadd.f32 %v8337, %v7718
        %v8339 = vrot.slane %v8338, 4
        %v8340 = vadd.f32 %v8338, %v8339
        %v8341 = vrot.slane %v8340, 2
        %v8342 = vadd.f32 %v8340, %v8341
        %v8343 = vrot.slane %v8342, 1
        %v8344 = vadd.f32 %v8342, %v8343
        %v8345 = vadd.f32 %v7686, %v7690
        %v8346 = vadd.f32 %v8345, %v7696
        %v8347 = vadd.f32 %v8346, %v7700
        %v8348 = vadd.f32 %v8347, %v7706
        %v8349 = vadd.f32 %v8348, %v7710
        %v8350 = vadd.f32 %v8349, %v7716
        %v8351 = vadd.f32 %v8350, %v7720
        %v8352 = vrot.slane %v8351, 4
        %v8353 = vadd.f32 %v8351, %v8352
        %v8354 = vrot.slane %v8353, 2
        %v8355 = vadd.f32 %v8353, %v8354
        %v8356 = vrot.slane %v8355, 1
        %v8357 = vadd.f32 %v8355, %v8356
        %v8358 = vadd.f32 %v7830, %v7834
        %v8359 = vadd.f32 %v8358, %v7840
        %v8360 = vadd.f32 %v8359, %v7844
        %v8361 = vadd.f32 %v8360, %v7850
        %v8362 = vadd.f32 %v8361, %v7854
        %v8363 = vadd.f32 %v8362, %v7860
        %v8364 = vadd.f32 %v8363, %v7864
        %v8365 = vrot.slane %v8364, 4
        %v8366 = vadd.f32 %v8364, %v8365
        %v8367 = vrot.slane %v8366, 2
        %v8368 = vadd.f32 %v8366, %v8367
        %v8369 = vrot.slane %v8368, 1
        %v8370 = vadd.f32 %v8368, %v8369
        %v8371 = vadd.f32 %v7832, %v7836
        %v8372 = vadd.f32 %v8371, %v7842
        %v8373 = vadd.f32 %v8372, %v7846
        %v8374 = vadd.f32 %v8373, %v7852
        %v8375 = vadd.f32 %v8374, %v7856
        %v8376 = vadd.f32 %v8375, %v7862
        %v8377 = vadd.f32 %v8376, %v7866
        %v8378 = vrot.slane %v8377, 4
        %v8379 = vadd.f32 %v8377, %v8378
        %v8380 = vrot.slane %v8379, 2
        %v8381 = vadd.f32 %v8379, %v8380
        %v8382 = vrot.slane %v8381, 1
        %v8383 = vadd.f32 %v8381, %v8382
        %v8384 = vadd.f32 %v7976, %v7980
        %v8385 = vadd.f32 %v8384, %v7986
        %v8386 = vadd.f32 %v8385, %v7990
        %v8387 = vadd.f32 %v8386, %v7996
        %v8388 = vadd.f32 %v8387, %v8000
        %v8389 = vadd.f32 %v8388, %v8006
        %v8390 = vadd.f32 %v8389, %v8010
        %v8391 = vrot.slane %v8390, 4
        %v8392 = vadd.f32 %v8390, %v8391
        %v8393 = vrot.slane %v8392, 2
        %v8394 = vadd.f32 %v8392, %v8393
        %v8395 = vrot.slane %v8394, 1
        %v8396 = vadd.f32 %v8394, %v8395
        %v8397 = vadd.f32 %v7978, %v7982
        %v8398 = vadd.f32 %v8397, %v7988
        %v8399 = vadd.f32 %v8398, %v7992
        %v8400 = vadd.f32 %v8399, %v7998
        %v8401 = vadd.f32 %v8400, %v8002
        %v8402 = vadd.f32 %v8401, %v8008
        %v8403 = vadd.f32 %v8402, %v8012
        %v8404 = vrot.slane %v8403, 4
        %v8405 = vadd.f32 %v8403, %v8404
        %v8406 = vrot.slane %v8405, 2
        %v8407 = vadd.f32 %v8405, %v8406
        %v8408 = vrot.slane %v8407, 1
        %v8409 = vadd.f32 %v8407, %v8408
        %v8410 = vadd.f32 %v8122, %v8126
        %v8411 = vadd.f32 %v8410, %v8132
        %v8412 = vadd.f32 %v8411, %v8136
        %v8413 = vadd.f32 %v8412, %v8142
        %v8414 = vadd.f32 %v8413, %v8146
        %v8415 = vadd.f32 %v8414, %v8152
        %v8416 = vadd.f32 %v8415, %v8156
        %v8417 = vrot.slane %v8416, 4
        %v8418 = vadd.f32 %v8416, %v8417
        %v8419 = vrot.slane %v8418, 2
        %v8420 = vadd.f32 %v8418, %v8419
        %v8421 = vrot.slane %v8420, 1
        %v8422 = vadd.f32 %v8420, %v8421
        %v8423 = vadd.f32 %v8124, %v8128
        %v8424 = vadd.f32 %v8423, %v8134
        %v8425 = vadd.f32 %v8424, %v8138
        %v8426 = vadd.f32 %v8425, %v8144
        %v8427 = vadd.f32 %v8426, %v8148
        %v8428 = vadd.f32 %v8427, %v8154
        %v8429 = vadd.f32 %v8428, %v8158
        %v8430 = vrot.slane %v8429, 4
        %v8431 = vadd.f32 %v8429, %v8430
        %v8432 = vrot.slane %v8431, 2
        %v8433 = vadd.f32 %v8431, %v8432
        %v8434 = vrot.slane %v8433, 1
        %v8435 = vadd.f32 %v8433, %v8434
        %v8436 = vadd.f32 %v8268, %v8272
        %v8437 = vadd.f32 %v8436, %v8278
        %v8438 = vadd.f32 %v8437, %v8282
        %v8439 = vadd.f32 %v8438, %v8288
        %v8440 = vadd.f32 %v8439, %v8292
        %v8441 = vadd.f32 %v8440, %v8298
        %v8442 = vadd.f32 %v8441, %v8302
        %v8443 = vrot.slane %v8442, 4
        %v8444 = vadd.f32 %v8442, %v8443
        %v8445 = vrot.slane %v8444, 2
        %v8446 = vadd.f32 %v8444, %v8445
        %v8447 = vrot.slane %v8446, 1
        %v8448 = vadd.f32 %v8446, %v8447
        %v8449 = vadd.f32 %v8270, %v8274
        %v8450 = vadd.f32 %v8449, %v8280
        %v8451 = vadd.f32 %v8450, %v8284
        %v8452 = vadd.f32 %v8451, %v8290
        %v8453 = vadd.f32 %v8452, %v8294
        %v8454 = vadd.f32 %v8453, %v8300
        %v8455 = vadd.f32 %v8454, %v8304
        %v8456 = vrot.slane %v8455, 4
        %v8457 = vadd.f32 %v8455, %v8456
        %v8458 = vrot.slane %v8457, 2
        %v8459 = vadd.f32 %v8457, %v8458
        %v8460 = vrot.slane %v8459, 1
        %v8461 = vadd.f32 %v8459, %v8460
        %v8462 = vmul.f32 %v8318, 0.020408163
        %v8463 = vmul.f32 %v8331, 0.020408163
        %v8464 = vmul.f32 %v8344, 0.020408163
        %v8465 = vmul.f32 %v8357, 0.020408163
        %v8466 = vmul.f32 %v8370, 0.020408163
        %v8467 = vmul.f32 %v8383, 0.020408163
        %v8468 = vmul.f32 %v8396, 0.020408163
        %v8469 = vmul.f32 %v8409, 0.020408163
        %v8470 = vmul.f32 %v8422, 0.020408163
        %v8471 = vmul.f32 %v8435, 0.020408163
        %v8472 = vmul.f32 %v8448, 0.020408163
        %v8473 = vmul.f32 %v8461, 0.020408163
        %v8474 = vsub.f32 %v7538, %v8462
        %v8475 = vsub.f32 %v7540, %v8463
        %v8476 = vsub.f32 %v7684, %v8464
        %v8477 = vsub.f32 %v7686, %v8465
        %v8478 = vsub.f32 %v7830, %v8466
        %v8479 = vsub.f32 %v7832, %v8467
        %v8480 = vsub.f32 %v7976, %v8468
        %v8481 = vsub.f32 %v7978, %v8469
        %v8482 = vsub.f32 %v8122, %v8470
        %v8483 = vsub.f32 %v8124, %v8471
        %v8484 = vsub.f32 %v8268, %v8472
        %v8485 = vsub.f32 %v8270, %v8473
        %v8486 = vsub.f32 %v7542, %v8462
        %v8487 = vsub.f32 %v7544, %v8463
        %v8488 = vsub.f32 %v7688, %v8464
        %v8489 = vsub.f32 %v7690, %v8465
        %v8490 = vsub.f32 %v7834, %v8466
        %v8491 = vsub.f32 %v7836, %v8467
        %v8492 = vsub.f32 %v7980, %v8468
        %v8493 = vsub.f32 %v7982, %v8469
        %v8494 = vsub.f32 %v8126, %v8470
        %v8495 = vsub.f32 %v8128, %v8471
        %v8496 = vsub.f32 %v8272, %v8472
        %v8497 = vsub.f32 %v8274, %v8473
        %v8498 = vsub.f32 %v7548, %v8462
        %v8499 = vsub.f32 %v7550, %v8463
        %v8500 = vsub.f32 %v7694, %v8464
        %v8501 = vsub.f32 %v7696, %v8465
        %v8502 = vsub.f32 %v7840, %v8466
        %v8503 = vsub.f32 %v7842, %v8467
        %v8504 = vsub.f32 %v7986, %v8468
        %v8505 = vsub.f32 %v7988, %v8469
        %v8506 = vsub.f32 %v8132, %v8470
        %v8507 = vsub.f32 %v8134, %v8471
        %v8508 = vsub.f32 %v8278, %v8472
        %v8509 = vsub.f32 %v8280, %v8473
        %v8510 = vsub.f32 %v7552, %v8462
        %v8511 = vsub.f32 %v7554, %v8463
        %v8512 = vsub.f32 %v7698, %v8464
        %v8513 = vsub.f32 %v7700, %v8465
        %v8514 = vsub.f32 %v7844, %v8466
        %v8515 = vsub.f32 %v7846, %v8467
        %v8516 = vsub.f32 %v7990, %v8468
        %v8517 = vsub.f32 %v7992, %v8469
        %v8518 = vsub.f32 %v8136, %v8470
        %v8519 = vsub.f32 %v8138, %v8471
        %v8520 = vsub.f32 %v8282, %v8472
        %v8521 = vsub.f32 %v8284, %v8473
        %v8522 = vsub.f32 %v7558, %v8462
        %v8523 = vsub.f32 %v7560, %v8463
        %v8524 = vsub.f32 %v7704, %v8464
        %v8525 = vsub.f32 %v7706, %v8465
        %v8526 = vsub.f32 %v7850, %v8466
        %v8527 = vsub.f32 %v7852, %v8467
        %v8528 = vsub.f32 %v7996, %v8468
        %v8529 = vsub.f32 %v7998, %v8469
        %v8530 = vsub.f32 %v8142, %v8470
        %v8531 = vsub.f32 %v8144, %v8471
        %v8532 = vsub.f32 %v8288, %v8472
        %v8533 = vsub.f32 %v8290, %v8473
        %v8534 = vsub.f32 %v7562, %v8462
        %v8535 = vsub.f32 %v7564, %v8463
        %v8536 = vsub.f32 %v7708, %v8464
        %v8537 = vsub.f32 %v7710, %v8465
        %v8538 = vsub.f32 %v7854, %v8466
        %v8539 = vsub.f32 %v7856, %v8467
        %v8540 = vsub.f32 %v8000, %v8468
        %v8541 = vsub.f32 %v8002, %v8469
        %v8542 = vsub.f32 %v8146, %v8470
        %v8543 = vsub.f32 %v8148, %v8471
        %v8544 = vsub.f32 %v8292, %v8472
        %v8545 = vsub.f32 %v8294, %v8473
        %v8546 = vsub.f32 %v7568, %v8462
        %v8547 = vsub.f32 %v7570, %v8463
        %v8548 = vsub.f32 %v7714, %v8464
        %v8549 = vsub.f32 %v7716, %v8465
        %v8550 = vsub.f32 %v7860, %v8466
        %v8551 = vsub.f32 %v7862, %v8467
        %v8552 = vsub.f32 %v8006, %v8468
        %v8553 = vsub.f32 %v8008, %v8469
        %v8554 = vsub.f32 %v8152, %v8470
        %v8555 = vsub.f32 %v8154, %v8471
        %v8556 = vsub.f32 %v8298, %v8472
        %v8557 = vsub.f32 %v8300, %v8473
        %v8558 = vsub.f32 %v7572, %v8462
        %v8559 = vsub.f32 %v7574, %v8463
        %v8560 = vsub.f32 %v7718, %v8464
        %v8561 = vsub.f32 %v7720, %v8465
        %v8562 = vsub.f32 %v7864, %v8466
        %v8563 = vsub.f32 %v7866, %v8467
        %v8564 = vsub.f32 %v8010, %v8468
        %v8565 = vsub.f32 %v8012, %v8469
        %v8566 = vsub.f32 %v8156, %v8470
        %v8567 = vsub.f32 %v8158, %v8471
        %v8568 = vsub.f32 %v8302, %v8472
        %v8569 = vsub.f32 %v8304, %v8473
        %v8570 = vsel %vm4714, %v8474, 0.0
        %v8571 = vsel %vm4714, %v8475, 0.0
        %v8572 = vsel %vm4714, %v8476, 0.0
        %v8573 = vsel %vm4714, %v8477, 0.0
        %v8574 = vsel %vm4714, %v8478, 0.0
        %v8575 = vsel %vm4714, %v8479, 0.0
        %v8576 = vsel %vm4714, %v8480, 0.0
        %v8577 = vsel %vm4714, %v8481, 0.0
        %v8578 = vsel %vm4714, %v8482, 0.0
        %v8579 = vsel %vm4714, %v8483, 0.0
        %v8580 = vsel %vm4714, %v8484, 0.0
        %v8581 = vsel %vm4714, %v8485, 0.0
        %v8582 = vsel %vm4715, %v8486, 0.0
        %v8583 = vsel %vm4715, %v8487, 0.0
        %v8584 = vsel %vm4715, %v8488, 0.0
        %v8585 = vsel %vm4715, %v8489, 0.0
        %v8586 = vsel %vm4715, %v8490, 0.0
        %v8587 = vsel %vm4715, %v8491, 0.0
        %v8588 = vsel %vm4715, %v8492, 0.0
        %v8589 = vsel %vm4715, %v8493, 0.0
        %v8590 = vsel %vm4715, %v8494, 0.0
        %v8591 = vsel %vm4715, %v8495, 0.0
        %v8592 = vsel %vm4715, %v8496, 0.0
        %v8593 = vsel %vm4715, %v8497, 0.0
        %v8594 = vsel %vm4716, %v8498, 0.0
        %v8595 = vsel %vm4716, %v8499, 0.0
        %v8596 = vsel %vm4716, %v8500, 0.0
        %v8597 = vsel %vm4716, %v8501, 0.0
        %v8598 = vsel %vm4716, %v8502, 0.0
        %v8599 = vsel %vm4716, %v8503, 0.0
        %v8600 = vsel %vm4716, %v8504, 0.0
        %v8601 = vsel %vm4716, %v8505, 0.0
        %v8602 = vsel %vm4716, %v8506, 0.0
        %v8603 = vsel %vm4716, %v8507, 0.0
        %v8604 = vsel %vm4716, %v8508, 0.0
        %v8605 = vsel %vm4716, %v8509, 0.0
        %v8606 = vsel %vm4717, %v8510, 0.0
        %v8607 = vsel %vm4717, %v8511, 0.0
        %v8608 = vsel %vm4717, %v8512, 0.0
        %v8609 = vsel %vm4717, %v8513, 0.0
        %v8610 = vsel %vm4717, %v8514, 0.0
        %v8611 = vsel %vm4717, %v8515, 0.0
        %v8612 = vsel %vm4717, %v8516, 0.0
        %v8613 = vsel %vm4717, %v8517, 0.0
        %v8614 = vsel %vm4717, %v8518, 0.0
        %v8615 = vsel %vm4717, %v8519, 0.0
        %v8616 = vsel %vm4717, %v8520, 0.0
        %v8617 = vsel %vm4717, %v8521, 0.0
        %v8618 = vsel %vm4718, %v8522, 0.0
        %v8619 = vsel %vm4718, %v8523, 0.0
        %v8620 = vsel %vm4718, %v8524, 0.0
        %v8621 = vsel %vm4718, %v8525, 0.0
        %v8622 = vsel %vm4718, %v8526, 0.0
        %v8623 = vsel %vm4718, %v8527, 0.0
        %v8624 = vsel %vm4718, %v8528, 0.0
        %v8625 = vsel %vm4718, %v8529, 0.0
        %v8626 = vsel %vm4718, %v8530, 0.0
        %v8627 = vsel %vm4718, %v8531, 0.0
        %v8628 = vsel %vm4718, %v8532, 0.0
        %v8629 = vsel %vm4718, %v8533, 0.0
        %v8630 = vsel %vm4719, %v8534, 0.0
        %v8631 = vsel %vm4719, %v8535, 0.0
        %v8632 = vsel %vm4719, %v8536, 0.0
        %v8633 = vsel %vm4719, %v8537, 0.0
        %v8634 = vsel %vm4719, %v8538, 0.0
        %v8635 = vsel %vm4719, %v8539, 0.0
        %v8636 = vsel %vm4719, %v8540, 0.0
        %v8637 = vsel %vm4719, %v8541, 0.0
        %v8638 = vsel %vm4719, %v8542, 0.0
        %v8639 = vsel %vm4719, %v8543, 0.0
        %v8640 = vsel %vm4719, %v8544, 0.0
        %v8641 = vsel %vm4719, %v8545, 0.0
        %v8642 = vsel %vm4720, %v8546, 0.0
        %v8643 = vsel %vm4720, %v8547, 0.0
        %v8644 = vsel %vm4720, %v8548, 0.0
        %v8645 = vsel %vm4720, %v8549, 0.0
        %v8646 = vsel %vm4720, %v8550, 0.0
        %v8647 = vsel %vm4720, %v8551, 0.0
        %v8648 = vsel %vm4720, %v8552, 0.0
        %v8649 = vsel %vm4720, %v8553, 0.0
        %v8650 = vsel %vm4720, %v8554, 0.0
        %v8651 = vsel %vm4720, %v8555, 0.0
        %v8652 = vsel %vm4720, %v8556, 0.0
        %v8653 = vsel %vm4720, %v8557, 0.0
        %v8654 = vsel %vm4721, %v8558, 0.0
        %v8655 = vsel %vm4721, %v8559, 0.0
        %v8656 = vsel %vm4721, %v8560, 0.0
        %v8657 = vsel %vm4721, %v8561, 0.0
        %v8658 = vsel %vm4721, %v8562, 0.0
        %v8659 = vsel %vm4721, %v8563, 0.0
        %v8660 = vsel %vm4721, %v8564, 0.0
        %v8661 = vsel %vm4721, %v8565, 0.0
        %v8662 = vsel %vm4721, %v8566, 0.0
        %v8663 = vsel %vm4721, %v8567, 0.0
        %v8664 = vsel %vm4721, %v8568, 0.0
        %v8665 = vsel %vm4721, %v8569, 0.0
        %v8666 = vmul.f32 %v8570, %v8570
        %v8667 = vmul.f32 %v8571, %v8571
        %v8668 = vmul.f32 %v8572, %v8572
        %v8669 = vmul.f32 %v8573, %v8573
        %v8670 = vmul.f32 %v8574, %v8574
        %v8671 = vmul.f32 %v8575, %v8575
        %v8672 = vmul.f32 %v8576, %v8576
        %v8673 = vmul.f32 %v8577, %v8577
        %v8674 = vmul.f32 %v8578, %v8578
        %v8675 = vmul.f32 %v8579, %v8579
        %v8676 = vmul.f32 %v8580, %v8580
        %v8677 = vmul.f32 %v8581, %v8581
        %v8678 = vmul.f32 %v8582, %v8582
        %v8679 = vmul.f32 %v8583, %v8583
        %v8680 = vmul.f32 %v8584, %v8584
        %v8681 = vmul.f32 %v8585, %v8585
        %v8682 = vmul.f32 %v8586, %v8586
        %v8683 = vmul.f32 %v8587, %v8587
        %v8684 = vmul.f32 %v8588, %v8588
        %v8685 = vmul.f32 %v8589, %v8589
        %v8686 = vmul.f32 %v8590, %v8590
        %v8687 = vmul.f32 %v8591, %v8591
        %v8688 = vmul.f32 %v8592, %v8592
        %v8689 = vmul.f32 %v8593, %v8593
        %v8690 = vmul.f32 %v8594, %v8594
        %v8691 = vmul.f32 %v8595, %v8595
        %v8692 = vmul.f32 %v8596, %v8596
        %v8693 = vmul.f32 %v8597, %v8597
        %v8694 = vmul.f32 %v8598, %v8598
        %v8695 = vmul.f32 %v8599, %v8599
        %v8696 = vmul.f32 %v8600, %v8600
        %v8697 = vmul.f32 %v8601, %v8601
        %v8698 = vmul.f32 %v8602, %v8602
        %v8699 = vmul.f32 %v8603, %v8603
        %v8700 = vmul.f32 %v8604, %v8604
        %v8701 = vmul.f32 %v8605, %v8605
        %v8702 = vmul.f32 %v8606, %v8606
        %v8703 = vmul.f32 %v8607, %v8607
        %v8704 = vmul.f32 %v8608, %v8608
        %v8705 = vmul.f32 %v8609, %v8609
        %v8706 = vmul.f32 %v8610, %v8610
        %v8707 = vmul.f32 %v8611, %v8611
        %v8708 = vmul.f32 %v8612, %v8612
        %v8709 = vmul.f32 %v8613, %v8613
        %v8710 = vmul.f32 %v8614, %v8614
        %v8711 = vmul.f32 %v8615, %v8615
        %v8712 = vmul.f32 %v8616, %v8616
        %v8713 = vmul.f32 %v8617, %v8617
        %v8714 = vmul.f32 %v8618, %v8618
        %v8715 = vmul.f32 %v8619, %v8619
        %v8716 = vmul.f32 %v8620, %v8620
        %v8717 = vmul.f32 %v8621, %v8621
        %v8718 = vmul.f32 %v8622, %v8622
        %v8719 = vmul.f32 %v8623, %v8623
        %v8720 = vmul.f32 %v8624, %v8624
        %v8721 = vmul.f32 %v8625, %v8625
        %v8722 = vmul.f32 %v8626, %v8626
        %v8723 = vmul.f32 %v8627, %v8627
        %v8724 = vmul.f32 %v8628, %v8628
        %v8725 = vmul.f32 %v8629, %v8629
        %v8726 = vmul.f32 %v8630, %v8630
        %v8727 = vmul.f32 %v8631, %v8631
        %v8728 = vmul.f32 %v8632, %v8632
        %v8729 = vmul.f32 %v8633, %v8633
        %v8730 = vmul.f32 %v8634, %v8634
        %v8731 = vmul.f32 %v8635, %v8635
        %v8732 = vmul.f32 %v8636, %v8636
        %v8733 = vmul.f32 %v8637, %v8637
        %v8734 = vmul.f32 %v8638, %v8638
        %v8735 = vmul.f32 %v8639, %v8639
        %v8736 = vmul.f32 %v8640, %v8640
        %v8737 = vmul.f32 %v8641, %v8641
        %v8738 = vmul.f32 %v8642, %v8642
        %v8739 = vmul.f32 %v8643, %v8643
        %v8740 = vmul.f32 %v8644, %v8644
        %v8741 = vmul.f32 %v8645, %v8645
        %v8742 = vmul.f32 %v8646, %v8646
        %v8743 = vmul.f32 %v8647, %v8647
        %v8744 = vmul.f32 %v8648, %v8648
        %v8745 = vmul.f32 %v8649, %v8649
        %v8746 = vmul.f32 %v8650, %v8650
        %v8747 = vmul.f32 %v8651, %v8651
        %v8748 = vmul.f32 %v8652, %v8652
        %v8749 = vmul.f32 %v8653, %v8653
        %v8750 = vmul.f32 %v8654, %v8654
        %v8751 = vmul.f32 %v8655, %v8655
        %v8752 = vmul.f32 %v8656, %v8656
        %v8753 = vmul.f32 %v8657, %v8657
        %v8754 = vmul.f32 %v8658, %v8658
        %v8755 = vmul.f32 %v8659, %v8659
        %v8756 = vmul.f32 %v8660, %v8660
        %v8757 = vmul.f32 %v8661, %v8661
        %v8758 = vmul.f32 %v8662, %v8662
        %v8759 = vmul.f32 %v8663, %v8663
        %v8760 = vmul.f32 %v8664, %v8664
        %v8761 = vmul.f32 %v8665, %v8665
        %v8762 = vadd.f32 %v8666, %v8678
        %v8763 = vadd.f32 %v8762, %v8690
        %v8764 = vadd.f32 %v8763, %v8702
        %v8765 = vadd.f32 %v8764, %v8714
        %v8766 = vadd.f32 %v8765, %v8726
        %v8767 = vadd.f32 %v8766, %v8738
        %v8768 = vadd.f32 %v8767, %v8750
        %v8769 = vrot.slane %v8768, 4
        %v8770 = vadd.f32 %v8768, %v8769
        %v8771 = vrot.slane %v8770, 2
        %v8772 = vadd.f32 %v8770, %v8771
        %v8773 = vrot.slane %v8772, 1
        %v8774 = vadd.f32 %v8772, %v8773
        %v8775 = vadd.f32 %v8667, %v8679
        %v8776 = vadd.f32 %v8775, %v8691
        %v8777 = vadd.f32 %v8776, %v8703
        %v8778 = vadd.f32 %v8777, %v8715
        %v8779 = vadd.f32 %v8778, %v8727
        %v8780 = vadd.f32 %v8779, %v8739
        %v8781 = vadd.f32 %v8780, %v8751
        %v8782 = vrot.slane %v8781, 4
        %v8783 = vadd.f32 %v8781, %v8782
        %v8784 = vrot.slane %v8783, 2
        %v8785 = vadd.f32 %v8783, %v8784
        %v8786 = vrot.slane %v8785, 1
        %v8787 = vadd.f32 %v8785, %v8786
        %v8788 = vadd.f32 %v8668, %v8680
        %v8789 = vadd.f32 %v8788, %v8692
        %v8790 = vadd.f32 %v8789, %v8704
        %v8791 = vadd.f32 %v8790, %v8716
        %v8792 = vadd.f32 %v8791, %v8728
        %v8793 = vadd.f32 %v8792, %v8740
        %v8794 = vadd.f32 %v8793, %v8752
        %v8795 = vrot.slane %v8794, 4
        %v8796 = vadd.f32 %v8794, %v8795
        %v8797 = vrot.slane %v8796, 2
        %v8798 = vadd.f32 %v8796, %v8797
        %v8799 = vrot.slane %v8798, 1
        %v8800 = vadd.f32 %v8798, %v8799
        %v8801 = vadd.f32 %v8669, %v8681
        %v8802 = vadd.f32 %v8801, %v8693
        %v8803 = vadd.f32 %v8802, %v8705
        %v8804 = vadd.f32 %v8803, %v8717
        %v8805 = vadd.f32 %v8804, %v8729
        %v8806 = vadd.f32 %v8805, %v8741
        %v8807 = vadd.f32 %v8806, %v8753
        %v8808 = vrot.slane %v8807, 4
        %v8809 = vadd.f32 %v8807, %v8808
        %v8810 = vrot.slane %v8809, 2
        %v8811 = vadd.f32 %v8809, %v8810
        %v8812 = vrot.slane %v8811, 1
        %v8813 = vadd.f32 %v8811, %v8812
        %v8814 = vadd.f32 %v8670, %v8682
        %v8815 = vadd.f32 %v8814, %v8694
        %v8816 = vadd.f32 %v8815, %v8706
        %v8817 = vadd.f32 %v8816, %v8718
        %v8818 = vadd.f32 %v8817, %v8730
        %v8819 = vadd.f32 %v8818, %v8742
        %v8820 = vadd.f32 %v8819, %v8754
        %v8821 = vrot.slane %v8820, 4
        %v8822 = vadd.f32 %v8820, %v8821
        %v8823 = vrot.slane %v8822, 2
        %v8824 = vadd.f32 %v8822, %v8823
        %v8825 = vrot.slane %v8824, 1
        %v8826 = vadd.f32 %v8824, %v8825
        %v8827 = vadd.f32 %v8671, %v8683
        %v8828 = vadd.f32 %v8827, %v8695
        %v8829 = vadd.f32 %v8828, %v8707
        %v8830 = vadd.f32 %v8829, %v8719
        %v8831 = vadd.f32 %v8830, %v8731
        %v8832 = vadd.f32 %v8831, %v8743
        %v8833 = vadd.f32 %v8832, %v8755
        %v8834 = vrot.slane %v8833, 4
        %v8835 = vadd.f32 %v8833, %v8834
        %v8836 = vrot.slane %v8835, 2
        %v8837 = vadd.f32 %v8835, %v8836
        %v8838 = vrot.slane %v8837, 1
        %v8839 = vadd.f32 %v8837, %v8838
        %v8840 = vadd.f32 %v8672, %v8684
        %v8841 = vadd.f32 %v8840, %v8696
        %v8842 = vadd.f32 %v8841, %v8708
        %v8843 = vadd.f32 %v8842, %v8720
        %v8844 = vadd.f32 %v8843, %v8732
        %v8845 = vadd.f32 %v8844, %v8744
        %v8846 = vadd.f32 %v8845, %v8756
        %v8847 = vrot.slane %v8846, 4
        %v8848 = vadd.f32 %v8846, %v8847
        %v8849 = vrot.slane %v8848, 2
        %v8850 = vadd.f32 %v8848, %v8849
        %v8851 = vrot.slane %v8850, 1
        %v8852 = vadd.f32 %v8850, %v8851
        %v8853 = vadd.f32 %v8673, %v8685
        %v8854 = vadd.f32 %v8853, %v8697
        %v8855 = vadd.f32 %v8854, %v8709
        %v8856 = vadd.f32 %v8855, %v8721
        %v8857 = vadd.f32 %v8856, %v8733
        %v8858 = vadd.f32 %v8857, %v8745
        %v8859 = vadd.f32 %v8858, %v8757
        %v8860 = vrot.slane %v8859, 4
        %v8861 = vadd.f32 %v8859, %v8860
        %v8862 = vrot.slane %v8861, 2
        %v8863 = vadd.f32 %v8861, %v8862
        %v8864 = vrot.slane %v8863, 1
        %v8865 = vadd.f32 %v8863, %v8864
        %v8866 = vadd.f32 %v8674, %v8686
        %v8867 = vadd.f32 %v8866, %v8698
        %v8868 = vadd.f32 %v8867, %v8710
        %v8869 = vadd.f32 %v8868, %v8722
        %v8870 = vadd.f32 %v8869, %v8734
        %v8871 = vadd.f32 %v8870, %v8746
        %v8872 = vadd.f32 %v8871, %v8758
        %v8873 = vrot.slane %v8872, 4
        %v8874 = vadd.f32 %v8872, %v8873
        %v8875 = vrot.slane %v8874, 2
        %v8876 = vadd.f32 %v8874, %v8875
        %v8877 = vrot.slane %v8876, 1
        %v8878 = vadd.f32 %v8876, %v8877
        %v8879 = vadd.f32 %v8675, %v8687
        %v8880 = vadd.f32 %v8879, %v8699
        %v8881 = vadd.f32 %v8880, %v8711
        %v8882 = vadd.f32 %v8881, %v8723
        %v8883 = vadd.f32 %v8882, %v8735
        %v8884 = vadd.f32 %v8883, %v8747
        %v8885 = vadd.f32 %v8884, %v8759
        %v8886 = vrot.slane %v8885, 4
        %v8887 = vadd.f32 %v8885, %v8886
        %v8888 = vrot.slane %v8887, 2
        %v8889 = vadd.f32 %v8887, %v8888
        %v8890 = vrot.slane %v8889, 1
        %v8891 = vadd.f32 %v8889, %v8890
        %v8892 = vadd.f32 %v8676, %v8688
        %v8893 = vadd.f32 %v8892, %v8700
        %v8894 = vadd.f32 %v8893, %v8712
        %v8895 = vadd.f32 %v8894, %v8724
        %v8896 = vadd.f32 %v8895, %v8736
        %v8897 = vadd.f32 %v8896, %v8748
        %v8898 = vadd.f32 %v8897, %v8760
        %v8899 = vrot.slane %v8898, 4
        %v8900 = vadd.f32 %v8898, %v8899
        %v8901 = vrot.slane %v8900, 2
        %v8902 = vadd.f32 %v8900, %v8901
        %v8903 = vrot.slane %v8902, 1
        %v8904 = vadd.f32 %v8902, %v8903
        %v8905 = vadd.f32 %v8677, %v8689
        %v8906 = vadd.f32 %v8905, %v8701
        %v8907 = vadd.f32 %v8906, %v8713
        %v8908 = vadd.f32 %v8907, %v8725
        %v8909 = vadd.f32 %v8908, %v8737
        %v8910 = vadd.f32 %v8909, %v8749
        %v8911 = vadd.f32 %v8910, %v8761
        %v8912 = vrot.slane %v8911, 4
        %v8913 = vadd.f32 %v8911, %v8912
        %v8914 = vrot.slane %v8913, 2
        %v8915 = vadd.f32 %v8913, %v8914
        %v8916 = vrot.slane %v8915, 1
        %v8917 = vadd.f32 %v8915, %v8916
        %v8918 = vmul.f32 %v8774, 0.020408163
        %v8919 = vmul.f32 %v8787, 0.020408163
        %v8920 = vmul.f32 %v8800, 0.020408163
        %v8921 = vmul.f32 %v8813, 0.020408163
        %v8922 = vmul.f32 %v8826, 0.020408163
        %v8923 = vmul.f32 %v8839, 0.020408163
        %v8924 = vmul.f32 %v8852, 0.020408163
        %v8925 = vmul.f32 %v8865, 0.020408163
        %v8926 = vmul.f32 %v8878, 0.020408163
        %v8927 = vmul.f32 %v8891, 0.020408163
        %v8928 = vmul.f32 %v8904, 0.020408163
        %v8929 = vmul.f32 %v8917, 0.020408163
        %v8930 = vadd.f32 %v8918, 0.001
        %v8931 = vadd.f32 %v8919, 0.001
        %v8932 = vadd.f32 %v8920, 0.001
        %v8933 = vadd.f32 %v8921, 0.001
        %v8934 = vadd.f32 %v8922, 0.001
        %v8935 = vadd.f32 %v8923, 0.001
        %v8936 = vadd.f32 %v8924, 0.001
        %v8937 = vadd.f32 %v8925, 0.001
        %v8938 = vadd.f32 %v8926, 0.001
        %v8939 = vadd.f32 %v8927, 0.001
        %v8940 = vadd.f32 %v8928, 0.001
        %v8941 = vadd.f32 %v8929, 0.001
        %v8942 = vrsqrt.pop %v8930
        %v8943 = vrsqrt.pop %v8931
        %v8944 = vrsqrt.pop %v8932
        %v8945 = vrsqrt.pop %v8933
        %v8946 = vrsqrt.pop %v8934
        %v8947 = vrsqrt.pop %v8935
        %v8948 = vrsqrt.pop %v8936
        %v8949 = vrsqrt.pop %v8937
        %v8950 = vrsqrt.pop %v8938
        %v8951 = vrsqrt.pop %v8939
        %v8952 = vrsqrt.pop %v8940
        %v8953 = vrsqrt.pop %v8941
        %v8954 = vmul.f32 %v8570, %v8942
        %v8955 = vmul.f32 %v8571, %v8943
        %v8956 = vmul.f32 %v8572, %v8944
        %v8957 = vmul.f32 %v8573, %v8945
        %v8958 = vmul.f32 %v8574, %v8946
        %v8959 = vmul.f32 %v8575, %v8947
        %v8960 = vmul.f32 %v8576, %v8948
        %v8961 = vmul.f32 %v8577, %v8949
        %v8962 = vmul.f32 %v8578, %v8950
        %v8963 = vmul.f32 %v8579, %v8951
        %v8964 = vmul.f32 %v8580, %v8952
        %v8965 = vmul.f32 %v8581, %v8953
        %v8966 = vmul.f32 %v8582, %v8942
        %v8967 = vmul.f32 %v8583, %v8943
        %v8968 = vmul.f32 %v8584, %v8944
        %v8969 = vmul.f32 %v8585, %v8945
        %v8970 = vmul.f32 %v8586, %v8946
        %v8971 = vmul.f32 %v8587, %v8947
        %v8972 = vmul.f32 %v8588, %v8948
        %v8973 = vmul.f32 %v8589, %v8949
        %v8974 = vmul.f32 %v8590, %v8950
        %v8975 = vmul.f32 %v8591, %v8951
        %v8976 = vmul.f32 %v8592, %v8952
        %v8977 = vmul.f32 %v8593, %v8953
        %v8978 = vmul.f32 %v8594, %v8942
        %v8979 = vmul.f32 %v8595, %v8943
        %v8980 = vmul.f32 %v8596, %v8944
        %v8981 = vmul.f32 %v8597, %v8945
        %v8982 = vmul.f32 %v8598, %v8946
        %v8983 = vmul.f32 %v8599, %v8947
        %v8984 = vmul.f32 %v8600, %v8948
        %v8985 = vmul.f32 %v8601, %v8949
        %v8986 = vmul.f32 %v8602, %v8950
        %v8987 = vmul.f32 %v8603, %v8951
        %v8988 = vmul.f32 %v8604, %v8952
        %v8989 = vmul.f32 %v8605, %v8953
        %v8990 = vmul.f32 %v8606, %v8942
        %v8991 = vmul.f32 %v8607, %v8943
        %v8992 = vmul.f32 %v8608, %v8944
        %v8993 = vmul.f32 %v8609, %v8945
        %v8994 = vmul.f32 %v8610, %v8946
        %v8995 = vmul.f32 %v8611, %v8947
        %v8996 = vmul.f32 %v8612, %v8948
        %v8997 = vmul.f32 %v8613, %v8949
        %v8998 = vmul.f32 %v8614, %v8950
        %v8999 = vmul.f32 %v8615, %v8951
        %v9000 = vmul.f32 %v8616, %v8952
        %v9001 = vmul.f32 %v8617, %v8953
        %v9002 = vmul.f32 %v8618, %v8942
        %v9003 = vmul.f32 %v8619, %v8943
        %v9004 = vmul.f32 %v8620, %v8944
        %v9005 = vmul.f32 %v8621, %v8945
        %v9006 = vmul.f32 %v8622, %v8946
        %v9007 = vmul.f32 %v8623, %v8947
        %v9008 = vmul.f32 %v8624, %v8948
        %v9009 = vmul.f32 %v8625, %v8949
        %v9010 = vmul.f32 %v8626, %v8950
        %v9011 = vmul.f32 %v8627, %v8951
        %v9012 = vmul.f32 %v8628, %v8952
        %v9013 = vmul.f32 %v8629, %v8953
        %v9014 = vmul.f32 %v8630, %v8942
        %v9015 = vmul.f32 %v8631, %v8943
        %v9016 = vmul.f32 %v8632, %v8944
        %v9017 = vmul.f32 %v8633, %v8945
        %v9018 = vmul.f32 %v8634, %v8946
        %v9019 = vmul.f32 %v8635, %v8947
        %v9020 = vmul.f32 %v8636, %v8948
        %v9021 = vmul.f32 %v8637, %v8949
        %v9022 = vmul.f32 %v8638, %v8950
        %v9023 = vmul.f32 %v8639, %v8951
        %v9024 = vmul.f32 %v8640, %v8952
        %v9025 = vmul.f32 %v8641, %v8953
        %v9026 = vmul.f32 %v8642, %v8942
        %v9027 = vmul.f32 %v8643, %v8943
        %v9028 = vmul.f32 %v8644, %v8944
        %v9029 = vmul.f32 %v8645, %v8945
        %v9030 = vmul.f32 %v8646, %v8946
        %v9031 = vmul.f32 %v8647, %v8947
        %v9032 = vmul.f32 %v8648, %v8948
        %v9033 = vmul.f32 %v8649, %v8949
        %v9034 = vmul.f32 %v8650, %v8950
        %v9035 = vmul.f32 %v8651, %v8951
        %v9036 = vmul.f32 %v8652, %v8952
        %v9037 = vmul.f32 %v8653, %v8953
        %v9038 = vmul.f32 %v8654, %v8942
        %v9039 = vmul.f32 %v8655, %v8943
        %v9040 = vmul.f32 %v8656, %v8944
        %v9041 = vmul.f32 %v8657, %v8945
        %v9042 = vmul.f32 %v8658, %v8946
        %v9043 = vmul.f32 %v8659, %v8947
        %v9044 = vmul.f32 %v8660, %v8948
        %v9045 = vmul.f32 %v8661, %v8949
        %v9046 = vmul.f32 %v8662, %v8950
        %v9047 = vmul.f32 %v8663, %v8951
        %v9048 = vmul.f32 %v8664, %v8952
        %v9049 = vmul.f32 %v8665, %v8953
        %v9050 = vld [vmem:[%s369] sm:$0xff]
        %v9051 = vld [vmem:[%s369 + $0x8] sm:$0xf]
        %v9054 = vlaneseq
        %v9055 = vshrl.u32 %v9054, 7
        %v9056 = vsub.s32 0, %v9055
        %v9057 = vrot.slane %v9050, %v9056
        %v9058 = vlaneseq
        %v9059 = vshrl.u32 %v9058, 7
        %v9060 = vsub.s32 1, %v9059
        %v9061 = vrot.slane %v9050, %v9060
        %v9062 = vlaneseq
        %v9063 = vshrl.u32 %v9062, 7
        %v9064 = vsub.s32 2, %v9063
        %v9065 = vrot.slane %v9050, %v9064
        %v9066 = vlaneseq
        %v9067 = vshrl.u32 %v9066, 7
        %v9068 = vsub.s32 3, %v9067
        %v9069 = vrot.slane %v9050, %v9068
        %v9070 = vlaneseq
        %v9071 = vshrl.u32 %v9070, 7
        %v9072 = vsub.s32 4, %v9071
        %v9073 = vrot.slane %v9050, %v9072
        %v9074 = vlaneseq
        %v9075 = vshrl.u32 %v9074, 7
        %v9076 = vsub.s32 5, %v9075
        %v9077 = vrot.slane %v9050, %v9076
        %v9078 = vlaneseq
        %v9079 = vshrl.u32 %v9078, 7
        %v9080 = vsub.s32 6, %v9079
        %v9081 = vrot.slane %v9050, %v9080
        %v9082 = vlaneseq
        %v9083 = vshrl.u32 %v9082, 7
        %v9084 = vsub.s32 7, %v9083
        %v9085 = vrot.slane %v9050, %v9084
        %v9086 = vlaneseq
        %v9087 = vshrl.u32 %v9086, 7
        %v9088 = vsub.s32 0, %v9087
        %v9089 = vrot.slane %v9051, %v9088
        %v9090 = vlaneseq
        %v9091 = vshrl.u32 %v9090, 7
        %v9092 = vsub.s32 1, %v9091
        %v9093 = vrot.slane %v9051, %v9092
        %v9094 = vlaneseq
        %v9095 = vshrl.u32 %v9094, 7
        %v9096 = vsub.s32 2, %v9095
        %v9097 = vrot.slane %v9051, %v9096
        %v9098 = vlaneseq
        %v9099 = vshrl.u32 %v9098, 7
        %v9100 = vsub.s32 3, %v9099
        %v9101 = vrot.slane %v9051, %v9100
        %v9114 = vmul.f32 %v8954, %v9057
        %v9115 = vmul.f32 %v8955, %v9061
        %v9116 = vmul.f32 %v8956, %v9065
        %v9117 = vmul.f32 %v8957, %v9069
        %v9118 = vmul.f32 %v8958, %v9073
        %v9119 = vmul.f32 %v8959, %v9077
        %v9120 = vmul.f32 %v8960, %v9081
        %v9121 = vmul.f32 %v8961, %v9085
        %v9122 = vmul.f32 %v8962, %v9089
        %v9123 = vmul.f32 %v8963, %v9093
        %v9124 = vmul.f32 %v8964, %v9097
        %v9125 = vmul.f32 %v8965, %v9101
        %v9126 = vmul.f32 %v8966, %v9057
        %v9127 = vmul.f32 %v8967, %v9061
        %v9128 = vmul.f32 %v8968, %v9065
        %v9129 = vmul.f32 %v8969, %v9069
        %v9130 = vmul.f32 %v8970, %v9073
        %v9131 = vmul.f32 %v8971, %v9077
        %v9132 = vmul.f32 %v8972, %v9081
        %v9133 = vmul.f32 %v8973, %v9085
        %v9134 = vmul.f32 %v8974, %v9089
        %v9135 = vmul.f32 %v8975, %v9093
        %v9136 = vmul.f32 %v8976, %v9097
        %v9137 = vmul.f32 %v8977, %v9101
        %v9138 = vmul.f32 %v8978, %v9057
        %v9139 = vmul.f32 %v8979, %v9061
        %v9140 = vmul.f32 %v8980, %v9065
        %v9141 = vmul.f32 %v8981, %v9069
        %v9142 = vmul.f32 %v8982, %v9073
        %v9143 = vmul.f32 %v8983, %v9077
        %v9144 = vmul.f32 %v8984, %v9081
        %v9145 = vmul.f32 %v8985, %v9085
        %v9146 = vmul.f32 %v8986, %v9089
        %v9147 = vmul.f32 %v8987, %v9093
        %v9148 = vmul.f32 %v8988, %v9097
        %v9149 = vmul.f32 %v8989, %v9101
        %v9150 = vmul.f32 %v8990, %v9057
        %v9151 = vmul.f32 %v8991, %v9061
        %v9152 = vmul.f32 %v8992, %v9065
        %v9153 = vmul.f32 %v8993, %v9069
        %v9154 = vmul.f32 %v8994, %v9073
        %v9155 = vmul.f32 %v8995, %v9077
        %v9156 = vmul.f32 %v8996, %v9081
        %v9157 = vmul.f32 %v8997, %v9085
        %v9158 = vmul.f32 %v8998, %v9089
        %v9159 = vmul.f32 %v8999, %v9093
        %v9160 = vmul.f32 %v9000, %v9097
        %v9161 = vmul.f32 %v9001, %v9101
        %v9162 = vmul.f32 %v9002, %v9057
        %v9163 = vmul.f32 %v9003, %v9061
        %v9164 = vmul.f32 %v9004, %v9065
        %v9165 = vmul.f32 %v9005, %v9069
        %v9166 = vmul.f32 %v9006, %v9073
        %v9167 = vmul.f32 %v9007, %v9077
        %v9168 = vmul.f32 %v9008, %v9081
        %v9169 = vmul.f32 %v9009, %v9085
        %v9170 = vmul.f32 %v9010, %v9089
        %v9171 = vmul.f32 %v9011, %v9093
        %v9172 = vmul.f32 %v9012, %v9097
        %v9173 = vmul.f32 %v9013, %v9101
        %v9174 = vmul.f32 %v9014, %v9057
        %v9175 = vmul.f32 %v9015, %v9061
        %v9176 = vmul.f32 %v9016, %v9065
        %v9177 = vmul.f32 %v9017, %v9069
        %v9178 = vmul.f32 %v9018, %v9073
        %v9179 = vmul.f32 %v9019, %v9077
        %v9180 = vmul.f32 %v9020, %v9081
        %v9181 = vmul.f32 %v9021, %v9085
        %v9182 = vmul.f32 %v9022, %v9089
        %v9183 = vmul.f32 %v9023, %v9093
        %v9184 = vmul.f32 %v9024, %v9097
        %v9185 = vmul.f32 %v9025, %v9101
        %v9186 = vmul.f32 %v9026, %v9057
        %v9187 = vmul.f32 %v9027, %v9061
        %v9188 = vmul.f32 %v9028, %v9065
        %v9189 = vmul.f32 %v9029, %v9069
        %v9190 = vmul.f32 %v9030, %v9073
        %v9191 = vmul.f32 %v9031, %v9077
        %v9192 = vmul.f32 %v9032, %v9081
        %v9193 = vmul.f32 %v9033, %v9085
        %v9194 = vmul.f32 %v9034, %v9089
        %v9195 = vmul.f32 %v9035, %v9093
        %v9196 = vmul.f32 %v9036, %v9097
        %v9197 = vmul.f32 %v9037, %v9101
        %v9198 = vmul.f32 %v9038, %v9057
        %v9199 = vmul.f32 %v9039, %v9061
        %v9200 = vmul.f32 %v9040, %v9065
        %v9201 = vmul.f32 %v9041, %v9069
        %v9202 = vmul.f32 %v9042, %v9073
        %v9203 = vmul.f32 %v9043, %v9077
        %v9204 = vmul.f32 %v9044, %v9081
        %v9205 = vmul.f32 %v9045, %v9085
        %v9206 = vmul.f32 %v9046, %v9089
        %v9207 = vmul.f32 %v9047, %v9093
        %v9208 = vmul.f32 %v9048, %v9097
        %v9209 = vmul.f32 %v9049, %v9101
        %v9210 = vld [vmem:[%s378] sm:$0xff]
        %v9211 = vld [vmem:[%s378 + $0x8] sm:$0xf]
        %v9214 = vlaneseq
        %v9215 = vshrl.u32 %v9214, 7
        %v9216 = vsub.s32 0, %v9215
        %v9217 = vrot.slane %v9210, %v9216
        %v9218 = vlaneseq
        %v9219 = vshrl.u32 %v9218, 7
        %v9220 = vsub.s32 1, %v9219
        %v9221 = vrot.slane %v9210, %v9220
        %v9222 = vlaneseq
        %v9223 = vshrl.u32 %v9222, 7
        %v9224 = vsub.s32 2, %v9223
        %v9225 = vrot.slane %v9210, %v9224
        %v9226 = vlaneseq
        %v9227 = vshrl.u32 %v9226, 7
        %v9228 = vsub.s32 3, %v9227
        %v9229 = vrot.slane %v9210, %v9228
        %v9230 = vlaneseq
        %v9231 = vshrl.u32 %v9230, 7
        %v9232 = vsub.s32 4, %v9231
        %v9233 = vrot.slane %v9210, %v9232
        %v9234 = vlaneseq
        %v9235 = vshrl.u32 %v9234, 7
        %v9236 = vsub.s32 5, %v9235
        %v9237 = vrot.slane %v9210, %v9236
        %v9238 = vlaneseq
        %v9239 = vshrl.u32 %v9238, 7
        %v9240 = vsub.s32 6, %v9239
        %v9241 = vrot.slane %v9210, %v9240
        %v9242 = vlaneseq
        %v9243 = vshrl.u32 %v9242, 7
        %v9244 = vsub.s32 7, %v9243
        %v9245 = vrot.slane %v9210, %v9244
        %v9246 = vlaneseq
        %v9247 = vshrl.u32 %v9246, 7
        %v9248 = vsub.s32 0, %v9247
        %v9249 = vrot.slane %v9211, %v9248
        %v9250 = vlaneseq
        %v9251 = vshrl.u32 %v9250, 7
        %v9252 = vsub.s32 1, %v9251
        %v9253 = vrot.slane %v9211, %v9252
        %v9254 = vlaneseq
        %v9255 = vshrl.u32 %v9254, 7
        %v9256 = vsub.s32 2, %v9255
        %v9257 = vrot.slane %v9211, %v9256
        %v9258 = vlaneseq
        %v9259 = vshrl.u32 %v9258, 7
        %v9260 = vsub.s32 3, %v9259
        %v9261 = vrot.slane %v9211, %v9260
        %v9274 = vadd.f32 %v9114, %v9217
        %v9275 = vadd.f32 %v9115, %v9221
        %v9276 = vadd.f32 %v9116, %v9225
        %v9277 = vadd.f32 %v9117, %v9229
        %v9278 = vadd.f32 %v9118, %v9233
        %v9279 = vadd.f32 %v9119, %v9237
        %v9280 = vadd.f32 %v9120, %v9241
        %v9281 = vadd.f32 %v9121, %v9245
        %v9282 = vadd.f32 %v9122, %v9249
        %v9283 = vadd.f32 %v9123, %v9253
        %v9284 = vadd.f32 %v9124, %v9257
        %v9285 = vadd.f32 %v9125, %v9261
        %v9286 = vadd.f32 %v9126, %v9217
        %v9287 = vadd.f32 %v9127, %v9221
        %v9288 = vadd.f32 %v9128, %v9225
        %v9289 = vadd.f32 %v9129, %v9229
        %v9290 = vadd.f32 %v9130, %v9233
        %v9291 = vadd.f32 %v9131, %v9237
        %v9292 = vadd.f32 %v9132, %v9241
        %v9293 = vadd.f32 %v9133, %v9245
        %v9294 = vadd.f32 %v9134, %v9249
        %v9295 = vadd.f32 %v9135, %v9253
        %v9296 = vadd.f32 %v9136, %v9257
        %v9297 = vadd.f32 %v9137, %v9261
        %v9298 = vadd.f32 %v9138, %v9217
        %v9299 = vadd.f32 %v9139, %v9221
        %v9300 = vadd.f32 %v9140, %v9225
        %v9301 = vadd.f32 %v9141, %v9229
        %v9302 = vadd.f32 %v9142, %v9233
        %v9303 = vadd.f32 %v9143, %v9237
        %v9304 = vadd.f32 %v9144, %v9241
        %v9305 = vadd.f32 %v9145, %v9245
        %v9306 = vadd.f32 %v9146, %v9249
        %v9307 = vadd.f32 %v9147, %v9253
        %v9308 = vadd.f32 %v9148, %v9257
        %v9309 = vadd.f32 %v9149, %v9261
        %v9310 = vadd.f32 %v9150, %v9217
        %v9311 = vadd.f32 %v9151, %v9221
        %v9312 = vadd.f32 %v9152, %v9225
        %v9313 = vadd.f32 %v9153, %v9229
        %v9314 = vadd.f32 %v9154, %v9233
        %v9315 = vadd.f32 %v9155, %v9237
        %v9316 = vadd.f32 %v9156, %v9241
        %v9317 = vadd.f32 %v9157, %v9245
        %v9318 = vadd.f32 %v9158, %v9249
        %v9319 = vadd.f32 %v9159, %v9253
        %v9320 = vadd.f32 %v9160, %v9257
        %v9321 = vadd.f32 %v9161, %v9261
        %v9322 = vadd.f32 %v9162, %v9217
        %v9323 = vadd.f32 %v9163, %v9221
        %v9324 = vadd.f32 %v9164, %v9225
        %v9325 = vadd.f32 %v9165, %v9229
        %v9326 = vadd.f32 %v9166, %v9233
        %v9327 = vadd.f32 %v9167, %v9237
        %v9328 = vadd.f32 %v9168, %v9241
        %v9329 = vadd.f32 %v9169, %v9245
        %v9330 = vadd.f32 %v9170, %v9249
        %v9331 = vadd.f32 %v9171, %v9253
        %v9332 = vadd.f32 %v9172, %v9257
        %v9333 = vadd.f32 %v9173, %v9261
        %v9334 = vadd.f32 %v9174, %v9217
        %v9335 = vadd.f32 %v9175, %v9221
        %v9336 = vadd.f32 %v9176, %v9225
        %v9337 = vadd.f32 %v9177, %v9229
        %v9338 = vadd.f32 %v9178, %v9233
        %v9339 = vadd.f32 %v9179, %v9237
        %v9340 = vadd.f32 %v9180, %v9241
        %v9341 = vadd.f32 %v9181, %v9245
        %v9342 = vadd.f32 %v9182, %v9249
        %v9343 = vadd.f32 %v9183, %v9253
        %v9344 = vadd.f32 %v9184, %v9257
        %v9345 = vadd.f32 %v9185, %v9261
        %v9346 = vadd.f32 %v9186, %v9217
        %v9347 = vadd.f32 %v9187, %v9221
        %v9348 = vadd.f32 %v9188, %v9225
        %v9349 = vadd.f32 %v9189, %v9229
        %v9350 = vadd.f32 %v9190, %v9233
        %v9351 = vadd.f32 %v9191, %v9237
        %v9352 = vadd.f32 %v9192, %v9241
        %v9353 = vadd.f32 %v9193, %v9245
        %v9354 = vadd.f32 %v9194, %v9249
        %v9355 = vadd.f32 %v9195, %v9253
        %v9356 = vadd.f32 %v9196, %v9257
        %v9357 = vadd.f32 %v9197, %v9261
        %v9358 = vadd.f32 %v9198, %v9217
        %v9359 = vadd.f32 %v9199, %v9221
        %v9360 = vadd.f32 %v9200, %v9225
        %v9361 = vadd.f32 %v9201, %v9229
        %v9362 = vadd.f32 %v9202, %v9233
        %v9363 = vadd.f32 %v9203, %v9237
        %v9364 = vadd.f32 %v9204, %v9241
        %v9365 = vadd.f32 %v9205, %v9245
        %v9366 = vadd.f32 %v9206, %v9249
        %v9367 = vadd.f32 %v9207, %v9253
        %v9368 = vadd.f32 %v9208, %v9257
        %v9369 = vadd.f32 %v9209, %v9261
        %v9370 = vpack.c.bf16 %v9286, %v9274
        %v9371 = vpack.c.bf16 %v9287, %v9275
        %v9372 = vpack.c.bf16 %v9288, %v9276
        %v9373 = vpack.c.bf16 %v9289, %v9277
        %v9374 = vpack.c.bf16 %v9290, %v9278
        %v9375 = vpack.c.bf16 %v9291, %v9279
        %v9376 = vpack.c.bf16 %v9292, %v9280
        %v9377 = vpack.c.bf16 %v9293, %v9281
        %v9378 = vpack.c.bf16 %v9294, %v9282
        %v9379 = vpack.c.bf16 %v9295, %v9283
        %v9380 = vpack.c.bf16 %v9296, %v9284
        %v9381 = vpack.c.bf16 %v9297, %v9285
        %v9382 = vpack.c.bf16 %v9310, %v9298
        %v9383 = vpack.c.bf16 %v9311, %v9299
        %v9384 = vpack.c.bf16 %v9312, %v9300
        %v9385 = vpack.c.bf16 %v9313, %v9301
        %v9386 = vpack.c.bf16 %v9314, %v9302
        %v9387 = vpack.c.bf16 %v9315, %v9303
        %v9388 = vpack.c.bf16 %v9316, %v9304
        %v9389 = vpack.c.bf16 %v9317, %v9305
        %v9390 = vpack.c.bf16 %v9318, %v9306
        %v9391 = vpack.c.bf16 %v9319, %v9307
        %v9392 = vpack.c.bf16 %v9320, %v9308
        %v9393 = vpack.c.bf16 %v9321, %v9309
        %v9394 = vpack.c.bf16 %v9334, %v9322
        %v9395 = vpack.c.bf16 %v9335, %v9323
        %v9396 = vpack.c.bf16 %v9336, %v9324
        %v9397 = vpack.c.bf16 %v9337, %v9325
        %v9398 = vpack.c.bf16 %v9338, %v9326
        %v9399 = vpack.c.bf16 %v9339, %v9327
        %v9400 = vpack.c.bf16 %v9340, %v9328
        %v9401 = vpack.c.bf16 %v9341, %v9329
        %v9402 = vpack.c.bf16 %v9342, %v9330
        %v9403 = vpack.c.bf16 %v9343, %v9331
        %v9404 = vpack.c.bf16 %v9344, %v9332
        %v9405 = vpack.c.bf16 %v9345, %v9333
        %v9406 = vpack.c.bf16 %v9358, %v9346
        %v9407 = vpack.c.bf16 %v9359, %v9347
        %v9408 = vpack.c.bf16 %v9360, %v9348
        %v9409 = vpack.c.bf16 %v9361, %v9349
        %v9410 = vpack.c.bf16 %v9362, %v9350
        %v9411 = vpack.c.bf16 %v9363, %v9351
        %v9412 = vpack.c.bf16 %v9364, %v9352
        %v9413 = vpack.c.bf16 %v9365, %v9353
        %v9414 = vpack.c.bf16 %v9366, %v9354
        %v9415 = vpack.c.bf16 %v9367, %v9355
        %v9416 = vpack.c.bf16 %v9368, %v9356
        %v9417 = vpack.c.bf16 %v9369, %v9357
        %v9466 = vunpack.c.l.b16 %v9370
        %v9467 = vunpack.c.l.b16 %v9371
        %v9468 = vunpack.c.l.b16 %v9372
        %v9469 = vunpack.c.l.b16 %v9373
        %v9470 = vunpack.c.l.b16 %v9374
        %v9471 = vunpack.c.l.b16 %v9375
        %v9472 = vunpack.c.l.b16 %v9376
        %v9473 = vunpack.c.l.b16 %v9377
        %v9474 = vunpack.c.l.b16 %v9378
        %v9475 = vunpack.c.l.b16 %v9379
        %v9476 = vunpack.c.l.b16 %v9380
        %v9477 = vunpack.c.l.b16 %v9381
        %v9478 = vunpack.c.h.b16 %v9370
        %v9479 = vunpack.c.h.b16 %v9371
        %v9480 = vunpack.c.h.b16 %v9372
        %v9481 = vunpack.c.h.b16 %v9373
        %v9482 = vunpack.c.h.b16 %v9374
        %v9483 = vunpack.c.h.b16 %v9375
        %v9484 = vunpack.c.h.b16 %v9376
        %v9485 = vunpack.c.h.b16 %v9377
        %v9486 = vunpack.c.h.b16 %v9378
        %v9487 = vunpack.c.h.b16 %v9379
        %v9488 = vunpack.c.h.b16 %v9380
        %v9489 = vunpack.c.h.b16 %v9381
        %v9490 = vunpack.c.l.b16 %v9382
        %v9491 = vunpack.c.l.b16 %v9383
        %v9492 = vunpack.c.l.b16 %v9384
        %v9493 = vunpack.c.l.b16 %v9385
        %v9494 = vunpack.c.l.b16 %v9386
        %v9495 = vunpack.c.l.b16 %v9387
        %v9496 = vunpack.c.l.b16 %v9388
        %v9497 = vunpack.c.l.b16 %v9389
        %v9498 = vunpack.c.l.b16 %v9390
        %v9499 = vunpack.c.l.b16 %v9391
        %v9500 = vunpack.c.l.b16 %v9392
        %v9501 = vunpack.c.l.b16 %v9393
        %v9502 = vunpack.c.h.b16 %v9382
        %v9503 = vunpack.c.h.b16 %v9383
        %v9504 = vunpack.c.h.b16 %v9384
        %v9505 = vunpack.c.h.b16 %v9385
        %v9506 = vunpack.c.h.b16 %v9386
        %v9507 = vunpack.c.h.b16 %v9387
        %v9508 = vunpack.c.h.b16 %v9388
        %v9509 = vunpack.c.h.b16 %v9389
        %v9510 = vunpack.c.h.b16 %v9390
        %v9511 = vunpack.c.h.b16 %v9391
        %v9512 = vunpack.c.h.b16 %v9392
        %v9513 = vunpack.c.h.b16 %v9393
        %v9514 = vunpack.c.l.b16 %v9394
        %v9515 = vunpack.c.l.b16 %v9395
        %v9516 = vunpack.c.l.b16 %v9396
        %v9517 = vunpack.c.l.b16 %v9397
        %v9518 = vunpack.c.l.b16 %v9398
        %v9519 = vunpack.c.l.b16 %v9399
        %v9520 = vunpack.c.l.b16 %v9400
        %v9521 = vunpack.c.l.b16 %v9401
        %v9522 = vunpack.c.l.b16 %v9402
        %v9523 = vunpack.c.l.b16 %v9403
        %v9524 = vunpack.c.l.b16 %v9404
        %v9525 = vunpack.c.l.b16 %v9405
        %v9526 = vunpack.c.h.b16 %v9394
        %v9527 = vunpack.c.h.b16 %v9395
        %v9528 = vunpack.c.h.b16 %v9396
        %v9529 = vunpack.c.h.b16 %v9397
        %v9530 = vunpack.c.h.b16 %v9398
        %v9531 = vunpack.c.h.b16 %v9399
        %v9532 = vunpack.c.h.b16 %v9400
        %v9533 = vunpack.c.h.b16 %v9401
        %v9534 = vunpack.c.h.b16 %v9402
        %v9535 = vunpack.c.h.b16 %v9403
        %v9536 = vunpack.c.h.b16 %v9404
        %v9537 = vunpack.c.h.b16 %v9405
        %v9538 = vunpack.c.l.b16 %v9406
        %v9539 = vunpack.c.l.b16 %v9407
        %v9540 = vunpack.c.l.b16 %v9408
        %v9541 = vunpack.c.l.b16 %v9409
        %v9542 = vunpack.c.l.b16 %v9410
        %v9543 = vunpack.c.l.b16 %v9411
        %v9544 = vunpack.c.l.b16 %v9412
        %v9545 = vunpack.c.l.b16 %v9413
        %v9546 = vunpack.c.l.b16 %v9414
        %v9547 = vunpack.c.l.b16 %v9415
        %v9548 = vunpack.c.l.b16 %v9416
        %v9549 = vunpack.c.l.b16 %v9417
        %v9550 = vunpack.c.h.b16 %v9406
        %v9551 = vunpack.c.h.b16 %v9407
        %v9552 = vunpack.c.h.b16 %v9408
        %v9553 = vunpack.c.h.b16 %v9409
        %v9554 = vunpack.c.h.b16 %v9410
        %v9555 = vunpack.c.h.b16 %v9411
        %v9556 = vunpack.c.h.b16 %v9412
        %v9557 = vunpack.c.h.b16 %v9413
        %v9558 = vunpack.c.h.b16 %v9414
        %v9559 = vunpack.c.h.b16 %v9415
        %v9560 = vunpack.c.h.b16 %v9416
        %v9561 = vunpack.c.h.b16 %v9417
        %v9562 = vpack.c.b16 %v9467, %v9466
        %v9563 = vpack.c.b16 %v9469, %v9468
        %v9564 = vpack.c.b16 %v9471, %v9470
        %v9565 = vpack.c.b16 %v9473, %v9472
        %v9566 = vpack.c.b16 %v9475, %v9474
        %v9567 = vpack.c.b16 %v9477, %v9476
        %v9568 = vpack.c.b16 %v9479, %v9478
        %v9569 = vpack.c.b16 %v9481, %v9480
        %v9570 = vpack.c.b16 %v9483, %v9482
        %v9571 = vpack.c.b16 %v9485, %v9484
        %v9572 = vpack.c.b16 %v9487, %v9486
        %v9573 = vpack.c.b16 %v9489, %v9488
        %v9574 = vpack.c.b16 %v9491, %v9490
        %v9575 = vpack.c.b16 %v9493, %v9492
        %v9576 = vpack.c.b16 %v9495, %v9494
        %v9577 = vpack.c.b16 %v9497, %v9496
        %v9578 = vpack.c.b16 %v9499, %v9498
        %v9579 = vpack.c.b16 %v9501, %v9500
        %v9580 = vpack.c.b16 %v9503, %v9502
        %v9581 = vpack.c.b16 %v9505, %v9504
        %v9582 = vpack.c.b16 %v9507, %v9506
        %v9583 = vpack.c.b16 %v9509, %v9508
        %v9584 = vpack.c.b16 %v9511, %v9510
        %v9585 = vpack.c.b16 %v9513, %v9512
        %v9586 = vpack.c.b16 %v9515, %v9514
        %v9587 = vpack.c.b16 %v9517, %v9516
        %v9588 = vpack.c.b16 %v9519, %v9518
        %v9589 = vpack.c.b16 %v9521, %v9520
        %v9590 = vpack.c.b16 %v9523, %v9522
        %v9591 = vpack.c.b16 %v9525, %v9524
        %v9592 = vpack.c.b16 %v9527, %v9526
        %v9593 = vpack.c.b16 %v9529, %v9528
        %v9594 = vpack.c.b16 %v9531, %v9530
        %v9595 = vpack.c.b16 %v9533, %v9532
        %v9596 = vpack.c.b16 %v9535, %v9534
        %v9597 = vpack.c.b16 %v9537, %v9536
        %v9598 = vpack.c.b16 %v9539, %v9538
        %v9599 = vpack.c.b16 %v9541, %v9540
        %v9600 = vpack.c.b16 %v9543, %v9542
        %v9601 = vpack.c.b16 %v9545, %v9544
        %v9602 = vpack.c.b16 %v9547, %v9546
        %v9603 = vpack.c.b16 %v9549, %v9548
        %v9604 = vpack.c.b16 %v9551, %v9550
        %v9605 = vpack.c.b16 %v9553, %v9552
        %v9606 = vpack.c.b16 %v9555, %v9554
        %v9607 = vpack.c.b16 %v9557, %v9556
        %v9608 = vpack.c.b16 %v9559, %v9558
        %v9609 = vpack.c.b16 %v9561, %v9560
        %9658 = vst [vmem:[%s418] sm:$0xff] %v9562
        %9659 = vst [vmem:[%s418 + $0x8] sm:$0xff] %v9563
        %9660 = vst [vmem:[%s418 + $0x10] sm:$0xff] %v9564
        %9661 = vst [vmem:[%s418 + $0x18] sm:$0xff] %v9565
        %9662 = vst [vmem:[%s418 + $0x20] sm:$0xff] %v9566
        %9663 = vst [vmem:[%s418 + $0x28] sm:$0xff] %v9567
        %9664 = vst [vmem:[%s418 + $0x30] sm:$0xff] %v9568
        %9665 = vst [vmem:[%s418 + $0x38] sm:$0xff] %v9569
        %9666 = vst [vmem:[%s418 + $0x40] sm:$0xff] %v9570
        %9667 = vst [vmem:[%s418 + $0x48] sm:$0xff] %v9571
        %9668 = vst [vmem:[%s418 + $0x50] sm:$0xff] %v9572
        %9669 = vst [vmem:[%s418 + $0x58] sm:$0xff] %v9573
        %9670 = vst [vmem:[%s418 + $0x60] sm:$0xff] %v9574
        %9671 = vst [vmem:[%s418 + $0x68] sm:$0xff] %v9575
        %9672 = vst [vmem:[%s418 + $0x70] sm:$0xff] %v9576
        %9673 = vst [vmem:[%s418 + $0x78] sm:$0xff] %v9577
        %9674 = vst [vmem:[%s418 + $0x80] sm:$0xff] %v9578
        %9675 = vst [vmem:[%s418 + $0x88] sm:$0xff] %v9579
        %9676 = vst [vmem:[%s418 + $0x90] sm:$0xff] %v9580
        %9677 = vst [vmem:[%s418 + $0x98] sm:$0xff] %v9581
        %9678 = vst [vmem:[%s418 + $0xa0] sm:$0xff] %v9582
        %9679 = vst [vmem:[%s418 + $0xa8] sm:$0xff] %v9583
        %9680 = vst [vmem:[%s418 + $0xb0] sm:$0xff] %v9584
        %9681 = vst [vmem:[%s418 + $0xb8] sm:$0xff] %v9585
        %9682 = vst [vmem:[%s418 + $0xc0] sm:$0xff] %v9586
        %9683 = vst [vmem:[%s418 + $0xc8] sm:$0xff] %v9587
        %9684 = vst [vmem:[%s418 + $0xd0] sm:$0xff] %v9588
        %9685 = vst [vmem:[%s418 + $0xd8] sm:$0xff] %v9589
        %9686 = vst [vmem:[%s418 + $0xe0] sm:$0xff] %v9590
        %9687 = vst [vmem:[%s418 + $0xe8] sm:$0xff] %v9591
        %9688 = vst [vmem:[%s418 + $0xf0] sm:$0xff] %v9592
        %9689 = vst [vmem:[%s418 + $0xf8] sm:$0xff] %v9593
        %9690 = vst [vmem:[%s418 + $0x100] sm:$0xff] %v9594
        %9691 = vst [vmem:[%s418 + $0x108] sm:$0xff] %v9595
        %9692 = vst [vmem:[%s418 + $0x110] sm:$0xff] %v9596
        %9693 = vst [vmem:[%s418 + $0x118] sm:$0xff] %v9597
        %9694 = vst [vmem:[%s418 + $0x120] sm:$0xff] %v9598
        %9695 = vst [vmem:[%s418 + $0x128] sm:$0xff] %v9599
        %9696 = vst [vmem:[%s418 + $0x130] sm:$0xff] %v9600
        %9697 = vst [vmem:[%s418 + $0x138] sm:$0xff] %v9601
        %9698 = vst [vmem:[%s418 + $0x140] sm:$0xff] %v9602
        %9699 = vst [vmem:[%s418 + $0x148] sm:$0xff] %v9603
        %9700 = vst [vmem:[%s418 + $0x150] sm:$0xff] %v9604
        %9701 = vst [vmem:[%s418 + $0x158] sm:$0xff] %v9605
        %9702 = vst [vmem:[%s418 + $0x160] sm:$0xff] %v9606
        %9703 = vst [vmem:[%s418 + $0x168] sm:$0xff] %v9607
        %9704 = vst [vmem:[%s418 + $0x170] sm:$0xff] %v9608
        %9705 = vst [vmem:[%s418 + $0x178] sm:$0xff] %v9609
        %s9706 = sand.u32 %s194, 1
        %s9707 = scalar_lea.sflag [#allocation4], %s9706
        %s9708 = sand.u32 %s194, 1
        %s9709 = smul.addr %s9708, 384
        %s9710 = scalar_lea.vmem [#allocation13], %s9709
        // Predicated region
        $region77: #{tpu_custom_call.1} parent=47 // pred_check
          %p9711 = pneg %p204
        $region78: #{tpu_custom_call.1} parent=47 // pred_check_branch
          %9713 = sbr.rel (%p9711) target = $region80
        $region79: #{tpu_custom_call.1} parent=47 // pred_region
          %s9714 = smul.u32 12, %s24
          %s9716 = ssub.s32 6144, 6144
          %9717 = vsyncadd %s9707, %s9716
          %s9718 = smul.addr %s9714, 64
          %s9719 = scalar_lea.hbm %s7, %s9718
          %s9720 = sshll.u32 %s9710, 4
          %s9721 = int_to_ptr.vmem [resolvable:$true] %s9720
          %9726 = dma.vmem_to_hbm [thread:$0]  %s9721, 6144, %s9719, %s9707, 768, 1536, 48
        $region80: #{tpu_custom_call.1} parent=47 // pred_fallthru
          _
      $region48: #{tpu_custom_call.1} parent=5 // pred_fallthru
        _
      %p9727 = scmp.le.s32.totalorder 2, %s19
      // Predicated region
      $region81: #{tpu_custom_call.1} parent=5 // pred_check
        %p9728 = pneg %p9727
      $region82: #{tpu_custom_call.1} parent=5 // pred_check_branch
        %9730 = sbr.rel (%p9728) target = $region84
      $region83: #{tpu_custom_call.1} parent=5 // pred_region
        %s9731 = ssub.s32 %s19, 2
        // Predicated region
        $region85: #{tpu_custom_call.1} parent=83 // pred_check
          %p9732 = pneg %p210
        $region86: #{tpu_custom_call.1} parent=83 // pred_check_branch
          %9734 = sbr.rel (%p9732) target = $region88
        $region87: #{tpu_custom_call.1} parent=83 // pred_region
          %s9735 = sand.u32 %s195, 1
          %s9736 = scalar_lea.sflag [#allocation4], %s9735
          %s9737 = sand.u32 %s195, 1
          %s9738 = smul.addr %s9737, 384
          %s9739 = scalar_lea.vmem [#allocation13], %s9738
          %9740 = dma.done %s9736, 6144
        $region88: #{tpu_custom_call.1} parent=83 // pred_fallthru
          _
      $region84: #{tpu_custom_call.1} parent=5 // pred_fallthru
        _
    $region6: #{tpu_custom_call.1} parent=1 // loop_footer
      %s23 = sadd.s32 1, %s19
    $region7: #{tpu_custom_call.1} parent=1 // loop_footer_branch
      %18 = sbr.rel target = $region3
    $region8: #{tpu_custom_call.1} parent=1 // loop_exit
      _
    %9741 = vsyncpa [#allocation3], 1
    %s9742 = scalar_lea.sflag [#allocation3], 1
    %9743 = vsyncpa %s9742, 1
    %9744 = vsyncpa [#allocation6], 1
    %9745 = vsyncpa [#allocation9], 1
    %9746 = vsyncpa [#allocation4], 1
    %s9747 = scalar_lea.sflag [#allocation4], 1
    %9748 = vsyncpa %s9747, 1

</llo_original>
